<compile_context>
chip_gen: v6e
topology: v6e:2x2x1
jax: 0.10.0
libtpu: 0.0.40
codegen_flags: <defaults>
</compile_context>

<pallas_src>
import functools

import jax
import jax.numpy as jnp
import numpy as np
from jax.experimental import pallas as pl
from jax.experimental.pallas import tpu as pltpu

SQRT_HALF = 0.7071067811865476


def _gelu_exact(v):
    """erf-based GELU (torch.nn.GELU default).

    erf via Abramowitz & Stegun 7.1.26 (max abs err 1.5e-7); avoids relying on
    a lax.erf lowering in Mosaic.  The plain divide is kept (instead of
    pl.reciprocal(approx=True)): the EUP-slot saving is negligible for this
    kernel and the exact divide keeps the erf ~1e-7 accurate.
    """
    a1, a2, a3, a4, a5 = (0.254829592, -0.284496736, 1.421413741,
                          -1.453152027, 1.061405429)
    p = 0.3275911
    u = v * SQRT_HALF
    sgn = jnp.where(u >= 0.0, 1.0, -1.0)
    au = jnp.abs(u)
    t = 1.0 / (1.0 + p * au)
    poly = ((((a5 * t + a4) * t + a3) * t + a2) * t + a1) * t
    erf = sgn * (1.0 - poly * jnp.exp(-au * au))
    return 0.5 * v * (1.0 + erf)


def _mxu(a, b):
    # Single-pass bf16 MXU matmul, f32 accumulation (no Precision.HIGHEST).
    return jnp.dot(a.astype(jnp.bfloat16), b.astype(jnp.bfloat16),
                   preferred_element_type=jnp.float32)


def _dw3x3(xhwc, Hh, Ww, C, taps, biases):
    """Depthwise 3x3 conv (stride 1, pad 1) on an (Hh, Ww, C) map.

    taps / biases: lists of (9, C) / (1, C) arrays, one per output group.
    Only the 3 W-shifted views are sublane-misaligned relayouts; the H taps
    are free leading-dim slices.
    """
    zc = jnp.zeros((Hh, 1, C), jnp.float32)
    zr = jnp.zeros((1, Ww + 2, C), jnp.float32)
    pad = jnp.concatenate(
        [zr, jnp.concatenate([zc, xhwc, zc], axis=1), zr], axis=0)
    cols = [pad[:, kw:kw + Ww, :] for kw in range(3)]      # (Hh+2, Ww, C) x 3
    accs = [jnp.zeros((Hh, Ww, C), jnp.float32) + b[0, :] for b in biases]
    for kh in range(3):
        for kw in range(3):
            blk = cols[kw][kh:kh + Hh]                     # leading-dim slice
            for gi in range(len(taps)):
                accs[gi] = accs[gi] + blk * taps[gi][kh * 3 + kw, :]
    return accs


def _smfa_kernel(f_ref, ups_ref,
                 w0y_ref, w0x_ref, b0y_ref, b0x_ref,
                 w1_ref, b1_ref, w2_ref, b2_ref,
                 dwk_ref, dwb_ref,
                 dk0_ref, dk1_ref, db0_ref, db1_ref,
                 wl0a_ref, wl0b_ref, bl0_ref,
                 wl1_ref, bl1_ref,
                 o_ref, *, H, W, C, down):
    Hs, Ws = H // down, W // down
    HW = H * W

    fm = f_ref[...]                                        # (HW, C) bf16

    # ---- linear_0 (1x1, C -> 2C) as two C->C matmuls (no chunk slice) ----
    y = _mxu(fm, w0y_ref[...]) + b0y_ref[...]              # (HW, C) f32
    x = _mxu(fm, w0x_ref[...]) + b0x_ref[...]              # (HW, C) f32

    # ---- adaptive max pool to (Hs, Ws): vectorized 8x8 max pool ----
    xw = jnp.max(x.reshape(H, Ws, down, C), axis=2)        # pool along W
    xw = xw.reshape(Hs, down, Ws, C)                       # leading-dim split
    pooled = xw[:, 0]
    for r in range(1, down):                               # pool along H
        pooled = jnp.maximum(pooled, xw[:, r])             # (Hs, Ws, C)

    # ---- dw_conv: depthwise 3x3 on the pooled map ----
    (x_s,) = _dw3x3(pooled, Hs, Ws, C, [dwk_ref[...]], [dwb_ref[...]])

    # ---- x_v: unbiased spatial variance (single pass) ----
    ssum = jnp.sum(x, axis=0, keepdims=True)               # (1, C)
    ssq = jnp.sum(x * x, axis=0, keepdims=True)            # (1, C)
    var = (ssq - ssum * ssum * (1.0 / HW)) * (1.0 / (HW - 1))

    # ---- linear_1 + exact GELU on (x_s + x_v) ----
    s = (x_s + var[0, :]).reshape(Hs * Ws, C)
    g = _gelu_exact(_mxu(s, w1_ref[...]) + b1_ref[...])    # (Hs*Ws, C)

    # ---- lde = DMlp(y): grouped dw 3x3 (C -> 2C), 1x1, GELU, 1x1 ----
    # Hidden channels use the fixed [group r=0 | group r=1] permutation of
    # torch's interleaved grouped-conv order; all weights are generated in
    # the same layout, so the math is equivalent.
    y3 = y.reshape(H, W, C)
    acc0, acc1 = _dw3x3(y3, H, W, C,
                        [dk0_ref[...], dk1_ref[...]],
                        [db0_ref[...], db1_ref[...]])
    hid = (_mxu(acc0.reshape(HW, C), wl0a_ref[...])
           + _mxu(acc1.reshape(HW, C), wl0b_ref[...]) + bl0_ref[...])
    y_d = _mxu(_gelu_exact(hid), wl1_ref[...]) + bl1_ref[...]   # (HW, C)

    # ---- x_l = x * nearest-upsample(g); upsample = one-hot expander matmul
    # (exact row gather on the MXU, no per-block slicing/concat loops) ----
    gup = _mxu(ups_ref[...], g)                            # (HW, C)
    t = x * gup + y_d

    # ---- linear_2 (1x1, C -> C) ----
    o_ref[...] = _mxu(t, w2_ref[...]) + b2_ref[...]


def _prep_weights(params, C, H, W, down):
    """Split / cast the torch-style params into the kernel's weight list."""
    bf, f32 = jnp.bfloat16, jnp.float32
    Hs, Ws = H // down, W // down
    # one-hot nearest-upsample expander: E[p, b] = 1 iff pixel p is in block b
    hh = np.arange(H)[:, None] // down
    ww = np.arange(W)[None, :] // down
    blk = (hh * Ws + ww).reshape(-1)
    ups = np.zeros((H * W, Hs * Ws), np.float32)
    ups[np.arange(H * W), blk] = 1.0
    w0, b0 = params["w0"], params["b0"]
    dw0_w, dw0_b, wl0 = params["dw0_w"], params["dw0_b"], params["wl0"]
    return [
        jnp.asarray(ups, bf),
        w0[:, :C].astype(bf), w0[:, C:].astype(bf),
        b0[:, :C].astype(f32), b0[:, C:].astype(f32),
        params["w1"].astype(bf), params["b1"].astype(f32),
        params["w2"].astype(bf), params["b2"].astype(f32),
        params["dw_w"].astype(f32), params["dw_b"].astype(f32),
        dw0_w[:, :C].astype(f32), dw0_w[:, C:].astype(f32),
        dw0_b[:, :C].astype(f32), dw0_b[:, C:].astype(f32),
        wl0[:C, :].astype(bf), wl0[C:, :].astype(bf), params["bl0"].astype(f32),
        params["wl1"].astype(bf), params["bl1"].astype(f32),
    ]


def smfa_pallas_nhwc(f_nhwc, params, down=8):
    """SMFA forward on an NHWC input (no layout transposes)."""
    B, H, W, C = f_nhwc.shape
    assert H % down == 0 and W % down == 0, "adaptive pool assumed evenly divisible"
    fm = f_nhwc.reshape(B, H * W, C).astype(jnp.bfloat16)
    weights = _prep_weights(params, C, H, W, down)
    kernel = functools.partial(_smfa_kernel, H=H, W=W, C=C, down=down)

    in_specs = [pl.BlockSpec((None, H * W, C), lambda b: (b, 0, 0))]
    in_specs += [pl.BlockSpec(w.shape, lambda b: (0, 0)) for w in weights]

    out = pl.pallas_call(
        kernel,
        out_shape=jax.ShapeDtypeStruct((B, H * W, C), jnp.float32),
        grid=(B,),
        in_specs=in_specs,
        out_specs=pl.BlockSpec((None, H * W, C), lambda b: (b, 0, 0)),
        compiler_params=pltpu.CompilerParams(
            dimension_semantics=("parallel",),
            vmem_limit_bytes=32 * 1024 * 1024),
    )(fm, *weights)
    return out.reshape(B, H, W, C)


def smfa_pallas(f_nchw, params, down=8):
    """NCHW public interface mirroring the PyTorch module.

    If the surrounding model runs NHWC, call smfa_pallas_nhwc directly and
    skip both layout transposes (they are plain XLA ops outside the kernel).
    """
    f = jnp.transpose(f_nchw, (0, 2, 3, 1))
    out = smfa_pallas_nhwc(f, params, down=down)
    return jnp.transpose(out, (0, 3, 1, 2))


def init_params(key, C):
    ks = jax.random.split(key, 14)
    w = lambda k, shape, s: jax.random.normal(k, shape, jnp.float32) * s
    return {
        "w0":    w(ks[0],  (C, 2 * C), 0.2),      "b0":    w(ks[1],  (1, 2 * C), 0.1),
        "w1":    w(ks[2],  (C, C), 0.2),          "b1":    w(ks[3],  (1, C), 0.1),
        "w2":    w(ks[4],  (C, C), 0.2),          "b2":    w(ks[5],  (1, C), 0.1),
        "dw_w":  w(ks[6],  (9, C), 0.2),          "dw_b":  w(ks[7],  (1, C), 0.1),
        "dw0_w": w(ks[8],  (9, 2 * C), 0.2),      "dw0_b": w(ks[9],  (1, 2 * C), 0.1),
        "wl0":   w(ks[10], (2 * C, 2 * C), 0.15), "bl0":   w(ks[11], (1, 2 * C), 0.1),
        "wl1":   w(ks[12], (2 * C, C), 0.15),     "bl1":   w(ks[13], (1, C), 0.1),
    }


def smfa_reference(f_nchw, params, down=8):
    """Pure-JAX (XLA) reference with identical semantics.

    It mirrors the kernel's (review-endorsed) matmul precision policy --
    bf16 operands with f32 accumulation, and a bf16-rounded `g` before the
    nearest upsample -- so the comparison validates the implementation
    structure tightly; everything else is the canonical formulation
    (jnp.var ddof=1, lax.erf GELU, padded depthwise taps, jnp.repeat upsample).
    """
    B, C, H, W = f_nchw.shape
    Hs, Ws = H // down, W // down
    bf = jnp.bfloat16
    f = jnp.transpose(f_nchw, (0, 2, 3, 1))
    mm = lambda a, b: jnp.einsum('...c,cd->...d', a.astype(bf), b.astype(bf),
                                 preferred_element_type=jnp.float32)
    gelu = lambda v: 0.5 * v * (1.0 + jax.lax.erf(v * SQRT_HALF))

    z = mm(f, params["w0"]) + params["b0"][0]
    y, x = z[..., :C], z[..., C:]
    pooled = jnp.max(x.reshape(B, Hs, down, Ws, down, C), axis=(2, 4))
    pad = jnp.pad(pooled, ((0, 0), (1, 1), (1, 1), (0, 0)))
    x_s = jnp.zeros((B, Hs, Ws, C), jnp.float32) + params["dw_b"][0]
    for kh in range(3):
        for kw in range(3):
            x_s = x_s + pad[:, kh:kh + Hs, kw:kw + Ws, :] * params["dw_w"][kh * 3 + kw]
    var = jnp.var(x, axis=(1, 2), keepdims=True, ddof=1)
    g = gelu(mm(x_s + var, params["w1"]) + params["b1"][0])
    g = g.astype(bf).astype(jnp.float32)      # mirrors the kernel's bf16 expander matmul
    gup = jnp.repeat(jnp.repeat(g, down, axis=1), down, axis=2)
    x_l = x * gup
    ypad = jnp.pad(y, ((0, 0), (1, 1), (1, 1), (0, 0)))
    acc0 = jnp.zeros((B, H, W, C), jnp.float32) + params["dw0_b"][0, :C]
    acc1 = jnp.zeros((B, H, W, C), jnp.float32) + params["dw0_b"][0, C:]
    for kh in range(3):
        for kw in range(3):
            blk = ypad[:, kh:kh + H, kw:kw + W, :]
            acc0 = acc0 + blk * params["dw0_w"][kh * 3 + kw, :C]
            acc1 = acc1 + blk * params["dw0_w"][kh * 3 + kw, C:]
    hid = jnp.concatenate([acc0, acc1], axis=-1)
    hid = gelu(mm(hid, params["wl0"]) + params["bl0"][0])
    y_d = mm(hid, params["wl1"]) + params["bl1"][0]
    out = mm(x_l + y_d, params["w2"]) + params["b2"][0]
    return jnp.transpose(out, (0, 3, 1, 2))


if __name__ == "__main__":
    key = jax.random.PRNGKey(0)
    kf, kp = jax.random.split(key)
    B, C, H, W = 2, 32, 16, 16          # small shapes; dim=32, down_scale=8
    f = jax.random.normal(kf, (B, C, H, W), jnp.float32)
    params = init_params(kp, C)

    out = jax.block_until_ready(smfa_pallas(f, params))
    assert out.shape == (B, C, H, W)

    ref = jax.block_until_ready(smfa_reference(f, params))
    diff = np.abs(np.asarray(out) - np.asarray(ref))
    # bf16 MXU operands (per the perf review) => validate at 1e-2 max /
    # 1e-3 mean; any structural bug shows up orders of magnitude above this.
    if not (float(diff.max()) < 1e-2 and float(diff.mean()) < 1e-3):
        raise AssertionError(
            f"Pallas mismatch: max={float(diff.max())}, mean={float(diff.mean())}")
    print("KERNEL_OK")
</pallas_src>

<mosaic_0001>
module attributes {stable_mosaic.version = 11 : i64} {
  func.func @_smfa_kernel(%arg0: i32, %arg1: memref<1x256x32xbf16, #tpu.memory_space<vmem>>, %arg2: memref<256x4xbf16, #tpu.memory_space<vmem>>, %arg3: memref<32x32xbf16, #tpu.memory_space<vmem>>, %arg4: memref<32x32xbf16, #tpu.memory_space<vmem>>, %arg5: memref<1x32xf32, #tpu.memory_space<vmem>>, %arg6: memref<1x32xf32, #tpu.memory_space<vmem>>, %arg7: memref<32x32xbf16, #tpu.memory_space<vmem>>, %arg8: memref<1x32xf32, #tpu.memory_space<vmem>>, %arg9: memref<32x32xbf16, #tpu.memory_space<vmem>>, %arg10: memref<1x32xf32, #tpu.memory_space<vmem>>, %arg11: memref<9x32xf32, #tpu.memory_space<vmem>>, %arg12: memref<1x32xf32, #tpu.memory_space<vmem>>, %arg13: memref<9x32xf32, #tpu.memory_space<vmem>>, %arg14: memref<9x32xf32, #tpu.memory_space<vmem>>, %arg15: memref<1x32xf32, #tpu.memory_space<vmem>>, %arg16: memref<1x32xf32, #tpu.memory_space<vmem>>, %arg17: memref<32x64xbf16, #tpu.memory_space<vmem>>, %arg18: memref<32x64xbf16, #tpu.memory_space<vmem>>, %arg19: memref<1x64xf32, #tpu.memory_space<vmem>>, %arg20: memref<64x32xbf16, #tpu.memory_space<vmem>>, %arg21: memref<1x32xf32, #tpu.memory_space<vmem>>, %arg22: memref<1x256x32xf32, #tpu.memory_space<vmem>>) attributes {dimension_semantics = [#tpu.dimension_semantics<parallel>], iteration_bounds = array<i64: 2>, scalar_prefetch = 0 : i64, scratch_operands = 0 : i64, tpu.core_type = #tpu.core_type<tc>, window_params = [{transform_indices = @transform_0, window_bounds = array<i64: 1, 256, 32>}, {pipeline_mode = #tpu.pipeline_mode<synchronous>, transform_indices = @transform_1, window_bounds = array<i64: 256, 4>}, {pipeline_mode = #tpu.pipeline_mode<synchronous>, transform_indices = @transform_2, window_bounds = array<i64: 32, 32>}, {pipeline_mode = #tpu.pipeline_mode<synchronous>, transform_indices = @transform_3, window_bounds = array<i64: 32, 32>}, {pipeline_mode = #tpu.pipeline_mode<synchronous>, transform_indices = @transform_4, window_bounds = array<i64: 1, 32>}, {pipeline_mode = #tpu.pipeline_mode<synchronous>, transform_indices = @transform_5, window_bounds = array<i64: 1, 32>}, {pipeline_mode = #tpu.pipeline_mode<synchronous>, transform_indices = @transform_6, window_bounds = array<i64: 32, 32>}, {pipeline_mode = #tpu.pipeline_mode<synchronous>, transform_indices = @transform_7, window_bounds = array<i64: 1, 32>}, {pipeline_mode = #tpu.pipeline_mode<synchronous>, transform_indices = @transform_8, window_bounds = array<i64: 32, 32>}, {pipeline_mode = #tpu.pipeline_mode<synchronous>, transform_indices = @transform_9, window_bounds = array<i64: 1, 32>}, {pipeline_mode = #tpu.pipeline_mode<synchronous>, transform_indices = @transform_10, window_bounds = array<i64: 9, 32>}, {pipeline_mode = #tpu.pipeline_mode<synchronous>, transform_indices = @transform_11, window_bounds = array<i64: 1, 32>}, {pipeline_mode = #tpu.pipeline_mode<synchronous>, transform_indices = @transform_12, window_bounds = array<i64: 9, 32>}, {pipeline_mode = #tpu.pipeline_mode<synchronous>, transform_indices = @transform_13, window_bounds = array<i64: 9, 32>}, {pipeline_mode = #tpu.pipeline_mode<synchronous>, transform_indices = @transform_14, window_bounds = array<i64: 1, 32>}, {pipeline_mode = #tpu.pipeline_mode<synchronous>, transform_indices = @transform_15, window_bounds = array<i64: 1, 32>}, {pipeline_mode = #tpu.pipeline_mode<synchronous>, transform_indices = @transform_16, window_bounds = array<i64: 32, 64>}, {pipeline_mode = #tpu.pipeline_mode<synchronous>, transform_indices = @transform_17, window_bounds = array<i64: 32, 64>}, {pipeline_mode = #tpu.pipeline_mode<synchronous>, transform_indices = @transform_18, window_bounds = array<i64: 1, 64>}, {pipeline_mode = #tpu.pipeline_mode<synchronous>, transform_indices = @transform_19, window_bounds = array<i64: 64, 32>}, {pipeline_mode = #tpu.pipeline_mode<synchronous>, transform_indices = @transform_20, window_bounds = array<i64: 1, 32>}, {transform_indices = @transform_21, window_bounds = array<i64: 1, 256, 32>}]} {
    %c0 = arith.constant 0 : index
    %c0_0 = arith.constant 0 : index
    %c0_1 = arith.constant 0 : index
    %0 = vector.load %arg1[%c0, %c0_0, %c0_1] : memref<1x256x32xbf16, #tpu.memory_space<vmem>>, vector<1x256x32xbf16>
    %1 = vector.shape_cast %0 : vector<1x256x32xbf16> to vector<256x32xbf16>
    %c0_2 = arith.constant 0 : index
    %c0_3 = arith.constant 0 : index
    %2 = vector.load %arg3[%c0_2, %c0_3] : memref<32x32xbf16, #tpu.memory_space<vmem>>, vector<32x32xbf16>
    %cst = arith.constant dense<0.000000e+00> : vector<256x32xf32>
    %3 = tpu.matmul %1, %2, %cst {dimension_numbers = #tpu.dot_dimension_numbers<[1], [0], [0], [1], [0, 0, 1, 1], [], []>} : vector<256x32xbf16>, vector<32x32xbf16>, vector<256x32xf32> -> vector<256x32xf32>
    %c0_4 = arith.constant 0 : index
    %c0_5 = arith.constant 0 : index
    %4 = vector.load %arg5[%c0_4, %c0_5] : memref<1x32xf32, #tpu.memory_space<vmem>>, vector<1x32xf32>
    %5 = vector.broadcast %4 : vector<1x32xf32> to vector<256x32xf32>
    %6 = arith.addf %3, %5 : vector<256x32xf32>
    %c0_6 = arith.constant 0 : index
    %c0_7 = arith.constant 0 : index
    %7 = vector.load %arg4[%c0_6, %c0_7] : memref<32x32xbf16, #tpu.memory_space<vmem>>, vector<32x32xbf16>
    %cst_8 = arith.constant dense<0.000000e+00> : vector<256x32xf32>
    %8 = tpu.matmul %1, %7, %cst_8 {dimension_numbers = #tpu.dot_dimension_numbers<[1], [0], [0], [1], [0, 0, 1, 1], [], []>} : vector<256x32xbf16>, vector<32x32xbf16>, vector<256x32xf32> -> vector<256x32xf32>
    %c0_9 = arith.constant 0 : index
    %c0_10 = arith.constant 0 : index
    %9 = vector.load %arg6[%c0_9, %c0_10] : memref<1x32xf32, #tpu.memory_space<vmem>>, vector<1x32xf32>
    %10 = vector.broadcast %9 : vector<1x32xf32> to vector<256x32xf32>
    %11 = arith.addf %8, %10 : vector<256x32xf32>
    %12 = vector.shape_cast %11 : vector<256x32xf32> to vector<16x2x8x32xf32>
    %cst_11 = arith.constant dense<0xFF800000> : vector<16x2x32xf32>
    %13 = vector.multi_reduction <maximumf>, %12, %cst_11 [2] : vector<16x2x8x32xf32> to vector<16x2x32xf32>
    %14 = vector.shape_cast %13 : vector<16x2x32xf32> to vector<2x8x2x32xf32>
    %15 = vector.extract_strided_slice %14 {offsets = [0, 0, 0, 0], sizes = [2, 1, 2, 32], strides = [1, 1, 1, 1]} : vector<2x8x2x32xf32> to vector<2x1x2x32xf32>
    %16 = vector.shape_cast %15 : vector<2x1x2x32xf32> to vector<2x2x32xf32>
    %17 = vector.extract_strided_slice %14 {offsets = [0, 1, 0, 0], sizes = [2, 1, 2, 32], strides = [1, 1, 1, 1]} : vector<2x8x2x32xf32> to vector<2x1x2x32xf32>
    %18 = vector.shape_cast %17 : vector<2x1x2x32xf32> to vector<2x2x32xf32>
    %19 = arith.maximumf %16, %18 : vector<2x2x32xf32>
    %20 = vector.extract_strided_slice %14 {offsets = [0, 2, 0, 0], sizes = [2, 1, 2, 32], strides = [1, 1, 1, 1]} : vector<2x8x2x32xf32> to vector<2x1x2x32xf32>
    %21 = vector.shape_cast %20 : vector<2x1x2x32xf32> to vector<2x2x32xf32>
    %22 = arith.maximumf %19, %21 : vector<2x2x32xf32>
    %23 = vector.extract_strided_slice %14 {offsets = [0, 3, 0, 0], sizes = [2, 1, 2, 32], strides = [1, 1, 1, 1]} : vector<2x8x2x32xf32> to vector<2x1x2x32xf32>
    %24 = vector.shape_cast %23 : vector<2x1x2x32xf32> to vector<2x2x32xf32>
    %25 = arith.maximumf %22, %24 : vector<2x2x32xf32>
    %26 = vector.extract_strided_slice %14 {offsets = [0, 4, 0, 0], sizes = [2, 1, 2, 32], strides = [1, 1, 1, 1]} : vector<2x8x2x32xf32> to vector<2x1x2x32xf32>
    %27 = vector.shape_cast %26 : vector<2x1x2x32xf32> to vector<2x2x32xf32>
    %28 = arith.maximumf %25, %27 : vector<2x2x32xf32>
    %29 = vector.extract_strided_slice %14 {offsets = [0, 5, 0, 0], sizes = [2, 1, 2, 32], strides = [1, 1, 1, 1]} : vector<2x8x2x32xf32> to vector<2x1x2x32xf32>
    %30 = vector.shape_cast %29 : vector<2x1x2x32xf32> to vector<2x2x32xf32>
    %31 = arith.maximumf %28, %30 : vector<2x2x32xf32>
    %32 = vector.extract_strided_slice %14 {offsets = [0, 6, 0, 0], sizes = [2, 1, 2, 32], strides = [1, 1, 1, 1]} : vector<2x8x2x32xf32> to vector<2x1x2x32xf32>
    %33 = vector.shape_cast %32 : vector<2x1x2x32xf32> to vector<2x2x32xf32>
    %34 = arith.maximumf %31, %33 : vector<2x2x32xf32>
    %35 = vector.extract_strided_slice %14 {offsets = [0, 7, 0, 0], sizes = [2, 1, 2, 32], strides = [1, 1, 1, 1]} : vector<2x8x2x32xf32> to vector<2x1x2x32xf32>
    %36 = vector.shape_cast %35 : vector<2x1x2x32xf32> to vector<2x2x32xf32>
    %37 = arith.maximumf %34, %36 : vector<2x2x32xf32>
    %c0_12 = arith.constant 0 : index
    %c0_13 = arith.constant 0 : index
    %38 = vector.load %arg11[%c0_12, %c0_13] : memref<9x32xf32, #tpu.memory_space<vmem>>, vector<9x32xf32>
    %c0_14 = arith.constant 0 : index
    %c0_15 = arith.constant 0 : index
    %39 = vector.load %arg12[%c0_14, %c0_15] : memref<1x32xf32, #tpu.memory_space<vmem>>, vector<1x32xf32>
    %cst_16 = arith.constant 0.000000e+00 : f32
    %40 = vector.broadcast %cst_16 : f32 to vector<2x1x32xf32>
    %cst_17 = arith.constant 0.000000e+00 : f32
    %41 = vector.broadcast %cst_17 : f32 to vector<1x4x32xf32>
    %42 = tpu.concatenate %40, %37, %40 in 1 : vector<2x1x32xf32>, vector<2x2x32xf32>, vector<2x1x32xf32> -> vector<2x4x32xf32>
    %43 = tpu.concatenate %41, %42, %41 in 0 : vector<1x4x32xf32>, vector<2x4x32xf32>, vector<1x4x32xf32> -> vector<4x4x32xf32>
    %44 = vector.extract_strided_slice %43 {offsets = [0, 0, 0], sizes = [4, 2, 32], strides = [1, 1, 1]} : vector<4x4x32xf32> to vector<4x2x32xf32>
    %45 = vector.extract_strided_slice %43 {offsets = [0, 1, 0], sizes = [4, 2, 32], strides = [1, 1, 1]} : vector<4x4x32xf32> to vector<4x2x32xf32>
    %46 = vector.extract_strided_slice %43 {offsets = [0, 2, 0], sizes = [4, 2, 32], strides = [1, 1, 1]} : vector<4x4x32xf32> to vector<4x2x32xf32>
    %cst_18 = arith.constant 0.000000e+00 : f32
    %47 = vector.broadcast %cst_18 : f32 to vector<2x2x32xf32>
    %48 = vector.shape_cast %39 : vector<1x32xf32> to vector<32xf32>
    %49 = vector.shape_cast %48 : vector<32xf32> to vector<1x1x32xf32>
    %50 = vector.broadcast %49 : vector<1x1x32xf32> to vector<2x2x32xf32>
    %51 = arith.addf %47, %50 : vector<2x2x32xf32>
    %52 = vector.extract_strided_slice %44 {offsets = [0, 0, 0], sizes = [2, 2, 32], strides = [1, 1, 1]} : vector<4x2x32xf32> to vector<2x2x32xf32>
    %53 = vector.extract_strided_slice %38 {offsets = [0, 0], sizes = [1, 32], strides = [1, 1]} : vector<9x32xf32> to vector<1x32xf32>
    %54 = vector.shape_cast %53 : vector<1x32xf32> to vector<32xf32>
    %55 = vector.shape_cast %54 : vector<32xf32> to vector<1x1x32xf32>
    %56 = vector.broadcast %55 : vector<1x1x32xf32> to vector<2x2x32xf32>
    %57 = arith.mulf %52, %56 : vector<2x2x32xf32>
    %58 = arith.addf %51, %57 : vector<2x2x32xf32>
    %59 = vector.extract_strided_slice %45 {offsets = [0, 0, 0], sizes = [2, 2, 32], strides = [1, 1, 1]} : vector<4x2x32xf32> to vector<2x2x32xf32>
    %60 = vector.extract_strided_slice %38 {offsets = [1, 0], sizes = [1, 32], strides = [1, 1]} : vector<9x32xf32> to vector<1x32xf32>
    %61 = vector.shape_cast %60 : vector<1x32xf32> to vector<32xf32>
    %62 = vector.shape_cast %61 : vector<32xf32> to vector<1x1x32xf32>
    %63 = vector.broadcast %62 : vector<1x1x32xf32> to vector<2x2x32xf32>
    %64 = arith.mulf %59, %63 : vector<2x2x32xf32>
    %65 = arith.addf %58, %64 : vector<2x2x32xf32>
    %66 = vector.extract_strided_slice %46 {offsets = [0, 0, 0], sizes = [2, 2, 32], strides = [1, 1, 1]} : vector<4x2x32xf32> to vector<2x2x32xf32>
    %67 = vector.extract_strided_slice %38 {offsets = [2, 0], sizes = [1, 32], strides = [1, 1]} : vector<9x32xf32> to vector<1x32xf32>
    %68 = vector.shape_cast %67 : vector<1x32xf32> to vector<32xf32>
    %69 = vector.shape_cast %68 : vector<32xf32> to vector<1x1x32xf32>
    %70 = vector.broadcast %69 : vector<1x1x32xf32> to vector<2x2x32xf32>
    %71 = arith.mulf %66, %70 : vector<2x2x32xf32>
    %72 = arith.addf %65, %71 : vector<2x2x32xf32>
    %73 = vector.extract_strided_slice %44 {offsets = [1, 0, 0], sizes = [2, 2, 32], strides = [1, 1, 1]} : vector<4x2x32xf32> to vector<2x2x32xf32>
    %74 = vector.extract_strided_slice %38 {offsets = [3, 0], sizes = [1, 32], strides = [1, 1]} : vector<9x32xf32> to vector<1x32xf32>
    %75 = vector.shape_cast %74 : vector<1x32xf32> to vector<32xf32>
    %76 = vector.shape_cast %75 : vector<32xf32> to vector<1x1x32xf32>
    %77 = vector.broadcast %76 : vector<1x1x32xf32> to vector<2x2x32xf32>
    %78 = arith.mulf %73, %77 : vector<2x2x32xf32>
    %79 = arith.addf %72, %78 : vector<2x2x32xf32>
    %80 = vector.extract_strided_slice %45 {offsets = [1, 0, 0], sizes = [2, 2, 32], strides = [1, 1, 1]} : vector<4x2x32xf32> to vector<2x2x32xf32>
    %81 = vector.extract_strided_slice %38 {offsets = [4, 0], sizes = [1, 32], strides = [1, 1]} : vector<9x32xf32> to vector<1x32xf32>
    %82 = vector.shape_cast %81 : vector<1x32xf32> to vector<32xf32>
    %83 = vector.shape_cast %82 : vector<32xf32> to vector<1x1x32xf32>
    %84 = vector.broadcast %83 : vector<1x1x32xf32> to vector<2x2x32xf32>
    %85 = arith.mulf %80, %84 : vector<2x2x32xf32>
    %86 = arith.addf %79, %85 : vector<2x2x32xf32>
    %87 = vector.extract_strided_slice %46 {offsets = [1, 0, 0], sizes = [2, 2, 32], strides = [1, 1, 1]} : vector<4x2x32xf32> to vector<2x2x32xf32>
    %88 = vector.extract_strided_slice %38 {offsets = [5, 0], sizes = [1, 32], strides = [1, 1]} : vector<9x32xf32> to vector<1x32xf32>
    %89 = vector.shape_cast %88 : vector<1x32xf32> to vector<32xf32>
    %90 = vector.shape_cast %89 : vector<32xf32> to vector<1x1x32xf32>
    %91 = vector.broadcast %90 : vector<1x1x32xf32> to vector<2x2x32xf32>
    %92 = arith.mulf %87, %91 : vector<2x2x32xf32>
    %93 = arith.addf %86, %92 : vector<2x2x32xf32>
    %94 = vector.extract_strided_slice %44 {offsets = [2, 0, 0], sizes = [2, 2, 32], strides = [1, 1, 1]} : vector<4x2x32xf32> to vector<2x2x32xf32>
    %95 = vector.extract_strided_slice %38 {offsets = [6, 0], sizes = [1, 32], strides = [1, 1]} : vector<9x32xf32> to vector<1x32xf32>
    %96 = vector.shape_cast %95 : vector<1x32xf32> to vector<32xf32>
    %97 = vector.shape_cast %96 : vector<32xf32> to vector<1x1x32xf32>
    %98 = vector.broadcast %97 : vector<1x1x32xf32> to vector<2x2x32xf32>
    %99 = arith.mulf %94, %98 : vector<2x2x32xf32>
    %100 = arith.addf %93, %99 : vector<2x2x32xf32>
    %101 = vector.extract_strided_slice %45 {offsets = [2, 0, 0], sizes = [2, 2, 32], strides = [1, 1, 1]} : vector<4x2x32xf32> to vector<2x2x32xf32>
    %102 = vector.extract_strided_slice %38 {offsets = [7, 0], sizes = [1, 32], strides = [1, 1]} : vector<9x32xf32> to vector<1x32xf32>
    %103 = vector.shape_cast %102 : vector<1x32xf32> to vector<32xf32>
    %104 = vector.shape_cast %103 : vector<32xf32> to vector<1x1x32xf32>
    %105 = vector.broadcast %104 : vector<1x1x32xf32> to vector<2x2x32xf32>
    %106 = arith.mulf %101, %105 : vector<2x2x32xf32>
    %107 = arith.addf %100, %106 : vector<2x2x32xf32>
    %108 = vector.extract_strided_slice %46 {offsets = [2, 0, 0], sizes = [2, 2, 32], strides = [1, 1, 1]} : vector<4x2x32xf32> to vector<2x2x32xf32>
    %109 = vector.extract_strided_slice %38 {offsets = [8, 0], sizes = [1, 32], strides = [1, 1]} : vector<9x32xf32> to vector<1x32xf32>
    %110 = vector.shape_cast %109 : vector<1x32xf32> to vector<32xf32>
    %111 = vector.shape_cast %110 : vector<32xf32> to vector<1x1x32xf32>
    %112 = vector.broadcast %111 : vector<1x1x32xf32> to vector<2x2x32xf32>
    %113 = arith.mulf %108, %112 : vector<2x2x32xf32>
    %114 = arith.addf %107, %113 : vector<2x2x32xf32>
    %cst_19 = arith.constant dense<0.000000e+00> : vector<32xf32>
    %115 = vector.multi_reduction <add>, %11, %cst_19 [0] : vector<256x32xf32> to vector<32xf32>
    %116 = vector.shape_cast %115 : vector<32xf32> to vector<1x32xf32>
    %117 = arith.mulf %11, %11 : vector<256x32xf32>
    %cst_20 = arith.constant dense<0.000000e+00> : vector<32xf32>
    %118 = vector.multi_reduction <add>, %117, %cst_20 [0] : vector<256x32xf32> to vector<32xf32>
    %119 = vector.shape_cast %118 : vector<32xf32> to vector<1x32xf32>
    %120 = arith.mulf %116, %116 : vector<1x32xf32>
    %cst_21 = arith.constant 3.906250e-03 : f32
    %121 = vector.broadcast %cst_21 : f32 to vector<1x32xf32>
    %122 = arith.mulf %120, %121 : vector<1x32xf32>
    %123 = arith.subf %119, %122 : vector<1x32xf32>
    %cst_22 = arith.constant 0.00392156886 : f32
    %124 = vector.broadcast %cst_22 : f32 to vector<1x32xf32>
    %125 = arith.mulf %123, %124 : vector<1x32xf32>
    %126 = vector.shape_cast %125 : vector<1x32xf32> to vector<32xf32>
    %127 = vector.shape_cast %126 : vector<32xf32> to vector<1x1x32xf32>
    %128 = vector.broadcast %127 : vector<1x1x32xf32> to vector<2x2x32xf32>
    %129 = arith.addf %114, %128 : vector<2x2x32xf32>
    %130 = vector.shape_cast %129 : vector<2x2x32xf32> to vector<4x32xf32>
    %c0_23 = arith.constant 0 : index
    %c0_24 = arith.constant 0 : index
    %131 = vector.load %arg7[%c0_23, %c0_24] : memref<32x32xbf16, #tpu.memory_space<vmem>>, vector<32x32xbf16>
    %132 = arith.truncf %130 : vector<4x32xf32> to vector<4x32xbf16>
    %cst_25 = arith.constant dense<0.000000e+00> : vector<4x32xf32>
    %133 = tpu.matmul %132, %131, %cst_25 {dimension_numbers = #tpu.dot_dimension_numbers<[1], [0], [0], [1], [0, 0, 1, 1], [], []>} : vector<4x32xbf16>, vector<32x32xbf16>, vector<4x32xf32> -> vector<4x32xf32>
    %c0_26 = arith.constant 0 : index
    %c0_27 = arith.constant 0 : index
    %134 = vector.load %arg8[%c0_26, %c0_27] : memref<1x32xf32, #tpu.memory_space<vmem>>, vector<1x32xf32>
    %135 = vector.broadcast %134 : vector<1x32xf32> to vector<4x32xf32>
    %136 = arith.addf %133, %135 : vector<4x32xf32>
    %cst_28 = arith.constant 0.707106769 : f32
    %137 = vector.broadcast %cst_28 : f32 to vector<4x32xf32>
    %138 = arith.mulf %136, %137 : vector<4x32xf32>
    %cst_29 = arith.constant 0.000000e+00 : f32
    %139 = vector.broadcast %cst_29 : f32 to vector<4x32xf32>
    %140 = arith.cmpf oge, %138, %139 : vector<4x32xf32>
    %cst_30 = arith.constant 1.000000e+00 : f32
    %cst_31 = arith.constant -1.000000e+00 : f32
    %141 = vector.broadcast %cst_30 : f32 to vector<4x32xf32>
    %142 = vector.broadcast %cst_31 : f32 to vector<4x32xf32>
    %143 = arith.select %140, %141, %142 : vector<4x32xi1>, vector<4x32xf32>
    %144 = math.absf %138 : vector<4x32xf32>
    %cst_32 = arith.constant 0.327591091 : f32
    %145 = vector.broadcast %cst_32 : f32 to vector<4x32xf32>
    %146 = arith.mulf %145, %144 : vector<4x32xf32>
    %cst_33 = arith.constant 1.000000e+00 : f32
    %147 = vector.broadcast %cst_33 : f32 to vector<4x32xf32>
    %148 = arith.addf %147, %146 : vector<4x32xf32>
    %cst_34 = arith.constant 1.000000e+00 : f32
    %149 = vector.broadcast %cst_34 : f32 to vector<4x32xf32>
    %150 = arith.divf %149, %148 : vector<4x32xf32>
    %cst_35 = arith.constant 1.06140542 : f32
    %151 = vector.broadcast %cst_35 : f32 to vector<4x32xf32>
    %152 = arith.mulf %151, %150 : vector<4x32xf32>
    %cst_36 = arith.constant -1.45315206 : f32
    %153 = vector.broadcast %cst_36 : f32 to vector<4x32xf32>
    %154 = arith.addf %152, %153 : vector<4x32xf32>
    %155 = arith.mulf %154, %150 : vector<4x32xf32>
    %cst_37 = arith.constant 1.42141378 : f32
    %156 = vector.broadcast %cst_37 : f32 to vector<4x32xf32>
    %157 = arith.addf %155, %156 : vector<4x32xf32>
    %158 = arith.mulf %157, %150 : vector<4x32xf32>
    %cst_38 = arith.constant -0.284496725 : f32
    %159 = vector.broadcast %cst_38 : f32 to vector<4x32xf32>
    %160 = arith.addf %158, %159 : vector<4x32xf32>
    %161 = arith.mulf %160, %150 : vector<4x32xf32>
    %cst_39 = arith.constant 0.254829586 : f32
    %162 = vector.broadcast %cst_39 : f32 to vector<4x32xf32>
    %163 = arith.addf %161, %162 : vector<4x32xf32>
    %164 = arith.mulf %163, %150 : vector<4x32xf32>
    %cst_40 = arith.constant 0.000000e+00 : f32
    %165 = vector.broadcast %cst_40 : f32 to vector<4x32xf32>
    %166 = arith.subf %165, %144 : vector<4x32xf32>
    %167 = arith.mulf %166, %144 : vector<4x32xf32>
    %168 = math.exp %167 : vector<4x32xf32>
    %169 = arith.mulf %164, %168 : vector<4x32xf32>
    %cst_41 = arith.constant 1.000000e+00 : f32
    %170 = vector.broadcast %cst_41 : f32 to vector<4x32xf32>
    %171 = arith.subf %170, %169 : vector<4x32xf32>
    %172 = arith.mulf %143, %171 : vector<4x32xf32>
    %cst_42 = arith.constant 5.000000e-01 : f32
    %173 = vector.broadcast %cst_42 : f32 to vector<4x32xf32>
    %174 = arith.mulf %173, %136 : vector<4x32xf32>
    %cst_43 = arith.constant 1.000000e+00 : f32
    %175 = vector.broadcast %cst_43 : f32 to vector<4x32xf32>
    %176 = arith.addf %175, %172 : vector<4x32xf32>
    %177 = arith.mulf %174, %176 : vector<4x32xf32>
    %178 = vector.shape_cast %6 : vector<256x32xf32> to vector<16x16x32xf32>
    %c0_44 = arith.constant 0 : index
    %c0_45 = arith.constant 0 : index
    %179 = vector.load %arg13[%c0_44, %c0_45] : memref<9x32xf32, #tpu.memory_space<vmem>>, vector<9x32xf32>
    %c0_46 = arith.constant 0 : index
    %c0_47 = arith.constant 0 : index
    %180 = vector.load %arg14[%c0_46, %c0_47] : memref<9x32xf32, #tpu.memory_space<vmem>>, vector<9x32xf32>
    %c0_48 = arith.constant 0 : index
    %c0_49 = arith.constant 0 : index
    %181 = vector.load %arg15[%c0_48, %c0_49] : memref<1x32xf32, #tpu.memory_space<vmem>>, vector<1x32xf32>
    %c0_50 = arith.constant 0 : index
    %c0_51 = arith.constant 0 : index
    %182 = vector.load %arg16[%c0_50, %c0_51] : memref<1x32xf32, #tpu.memory_space<vmem>>, vector<1x32xf32>
    %cst_52 = arith.constant 0.000000e+00 : f32
    %183 = vector.broadcast %cst_52 : f32 to vector<16x1x32xf32>
    %cst_53 = arith.constant 0.000000e+00 : f32
    %184 = vector.broadcast %cst_53 : f32 to vector<1x18x32xf32>
    %185 = tpu.concatenate %183, %178, %183 in 1 : vector<16x1x32xf32>, vector<16x16x32xf32>, vector<16x1x32xf32> -> vector<16x18x32xf32>
    %186 = tpu.concatenate %184, %185, %184 in 0 : vector<1x18x32xf32>, vector<16x18x32xf32>, vector<1x18x32xf32> -> vector<18x18x32xf32>
    %187 = vector.extract_strided_slice %186 {offsets = [0, 0, 0], sizes = [18, 16, 32], strides = [1, 1, 1]} : vector<18x18x32xf32> to vector<18x16x32xf32>
    %188 = vector.extract_strided_slice %186 {offsets = [0, 1, 0], sizes = [18, 16, 32], strides = [1, 1, 1]} : vector<18x18x32xf32> to vector<18x16x32xf32>
    %189 = vector.extract_strided_slice %186 {offsets = [0, 2, 0], sizes = [18, 16, 32], strides = [1, 1, 1]} : vector<18x18x32xf32> to vector<18x16x32xf32>
    %cst_54 = arith.constant 0.000000e+00 : f32
    %190 = vector.broadcast %cst_54 : f32 to vector<16x16x32xf32>
    %191 = vector.shape_cast %181 : vector<1x32xf32> to vector<32xf32>
    %192 = vector.shape_cast %191 : vector<32xf32> to vector<1x1x32xf32>
    %193 = vector.broadcast %192 : vector<1x1x32xf32> to vector<16x16x32xf32>
    %194 = arith.addf %190, %193 : vector<16x16x32xf32>
    %cst_55 = arith.constant 0.000000e+00 : f32
    %195 = vector.broadcast %cst_55 : f32 to vector<16x16x32xf32>
    %196 = vector.shape_cast %182 : vector<1x32xf32> to vector<32xf32>
    %197 = vector.shape_cast %196 : vector<32xf32> to vector<1x1x32xf32>
    %198 = vector.broadcast %197 : vector<1x1x32xf32> to vector<16x16x32xf32>
    %199 = arith.addf %195, %198 : vector<16x16x32xf32>
    %200 = vector.extract_strided_slice %187 {offsets = [0, 0, 0], sizes = [16, 16, 32], strides = [1, 1, 1]} : vector<18x16x32xf32> to vector<16x16x32xf32>
    %201 = vector.extract_strided_slice %179 {offsets = [0, 0], sizes = [1, 32], strides = [1, 1]} : vector<9x32xf32> to vector<1x32xf32>
    %202 = vector.shape_cast %201 : vector<1x32xf32> to vector<32xf32>
    %203 = vector.shape_cast %202 : vector<32xf32> to vector<1x1x32xf32>
    %204 = vector.broadcast %203 : vector<1x1x32xf32> to vector<16x16x32xf32>
    %205 = arith.mulf %200, %204 : vector<16x16x32xf32>
    %206 = arith.addf %194, %205 : vector<16x16x32xf32>
    %207 = vector.extract_strided_slice %180 {offsets = [0, 0], sizes = [1, 32], strides = [1, 1]} : vector<9x32xf32> to vector<1x32xf32>
    %208 = vector.shape_cast %207 : vector<1x32xf32> to vector<32xf32>
    %209 = vector.shape_cast %208 : vector<32xf32> to vector<1x1x32xf32>
    %210 = vector.broadcast %209 : vector<1x1x32xf32> to vector<16x16x32xf32>
    %211 = arith.mulf %200, %210 : vector<16x16x32xf32>
    %212 = arith.addf %199, %211 : vector<16x16x32xf32>
    %213 = vector.extract_strided_slice %188 {offsets = [0, 0, 0], sizes = [16, 16, 32], strides = [1, 1, 1]} : vector<18x16x32xf32> to vector<16x16x32xf32>
    %214 = vector.extract_strided_slice %179 {offsets = [1, 0], sizes = [1, 32], strides = [1, 1]} : vector<9x32xf32> to vector<1x32xf32>
    %215 = vector.shape_cast %214 : vector<1x32xf32> to vector<32xf32>
    %216 = vector.shape_cast %215 : vector<32xf32> to vector<1x1x32xf32>
    %217 = vector.broadcast %216 : vector<1x1x32xf32> to vector<16x16x32xf32>
    %218 = arith.mulf %213, %217 : vector<16x16x32xf32>
    %219 = arith.addf %206, %218 : vector<16x16x32xf32>
    %220 = vector.extract_strided_slice %180 {offsets = [1, 0], sizes = [1, 32], strides = [1, 1]} : vector<9x32xf32> to vector<1x32xf32>
    %221 = vector.shape_cast %220 : vector<1x32xf32> to vector<32xf32>
    %222 = vector.shape_cast %221 : vector<32xf32> to vector<1x1x32xf32>
    %223 = vector.broadcast %222 : vector<1x1x32xf32> to vector<16x16x32xf32>
    %224 = arith.mulf %213, %223 : vector<16x16x32xf32>
    %225 = arith.addf %212, %224 : vector<16x16x32xf32>
    %226 = vector.extract_strided_slice %189 {offsets = [0, 0, 0], sizes = [16, 16, 32], strides = [1, 1, 1]} : vector<18x16x32xf32> to vector<16x16x32xf32>
    %227 = vector.extract_strided_slice %179 {offsets = [2, 0], sizes = [1, 32], strides = [1, 1]} : vector<9x32xf32> to vector<1x32xf32>
    %228 = vector.shape_cast %227 : vector<1x32xf32> to vector<32xf32>
    %229 = vector.shape_cast %228 : vector<32xf32> to vector<1x1x32xf32>
    %230 = vector.broadcast %229 : vector<1x1x32xf32> to vector<16x16x32xf32>
    %231 = arith.mulf %226, %230 : vector<16x16x32xf32>
    %232 = arith.addf %219, %231 : vector<16x16x32xf32>
    %233 = vector.extract_strided_slice %180 {offsets = [2, 0], sizes = [1, 32], strides = [1, 1]} : vector<9x32xf32> to vector<1x32xf32>
    %234 = vector.shape_cast %233 : vector<1x32xf32> to vector<32xf32>
    %235 = vector.shape_cast %234 : vector<32xf32> to vector<1x1x32xf32>
    %236 = vector.broadcast %235 : vector<1x1x32xf32> to vector<16x16x32xf32>
    %237 = arith.mulf %226, %236 : vector<16x16x32xf32>
    %238 = arith.addf %225, %237 : vector<16x16x32xf32>
    %239 = vector.extract_strided_slice %187 {offsets = [1, 0, 0], sizes = [16, 16, 32], strides = [1, 1, 1]} : vector<18x16x32xf32> to vector<16x16x32xf32>
    %240 = vector.extract_strided_slice %179 {offsets = [3, 0], sizes = [1, 32], strides = [1, 1]} : vector<9x32xf32> to vector<1x32xf32>
    %241 = vector.shape_cast %240 : vector<1x32xf32> to vector<32xf32>
    %242 = vector.shape_cast %241 : vector<32xf32> to vector<1x1x32xf32>
    %243 = vector.broadcast %242 : vector<1x1x32xf32> to vector<16x16x32xf32>
    %244 = arith.mulf %239, %243 : vector<16x16x32xf32>
    %245 = arith.addf %232, %244 : vector<16x16x32xf32>
    %246 = vector.extract_strided_slice %180 {offsets = [3, 0], sizes = [1, 32], strides = [1, 1]} : vector<9x32xf32> to vector<1x32xf32>
    %247 = vector.shape_cast %246 : vector<1x32xf32> to vector<32xf32>
    %248 = vector.shape_cast %247 : vector<32xf32> to vector<1x1x32xf32>
    %249 = vector.broadcast %248 : vector<1x1x32xf32> to vector<16x16x32xf32>
    %250 = arith.mulf %239, %249 : vector<16x16x32xf32>
    %251 = arith.addf %238, %250 : vector<16x16x32xf32>
    %252 = vector.extract_strided_slice %188 {offsets = [1, 0, 0], sizes = [16, 16, 32], strides = [1, 1, 1]} : vector<18x16x32xf32> to vector<16x16x32xf32>
    %253 = vector.extract_strided_slice %179 {offsets = [4, 0], sizes = [1, 32], strides = [1, 1]} : vector<9x32xf32> to vector<1x32xf32>
    %254 = vector.shape_cast %253 : vector<1x32xf32> to vector<32xf32>
    %255 = vector.shape_cast %254 : vector<32xf32> to vector<1x1x32xf32>
    %256 = vector.broadcast %255 : vector<1x1x32xf32> to vector<16x16x32xf32>
    %257 = arith.mulf %252, %256 : vector<16x16x32xf32>
    %258 = arith.addf %245, %257 : vector<16x16x32xf32>
    %259 = vector.extract_strided_slice %180 {offsets = [4, 0], sizes = [1, 32], strides = [1, 1]} : vector<9x32xf32> to vector<1x32xf32>
    %260 = vector.shape_cast %259 : vector<1x32xf32> to vector<32xf32>
    %261 = vector.shape_cast %260 : vector<32xf32> to vector<1x1x32xf32>
    %262 = vector.broadcast %261 : vector<1x1x32xf32> to vector<16x16x32xf32>
    %263 = arith.mulf %252, %262 : vector<16x16x32xf32>
    %264 = arith.addf %251, %263 : vector<16x16x32xf32>
    %265 = vector.extract_strided_slice %189 {offsets = [1, 0, 0], sizes = [16, 16, 32], strides = [1, 1, 1]} : vector<18x16x32xf32> to vector<16x16x32xf32>
    %266 = vector.extract_strided_slice %179 {offsets = [5, 0], sizes = [1, 32], strides = [1, 1]} : vector<9x32xf32> to vector<1x32xf32>
    %267 = vector.shape_cast %266 : vector<1x32xf32> to vector<32xf32>
    %268 = vector.shape_cast %267 : vector<32xf32> to vector<1x1x32xf32>
    %269 = vector.broadcast %268 : vector<1x1x32xf32> to vector<16x16x32xf32>
    %270 = arith.mulf %265, %269 : vector<16x16x32xf32>
    %271 = arith.addf %258, %270 : vector<16x16x32xf32>
    %272 = vector.extract_strided_slice %180 {offsets = [5, 0], sizes = [1, 32], strides = [1, 1]} : vector<9x32xf32> to vector<1x32xf32>
    %273 = vector.shape_cast %272 : vector<1x32xf32> to vector<32xf32>
    %274 = vector.shape_cast %273 : vector<32xf32> to vector<1x1x32xf32>
    %275 = vector.broadcast %274 : vector<1x1x32xf32> to vector<16x16x32xf32>
    %276 = arith.mulf %265, %275 : vector<16x16x32xf32>
    %277 = arith.addf %264, %276 : vector<16x16x32xf32>
    %278 = vector.extract_strided_slice %187 {offsets = [2, 0, 0], sizes = [16, 16, 32], strides = [1, 1, 1]} : vector<18x16x32xf32> to vector<16x16x32xf32>
    %279 = vector.extract_strided_slice %179 {offsets = [6, 0], sizes = [1, 32], strides = [1, 1]} : vector<9x32xf32> to vector<1x32xf32>
    %280 = vector.shape_cast %279 : vector<1x32xf32> to vector<32xf32>
    %281 = vector.shape_cast %280 : vector<32xf32> to vector<1x1x32xf32>
    %282 = vector.broadcast %281 : vector<1x1x32xf32> to vector<16x16x32xf32>
    %283 = arith.mulf %278, %282 : vector<16x16x32xf32>
    %284 = arith.addf %271, %283 : vector<16x16x32xf32>
    %285 = vector.extract_strided_slice %180 {offsets = [6, 0], sizes = [1, 32], strides = [1, 1]} : vector<9x32xf32> to vector<1x32xf32>
    %286 = vector.shape_cast %285 : vector<1x32xf32> to vector<32xf32>
    %287 = vector.shape_cast %286 : vector<32xf32> to vector<1x1x32xf32>
    %288 = vector.broadcast %287 : vector<1x1x32xf32> to vector<16x16x32xf32>
    %289 = arith.mulf %278, %288 : vector<16x16x32xf32>
    %290 = arith.addf %277, %289 : vector<16x16x32xf32>
    %291 = vector.extract_strided_slice %188 {offsets = [2, 0, 0], sizes = [16, 16, 32], strides = [1, 1, 1]} : vector<18x16x32xf32> to vector<16x16x32xf32>
    %292 = vector.extract_strided_slice %179 {offsets = [7, 0], sizes = [1, 32], strides = [1, 1]} : vector<9x32xf32> to vector<1x32xf32>
    %293 = vector.shape_cast %292 : vector<1x32xf32> to vector<32xf32>
    %294 = vector.shape_cast %293 : vector<32xf32> to vector<1x1x32xf32>
    %295 = vector.broadcast %294 : vector<1x1x32xf32> to vector<16x16x32xf32>
    %296 = arith.mulf %291, %295 : vector<16x16x32xf32>
    %297 = arith.addf %284, %296 : vector<16x16x32xf32>
    %298 = vector.extract_strided_slice %180 {offsets = [7, 0], sizes = [1, 32], strides = [1, 1]} : vector<9x32xf32> to vector<1x32xf32>
    %299 = vector.shape_cast %298 : vector<1x32xf32> to vector<32xf32>
    %300 = vector.shape_cast %299 : vector<32xf32> to vector<1x1x32xf32>
    %301 = vector.broadcast %300 : vector<1x1x32xf32> to vector<16x16x32xf32>
    %302 = arith.mulf %291, %301 : vector<16x16x32xf32>
    %303 = arith.addf %290, %302 : vector<16x16x32xf32>
    %304 = vector.extract_strided_slice %189 {offsets = [2, 0, 0], sizes = [16, 16, 32], strides = [1, 1, 1]} : vector<18x16x32xf32> to vector<16x16x32xf32>
    %305 = vector.extract_strided_slice %179 {offsets = [8, 0], sizes = [1, 32], strides = [1, 1]} : vector<9x32xf32> to vector<1x32xf32>
    %306 = vector.shape_cast %305 : vector<1x32xf32> to vector<32xf32>
    %307 = vector.shape_cast %306 : vector<32xf32> to vector<1x1x32xf32>
    %308 = vector.broadcast %307 : vector<1x1x32xf32> to vector<16x16x32xf32>
    %309 = arith.mulf %304, %308 : vector<16x16x32xf32>
    %310 = arith.addf %297, %309 : vector<16x16x32xf32>
    %311 = vector.extract_strided_slice %180 {offsets = [8, 0], sizes = [1, 32], strides = [1, 1]} : vector<9x32xf32> to vector<1x32xf32>
    %312 = vector.shape_cast %311 : vector<1x32xf32> to vector<32xf32>
    %313 = vector.shape_cast %312 : vector<32xf32> to vector<1x1x32xf32>
    %314 = vector.broadcast %313 : vector<1x1x32xf32> to vector<16x16x32xf32>
    %315 = arith.mulf %304, %314 : vector<16x16x32xf32>
    %316 = arith.addf %303, %315 : vector<16x16x32xf32>
    %317 = vector.shape_cast %310 : vector<16x16x32xf32> to vector<256x32xf32>
    %c0_56 = arith.constant 0 : index
    %c0_57 = arith.constant 0 : index
    %318 = vector.load %arg17[%c0_56, %c0_57] : memref<32x64xbf16, #tpu.memory_space<vmem>>, vector<32x64xbf16>
    %319 = arith.truncf %317 : vector<256x32xf32> to vector<256x32xbf16>
    %cst_58 = arith.constant dense<0.000000e+00> : vector<256x64xf32>
    %320 = tpu.matmul %319, %318, %cst_58 {dimension_numbers = #tpu.dot_dimension_numbers<[1], [0], [0], [1], [0, 0, 1, 1], [], []>} : vector<256x32xbf16>, vector<32x64xbf16>, vector<256x64xf32> -> vector<256x64xf32>
    %321 = vector.shape_cast %316 : vector<16x16x32xf32> to vector<256x32xf32>
    %c0_59 = arith.constant 0 : index
    %c0_60 = arith.constant 0 : index
    %322 = vector.load %arg18[%c0_59, %c0_60] : memref<32x64xbf16, #tpu.memory_space<vmem>>, vector<32x64xbf16>
    %323 = arith.truncf %321 : vector<256x32xf32> to vector<256x32xbf16>
    %cst_61 = arith.constant dense<0.000000e+00> : vector<256x64xf32>
    %324 = tpu.matmul %323, %322, %cst_61 {dimension_numbers = #tpu.dot_dimension_numbers<[1], [0], [0], [1], [0, 0, 1, 1], [], []>} : vector<256x32xbf16>, vector<32x64xbf16>, vector<256x64xf32> -> vector<256x64xf32>
    %325 = arith.addf %320, %324 : vector<256x64xf32>
    %c0_62 = arith.constant 0 : index
    %c0_63 = arith.constant 0 : index
    %326 = vector.load %arg19[%c0_62, %c0_63] : memref<1x64xf32, #tpu.memory_space<vmem>>, vector<1x64xf32>
    %327 = vector.broadcast %326 : vector<1x64xf32> to vector<256x64xf32>
    %328 = arith.addf %325, %327 : vector<256x64xf32>
    %cst_64 = arith.constant 0.707106769 : f32
    %329 = vector.broadcast %cst_64 : f32 to vector<256x64xf32>
    %330 = arith.mulf %328, %329 : vector<256x64xf32>
    %cst_65 = arith.constant 0.000000e+00 : f32
    %331 = vector.broadcast %cst_65 : f32 to vector<256x64xf32>
    %332 = arith.cmpf oge, %330, %331 : vector<256x64xf32>
    %cst_66 = arith.constant 1.000000e+00 : f32
    %cst_67 = arith.constant -1.000000e+00 : f32
    %333 = vector.broadcast %cst_66 : f32 to vector<256x64xf32>
    %334 = vector.broadcast %cst_67 : f32 to vector<256x64xf32>
    %335 = arith.select %332, %333, %334 : vector<256x64xi1>, vector<256x64xf32>
    %336 = math.absf %330 : vector<256x64xf32>
    %cst_68 = arith.constant 0.327591091 : f32
    %337 = vector.broadcast %cst_68 : f32 to vector<256x64xf32>
    %338 = arith.mulf %337, %336 : vector<256x64xf32>
    %cst_69 = arith.constant 1.000000e+00 : f32
    %339 = vector.broadcast %cst_69 : f32 to vector<256x64xf32>
    %340 = arith.addf %339, %338 : vector<256x64xf32>
    %cst_70 = arith.constant 1.000000e+00 : f32
    %341 = vector.broadcast %cst_70 : f32 to vector<256x64xf32>
    %342 = arith.divf %341, %340 : vector<256x64xf32>
    %cst_71 = arith.constant 1.06140542 : f32
    %343 = vector.broadcast %cst_71 : f32 to vector<256x64xf32>
    %344 = arith.mulf %343, %342 : vector<256x64xf32>
    %cst_72 = arith.constant -1.45315206 : f32
    %345 = vector.broadcast %cst_72 : f32 to vector<256x64xf32>
    %346 = arith.addf %344, %345 : vector<256x64xf32>
    %347 = arith.mulf %346, %342 : vector<256x64xf32>
    %cst_73 = arith.constant 1.42141378 : f32
    %348 = vector.broadcast %cst_73 : f32 to vector<256x64xf32>
    %349 = arith.addf %347, %348 : vector<256x64xf32>
    %350 = arith.mulf %349, %342 : vector<256x64xf32>
    %cst_74 = arith.constant -0.284496725 : f32
    %351 = vector.broadcast %cst_74 : f32 to vector<256x64xf32>
    %352 = arith.addf %350, %351 : vector<256x64xf32>
    %353 = arith.mulf %352, %342 : vector<256x64xf32>
    %cst_75 = arith.constant 0.254829586 : f32
    %354 = vector.broadcast %cst_75 : f32 to vector<256x64xf32>
    %355 = arith.addf %353, %354 : vector<256x64xf32>
    %356 = arith.mulf %355, %342 : vector<256x64xf32>
    %cst_76 = arith.constant 0.000000e+00 : f32
    %357 = vector.broadcast %cst_76 : f32 to vector<256x64xf32>
    %358 = arith.subf %357, %336 : vector<256x64xf32>
    %359 = arith.mulf %358, %336 : vector<256x64xf32>
    %360 = math.exp %359 : vector<256x64xf32>
    %361 = arith.mulf %356, %360 : vector<256x64xf32>
    %cst_77 = arith.constant 1.000000e+00 : f32
    %362 = vector.broadcast %cst_77 : f32 to vector<256x64xf32>
    %363 = arith.subf %362, %361 : vector<256x64xf32>
    %364 = arith.mulf %335, %363 : vector<256x64xf32>
    %cst_78 = arith.constant 5.000000e-01 : f32
    %365 = vector.broadcast %cst_78 : f32 to vector<256x64xf32>
    %366 = arith.mulf %365, %328 : vector<256x64xf32>
    %cst_79 = arith.constant 1.000000e+00 : f32
    %367 = vector.broadcast %cst_79 : f32 to vector<256x64xf32>
    %368 = arith.addf %367, %364 : vector<256x64xf32>
    %369 = arith.mulf %366, %368 : vector<256x64xf32>
    %c0_80 = arith.constant 0 : index
    %c0_81 = arith.constant 0 : index
    %370 = vector.load %arg20[%c0_80, %c0_81] : memref<64x32xbf16, #tpu.memory_space<vmem>>, vector<64x32xbf16>
    %371 = arith.truncf %369 : vector<256x64xf32> to vector<256x64xbf16>
    %cst_82 = arith.constant dense<0.000000e+00> : vector<256x32xf32>
    %372 = tpu.matmul %371, %370, %cst_82 {dimension_numbers = #tpu.dot_dimension_numbers<[1], [0], [0], [1], [0, 0, 1, 1], [], []>} : vector<256x64xbf16>, vector<64x32xbf16>, vector<256x32xf32> -> vector<256x32xf32>
    %c0_83 = arith.constant 0 : index
    %c0_84 = arith.constant 0 : index
    %373 = vector.load %arg21[%c0_83, %c0_84] : memref<1x32xf32, #tpu.memory_space<vmem>>, vector<1x32xf32>
    %374 = vector.broadcast %373 : vector<1x32xf32> to vector<256x32xf32>
    %375 = arith.addf %372, %374 : vector<256x32xf32>
    %c0_85 = arith.constant 0 : index
    %c0_86 = arith.constant 0 : index
    %376 = vector.load %arg2[%c0_85, %c0_86] : memref<256x4xbf16, #tpu.memory_space<vmem>>, vector<256x4xbf16>
    %377 = arith.truncf %177 : vector<4x32xf32> to vector<4x32xbf16>
    %cst_87 = arith.constant dense<0.000000e+00> : vector<256x32xf32>
    %378 = tpu.matmul %376, %377, %cst_87 {dimension_numbers = #tpu.dot_dimension_numbers<[1], [0], [0], [1], [0, 0, 1, 1], [], []>} : vector<256x4xbf16>, vector<4x32xbf16>, vector<256x32xf32> -> vector<256x32xf32>
    %379 = arith.mulf %11, %378 : vector<256x32xf32>
    %380 = arith.addf %379, %375 : vector<256x32xf32>
    %c0_88 = arith.constant 0 : index
    %c0_89 = arith.constant 0 : index
    %381 = vector.load %arg9[%c0_88, %c0_89] : memref<32x32xbf16, #tpu.memory_space<vmem>>, vector<32x32xbf16>
    %382 = arith.truncf %380 : vector<256x32xf32> to vector<256x32xbf16>
    %cst_90 = arith.constant dense<0.000000e+00> : vector<256x32xf32>
    %383 = tpu.matmul %382, %381, %cst_90 {dimension_numbers = #tpu.dot_dimension_numbers<[1], [0], [0], [1], [0, 0, 1, 1], [], []>} : vector<256x32xbf16>, vector<32x32xbf16>, vector<256x32xf32> -> vector<256x32xf32>
    %c0_91 = arith.constant 0 : index
    %c0_92 = arith.constant 0 : index
    %384 = vector.load %arg10[%c0_91, %c0_92] : memref<1x32xf32, #tpu.memory_space<vmem>>, vector<1x32xf32>
    %385 = vector.broadcast %384 : vector<1x32xf32> to vector<256x32xf32>
    %386 = arith.addf %383, %385 : vector<256x32xf32>
    %c0_93 = arith.constant 0 : index
    %c0_94 = arith.constant 0 : index
    %c0_95 = arith.constant 0 : index
    %387 = vector.load %arg22[%c0_93, %c0_94, %c0_95] : memref<1x256x32xf32, #tpu.memory_space<vmem>>, vector<1x256x32xf32>
    %388 = vector.shape_cast %387 : vector<1x256x32xf32> to vector<256x32xf32>
    %389 = vector.shape_cast %386 : vector<256x32xf32> to vector<1x256x32xf32>
    tpu.vector_store %arg22[%c0_93, %c0_94, %c0_95], %389 {strides = array<i32>} : memref<1x256x32xf32, #tpu.memory_space<vmem>>, vector<1x256x32xf32>,
    return
  }
  func.func @transform_0(%arg0: i32) -> (i32, i32, i32) {
    %c0_i32 = arith.constant 0 : i32
    %c0_i32_0 = arith.constant 0 : i32
    %c0_i32_1 = arith.constant 0 : i32
    return %arg0, %c0_i32, %c0_i32_0 : i32, i32, i32
  }
  func.func @transform_1(%arg0: i32) -> (i32, i32) {
    %c0_i32 = arith.constant 0 : i32
    %c0_i32_0 = arith.constant 0 : i32
    %c0_i32_1 = arith.constant 0 : i32
    return %c0_i32, %c0_i32_0 : i32, i32
  }
  func.func @transform_2(%arg0: i32) -> (i32, i32) {
    %c0_i32 = arith.constant 0 : i32
    %c0_i32_0 = arith.constant 0 : i32
    %c0_i32_1 = arith.constant 0 : i32
    return %c0_i32, %c0_i32_0 : i32, i32
  }
  func.func @transform_3(%arg0: i32) -> (i32, i32) {
    %c0_i32 = arith.constant 0 : i32
    %c0_i32_0 = arith.constant 0 : i32
    %c0_i32_1 = arith.constant 0 : i32
    return %c0_i32, %c0_i32_0 : i32, i32
  }
  func.func @transform_4(%arg0: i32) -> (i32, i32) {
    %c0_i32 = arith.constant 0 : i32
    %c0_i32_0 = arith.constant 0 : i32
    %c0_i32_1 = arith.constant 0 : i32
    return %c0_i32, %c0_i32_0 : i32, i32
  }
  func.func @transform_5(%arg0: i32) -> (i32, i32) {
    %c0_i32 = arith.constant 0 : i32
    %c0_i32_0 = arith.constant 0 : i32
    %c0_i32_1 = arith.constant 0 : i32
    return %c0_i32, %c0_i32_0 : i32, i32
  }
  func.func @transform_6(%arg0: i32) -> (i32, i32) {
    %c0_i32 = arith.constant 0 : i32
    %c0_i32_0 = arith.constant 0 : i32
    %c0_i32_1 = arith.constant 0 : i32
    return %c0_i32, %c0_i32_0 : i32, i32
  }
  func.func @transform_7(%arg0: i32) -> (i32, i32) {
    %c0_i32 = arith.constant 0 : i32
    %c0_i32_0 = arith.constant 0 : i32
    %c0_i32_1 = arith.constant 0 : i32
    return %c0_i32, %c0_i32_0 : i32, i32
  }
  func.func @transform_8(%arg0: i32) -> (i32, i32) {
    %c0_i32 = arith.constant 0 : i32
    %c0_i32_0 = arith.constant 0 : i32
    %c0_i32_1 = arith.constant 0 : i32
    return %c0_i32, %c0_i32_0 : i32, i32
  }
  func.func @transform_9(%arg0: i32) -> (i32, i32) {
    %c0_i32 = arith.constant 0 : i32
    %c0_i32_0 = arith.constant 0 : i32
    %c0_i32_1 = arith.constant 0 : i32
    return %c0_i32, %c0_i32_0 : i32, i32
  }
  func.func @transform_10(%arg0: i32) -> (i32, i32) {
    %c0_i32 = arith.constant 0 : i32
    %c0_i32_0 = arith.constant 0 : i32
    %c0_i32_1 = arith.constant 0 : i32
    return %c0_i32, %c0_i32_0 : i32, i32
  }
  func.func @transform_11(%arg0: i32) -> (i32, i32) {
    %c0_i32 = arith.constant 0 : i32
    %c0_i32_0 = arith.constant 0 : i32
    %c0_i32_1 = arith.constant 0 : i32
    return %c0_i32, %c0_i32_0 : i32, i32
  }
  func.func @transform_12(%arg0: i32) -> (i32, i32) {
    %c0_i32 = arith.constant 0 : i32
    %c0_i32_0 = arith.constant 0 : i32
    %c0_i32_1 = arith.constant 0 : i32
    return %c0_i32, %c0_i32_0 : i32, i32
  }
  func.func @transform_13(%arg0: i32) -> (i32, i32) {
    %c0_i32 = arith.constant 0 : i32
    %c0_i32_0 = arith.constant 0 : i32
    %c0_i32_1 = arith.constant 0 : i32
    return %c0_i32, %c0_i32_0 : i32, i32
  }
  func.func @transform_14(%arg0: i32) -> (i32, i32) {
    %c0_i32 = arith.constant 0 : i32
    %c0_i32_0 = arith.constant 0 : i32
    %c0_i32_1 = arith.constant 0 : i32
    return %c0_i32, %c0_i32_0 : i32, i32
  }
  func.func @transform_15(%arg0: i32) -> (i32, i32) {
    %c0_i32 = arith.constant 0 : i32
    %c0_i32_0 = arith.constant 0 : i32
    %c0_i32_1 = arith.constant 0 : i32
    return %c0_i32, %c0_i32_0 : i32, i32
  }
  func.func @transform_16(%arg0: i32) -> (i32, i32) {
    %c0_i32 = arith.constant 0 : i32
    %c0_i32_0 = arith.constant 0 : i32
    %c0_i32_1 = arith.constant 0 : i32
    return %c0_i32, %c0_i32_0 : i32, i32
  }
  func.func @transform_17(%arg0: i32) -> (i32, i32) {
    %c0_i32 = arith.constant 0 : i32
    %c0_i32_0 = arith.constant 0 : i32
    %c0_i32_1 = arith.constant 0 : i32
    return %c0_i32, %c0_i32_0 : i32, i32
  }
  func.func @transform_18(%arg0: i32) -> (i32, i32) {
    %c0_i32 = arith.constant 0 : i32
    %c0_i32_0 = arith.constant 0 : i32
    %c0_i32_1 = arith.constant 0 : i32
    return %c0_i32, %c0_i32_0 : i32, i32
  }
  func.func @transform_19(%arg0: i32) -> (i32, i32) {
    %c0_i32 = arith.constant 0 : i32
    %c0_i32_0 = arith.constant 0 : i32
    %c0_i32_1 = arith.constant 0 : i32
    return %c0_i32, %c0_i32_0 : i32, i32
  }
  func.func @transform_20(%arg0: i32) -> (i32, i32) {
    %c0_i32 = arith.constant 0 : i32
    %c0_i32_0 = arith.constant 0 : i32
    %c0_i32_1 = arith.constant 0 : i32
    return %c0_i32, %c0_i32_0 : i32, i32
  }
  func.func @transform_21(%arg0: i32) -> (i32, i32, i32) {
    %c0_i32 = arith.constant 0 : i32
    %c0_i32_0 = arith.constant 0 : i32
    %c0_i32_1 = arith.constant 0 : i32
    return %arg0, %c0_i32, %c0_i32_0 : i32, i32, i32
  }
}

</mosaic_0001>

<llo_original>
// kernel: tpu_custom_call.1
$region0: #{tpu_custom_call.1}
  #allocation0 [shape = 'u32[]', space=smem, size = 0x4, offset = 0x4, fixed_abs, tag = 'smem constant byte address 0x4 - core index']
  #allocation1 [shape = 'u32[144,128]{1,0:T(1,128)}', space=vmem, size = 0x12000, scoped, tag = 'internal scratch']
  %s0 = inlined_call_operand.vmem [shape: bf16[2,256,32], index: 0, kind: input, shape index: {}]
  %s1 = inlined_call_operand.vmem [shape: bf16[256,4], index: 1, kind: input, shape index: {}]
  %s2 = inlined_call_operand.vmem [shape: bf16[32,32], index: 2, kind: input, shape index: {}]
  %s3 = inlined_call_operand.vmem [shape: bf16[32,32], index: 3, kind: input, shape index: {}]
  %s4 = inlined_call_operand.vmem [shape: f32[1,32], index: 4, kind: input, shape index: {}]
  %s5 = inlined_call_operand.vmem [shape: f32[1,32], index: 5, kind: input, shape index: {}]
  %s6 = inlined_call_operand.vmem [shape: bf16[32,32], index: 6, kind: input, shape index: {}]
  %s7 = inlined_call_operand.vmem [shape: f32[1,32], index: 7, kind: input, shape index: {}]
  %s8 = inlined_call_operand.vmem [shape: bf16[32,32], index: 8, kind: input, shape index: {}]
  %s9 = inlined_call_operand.vmem [shape: f32[1,32], index: 9, kind: input, shape index: {}]
  %s10 = inlined_call_operand.vmem [shape: f32[9,32], index: 10, kind: input, shape index: {}]
  %s11 = inlined_call_operand.vmem [shape: f32[1,32], index: 11, kind: input, shape index: {}]
  %s12 = inlined_call_operand.vmem [shape: f32[9,32], index: 12, kind: input, shape index: {}]
  %s13 = inlined_call_operand.vmem [shape: f32[9,32], index: 13, kind: input, shape index: {}]
  %s14 = inlined_call_operand.vmem [shape: f32[1,32], index: 14, kind: input, shape index: {}]
  %s15 = inlined_call_operand.vmem [shape: f32[1,32], index: 15, kind: input, shape index: {}]
  %s16 = inlined_call_operand.vmem [shape: bf16[32,64], index: 16, kind: input, shape index: {}]
  %s17 = inlined_call_operand.vmem [shape: bf16[32,64], index: 17, kind: input, shape index: {}]
  %s18 = inlined_call_operand.vmem [shape: f32[1,64], index: 18, kind: input, shape index: {}]
  %s19 = inlined_call_operand.vmem [shape: bf16[64,32], index: 19, kind: input, shape index: {}]
  %s20 = inlined_call_operand.vmem [shape: f32[1,32], index: 20, kind: input, shape index: {}]
  %s21 = inlined_call_operand.vmem [shape: f32[2,256,32], index: 21, kind: output, shape index: {}]
  %s22 = sld [smem:[#allocation0]]
  $region117: #{tpu_custom_call.1} parent=0
    _
  %s24 = ssub.s32 1, %s22
  %s25 = scalar_select 0, %s24, %s22
  loop: start=0, step=1, limit=4
  $region2: #{tpu_custom_call.1} parent=0 // loop_pre_header
    _
  $region3: #{tpu_custom_call.1} parent=0 // loop_header
    %s27 = sphi 0, %s31
    %p28 = scmp.ge.s32.totalorder %s27, 4
    %s37 = sphi 0, %s39
    %s40 = sphi 0, %s37
    %s41 = sphi 0, %s40
    %s57 = sphi 0, %s41
    %s61 = sphi 0, %s61
    %s63 = sphi 0, %s61
    %s64 = sphi 0, %s63
    %s78 = sphi 0, %s64
    %s82 = sphi 0, %s82
    %s84 = sphi 0, %s82
    %s85 = sphi 0, %s84
    %s99 = sphi 0, %s85
    %s103 = sphi 0, %s103
    %s105 = sphi 0, %s103
    %s106 = sphi 0, %s105
    %s120 = sphi 0, %s106
    %s124 = sphi 0, %s124
    %s126 = sphi 0, %s124
    %s127 = sphi 0, %s126
    %s141 = sphi 0, %s127
    %s145 = sphi 0, %s145
    %s147 = sphi 0, %s145
    %s148 = sphi 0, %s147
    %s162 = sphi 0, %s148
    %s166 = sphi 0, %s166
    %s168 = sphi 0, %s166
    %s169 = sphi 0, %s168
    %s183 = sphi 0, %s169
    %s187 = sphi 0, %s187
    %s189 = sphi 0, %s187
    %s190 = sphi 0, %s189
    %s204 = sphi 0, %s190
    %s208 = sphi 0, %s208
    %s210 = sphi 0, %s208
    %s211 = sphi 0, %s210
    %s225 = sphi 0, %s211
    %s229 = sphi 0, %s229
    %s231 = sphi 0, %s229
    %s232 = sphi 0, %s231
    %s246 = sphi 0, %s232
    %s250 = sphi 0, %s250
    %s252 = sphi 0, %s250
    %s253 = sphi 0, %s252
    %s267 = sphi 0, %s253
    %s271 = sphi 0, %s271
    %s273 = sphi 0, %s271
    %s274 = sphi 0, %s273
    %s288 = sphi 0, %s274
    %s292 = sphi 0, %s292
    %s294 = sphi 0, %s292
    %s295 = sphi 0, %s294
    %s309 = sphi 0, %s295
    %s313 = sphi 0, %s313
    %s315 = sphi 0, %s313
    %s316 = sphi 0, %s315
    %s330 = sphi 0, %s316
    %s334 = sphi 0, %s334
    %s336 = sphi 0, %s334
    %s337 = sphi 0, %s336
    %s351 = sphi 0, %s337
    %s355 = sphi 0, %s355
    %s357 = sphi 0, %s355
    %s358 = sphi 0, %s357
    %s372 = sphi 0, %s358
    %s376 = sphi 0, %s376
    %s378 = sphi 0, %s376
    %s379 = sphi 0, %s378
    %s393 = sphi 0, %s379
    %s397 = sphi 0, %s397
    %s399 = sphi 0, %s397
    %s400 = sphi 0, %s399
    %s414 = sphi 0, %s400
    %s418 = sphi 0, %s418
    %s420 = sphi 0, %s418
    %s421 = sphi 0, %s420
    %s435 = sphi 0, %s421
    %s439 = sphi 0, %s439
    %s441 = sphi 0, %s439
    %s442 = sphi 0, %s441
    %s456 = sphi 0, %s442
    %s460 = sphi 0, %s460
    %s462 = sphi 0, %s460
    %s463 = sphi 0, %s462
    %s477 = sphi 0, %s463
    %s483 = sphi 0, %s485
    %s486 = sphi 0, %s483
    %s487 = sphi 0, %s486
    %s503 = sphi 0, %s487
  $region4: #{tpu_custom_call.1} parent=0 // loop_header_branch
    %30 = sbr.rel (%p28) target = $region8
  $region5: #{tpu_custom_call.1} parent=0 // loop_body
    %s32 = ssub.s32 %s27, 1
    %s33 = ssub.s32 %s27, 2
    %s34 = sadd.s32 %s27, 1
    %s35 = ssub.s32 %s27, %s34
    %p36 = scmp.eq.s32.totalorder %s35, 0
    %s38 = sadd.s32 %s37, 1
    %s39 = scalar_select %p36, %s37, %s38
    %p42 = pneg %p36
    %p43 = scmp.eq.s32.totalorder %s27, 1
    %p44 = por %p42, %p43
    %p45 = scmp.ne.s32.totalorder %s37, %s40
    %p46 = scmp.eq.s32.totalorder %s27, 0
    %p47 = por %p45, %p46
    %p48 = scmp.ne.s32.totalorder %s37, %s40
    %p49 = scmp.eq.s32.totalorder %s32, 1
    %p50 = por %p48, %p49
    %p51 = scmp.ne.s32.totalorder %s40, %s41
    %p52 = scmp.eq.s32.totalorder %s32, 0
    %p53 = por %p51, %p52
    %p54 = scmp.ne.s32.totalorder %s40, %s41
    %p55 = scmp.eq.s32.totalorder %s33, 1
    %p56 = por %p54, %p55
    %p58 = scmp.ne.s32.totalorder %s41, %s57
    %p59 = scmp.eq.s32.totalorder %s33, 0
    %p60 = por %p58, %p59
    %s62 = sadd.s32 %s61, 1
    %p65 = scmp.eq.s32.totalorder %s27, 1
    %p66 = scmp.ne.s32.totalorder %s61, %s63
    %p67 = scmp.eq.s32.totalorder %s27, 0
    %p68 = por %p66, %p67
    %p69 = scmp.ne.s32.totalorder %s61, %s63
    %p70 = scmp.eq.s32.totalorder %s32, 1
    %p71 = por %p69, %p70
    %p72 = scmp.ne.s32.totalorder %s63, %s64
    %p73 = scmp.eq.s32.totalorder %s32, 0
    %p74 = por %p72, %p73
    %p75 = scmp.ne.s32.totalorder %s63, %s64
    %p76 = scmp.eq.s32.totalorder %s33, 1
    %p77 = por %p75, %p76
    %p79 = scmp.ne.s32.totalorder %s64, %s78
    %p80 = scmp.eq.s32.totalorder %s33, 0
    %p81 = por %p79, %p80
    %s83 = sadd.s32 %s82, 1
    %p86 = scmp.eq.s32.totalorder %s27, 1
    %p87 = scmp.ne.s32.totalorder %s82, %s84
    %p88 = scmp.eq.s32.totalorder %s27, 0
    %p89 = por %p87, %p88
    %p90 = scmp.ne.s32.totalorder %s82, %s84
    %p91 = scmp.eq.s32.totalorder %s32, 1
    %p92 = por %p90, %p91
    %p93 = scmp.ne.s32.totalorder %s84, %s85
    %p94 = scmp.eq.s32.totalorder %s32, 0
    %p95 = por %p93, %p94
    %p96 = scmp.ne.s32.totalorder %s84, %s85
    %p97 = scmp.eq.s32.totalorder %s33, 1
    %p98 = por %p96, %p97
    %p100 = scmp.ne.s32.totalorder %s85, %s99
    %p101 = scmp.eq.s32.totalorder %s33, 0
    %p102 = por %p100, %p101
    %s104 = sadd.s32 %s103, 1
    %p107 = scmp.eq.s32.totalorder %s27, 1
    %p108 = scmp.ne.s32.totalorder %s103, %s105
    %p109 = scmp.eq.s32.totalorder %s27, 0
    %p110 = por %p108, %p109
    %p111 = scmp.ne.s32.totalorder %s103, %s105
    %p112 = scmp.eq.s32.totalorder %s32, 1
    %p113 = por %p111, %p112
    %p114 = scmp.ne.s32.totalorder %s105, %s106
    %p115 = scmp.eq.s32.totalorder %s32, 0
    %p116 = por %p114, %p115
    %p117 = scmp.ne.s32.totalorder %s105, %s106
    %p118 = scmp.eq.s32.totalorder %s33, 1
    %p119 = por %p117, %p118
    %p121 = scmp.ne.s32.totalorder %s106, %s120
    %p122 = scmp.eq.s32.totalorder %s33, 0
    %p123 = por %p121, %p122
    %s125 = sadd.s32 %s124, 1
    %p128 = scmp.eq.s32.totalorder %s27, 1
    %p129 = scmp.ne.s32.totalorder %s124, %s126
    %p130 = scmp.eq.s32.totalorder %s27, 0
    %p131 = por %p129, %p130
    %p132 = scmp.ne.s32.totalorder %s124, %s126
    %p133 = scmp.eq.s32.totalorder %s32, 1
    %p134 = por %p132, %p133
    %p135 = scmp.ne.s32.totalorder %s126, %s127
    %p136 = scmp.eq.s32.totalorder %s32, 0
    %p137 = por %p135, %p136
    %p138 = scmp.ne.s32.totalorder %s126, %s127
    %p139 = scmp.eq.s32.totalorder %s33, 1
    %p140 = por %p138, %p139
    %p142 = scmp.ne.s32.totalorder %s127, %s141
    %p143 = scmp.eq.s32.totalorder %s33, 0
    %p144 = por %p142, %p143
    %s146 = sadd.s32 %s145, 1
    %p149 = scmp.eq.s32.totalorder %s27, 1
    %p150 = scmp.ne.s32.totalorder %s145, %s147
    %p151 = scmp.eq.s32.totalorder %s27, 0
    %p152 = por %p150, %p151
    %p153 = scmp.ne.s32.totalorder %s145, %s147
    %p154 = scmp.eq.s32.totalorder %s32, 1
    %p155 = por %p153, %p154
    %p156 = scmp.ne.s32.totalorder %s147, %s148
    %p157 = scmp.eq.s32.totalorder %s32, 0
    %p158 = por %p156, %p157
    %p159 = scmp.ne.s32.totalorder %s147, %s148
    %p160 = scmp.eq.s32.totalorder %s33, 1
    %p161 = por %p159, %p160
    %p163 = scmp.ne.s32.totalorder %s148, %s162
    %p164 = scmp.eq.s32.totalorder %s33, 0
    %p165 = por %p163, %p164
    %s167 = sadd.s32 %s166, 1
    %p170 = scmp.eq.s32.totalorder %s27, 1
    %p171 = scmp.ne.s32.totalorder %s166, %s168
    %p172 = scmp.eq.s32.totalorder %s27, 0
    %p173 = por %p171, %p172
    %p174 = scmp.ne.s32.totalorder %s166, %s168
    %p175 = scmp.eq.s32.totalorder %s32, 1
    %p176 = por %p174, %p175
    %p177 = scmp.ne.s32.totalorder %s168, %s169
    %p178 = scmp.eq.s32.totalorder %s32, 0
    %p179 = por %p177, %p178
    %p180 = scmp.ne.s32.totalorder %s168, %s169
    %p181 = scmp.eq.s32.totalorder %s33, 1
    %p182 = por %p180, %p181
    %p184 = scmp.ne.s32.totalorder %s169, %s183
    %p185 = scmp.eq.s32.totalorder %s33, 0
    %p186 = por %p184, %p185
    %s188 = sadd.s32 %s187, 1
    %p191 = scmp.eq.s32.totalorder %s27, 1
    %p192 = scmp.ne.s32.totalorder %s187, %s189
    %p193 = scmp.eq.s32.totalorder %s27, 0
    %p194 = por %p192, %p193
    %p195 = scmp.ne.s32.totalorder %s187, %s189
    %p196 = scmp.eq.s32.totalorder %s32, 1
    %p197 = por %p195, %p196
    %p198 = scmp.ne.s32.totalorder %s189, %s190
    %p199 = scmp.eq.s32.totalorder %s32, 0
    %p200 = por %p198, %p199
    %p201 = scmp.ne.s32.totalorder %s189, %s190
    %p202 = scmp.eq.s32.totalorder %s33, 1
    %p203 = por %p201, %p202
    %p205 = scmp.ne.s32.totalorder %s190, %s204
    %p206 = scmp.eq.s32.totalorder %s33, 0
    %p207 = por %p205, %p206
    %s209 = sadd.s32 %s208, 1
    %p212 = scmp.eq.s32.totalorder %s27, 1
    %p213 = scmp.ne.s32.totalorder %s208, %s210
    %p214 = scmp.eq.s32.totalorder %s27, 0
    %p215 = por %p213, %p214
    %p216 = scmp.ne.s32.totalorder %s208, %s210
    %p217 = scmp.eq.s32.totalorder %s32, 1
    %p218 = por %p216, %p217
    %p219 = scmp.ne.s32.totalorder %s210, %s211
    %p220 = scmp.eq.s32.totalorder %s32, 0
    %p221 = por %p219, %p220
    %p222 = scmp.ne.s32.totalorder %s210, %s211
    %p223 = scmp.eq.s32.totalorder %s33, 1
    %p224 = por %p222, %p223
    %p226 = scmp.ne.s32.totalorder %s211, %s225
    %p227 = scmp.eq.s32.totalorder %s33, 0
    %p228 = por %p226, %p227
    %s230 = sadd.s32 %s229, 1
    %p233 = scmp.eq.s32.totalorder %s27, 1
    %p234 = scmp.ne.s32.totalorder %s229, %s231
    %p235 = scmp.eq.s32.totalorder %s27, 0
    %p236 = por %p234, %p235
    %p237 = scmp.ne.s32.totalorder %s229, %s231
    %p238 = scmp.eq.s32.totalorder %s32, 1
    %p239 = por %p237, %p238
    %p240 = scmp.ne.s32.totalorder %s231, %s232
    %p241 = scmp.eq.s32.totalorder %s32, 0
    %p242 = por %p240, %p241
    %p243 = scmp.ne.s32.totalorder %s231, %s232
    %p244 = scmp.eq.s32.totalorder %s33, 1
    %p245 = por %p243, %p244
    %p247 = scmp.ne.s32.totalorder %s232, %s246
    %p248 = scmp.eq.s32.totalorder %s33, 0
    %p249 = por %p247, %p248
    %s251 = sadd.s32 %s250, 1
    %p254 = scmp.eq.s32.totalorder %s27, 1
    %p255 = scmp.ne.s32.totalorder %s250, %s252
    %p256 = scmp.eq.s32.totalorder %s27, 0
    %p257 = por %p255, %p256
    %p258 = scmp.ne.s32.totalorder %s250, %s252
    %p259 = scmp.eq.s32.totalorder %s32, 1
    %p260 = por %p258, %p259
    %p261 = scmp.ne.s32.totalorder %s252, %s253
    %p262 = scmp.eq.s32.totalorder %s32, 0
    %p263 = por %p261, %p262
    %p264 = scmp.ne.s32.totalorder %s252, %s253
    %p265 = scmp.eq.s32.totalorder %s33, 1
    %p266 = por %p264, %p265
    %p268 = scmp.ne.s32.totalorder %s253, %s267
    %p269 = scmp.eq.s32.totalorder %s33, 0
    %p270 = por %p268, %p269
    %s272 = sadd.s32 %s271, 1
    %p275 = scmp.eq.s32.totalorder %s27, 1
    %p276 = scmp.ne.s32.totalorder %s271, %s273
    %p277 = scmp.eq.s32.totalorder %s27, 0
    %p278 = por %p276, %p277
    %p279 = scmp.ne.s32.totalorder %s271, %s273
    %p280 = scmp.eq.s32.totalorder %s32, 1
    %p281 = por %p279, %p280
    %p282 = scmp.ne.s32.totalorder %s273, %s274
    %p283 = scmp.eq.s32.totalorder %s32, 0
    %p284 = por %p282, %p283
    %p285 = scmp.ne.s32.totalorder %s273, %s274
    %p286 = scmp.eq.s32.totalorder %s33, 1
    %p287 = por %p285, %p286
    %p289 = scmp.ne.s32.totalorder %s274, %s288
    %p290 = scmp.eq.s32.totalorder %s33, 0
    %p291 = por %p289, %p290
    %s293 = sadd.s32 %s292, 1
    %p296 = scmp.eq.s32.totalorder %s27, 1
    %p297 = scmp.ne.s32.totalorder %s292, %s294
    %p298 = scmp.eq.s32.totalorder %s27, 0
    %p299 = por %p297, %p298
    %p300 = scmp.ne.s32.totalorder %s292, %s294
    %p301 = scmp.eq.s32.totalorder %s32, 1
    %p302 = por %p300, %p301
    %p303 = scmp.ne.s32.totalorder %s294, %s295
    %p304 = scmp.eq.s32.totalorder %s32, 0
    %p305 = por %p303, %p304
    %p306 = scmp.ne.s32.totalorder %s294, %s295
    %p307 = scmp.eq.s32.totalorder %s33, 1
    %p308 = por %p306, %p307
    %p310 = scmp.ne.s32.totalorder %s295, %s309
    %p311 = scmp.eq.s32.totalorder %s33, 0
    %p312 = por %p310, %p311
    %s314 = sadd.s32 %s313, 1
    %p317 = scmp.eq.s32.totalorder %s27, 1
    %p318 = scmp.ne.s32.totalorder %s313, %s315
    %p319 = scmp.eq.s32.totalorder %s27, 0
    %p320 = por %p318, %p319
    %p321 = scmp.ne.s32.totalorder %s313, %s315
    %p322 = scmp.eq.s32.totalorder %s32, 1
    %p323 = por %p321, %p322
    %p324 = scmp.ne.s32.totalorder %s315, %s316
    %p325 = scmp.eq.s32.totalorder %s32, 0
    %p326 = por %p324, %p325
    %p327 = scmp.ne.s32.totalorder %s315, %s316
    %p328 = scmp.eq.s32.totalorder %s33, 1
    %p329 = por %p327, %p328
    %p331 = scmp.ne.s32.totalorder %s316, %s330
    %p332 = scmp.eq.s32.totalorder %s33, 0
    %p333 = por %p331, %p332
    %s335 = sadd.s32 %s334, 1
    %p338 = scmp.eq.s32.totalorder %s27, 1
    %p339 = scmp.ne.s32.totalorder %s334, %s336
    %p340 = scmp.eq.s32.totalorder %s27, 0
    %p341 = por %p339, %p340
    %p342 = scmp.ne.s32.totalorder %s334, %s336
    %p343 = scmp.eq.s32.totalorder %s32, 1
    %p344 = por %p342, %p343
    %p345 = scmp.ne.s32.totalorder %s336, %s337
    %p346 = scmp.eq.s32.totalorder %s32, 0
    %p347 = por %p345, %p346
    %p348 = scmp.ne.s32.totalorder %s336, %s337
    %p349 = scmp.eq.s32.totalorder %s33, 1
    %p350 = por %p348, %p349
    %p352 = scmp.ne.s32.totalorder %s337, %s351
    %p353 = scmp.eq.s32.totalorder %s33, 0
    %p354 = por %p352, %p353
    %s356 = sadd.s32 %s355, 1
    %p359 = scmp.eq.s32.totalorder %s27, 1
    %p360 = scmp.ne.s32.totalorder %s355, %s357
    %p361 = scmp.eq.s32.totalorder %s27, 0
    %p362 = por %p360, %p361
    %p363 = scmp.ne.s32.totalorder %s355, %s357
    %p364 = scmp.eq.s32.totalorder %s32, 1
    %p365 = por %p363, %p364
    %p366 = scmp.ne.s32.totalorder %s357, %s358
    %p367 = scmp.eq.s32.totalorder %s32, 0
    %p368 = por %p366, %p367
    %p369 = scmp.ne.s32.totalorder %s357, %s358
    %p370 = scmp.eq.s32.totalorder %s33, 1
    %p371 = por %p369, %p370
    %p373 = scmp.ne.s32.totalorder %s358, %s372
    %p374 = scmp.eq.s32.totalorder %s33, 0
    %p375 = por %p373, %p374
    %s377 = sadd.s32 %s376, 1
    %p380 = scmp.eq.s32.totalorder %s27, 1
    %p381 = scmp.ne.s32.totalorder %s376, %s378
    %p382 = scmp.eq.s32.totalorder %s27, 0
    %p383 = por %p381, %p382
    %p384 = scmp.ne.s32.totalorder %s376, %s378
    %p385 = scmp.eq.s32.totalorder %s32, 1
    %p386 = por %p384, %p385
    %p387 = scmp.ne.s32.totalorder %s378, %s379
    %p388 = scmp.eq.s32.totalorder %s32, 0
    %p389 = por %p387, %p388
    %p390 = scmp.ne.s32.totalorder %s378, %s379
    %p391 = scmp.eq.s32.totalorder %s33, 1
    %p392 = por %p390, %p391
    %p394 = scmp.ne.s32.totalorder %s379, %s393
    %p395 = scmp.eq.s32.totalorder %s33, 0
    %p396 = por %p394, %p395
    %s398 = sadd.s32 %s397, 1
    %p401 = scmp.eq.s32.totalorder %s27, 1
    %p402 = scmp.ne.s32.totalorder %s397, %s399
    %p403 = scmp.eq.s32.totalorder %s27, 0
    %p404 = por %p402, %p403
    %p405 = scmp.ne.s32.totalorder %s397, %s399
    %p406 = scmp.eq.s32.totalorder %s32, 1
    %p407 = por %p405, %p406
    %p408 = scmp.ne.s32.totalorder %s399, %s400
    %p409 = scmp.eq.s32.totalorder %s32, 0
    %p410 = por %p408, %p409
    %p411 = scmp.ne.s32.totalorder %s399, %s400
    %p412 = scmp.eq.s32.totalorder %s33, 1
    %p413 = por %p411, %p412
    %p415 = scmp.ne.s32.totalorder %s400, %s414
    %p416 = scmp.eq.s32.totalorder %s33, 0
    %p417 = por %p415, %p416
    %s419 = sadd.s32 %s418, 1
    %p422 = scmp.eq.s32.totalorder %s27, 1
    %p423 = scmp.ne.s32.totalorder %s418, %s420
    %p424 = scmp.eq.s32.totalorder %s27, 0
    %p425 = por %p423, %p424
    %p426 = scmp.ne.s32.totalorder %s418, %s420
    %p427 = scmp.eq.s32.totalorder %s32, 1
    %p428 = por %p426, %p427
    %p429 = scmp.ne.s32.totalorder %s420, %s421
    %p430 = scmp.eq.s32.totalorder %s32, 0
    %p431 = por %p429, %p430
    %p432 = scmp.ne.s32.totalorder %s420, %s421
    %p433 = scmp.eq.s32.totalorder %s33, 1
    %p434 = por %p432, %p433
    %p436 = scmp.ne.s32.totalorder %s421, %s435
    %p437 = scmp.eq.s32.totalorder %s33, 0
    %p438 = por %p436, %p437
    %s440 = sadd.s32 %s439, 1
    %p443 = scmp.eq.s32.totalorder %s27, 1
    %p444 = scmp.ne.s32.totalorder %s439, %s441
    %p445 = scmp.eq.s32.totalorder %s27, 0
    %p446 = por %p444, %p445
    %p447 = scmp.ne.s32.totalorder %s439, %s441
    %p448 = scmp.eq.s32.totalorder %s32, 1
    %p449 = por %p447, %p448
    %p450 = scmp.ne.s32.totalorder %s441, %s442
    %p451 = scmp.eq.s32.totalorder %s32, 0
    %p452 = por %p450, %p451
    %p453 = scmp.ne.s32.totalorder %s441, %s442
    %p454 = scmp.eq.s32.totalorder %s33, 1
    %p455 = por %p453, %p454
    %p457 = scmp.ne.s32.totalorder %s442, %s456
    %p458 = scmp.eq.s32.totalorder %s33, 0
    %p459 = por %p457, %p458
    %s461 = sadd.s32 %s460, 1
    %p464 = scmp.eq.s32.totalorder %s27, 1
    %p465 = scmp.ne.s32.totalorder %s460, %s462
    %p466 = scmp.eq.s32.totalorder %s27, 0
    %p467 = por %p465, %p466
    %p468 = scmp.ne.s32.totalorder %s460, %s462
    %p469 = scmp.eq.s32.totalorder %s32, 1
    %p470 = por %p468, %p469
    %p471 = scmp.ne.s32.totalorder %s462, %s463
    %p472 = scmp.eq.s32.totalorder %s32, 0
    %p473 = por %p471, %p472
    %p474 = scmp.ne.s32.totalorder %s462, %s463
    %p475 = scmp.eq.s32.totalorder %s33, 1
    %p476 = por %p474, %p475
    %p478 = scmp.ne.s32.totalorder %s463, %s477
    %p479 = scmp.eq.s32.totalorder %s33, 0
    %p480 = por %p478, %p479
    %s481 = ssub.s32 %s27, %s34
    %p482 = scmp.eq.s32.totalorder %s481, 0
    %s484 = sadd.s32 %s483, 1
    %s485 = scalar_select %p482, %s483, %s484
    %p488 = pneg %p482
    %p489 = scmp.eq.s32.totalorder %s27, 1
    %p490 = por %p488, %p489
    %p491 = scmp.ne.s32.totalorder %s483, %s486
    %p492 = scmp.eq.s32.totalorder %s27, 0
    %p493 = por %p491, %p492
    %p494 = scmp.ne.s32.totalorder %s483, %s486
    %p495 = scmp.eq.s32.totalorder %s32, 1
    %p496 = por %p494, %p495
    %p497 = scmp.ne.s32.totalorder %s486, %s487
    %p498 = scmp.eq.s32.totalorder %s32, 0
    %p499 = por %p497, %p498
    %p500 = scmp.ne.s32.totalorder %s486, %s487
    %p501 = scmp.eq.s32.totalorder %s33, 1
    %p502 = por %p500, %p501
    %p504 = scmp.ne.s32.totalorder %s487, %s503
    %p505 = scmp.eq.s32.totalorder %s33, 0
    %p506 = por %p504, %p505
    %p507 = scmp.le.s32.totalorder 1, %s27
    %p508 = scmp.lt.s32.totalorder %s27, 3
    %p509 = pnand %p507, %p508
    %p510 = pneg %p509
    // Predicated region
    $region9: #{tpu_custom_call.1} parent=5 // pred_check
      _
    $region10: #{tpu_custom_call.1} parent=5 // pred_check_branch
      %512 = sbr.rel (%p509) target = $region12
    $region11: #{tpu_custom_call.1} parent=5 // pred_region
      %s513 = ssub.s32 %s27, 1
      // Predicated region
      $region13: #{tpu_custom_call.1} parent=11 // pred_check
        %p514 = pneg %p74
      $region14: #{tpu_custom_call.1} parent=11 // pred_check_branch
        %516 = sbr.rel (%p514) target = $region16
      $region15: #{tpu_custom_call.1} parent=11 // pred_region
        _
      $region16: #{tpu_custom_call.1} parent=11 // pred_fallthru
        _
      // Predicated region
      $region17: #{tpu_custom_call.1} parent=11 // pred_check
        %p517 = pneg %p95
      $region18: #{tpu_custom_call.1} parent=11 // pred_check_branch
        %519 = sbr.rel (%p517) target = $region20
      $region19: #{tpu_custom_call.1} parent=11 // pred_region
        _
      $region20: #{tpu_custom_call.1} parent=11 // pred_fallthru
        _
      // Predicated region
      $region21: #{tpu_custom_call.1} parent=11 // pred_check
        %p520 = pneg %p116
      $region22: #{tpu_custom_call.1} parent=11 // pred_check_branch
        %522 = sbr.rel (%p520) target = $region24
      $region23: #{tpu_custom_call.1} parent=11 // pred_region
        _
      $region24: #{tpu_custom_call.1} parent=11 // pred_fallthru
        _
      // Predicated region
      $region25: #{tpu_custom_call.1} parent=11 // pred_check
        %p523 = pneg %p137
      $region26: #{tpu_custom_call.1} parent=11 // pred_check_branch
        %525 = sbr.rel (%p523) target = $region28
      $region27: #{tpu_custom_call.1} parent=11 // pred_region
        _
      $region28: #{tpu_custom_call.1} parent=11 // pred_fallthru
        _
      // Predicated region
      $region29: #{tpu_custom_call.1} parent=11 // pred_check
        %p526 = pneg %p158
      $region30: #{tpu_custom_call.1} parent=11 // pred_check_branch
        %528 = sbr.rel (%p526) target = $region32
      $region31: #{tpu_custom_call.1} parent=11 // pred_region
        _
      $region32: #{tpu_custom_call.1} parent=11 // pred_fallthru
        _
      // Predicated region
      $region33: #{tpu_custom_call.1} parent=11 // pred_check
        %p529 = pneg %p179
      $region34: #{tpu_custom_call.1} parent=11 // pred_check_branch
        %531 = sbr.rel (%p529) target = $region36
      $region35: #{tpu_custom_call.1} parent=11 // pred_region
        _
      $region36: #{tpu_custom_call.1} parent=11 // pred_fallthru
        _
      // Predicated region
      $region37: #{tpu_custom_call.1} parent=11 // pred_check
        %p532 = pneg %p200
      $region38: #{tpu_custom_call.1} parent=11 // pred_check_branch
        %534 = sbr.rel (%p532) target = $region40
      $region39: #{tpu_custom_call.1} parent=11 // pred_region
        _
      $region40: #{tpu_custom_call.1} parent=11 // pred_fallthru
        _
      // Predicated region
      $region41: #{tpu_custom_call.1} parent=11 // pred_check
        %p535 = pneg %p221
      $region42: #{tpu_custom_call.1} parent=11 // pred_check_branch
        %537 = sbr.rel (%p535) target = $region44
      $region43: #{tpu_custom_call.1} parent=11 // pred_region
        _
      $region44: #{tpu_custom_call.1} parent=11 // pred_fallthru
        _
      // Predicated region
      $region45: #{tpu_custom_call.1} parent=11 // pred_check
        %p538 = pneg %p242
      $region46: #{tpu_custom_call.1} parent=11 // pred_check_branch
        %540 = sbr.rel (%p538) target = $region48
      $region47: #{tpu_custom_call.1} parent=11 // pred_region
        _
      $region48: #{tpu_custom_call.1} parent=11 // pred_fallthru
        _
      // Predicated region
      $region49: #{tpu_custom_call.1} parent=11 // pred_check
        %p541 = pneg %p263
      $region50: #{tpu_custom_call.1} parent=11 // pred_check_branch
        %543 = sbr.rel (%p541) target = $region52
      $region51: #{tpu_custom_call.1} parent=11 // pred_region
        _
      $region52: #{tpu_custom_call.1} parent=11 // pred_fallthru
        _
      // Predicated region
      $region53: #{tpu_custom_call.1} parent=11 // pred_check
        %p544 = pneg %p284
      $region54: #{tpu_custom_call.1} parent=11 // pred_check_branch
        %546 = sbr.rel (%p544) target = $region56
      $region55: #{tpu_custom_call.1} parent=11 // pred_region
        _
      $region56: #{tpu_custom_call.1} parent=11 // pred_fallthru
        _
      // Predicated region
      $region57: #{tpu_custom_call.1} parent=11 // pred_check
        %p547 = pneg %p305
      $region58: #{tpu_custom_call.1} parent=11 // pred_check_branch
        %549 = sbr.rel (%p547) target = $region60
      $region59: #{tpu_custom_call.1} parent=11 // pred_region
        _
      $region60: #{tpu_custom_call.1} parent=11 // pred_fallthru
        _
      // Predicated region
      $region61: #{tpu_custom_call.1} parent=11 // pred_check
        %p550 = pneg %p326
      $region62: #{tpu_custom_call.1} parent=11 // pred_check_branch
        %552 = sbr.rel (%p550) target = $region64
      $region63: #{tpu_custom_call.1} parent=11 // pred_region
        _
      $region64: #{tpu_custom_call.1} parent=11 // pred_fallthru
        _
      // Predicated region
      $region65: #{tpu_custom_call.1} parent=11 // pred_check
        %p553 = pneg %p347
      $region66: #{tpu_custom_call.1} parent=11 // pred_check_branch
        %555 = sbr.rel (%p553) target = $region68
      $region67: #{tpu_custom_call.1} parent=11 // pred_region
        _
      $region68: #{tpu_custom_call.1} parent=11 // pred_fallthru
        _
      // Predicated region
      $region69: #{tpu_custom_call.1} parent=11 // pred_check
        %p556 = pneg %p368
      $region70: #{tpu_custom_call.1} parent=11 // pred_check_branch
        %558 = sbr.rel (%p556) target = $region72
      $region71: #{tpu_custom_call.1} parent=11 // pred_region
        _
      $region72: #{tpu_custom_call.1} parent=11 // pred_fallthru
        _
      // Predicated region
      $region73: #{tpu_custom_call.1} parent=11 // pred_check
        %p559 = pneg %p389
      $region74: #{tpu_custom_call.1} parent=11 // pred_check_branch
        %561 = sbr.rel (%p559) target = $region76
      $region75: #{tpu_custom_call.1} parent=11 // pred_region
        _
      $region76: #{tpu_custom_call.1} parent=11 // pred_fallthru
        _
      // Predicated region
      $region77: #{tpu_custom_call.1} parent=11 // pred_check
        %p562 = pneg %p410
      $region78: #{tpu_custom_call.1} parent=11 // pred_check_branch
        %564 = sbr.rel (%p562) target = $region80
      $region79: #{tpu_custom_call.1} parent=11 // pred_region
        _
      $region80: #{tpu_custom_call.1} parent=11 // pred_fallthru
        _
      // Predicated region
      $region81: #{tpu_custom_call.1} parent=11 // pred_check
        %p565 = pneg %p431
      $region82: #{tpu_custom_call.1} parent=11 // pred_check_branch
        %567 = sbr.rel (%p565) target = $region84
      $region83: #{tpu_custom_call.1} parent=11 // pred_region
        _
      $region84: #{tpu_custom_call.1} parent=11 // pred_fallthru
        _
      // Predicated region
      $region85: #{tpu_custom_call.1} parent=11 // pred_check
        %p568 = pneg %p452
      $region86: #{tpu_custom_call.1} parent=11 // pred_check_branch
        %570 = sbr.rel (%p568) target = $region88
      $region87: #{tpu_custom_call.1} parent=11 // pred_region
        _
      $region88: #{tpu_custom_call.1} parent=11 // pred_fallthru
        _
      // Predicated region
      $region89: #{tpu_custom_call.1} parent=11 // pred_check
        %p571 = pneg %p473
      $region90: #{tpu_custom_call.1} parent=11 // pred_check_branch
        %573 = sbr.rel (%p571) target = $region92
      $region91: #{tpu_custom_call.1} parent=11 // pred_region
        _
      $region92: #{tpu_custom_call.1} parent=11 // pred_fallthru
        _
    $region12: #{tpu_custom_call.1} parent=5 // pred_fallthru
      _
    %p574 = scmp.lt.s32.totalorder %s27, 2
    // Predicated region
    $region93: #{tpu_custom_call.1} parent=5 // pred_check
      %p575 = pneg %p574
    $region94: #{tpu_custom_call.1} parent=5 // pred_check_branch
      %577 = sbr.rel (%p575) target = $region96
    $region95: #{tpu_custom_call.1} parent=5 // pred_region
      // Predicated region
      $region97: #{tpu_custom_call.1} parent=95 // pred_check
        %p578 = pneg %p47
      $region98: #{tpu_custom_call.1} parent=95 // pred_check_branch
        %580 = sbr.rel (%p578) target = $region100
      $region99: #{tpu_custom_call.1} parent=95 // pred_region
        %p581 = scmp.lt.s32.totalorder %s27, 1
        %s582 = scalar_select %p581, %s27, 1
        %s583 = smul.addr %s582, 32
        %s584 = smul.addr %s583, 4
        %s585 = scalar_lea.vmem %s0, %s584
      $region100: #{tpu_custom_call.1} parent=95 // pred_fallthru
        _
    $region96: #{tpu_custom_call.1} parent=5 // pred_fallthru
      _
    %p586 = scmp.le.s32.totalorder 1, %s27
    %p587 = scmp.lt.s32.totalorder %s27, 3
    %p588 = pnand %p586, %p587
    %p589 = pneg %p588
    // Predicated region
    $region101: #{tpu_custom_call.1} parent=5 // pred_check
      _
    $region102: #{tpu_custom_call.1} parent=5 // pred_check_branch
      %591 = sbr.rel (%p588) target = $region104
    $region103: #{tpu_custom_call.1} parent=5 // pred_region
      %s592 = ssub.s32 %s27, 1
      %p593 = scmp.lt.s32.totalorder %s32, 1
      %s594 = scalar_select %p593, %s32, 1
      %s595 = smul.addr %s594, 32
      %s596 = smul.addr %s595, 4
      %s597 = scalar_lea.vmem %s0, %s596
      %p598 = pneg %p53
      %p599 = pneg %p50
      %p600 = pneg %p74
      %p601 = pneg %p71
      %p602 = pneg %p95
      %p603 = pneg %p92
      %p604 = pneg %p116
      %p605 = pneg %p113
      %p606 = pneg %p137
      %p607 = pneg %p134
      %p608 = pneg %p158
      %p609 = pneg %p155
      %p610 = pneg %p179
      %p611 = pneg %p176
      %p612 = pneg %p200
      %p613 = pneg %p197
      %p614 = pneg %p221
      %p615 = pneg %p218
      %p616 = pneg %p242
      %p617 = pneg %p239
      %p618 = pneg %p263
      %p619 = pneg %p260
      %p620 = pneg %p284
      %p621 = pneg %p281
      %p622 = pneg %p305
      %p623 = pneg %p302
      %p624 = pneg %p326
      %p625 = pneg %p323
      %p626 = pneg %p347
      %p627 = pneg %p344
      %p628 = pneg %p368
      %p629 = pneg %p365
      %p630 = pneg %p389
      %p631 = pneg %p386
      %p632 = pneg %p410
      %p633 = pneg %p407
      %p634 = pneg %p431
      %p635 = pneg %p428
      %p636 = pneg %p452
      %p637 = pneg %p449
      %p638 = pneg %p473
      %p639 = pneg %p470
      %p640 = pneg %p499
      %p641 = pneg %p496
      %p642 = scmp.lt.s32.totalorder %s32, 1
      %s643 = scalar_select %p642, %s32, 1
      %s644 = smul.addr %s643, 32
      %s645 = smul.addr %s644, 8
      %s646 = scalar_lea.vmem %s21, %s645
      %p647 = scmp.lt.s32.totalorder %s32, 1
      %s648 = scalar_select %p647, %s32, 1
      %s649 = smul.addr %s648, 32
      %s650 = smul.addr %s649, 4
      %s651 = scalar_lea.vmem %s0, %s650
      %p652 = scmp.lt.s32.totalorder %s32, 1
      %s653 = scalar_select %p652, %s32, 1
      %s654 = smul.addr %s653, 32
      %s655 = smul.addr %s654, 8
      %s656 = scalar_lea.vmem %s21, %s655
      %v658 = vld [vmem:[%s651] sm:$0xf]
      %v659 = vld [vmem:[%s651 + $0x4] sm:$0xf]
      %v660 = vld [vmem:[%s651 + $0x8] sm:$0xf]
      %v661 = vld [vmem:[%s651 + $0xc] sm:$0xf]
      %v662 = vld [vmem:[%s651 + $0x10] sm:$0xf]
      %v663 = vld [vmem:[%s651 + $0x14] sm:$0xf]
      %v664 = vld [vmem:[%s651 + $0x18] sm:$0xf]
      %v665 = vld [vmem:[%s651 + $0x1c] sm:$0xf]
      %v666 = vld [vmem:[%s651 + $0x20] sm:$0xf]
      %v667 = vld [vmem:[%s651 + $0x24] sm:$0xf]
      %v668 = vld [vmem:[%s651 + $0x28] sm:$0xf]
      %v669 = vld [vmem:[%s651 + $0x2c] sm:$0xf]
      %v670 = vld [vmem:[%s651 + $0x30] sm:$0xf]
      %v671 = vld [vmem:[%s651 + $0x34] sm:$0xf]
      %v672 = vld [vmem:[%s651 + $0x38] sm:$0xf]
      %v673 = vld [vmem:[%s651 + $0x3c] sm:$0xf]
      %v674 = vld [vmem:[%s651 + $0x40] sm:$0xf]
      %v675 = vld [vmem:[%s651 + $0x44] sm:$0xf]
      %v676 = vld [vmem:[%s651 + $0x48] sm:$0xf]
      %v677 = vld [vmem:[%s651 + $0x4c] sm:$0xf]
      %v678 = vld [vmem:[%s651 + $0x50] sm:$0xf]
      %v679 = vld [vmem:[%s651 + $0x54] sm:$0xf]
      %v680 = vld [vmem:[%s651 + $0x58] sm:$0xf]
      %v681 = vld [vmem:[%s651 + $0x5c] sm:$0xf]
      %v682 = vld [vmem:[%s651 + $0x60] sm:$0xf]
      %v683 = vld [vmem:[%s651 + $0x64] sm:$0xf]
      %v684 = vld [vmem:[%s651 + $0x68] sm:$0xf]
      %v685 = vld [vmem:[%s651 + $0x6c] sm:$0xf]
      %v686 = vld [vmem:[%s651 + $0x70] sm:$0xf]
      %v687 = vld [vmem:[%s651 + $0x74] sm:$0xf]
      %v688 = vld [vmem:[%s651 + $0x78] sm:$0xf]
      %v689 = vld [vmem:[%s651 + $0x7c] sm:$0xf]
      %v690 = vld [vmem:[%s2] sm:$0xf]
      %v691 = vld [vmem:[%s2 + $0x4] sm:$0xf]
      %v692 = vld [vmem:[%s2 + $0x8] sm:$0xf]
      %v693 = vld [vmem:[%s2 + $0xc] sm:$0xf]
      %v694 = vld [vmem:[%s4] sm:$0x1]
      %v696 = vlaneseq
      %v697 = vshrl.u32 %v696, 7
      %v698 = vsub.s32 0, %v697
      %v699 = vrot.slane %v694, %v698
      %v733 = vunpack.c.l.b16 %v658
      %v734 = vunpack.c.l.b16 %v659
      %v735 = vunpack.c.l.b16 %v660
      %v736 = vunpack.c.l.b16 %v661
      %v737 = vunpack.c.l.b16 %v662
      %v738 = vunpack.c.l.b16 %v663
      %v739 = vunpack.c.l.b16 %v664
      %v740 = vunpack.c.l.b16 %v665
      %v741 = vunpack.c.l.b16 %v666
      %v742 = vunpack.c.l.b16 %v667
      %v743 = vunpack.c.l.b16 %v668
      %v744 = vunpack.c.l.b16 %v669
      %v745 = vunpack.c.l.b16 %v670
      %v746 = vunpack.c.l.b16 %v671
      %v747 = vunpack.c.l.b16 %v672
      %v748 = vunpack.c.l.b16 %v673
      %v749 = vunpack.c.l.b16 %v674
      %v750 = vunpack.c.l.b16 %v675
      %v751 = vunpack.c.l.b16 %v676
      %v752 = vunpack.c.l.b16 %v677
      %v753 = vunpack.c.l.b16 %v678
      %v754 = vunpack.c.l.b16 %v679
      %v755 = vunpack.c.l.b16 %v680
      %v756 = vunpack.c.l.b16 %v681
      %v757 = vunpack.c.l.b16 %v682
      %v758 = vunpack.c.l.b16 %v683
      %v759 = vunpack.c.l.b16 %v684
      %v760 = vunpack.c.l.b16 %v685
      %v761 = vunpack.c.l.b16 %v686
      %v762 = vunpack.c.l.b16 %v687
      %v763 = vunpack.c.l.b16 %v688
      %v764 = vunpack.c.l.b16 %v689
      %v765 = vpack.c.b16 %v734, %v733
      %v766 = vpack.c.b16 %v736, %v735
      %v767 = vpack.c.b16 %v738, %v737
      %v768 = vpack.c.b16 %v740, %v739
      %v769 = vpack.c.b16 %v742, %v741
      %v770 = vpack.c.b16 %v744, %v743
      %v771 = vpack.c.b16 %v746, %v745
      %v772 = vpack.c.b16 %v748, %v747
      %v773 = vpack.c.b16 %v750, %v749
      %v774 = vpack.c.b16 %v752, %v751
      %v775 = vpack.c.b16 %v754, %v753
      %v776 = vpack.c.b16 %v756, %v755
      %v777 = vpack.c.b16 %v758, %v757
      %v778 = vpack.c.b16 %v760, %v759
      %v779 = vpack.c.b16 %v762, %v761
      %v780 = vpack.c.b16 %v764, %v763
      %v785 = vunpack.c.l.b16 %v690
      %v786 = vunpack.c.l.b16 %v691
      %v787 = vunpack.c.l.b16 %v692
      %v788 = vunpack.c.l.b16 %v693
      %v789 = vpack.c.b16 %v786, %v785
      %v790 = vpack.c.b16 %v788, %v787
      %vm793 = vcmask 261120
      %v795 = vsel %vm793, %v765, 0
      %v798 = vsel %vm793, %v766, 0
      %v801 = vsel %vm793, %v767, 0
      %v804 = vsel %vm793, %v768, 0
      %v807 = vsel %vm793, %v769, 0
      %v810 = vsel %vm793, %v770, 0
      %v813 = vsel %vm793, %v771, 0
      %v816 = vsel %vm793, %v772, 0
      %v819 = vsel %vm793, %v773, 0
      %v822 = vsel %vm793, %v774, 0
      %v825 = vsel %vm793, %v775, 0
      %v828 = vsel %vm793, %v776, 0
      %v831 = vsel %vm793, %v777, 0
      %v834 = vsel %vm793, %v778, 0
      %v837 = vsel %vm793, %v779, 0
      %v840 = vsel %vm793, %v780, 0
      %842 = vmatprep.subr.bf16.mxu0 0
      %843 = vmatpush1.bf16.msra.mxu0 0
      %844 = vmatprep.subr.bf16.mxu0 0
      %845 = vmatpush1.bf16.msra.mxu0 0
      %846 = vmatprep.subr.bf16.mxu0 0
      %847 = vmatpush1.bf16.msra.mxu0 0
      %848 = vmatprep.subr.bf16.mxu0 0
      %849 = vmatpush1.bf16.msra.mxu0 0
      %850 = vmatprep.subr.bf16.mxu0 0
      %851 = vmatpush1.bf16.msra.mxu0 0
      %852 = vmatprep.subr.bf16.mxu0 0
      %853 = vmatpush1.bf16.msra.mxu0 0
      %854 = vmatprep.subr.bf16.mxu0 0
      %855 = vmatpush1.bf16.msra.mxu0 %v790
      %856 = vmatprep.subr.bf16.mxu0 0
      %857 = vmatpush1.bf16.msra.mxu0 %v789
      %858 = vmatprep.subr.bf16.mxu0 0
      %859 = vmatpush2.bf16.msra.mxu0 0
      %860 = vmatprep.subr.bf16.mxu0 0
      %861 = vmatpush2.bf16.msra.mxu0 0
      %862 = vmatprep.subr.bf16.mxu0 0
      %863 = vmatpush2.bf16.msra.mxu0 0
      %864 = vmatprep.subr.bf16.mxu0 0
      %865 = vmatpush2.bf16.msra.mxu0 0
      %866 = vmatprep.subr.bf16.mxu0 0
      %867 = vmatpush2.bf16.msra.mxu0 0
      %868 = vmatprep.subr.bf16.mxu0 0
      %869 = vmatpush2.bf16.msra.mxu0 0
      %870 = vmatprep.subr.bf16.mxu0 0
      %871 = vmatpush2.bf16.msra.mxu0 0
      %872 = vmatprep.subr.bf16.mxu0 0
      %873 = vmatpush2.bf16.msra.mxu0 0
      %874 = vmatprep.mubr.bf16.mxu0 0
      %875 = vmatmul.mubr.bf16.gmra.mxu0 %v795
      %v876 = vpop.f32.mrf.mxu0
      %v877 = vadd.f32 %v699, %v876
      %v878 = vpop.f32.mrf.mxu0
      %v879 = vpop.f32.mrf.mxu0
      %v880 = vadd.f32 %v699, %v879
      %v881 = vpop.f32.mrf.mxu0
      %882 = vmatprep.mubr.bf16.mxu0 0
      %883 = vmatmul.mubr.bf16.gmra.mxu0 %v798
      %v884 = vpop.f32.mrf.mxu0
      %v885 = vadd.f32 %v699, %v884
      %v886 = vpop.f32.mrf.mxu0
      %v887 = vpop.f32.mrf.mxu0
      %v888 = vadd.f32 %v699, %v887
      %v889 = vpop.f32.mrf.mxu0
      %890 = vmatprep.mubr.bf16.mxu0 0
      %891 = vmatmul.mubr.bf16.gmra.mxu0 %v801
      %v892 = vpop.f32.mrf.mxu0
      %v893 = vadd.f32 %v699, %v892
      %v894 = vpop.f32.mrf.mxu0
      %v895 = vpop.f32.mrf.mxu0
      %v896 = vadd.f32 %v699, %v895
      %v897 = vpop.f32.mrf.mxu0
      %898 = vmatprep.mubr.bf16.mxu0 0
      %899 = vmatmul.mubr.bf16.gmra.mxu0 %v804
      %v900 = vpop.f32.mrf.mxu0
      %v901 = vadd.f32 %v699, %v900
      %v902 = vpop.f32.mrf.mxu0
      %v903 = vpop.f32.mrf.mxu0
      %v904 = vadd.f32 %v699, %v903
      %v905 = vpop.f32.mrf.mxu0
      %906 = vmatprep.mubr.bf16.mxu0 0
      %907 = vmatmul.mubr.bf16.gmra.mxu0 %v807
      %v908 = vpop.f32.mrf.mxu0
      %v909 = vadd.f32 %v699, %v908
      %v910 = vpop.f32.mrf.mxu0
      %v911 = vpop.f32.mrf.mxu0
      %v912 = vadd.f32 %v699, %v911
      %v913 = vpop.f32.mrf.mxu0
      %914 = vmatprep.mubr.bf16.mxu0 0
      %915 = vmatmul.mubr.bf16.gmra.mxu0 %v810
      %v916 = vpop.f32.mrf.mxu0
      %v917 = vadd.f32 %v699, %v916
      %v918 = vpop.f32.mrf.mxu0
      %v919 = vpop.f32.mrf.mxu0
      %v920 = vadd.f32 %v699, %v919
      %v921 = vpop.f32.mrf.mxu0
      %922 = vmatprep.mubr.bf16.mxu0 0
      %923 = vmatmul.mubr.bf16.gmra.mxu0 %v813
      %v924 = vpop.f32.mrf.mxu0
      %v925 = vadd.f32 %v699, %v924
      %v926 = vpop.f32.mrf.mxu0
      %v927 = vpop.f32.mrf.mxu0
      %v928 = vadd.f32 %v699, %v927
      %v929 = vpop.f32.mrf.mxu0
      %930 = vmatprep.mubr.bf16.mxu0 0
      %931 = vmatmul.mubr.bf16.gmra.mxu0 %v816
      %v932 = vpop.f32.mrf.mxu0
      %v933 = vadd.f32 %v699, %v932
      %v934 = vpop.f32.mrf.mxu0
      %v935 = vpop.f32.mrf.mxu0
      %v936 = vadd.f32 %v699, %v935
      %v937 = vpop.f32.mrf.mxu0
      %938 = vmatprep.mubr.bf16.mxu0 0
      %939 = vmatmul.mubr.bf16.gmra.mxu0 %v819
      %v940 = vpop.f32.mrf.mxu0
      %v941 = vadd.f32 %v699, %v940
      %v942 = vpop.f32.mrf.mxu0
      %v943 = vpop.f32.mrf.mxu0
      %v944 = vadd.f32 %v699, %v943
      %v945 = vpop.f32.mrf.mxu0
      %946 = vmatprep.mubr.bf16.mxu0 0
      %947 = vmatmul.mubr.bf16.gmra.mxu0 %v822
      %v948 = vpop.f32.mrf.mxu0
      %v949 = vadd.f32 %v699, %v948
      %v950 = vpop.f32.mrf.mxu0
      %v951 = vpop.f32.mrf.mxu0
      %v952 = vadd.f32 %v699, %v951
      %v953 = vpop.f32.mrf.mxu0
      %954 = vmatprep.mubr.bf16.mxu0 0
      %955 = vmatmul.mubr.bf16.gmra.mxu0 %v825
      %v956 = vpop.f32.mrf.mxu0
      %v957 = vadd.f32 %v699, %v956
      %v958 = vpop.f32.mrf.mxu0
      %v959 = vpop.f32.mrf.mxu0
      %v960 = vadd.f32 %v699, %v959
      %v961 = vpop.f32.mrf.mxu0
      %962 = vmatprep.mubr.bf16.mxu0 0
      %963 = vmatmul.mubr.bf16.gmra.mxu0 %v828
      %v964 = vpop.f32.mrf.mxu0
      %v965 = vadd.f32 %v699, %v964
      %v966 = vpop.f32.mrf.mxu0
      %v967 = vpop.f32.mrf.mxu0
      %v968 = vadd.f32 %v699, %v967
      %v969 = vpop.f32.mrf.mxu0
      %970 = vmatprep.mubr.bf16.mxu0 0
      %971 = vmatmul.mubr.bf16.gmra.mxu0 %v831
      %v972 = vpop.f32.mrf.mxu0
      %v973 = vadd.f32 %v699, %v972
      %v974 = vpop.f32.mrf.mxu0
      %v975 = vpop.f32.mrf.mxu0
      %v976 = vadd.f32 %v699, %v975
      %v977 = vpop.f32.mrf.mxu0
      %978 = vmatprep.mubr.bf16.mxu0 0
      %979 = vmatmul.mubr.bf16.gmra.mxu0 %v834
      %v980 = vpop.f32.mrf.mxu0
      %v981 = vadd.f32 %v699, %v980
      %v982 = vpop.f32.mrf.mxu0
      %v983 = vpop.f32.mrf.mxu0
      %v984 = vadd.f32 %v699, %v983
      %v985 = vpop.f32.mrf.mxu0
      %986 = vmatprep.mubr.bf16.mxu0 0
      %987 = vmatmul.mubr.bf16.gmra.mxu0 %v837
      %v988 = vpop.f32.mrf.mxu0
      %v989 = vadd.f32 %v699, %v988
      %v990 = vpop.f32.mrf.mxu0
      %v991 = vpop.f32.mrf.mxu0
      %v992 = vadd.f32 %v699, %v991
      %v993 = vpop.f32.mrf.mxu0
      %994 = vmatprep.mubr.bf16.mxu0 0
      %995 = vmatmul.mubr.bf16.gmra.mxu0 %v840
      %v996 = vpop.f32.mrf.mxu0
      %v997 = vadd.f32 %v699, %v996
      %v998 = vpop.f32.mrf.mxu0
      %v999 = vpop.f32.mrf.mxu0
      %v1000 = vadd.f32 %v699, %v999
      %v1001 = vpop.f32.mrf.mxu0
      %1002 = vdwg.mxu0
      %v1003 = vld [vmem:[%s3] sm:$0xf]
      %v1004 = vld [vmem:[%s3 + $0x4] sm:$0xf]
      %v1005 = vld [vmem:[%s3 + $0x8] sm:$0xf]
      %v1006 = vld [vmem:[%s3 + $0xc] sm:$0xf]
      %v1007 = vld [vmem:[%s5] sm:$0x1]
      %v1009 = vlaneseq
      %v1010 = vshrl.u32 %v1009, 7
      %v1011 = vsub.s32 0, %v1010
      %v1012 = vrot.slane %v1007, %v1011
      %v1018 = vunpack.c.l.b16 %v1003
      %v1019 = vunpack.c.l.b16 %v1004
      %v1020 = vunpack.c.l.b16 %v1005
      %v1021 = vunpack.c.l.b16 %v1006
      %v1022 = vpack.c.b16 %v1019, %v1018
      %v1023 = vpack.c.b16 %v1021, %v1020
      %1026 = vmatprep.subr.bf16.mxu0 0
      %1027 = vmatpush1.bf16.msra.mxu0 0
      %1028 = vmatprep.subr.bf16.mxu0 0
      %1029 = vmatpush1.bf16.msra.mxu0 0
      %1030 = vmatprep.subr.bf16.mxu0 0
      %1031 = vmatpush1.bf16.msra.mxu0 0
      %1032 = vmatprep.subr.bf16.mxu0 0
      %1033 = vmatpush1.bf16.msra.mxu0 0
      %1034 = vmatprep.subr.bf16.mxu0 0
      %1035 = vmatpush1.bf16.msra.mxu0 0
      %1036 = vmatprep.subr.bf16.mxu0 0
      %1037 = vmatpush1.bf16.msra.mxu0 0
      %1038 = vmatprep.subr.bf16.mxu0 0
      %1039 = vmatpush1.bf16.msra.mxu0 %v1023
      %1040 = vmatprep.subr.bf16.mxu0 0
      %1041 = vmatpush1.bf16.msra.mxu0 %v1022
      %1042 = vmatprep.subr.bf16.mxu0 0
      %1043 = vmatpush2.bf16.msra.mxu0 0
      %1044 = vmatprep.subr.bf16.mxu0 0
      %1045 = vmatpush2.bf16.msra.mxu0 0
      %1046 = vmatprep.subr.bf16.mxu0 0
      %1047 = vmatpush2.bf16.msra.mxu0 0
      %1048 = vmatprep.subr.bf16.mxu0 0
      %1049 = vmatpush2.bf16.msra.mxu0 0
      %1050 = vmatprep.subr.bf16.mxu0 0
      %1051 = vmatpush2.bf16.msra.mxu0 0
      %1052 = vmatprep.subr.bf16.mxu0 0
      %1053 = vmatpush2.bf16.msra.mxu0 0
      %1054 = vmatprep.subr.bf16.mxu0 0
      %1055 = vmatpush2.bf16.msra.mxu0 0
      %1056 = vmatprep.subr.bf16.mxu0 0
      %1057 = vmatpush2.bf16.msra.mxu0 0
      %1058 = vmatprep.mubr.bf16.mxu0 0
      %1059 = vmatmul.mubr.bf16.gmra.mxu0 %v795
      %v1060 = vpop.f32.mrf.mxu0
      %v1061 = vadd.f32 %v1012, %v1060
      %v1062 = vpop.f32.mrf.mxu0
      %v1063 = vpop.f32.mrf.mxu0
      %v1064 = vadd.f32 %v1012, %v1063
      %v1065 = vpop.f32.mrf.mxu0
      %1066 = vmatprep.mubr.bf16.mxu0 0
      %1067 = vmatmul.mubr.bf16.gmra.mxu0 %v798
      %v1068 = vpop.f32.mrf.mxu0
      %v1069 = vadd.f32 %v1012, %v1068
      %v1070 = vpop.f32.mrf.mxu0
      %v1071 = vpop.f32.mrf.mxu0
      %v1072 = vadd.f32 %v1012, %v1071
      %v1073 = vpop.f32.mrf.mxu0
      %1074 = vmatprep.mubr.bf16.mxu0 0
      %1075 = vmatmul.mubr.bf16.gmra.mxu0 %v801
      %v1076 = vpop.f32.mrf.mxu0
      %v1077 = vadd.f32 %v1012, %v1076
      %v1078 = vpop.f32.mrf.mxu0
      %v1079 = vpop.f32.mrf.mxu0
      %v1080 = vadd.f32 %v1012, %v1079
      %v1081 = vpop.f32.mrf.mxu0
      %1082 = vmatprep.mubr.bf16.mxu0 0
      %1083 = vmatmul.mubr.bf16.gmra.mxu0 %v804
      %v1084 = vpop.f32.mrf.mxu0
      %v1085 = vadd.f32 %v1012, %v1084
      %v1086 = vpop.f32.mrf.mxu0
      %v1087 = vpop.f32.mrf.mxu0
      %v1088 = vadd.f32 %v1012, %v1087
      %v1089 = vpop.f32.mrf.mxu0
      %1090 = vmatprep.mubr.bf16.mxu0 0
      %1091 = vmatmul.mubr.bf16.gmra.mxu0 %v807
      %v1092 = vpop.f32.mrf.mxu0
      %v1093 = vadd.f32 %v1012, %v1092
      %v1094 = vpop.f32.mrf.mxu0
      %v1095 = vpop.f32.mrf.mxu0
      %v1096 = vadd.f32 %v1012, %v1095
      %v1097 = vpop.f32.mrf.mxu0
      %1098 = vmatprep.mubr.bf16.mxu0 0
      %1099 = vmatmul.mubr.bf16.gmra.mxu0 %v810
      %v1100 = vpop.f32.mrf.mxu0
      %v1101 = vadd.f32 %v1012, %v1100
      %v1102 = vpop.f32.mrf.mxu0
      %v1103 = vpop.f32.mrf.mxu0
      %v1104 = vadd.f32 %v1012, %v1103
      %v1105 = vpop.f32.mrf.mxu0
      %1106 = vmatprep.mubr.bf16.mxu0 0
      %1107 = vmatmul.mubr.bf16.gmra.mxu0 %v813
      %v1108 = vpop.f32.mrf.mxu0
      %v1109 = vadd.f32 %v1012, %v1108
      %v1110 = vpop.f32.mrf.mxu0
      %v1111 = vpop.f32.mrf.mxu0
      %v1112 = vadd.f32 %v1012, %v1111
      %v1113 = vpop.f32.mrf.mxu0
      %1114 = vmatprep.mubr.bf16.mxu0 0
      %1115 = vmatmul.mubr.bf16.gmra.mxu0 %v816
      %v1116 = vpop.f32.mrf.mxu0
      %v1117 = vadd.f32 %v1012, %v1116
      %v1118 = vpop.f32.mrf.mxu0
      %v1119 = vpop.f32.mrf.mxu0
      %v1120 = vadd.f32 %v1012, %v1119
      %v1121 = vpop.f32.mrf.mxu0
      %1122 = vmatprep.mubr.bf16.mxu0 0
      %1123 = vmatmul.mubr.bf16.gmra.mxu0 %v819
      %v1124 = vpop.f32.mrf.mxu0
      %v1125 = vadd.f32 %v1012, %v1124
      %v1126 = vpop.f32.mrf.mxu0
      %v1127 = vpop.f32.mrf.mxu0
      %v1128 = vadd.f32 %v1012, %v1127
      %v1129 = vpop.f32.mrf.mxu0
      %1130 = vmatprep.mubr.bf16.mxu0 0
      %1131 = vmatmul.mubr.bf16.gmra.mxu0 %v822
      %v1132 = vpop.f32.mrf.mxu0
      %v1133 = vadd.f32 %v1012, %v1132
      %v1134 = vpop.f32.mrf.mxu0
      %v1135 = vpop.f32.mrf.mxu0
      %v1136 = vadd.f32 %v1012, %v1135
      %v1137 = vpop.f32.mrf.mxu0
      %1138 = vmatprep.mubr.bf16.mxu0 0
      %1139 = vmatmul.mubr.bf16.gmra.mxu0 %v825
      %v1140 = vpop.f32.mrf.mxu0
      %v1141 = vadd.f32 %v1012, %v1140
      %v1142 = vpop.f32.mrf.mxu0
      %v1143 = vpop.f32.mrf.mxu0
      %v1144 = vadd.f32 %v1012, %v1143
      %v1145 = vpop.f32.mrf.mxu0
      %1146 = vmatprep.mubr.bf16.mxu0 0
      %1147 = vmatmul.mubr.bf16.gmra.mxu0 %v828
      %v1148 = vpop.f32.mrf.mxu0
      %v1149 = vadd.f32 %v1012, %v1148
      %v1150 = vpop.f32.mrf.mxu0
      %v1151 = vpop.f32.mrf.mxu0
      %v1152 = vadd.f32 %v1012, %v1151
      %v1153 = vpop.f32.mrf.mxu0
      %1154 = vmatprep.mubr.bf16.mxu0 0
      %1155 = vmatmul.mubr.bf16.gmra.mxu0 %v831
      %v1156 = vpop.f32.mrf.mxu0
      %v1157 = vadd.f32 %v1012, %v1156
      %v1158 = vpop.f32.mrf.mxu0
      %v1159 = vpop.f32.mrf.mxu0
      %v1160 = vadd.f32 %v1012, %v1159
      %v1161 = vpop.f32.mrf.mxu0
      %1162 = vmatprep.mubr.bf16.mxu0 0
      %1163 = vmatmul.mubr.bf16.gmra.mxu0 %v834
      %v1164 = vpop.f32.mrf.mxu0
      %v1165 = vadd.f32 %v1012, %v1164
      %v1166 = vpop.f32.mrf.mxu0
      %v1167 = vpop.f32.mrf.mxu0
      %v1168 = vadd.f32 %v1012, %v1167
      %v1169 = vpop.f32.mrf.mxu0
      %1170 = vmatprep.mubr.bf16.mxu0 0
      %1171 = vmatmul.mubr.bf16.gmra.mxu0 %v837
      %v1172 = vpop.f32.mrf.mxu0
      %v1173 = vadd.f32 %v1012, %v1172
      %v1174 = vpop.f32.mrf.mxu0
      %v1175 = vpop.f32.mrf.mxu0
      %v1176 = vadd.f32 %v1012, %v1175
      %v1177 = vpop.f32.mrf.mxu0
      %1178 = vmatprep.mubr.bf16.mxu0 0
      %1179 = vmatmul.mubr.bf16.gmra.mxu0 %v840
      %v1180 = vpop.f32.mrf.mxu0
      %v1181 = vadd.f32 %v1012, %v1180
      %v1182 = vpop.f32.mrf.mxu0
      %v1183 = vpop.f32.mrf.mxu0
      %v1184 = vadd.f32 %v1012, %v1183
      %v1185 = vpop.f32.mrf.mxu0
      %1186 = vdwg.mxu0
      %v1187 = vsel %vm793, %v1061, -inf
      %v1188 = vrot.slane %v1187, 4
      %v1189 = vmax.f32 %v1187, %v1188
      %v1190 = vrot.slane %v1189, 2
      %v1191 = vmax.f32 %v1189, %v1190
      %v1192 = vrot.slane %v1191, 1
      %v1193 = vmax.f32 %v1191, %v1192
      %v1194 = vsel %vm793, %v1064, -inf
      %v1195 = vrot.slane %v1194, 4
      %v1196 = vmax.f32 %v1194, %v1195
      %v1197 = vrot.slane %v1196, 2
      %v1198 = vmax.f32 %v1196, %v1197
      %v1199 = vrot.slane %v1198, 1
      %v1200 = vmax.f32 %v1198, %v1199
      %v1201 = vsel %vm793, %v1069, -inf
      %v1202 = vrot.slane %v1201, 4
      %v1203 = vmax.f32 %v1201, %v1202
      %v1204 = vrot.slane %v1203, 2
      %v1205 = vmax.f32 %v1203, %v1204
      %v1206 = vrot.slane %v1205, 1
      %v1207 = vmax.f32 %v1205, %v1206
      %v1208 = vsel %vm793, %v1072, -inf
      %v1209 = vrot.slane %v1208, 4
      %v1210 = vmax.f32 %v1208, %v1209
      %v1211 = vrot.slane %v1210, 2
      %v1212 = vmax.f32 %v1210, %v1211
      %v1213 = vrot.slane %v1212, 1
      %v1214 = vmax.f32 %v1212, %v1213
      %v1215 = vsel %vm793, %v1077, -inf
      %v1216 = vrot.slane %v1215, 4
      %v1217 = vmax.f32 %v1215, %v1216
      %v1218 = vrot.slane %v1217, 2
      %v1219 = vmax.f32 %v1217, %v1218
      %v1220 = vrot.slane %v1219, 1
      %v1221 = vmax.f32 %v1219, %v1220
      %v1222 = vsel %vm793, %v1080, -inf
      %v1223 = vrot.slane %v1222, 4
      %v1224 = vmax.f32 %v1222, %v1223
      %v1225 = vrot.slane %v1224, 2
      %v1226 = vmax.f32 %v1224, %v1225
      %v1227 = vrot.slane %v1226, 1
      %v1228 = vmax.f32 %v1226, %v1227
      %v1229 = vsel %vm793, %v1085, -inf
      %v1230 = vrot.slane %v1229, 4
      %v1231 = vmax.f32 %v1229, %v1230
      %v1232 = vrot.slane %v1231, 2
      %v1233 = vmax.f32 %v1231, %v1232
      %v1234 = vrot.slane %v1233, 1
      %v1235 = vmax.f32 %v1233, %v1234
      %v1236 = vsel %vm793, %v1088, -inf
      %v1237 = vrot.slane %v1236, 4
      %v1238 = vmax.f32 %v1236, %v1237
      %v1239 = vrot.slane %v1238, 2
      %v1240 = vmax.f32 %v1238, %v1239
      %v1241 = vrot.slane %v1240, 1
      %v1242 = vmax.f32 %v1240, %v1241
      %v1243 = vsel %vm793, %v1093, -inf
      %v1244 = vrot.slane %v1243, 4
      %v1245 = vmax.f32 %v1243, %v1244
      %v1246 = vrot.slane %v1245, 2
      %v1247 = vmax.f32 %v1245, %v1246
      %v1248 = vrot.slane %v1247, 1
      %v1249 = vmax.f32 %v1247, %v1248
      %v1250 = vsel %vm793, %v1096, -inf
      %v1251 = vrot.slane %v1250, 4
      %v1252 = vmax.f32 %v1250, %v1251
      %v1253 = vrot.slane %v1252, 2
      %v1254 = vmax.f32 %v1252, %v1253
      %v1255 = vrot.slane %v1254, 1
      %v1256 = vmax.f32 %v1254, %v1255
      %v1257 = vsel %vm793, %v1101, -inf
      %v1258 = vrot.slane %v1257, 4
      %v1259 = vmax.f32 %v1257, %v1258
      %v1260 = vrot.slane %v1259, 2
      %v1261 = vmax.f32 %v1259, %v1260
      %v1262 = vrot.slane %v1261, 1
      %v1263 = vmax.f32 %v1261, %v1262
      %v1264 = vsel %vm793, %v1104, -inf
      %v1265 = vrot.slane %v1264, 4
      %v1266 = vmax.f32 %v1264, %v1265
      %v1267 = vrot.slane %v1266, 2
      %v1268 = vmax.f32 %v1266, %v1267
      %v1269 = vrot.slane %v1268, 1
      %v1270 = vmax.f32 %v1268, %v1269
      %v1271 = vsel %vm793, %v1109, -inf
      %v1272 = vrot.slane %v1271, 4
      %v1273 = vmax.f32 %v1271, %v1272
      %v1274 = vrot.slane %v1273, 2
      %v1275 = vmax.f32 %v1273, %v1274
      %v1276 = vrot.slane %v1275, 1
      %v1277 = vmax.f32 %v1275, %v1276
      %v1278 = vsel %vm793, %v1112, -inf
      %v1279 = vrot.slane %v1278, 4
      %v1280 = vmax.f32 %v1278, %v1279
      %v1281 = vrot.slane %v1280, 2
      %v1282 = vmax.f32 %v1280, %v1281
      %v1283 = vrot.slane %v1282, 1
      %v1284 = vmax.f32 %v1282, %v1283
      %v1285 = vsel %vm793, %v1117, -inf
      %v1286 = vrot.slane %v1285, 4
      %v1287 = vmax.f32 %v1285, %v1286
      %v1288 = vrot.slane %v1287, 2
      %v1289 = vmax.f32 %v1287, %v1288
      %v1290 = vrot.slane %v1289, 1
      %v1291 = vmax.f32 %v1289, %v1290
      %v1292 = vsel %vm793, %v1120, -inf
      %v1293 = vrot.slane %v1292, 4
      %v1294 = vmax.f32 %v1292, %v1293
      %v1295 = vrot.slane %v1294, 2
      %v1296 = vmax.f32 %v1294, %v1295
      %v1297 = vrot.slane %v1296, 1
      %v1298 = vmax.f32 %v1296, %v1297
      %v1299 = vsel %vm793, %v1125, -inf
      %v1300 = vrot.slane %v1299, 4
      %v1301 = vmax.f32 %v1299, %v1300
      %v1302 = vrot.slane %v1301, 2
      %v1303 = vmax.f32 %v1301, %v1302
      %v1304 = vrot.slane %v1303, 1
      %v1305 = vmax.f32 %v1303, %v1304
      %v1306 = vsel %vm793, %v1128, -inf
      %v1307 = vrot.slane %v1306, 4
      %v1308 = vmax.f32 %v1306, %v1307
      %v1309 = vrot.slane %v1308, 2
      %v1310 = vmax.f32 %v1308, %v1309
      %v1311 = vrot.slane %v1310, 1
      %v1312 = vmax.f32 %v1310, %v1311
      %v1313 = vsel %vm793, %v1133, -inf
      %v1314 = vrot.slane %v1313, 4
      %v1315 = vmax.f32 %v1313, %v1314
      %v1316 = vrot.slane %v1315, 2
      %v1317 = vmax.f32 %v1315, %v1316
      %v1318 = vrot.slane %v1317, 1
      %v1319 = vmax.f32 %v1317, %v1318
      %v1320 = vsel %vm793, %v1136, -inf
      %v1321 = vrot.slane %v1320, 4
      %v1322 = vmax.f32 %v1320, %v1321
      %v1323 = vrot.slane %v1322, 2
      %v1324 = vmax.f32 %v1322, %v1323
      %v1325 = vrot.slane %v1324, 1
      %v1326 = vmax.f32 %v1324, %v1325
      %v1327 = vsel %vm793, %v1141, -inf
      %v1328 = vrot.slane %v1327, 4
      %v1329 = vmax.f32 %v1327, %v1328
      %v1330 = vrot.slane %v1329, 2
      %v1331 = vmax.f32 %v1329, %v1330
      %v1332 = vrot.slane %v1331, 1
      %v1333 = vmax.f32 %v1331, %v1332
      %v1334 = vsel %vm793, %v1144, -inf
      %v1335 = vrot.slane %v1334, 4
      %v1336 = vmax.f32 %v1334, %v1335
      %v1337 = vrot.slane %v1336, 2
      %v1338 = vmax.f32 %v1336, %v1337
      %v1339 = vrot.slane %v1338, 1
      %v1340 = vmax.f32 %v1338, %v1339
      %v1341 = vsel %vm793, %v1149, -inf
      %v1342 = vrot.slane %v1341, 4
      %v1343 = vmax.f32 %v1341, %v1342
      %v1344 = vrot.slane %v1343, 2
      %v1345 = vmax.f32 %v1343, %v1344
      %v1346 = vrot.slane %v1345, 1
      %v1347 = vmax.f32 %v1345, %v1346
      %v1348 = vsel %vm793, %v1152, -inf
      %v1349 = vrot.slane %v1348, 4
      %v1350 = vmax.f32 %v1348, %v1349
      %v1351 = vrot.slane %v1350, 2
      %v1352 = vmax.f32 %v1350, %v1351
      %v1353 = vrot.slane %v1352, 1
      %v1354 = vmax.f32 %v1352, %v1353
      %v1355 = vsel %vm793, %v1157, -inf
      %v1356 = vrot.slane %v1355, 4
      %v1357 = vmax.f32 %v1355, %v1356
      %v1358 = vrot.slane %v1357, 2
      %v1359 = vmax.f32 %v1357, %v1358
      %v1360 = vrot.slane %v1359, 1
      %v1361 = vmax.f32 %v1359, %v1360
      %v1362 = vsel %vm793, %v1160, -inf
      %v1363 = vrot.slane %v1362, 4
      %v1364 = vmax.f32 %v1362, %v1363
      %v1365 = vrot.slane %v1364, 2
      %v1366 = vmax.f32 %v1364, %v1365
      %v1367 = vrot.slane %v1366, 1
      %v1368 = vmax.f32 %v1366, %v1367
      %v1369 = vsel %vm793, %v1165, -inf
      %v1370 = vrot.slane %v1369, 4
      %v1371 = vmax.f32 %v1369, %v1370
      %v1372 = vrot.slane %v1371, 2
      %v1373 = vmax.f32 %v1371, %v1372
      %v1374 = vrot.slane %v1373, 1
      %v1375 = vmax.f32 %v1373, %v1374
      %v1376 = vsel %vm793, %v1168, -inf
      %v1377 = vrot.slane %v1376, 4
      %v1378 = vmax.f32 %v1376, %v1377
      %v1379 = vrot.slane %v1378, 2
      %v1380 = vmax.f32 %v1378, %v1379
      %v1381 = vrot.slane %v1380, 1
      %v1382 = vmax.f32 %v1380, %v1381
      %v1383 = vsel %vm793, %v1173, -inf
      %v1384 = vrot.slane %v1383, 4
      %v1385 = vmax.f32 %v1383, %v1384
      %v1386 = vrot.slane %v1385, 2
      %v1387 = vmax.f32 %v1385, %v1386
      %v1388 = vrot.slane %v1387, 1
      %v1389 = vmax.f32 %v1387, %v1388
      %v1390 = vsel %vm793, %v1176, -inf
      %v1391 = vrot.slane %v1390, 4
      %v1392 = vmax.f32 %v1390, %v1391
      %v1393 = vrot.slane %v1392, 2
      %v1394 = vmax.f32 %v1392, %v1393
      %v1395 = vrot.slane %v1394, 1
      %v1396 = vmax.f32 %v1394, %v1395
      %v1397 = vsel %vm793, %v1181, -inf
      %v1398 = vrot.slane %v1397, 4
      %v1399 = vmax.f32 %v1397, %v1398
      %v1400 = vrot.slane %v1399, 2
      %v1401 = vmax.f32 %v1399, %v1400
      %v1402 = vrot.slane %v1401, 1
      %v1403 = vmax.f32 %v1401, %v1402
      %v1404 = vsel %vm793, %v1184, -inf
      %v1405 = vrot.slane %v1404, 4
      %v1406 = vmax.f32 %v1404, %v1405
      %v1407 = vrot.slane %v1406, 2
      %v1408 = vmax.f32 %v1406, %v1407
      %v1409 = vrot.slane %v1408, 1
      %v1410 = vmax.f32 %v1408, %v1409
      %v1411 = vmax.f32 %v1193, %v1207
      %v1412 = vmax.f32 %v1200, %v1214
      %v1413 = vmax.f32 %v1305, %v1319
      %v1414 = vmax.f32 %v1312, %v1326
      %v1415 = vmax.f32 %v1411, %v1221
      %v1416 = vmax.f32 %v1412, %v1228
      %v1417 = vmax.f32 %v1413, %v1333
      %v1418 = vmax.f32 %v1414, %v1340
      %v1419 = vmax.f32 %v1415, %v1235
      %v1420 = vmax.f32 %v1416, %v1242
      %v1421 = vmax.f32 %v1417, %v1347
      %v1422 = vmax.f32 %v1418, %v1354
      %v1423 = vmax.f32 %v1419, %v1249
      %v1424 = vmax.f32 %v1420, %v1256
      %v1425 = vmax.f32 %v1421, %v1361
      %v1426 = vmax.f32 %v1422, %v1368
      %v1427 = vmax.f32 %v1423, %v1263
      %v1428 = vmax.f32 %v1424, %v1270
      %v1429 = vmax.f32 %v1425, %v1375
      %v1430 = vmax.f32 %v1426, %v1382
      %v1431 = vmax.f32 %v1427, %v1277
      %v1432 = vmax.f32 %v1428, %v1284
      %v1433 = vmax.f32 %v1429, %v1389
      %v1434 = vmax.f32 %v1430, %v1396
      %v1435 = vmax.f32 %v1431, %v1291
      %v1436 = vmax.f32 %v1432, %v1298
      %v1437 = vmax.f32 %v1433, %v1403
      %v1438 = vmax.f32 %v1434, %v1410
      %v1439 = vld [vmem:[%s10] sm:$0xff]
      %v1440 = vld [vmem:[%s10 + $0x8] sm:$0x1]
      %v1441 = vld [vmem:[%s11] sm:$0x1]
      %vm1446 = vcmask 1042434
      %v1447 = vsel %vm1446, %v1436, %v1435
      %v1448 = vsel %vm1446, %v1438, %v1437
      %vm1451 = vcmask 1040384
      %v1452 = vsel %vm1451, 0.0, %v1447
      %v1453 = vsel %vm1451, 0.0, %v1448
      %vm1454 = vcmask 1042432
      %v1455 = vsel %vm1454, %v1452, 0.0
      %v1456 = vsel %vm1454, %v1453, 0.0
      %v1458 = vlaneseq
      %v1459 = vshrl.u32 %v1458, 7
      %v1460 = vsub.s32 0, %v1459
      %v1461 = vrot.slane %v1441, %v1460
      %v1463 = vadd.f32 %v1461, 0.0
      %v1464 = vlaneseq
      %v1465 = vshrl.u32 %v1464, 7
      %v1466 = vsub.s32 0, %v1465
      %v1467 = vrot.slane %v1439, %v1466
      %v1468 = vmul.f32 %v1467, 0.0
      %v1469 = vmul.f32 %v1455, %v1467
      %v1470 = vadd.f32 %v1463, %v1468
      %v1471 = vadd.f32 %v1463, %v1469
      %v1472 = vlaneseq
      %v1473 = vshrl.u32 %v1472, 7
      %v1474 = vsub.s32 1, %v1473
      %v1475 = vrot.slane %v1439, %v1474
      %v1476 = vmul.f32 %v1475, 0.0
      %v1477 = vmul.f32 %v1455, %v1475
      %v1480 = vrot.slane %v1476, 1
      %v1481 = vrot.slane %v1477, 1
      %v1484 = vadd.f32 %v1470, %v1480
      %v1485 = vadd.f32 %v1471, %v1481
      %v1486 = vlaneseq
      %v1487 = vshrl.u32 %v1486, 7
      %v1488 = vsub.s32 2, %v1487
      %v1489 = vrot.slane %v1439, %v1488
      %v1490 = vmul.f32 %v1489, 0.0
      %v1491 = vmul.f32 %v1455, %v1489
      %v1494 = vrot.slane %v1490, 2
      %v1495 = vrot.slane %v1491, 2
      %v1498 = vadd.f32 %v1484, %v1494
      %v1499 = vadd.f32 %v1485, %v1495
      %v1500 = vlaneseq
      %v1501 = vshrl.u32 %v1500, 7
      %v1502 = vsub.s32 3, %v1501
      %v1503 = vrot.slane %v1439, %v1502
      %v1504 = vmul.f32 %v1455, %v1503
      %v1505 = vmul.f32 %v1456, %v1503
      %v1506 = vadd.f32 %v1498, %v1504
      %v1507 = vadd.f32 %v1499, %v1505
      %v1508 = vlaneseq
      %v1509 = vshrl.u32 %v1508, 7
      %v1510 = vsub.s32 4, %v1509
      %v1511 = vrot.slane %v1439, %v1510
      %v1512 = vmul.f32 %v1455, %v1511
      %v1513 = vmul.f32 %v1456, %v1511
      %v1516 = vrot.slane %v1512, 1
      %v1517 = vrot.slane %v1513, 1
      %v1520 = vadd.f32 %v1506, %v1516
      %v1521 = vadd.f32 %v1507, %v1517
      %v1522 = vlaneseq
      %v1523 = vshrl.u32 %v1522, 7
      %v1524 = vsub.s32 5, %v1523
      %v1525 = vrot.slane %v1439, %v1524
      %v1526 = vmul.f32 %v1455, %v1525
      %v1527 = vmul.f32 %v1456, %v1525
      %v1530 = vrot.slane %v1526, 2
      %v1531 = vrot.slane %v1527, 2
      %v1534 = vadd.f32 %v1520, %v1530
      %v1535 = vadd.f32 %v1521, %v1531
      %v1536 = vlaneseq
      %v1537 = vshrl.u32 %v1536, 7
      %v1538 = vsub.s32 6, %v1537
      %v1539 = vrot.slane %v1439, %v1538
      %v1540 = vmul.f32 %v1456, %v1539
      %v1541 = vmul.f32 %v1539, 0.0
      %v1542 = vadd.f32 %v1534, %v1540
      %v1543 = vadd.f32 %v1535, %v1541
      %v1544 = vlaneseq
      %v1545 = vshrl.u32 %v1544, 7
      %v1546 = vsub.s32 7, %v1545
      %v1547 = vrot.slane %v1439, %v1546
      %v1548 = vmul.f32 %v1456, %v1547
      %v1549 = vmul.f32 %v1547, 0.0
      %v1552 = vrot.slane %v1548, 1
      %v1553 = vrot.slane %v1549, 1
      %v1556 = vadd.f32 %v1542, %v1552
      %v1557 = vadd.f32 %v1543, %v1553
      %v1558 = vlaneseq
      %v1559 = vshrl.u32 %v1558, 7
      %v1560 = vsub.s32 0, %v1559
      %v1561 = vrot.slane %v1440, %v1560
      %v1562 = vmul.f32 %v1456, %v1561
      %v1563 = vmul.f32 %v1561, 0.0
      %v1566 = vrot.slane %v1562, 2
      %v1567 = vrot.slane %v1563, 2
      %v1570 = vadd.f32 %v1556, %v1566
      %v1571 = vadd.f32 %v1557, %v1567
      %v1572 = vsel %vm793, %v1061, 0.0
      %v1573 = vsel %vm793, %v1064, 0.0
      %v1574 = vadd.f32 %v1572, %v1573
      %v1575 = vsel %vm793, %v1069, 0.0
      %v1576 = vadd.f32 %v1574, %v1575
      %v1577 = vsel %vm793, %v1072, 0.0
      %v1578 = vadd.f32 %v1576, %v1577
      %v1579 = vsel %vm793, %v1077, 0.0
      %v1580 = vadd.f32 %v1578, %v1579
      %v1581 = vsel %vm793, %v1080, 0.0
      %v1582 = vadd.f32 %v1580, %v1581
      %v1583 = vsel %vm793, %v1085, 0.0
      %v1584 = vadd.f32 %v1582, %v1583
      %v1585 = vsel %vm793, %v1088, 0.0
      %v1586 = vadd.f32 %v1584, %v1585
      %v1587 = vsel %vm793, %v1093, 0.0
      %v1588 = vadd.f32 %v1586, %v1587
      %v1589 = vsel %vm793, %v1096, 0.0
      %v1590 = vadd.f32 %v1588, %v1589
      %v1591 = vsel %vm793, %v1101, 0.0
      %v1592 = vadd.f32 %v1590, %v1591
      %v1593 = vsel %vm793, %v1104, 0.0
      %v1594 = vadd.f32 %v1592, %v1593
      %v1595 = vsel %vm793, %v1109, 0.0
      %v1596 = vadd.f32 %v1594, %v1595
      %v1597 = vsel %vm793, %v1112, 0.0
      %v1598 = vadd.f32 %v1596, %v1597
      %v1599 = vsel %vm793, %v1117, 0.0
      %v1600 = vadd.f32 %v1598, %v1599
      %v1601 = vsel %vm793, %v1120, 0.0
      %v1602 = vadd.f32 %v1600, %v1601
      %v1603 = vsel %vm793, %v1125, 0.0
      %v1604 = vadd.f32 %v1602, %v1603
      %v1605 = vsel %vm793, %v1128, 0.0
      %v1606 = vadd.f32 %v1604, %v1605
      %v1607 = vsel %vm793, %v1133, 0.0
      %v1608 = vadd.f32 %v1606, %v1607
      %v1609 = vsel %vm793, %v1136, 0.0
      %v1610 = vadd.f32 %v1608, %v1609
      %v1611 = vsel %vm793, %v1141, 0.0
      %v1612 = vadd.f32 %v1610, %v1611
      %v1613 = vsel %vm793, %v1144, 0.0
      %v1614 = vadd.f32 %v1612, %v1613
      %v1615 = vsel %vm793, %v1149, 0.0
      %v1616 = vadd.f32 %v1614, %v1615
      %v1617 = vsel %vm793, %v1152, 0.0
      %v1618 = vadd.f32 %v1616, %v1617
      %v1619 = vsel %vm793, %v1157, 0.0
      %v1620 = vadd.f32 %v1618, %v1619
      %v1621 = vsel %vm793, %v1160, 0.0
      %v1622 = vadd.f32 %v1620, %v1621
      %v1623 = vsel %vm793, %v1165, 0.0
      %v1624 = vadd.f32 %v1622, %v1623
      %v1625 = vsel %vm793, %v1168, 0.0
      %v1626 = vadd.f32 %v1624, %v1625
      %v1627 = vsel %vm793, %v1173, 0.0
      %v1628 = vadd.f32 %v1626, %v1627
      %v1629 = vsel %vm793, %v1176, 0.0
      %v1630 = vadd.f32 %v1628, %v1629
      %v1631 = vsel %vm793, %v1181, 0.0
      %v1632 = vadd.f32 %v1630, %v1631
      %v1633 = vsel %vm793, %v1184, 0.0
      %v1634 = vadd.f32 %v1632, %v1633
      %v1635 = vrot.slane %v1634, 4
      %v1636 = vadd.f32 %v1634, %v1635
      %v1637 = vrot.slane %v1636, 2
      %v1638 = vadd.f32 %v1636, %v1637
      %v1639 = vrot.slane %v1638, 1
      %v1640 = vadd.f32 %v1638, %v1639
      %v1641 = vmul.f32 %v1061, %v1061
      %v1642 = vmul.f32 %v1064, %v1064
      %v1643 = vmul.f32 %v1069, %v1069
      %v1644 = vmul.f32 %v1072, %v1072
      %v1645 = vmul.f32 %v1077, %v1077
      %v1646 = vmul.f32 %v1080, %v1080
      %v1647 = vmul.f32 %v1085, %v1085
      %v1648 = vmul.f32 %v1088, %v1088
      %v1649 = vmul.f32 %v1093, %v1093
      %v1650 = vmul.f32 %v1096, %v1096
      %v1651 = vmul.f32 %v1101, %v1101
      %v1652 = vmul.f32 %v1104, %v1104
      %v1653 = vmul.f32 %v1109, %v1109
      %v1654 = vmul.f32 %v1112, %v1112
      %v1655 = vmul.f32 %v1117, %v1117
      %v1656 = vmul.f32 %v1120, %v1120
      %v1657 = vmul.f32 %v1125, %v1125
      %v1658 = vmul.f32 %v1128, %v1128
      %v1659 = vmul.f32 %v1133, %v1133
      %v1660 = vmul.f32 %v1136, %v1136
      %v1661 = vmul.f32 %v1141, %v1141
      %v1662 = vmul.f32 %v1144, %v1144
      %v1663 = vmul.f32 %v1149, %v1149
      %v1664 = vmul.f32 %v1152, %v1152
      %v1665 = vmul.f32 %v1157, %v1157
      %v1666 = vmul.f32 %v1160, %v1160
      %v1667 = vmul.f32 %v1165, %v1165
      %v1668 = vmul.f32 %v1168, %v1168
      %v1669 = vmul.f32 %v1173, %v1173
      %v1670 = vmul.f32 %v1176, %v1176
      %v1671 = vmul.f32 %v1181, %v1181
      %v1672 = vmul.f32 %v1184, %v1184
      %v1673 = vsel %vm793, %v1641, 0.0
      %v1674 = vsel %vm793, %v1642, 0.0
      %v1675 = vadd.f32 %v1673, %v1674
      %v1676 = vsel %vm793, %v1643, 0.0
      %v1677 = vadd.f32 %v1675, %v1676
      %v1678 = vsel %vm793, %v1644, 0.0
      %v1679 = vadd.f32 %v1677, %v1678
      %v1680 = vsel %vm793, %v1645, 0.0
      %v1681 = vadd.f32 %v1679, %v1680
      %v1682 = vsel %vm793, %v1646, 0.0
      %v1683 = vadd.f32 %v1681, %v1682
      %v1684 = vsel %vm793, %v1647, 0.0
      %v1685 = vadd.f32 %v1683, %v1684
      %v1686 = vsel %vm793, %v1648, 0.0
      %v1687 = vadd.f32 %v1685, %v1686
      %v1688 = vsel %vm793, %v1649, 0.0
      %v1689 = vadd.f32 %v1687, %v1688
      %v1690 = vsel %vm793, %v1650, 0.0
      %v1691 = vadd.f32 %v1689, %v1690
      %v1692 = vsel %vm793, %v1651, 0.0
      %v1693 = vadd.f32 %v1691, %v1692
      %v1694 = vsel %vm793, %v1652, 0.0
      %v1695 = vadd.f32 %v1693, %v1694
      %v1696 = vsel %vm793, %v1653, 0.0
      %v1697 = vadd.f32 %v1695, %v1696
      %v1698 = vsel %vm793, %v1654, 0.0
      %v1699 = vadd.f32 %v1697, %v1698
      %v1700 = vsel %vm793, %v1655, 0.0
      %v1701 = vadd.f32 %v1699, %v1700
      %v1702 = vsel %vm793, %v1656, 0.0
      %v1703 = vadd.f32 %v1701, %v1702
      %v1704 = vsel %vm793, %v1657, 0.0
      %v1705 = vadd.f32 %v1703, %v1704
      %v1706 = vsel %vm793, %v1658, 0.0
      %v1707 = vadd.f32 %v1705, %v1706
      %v1708 = vsel %vm793, %v1659, 0.0
      %v1709 = vadd.f32 %v1707, %v1708
      %v1710 = vsel %vm793, %v1660, 0.0
      %v1711 = vadd.f32 %v1709, %v1710
      %v1712 = vsel %vm793, %v1661, 0.0
      %v1713 = vadd.f32 %v1711, %v1712
      %v1714 = vsel %vm793, %v1662, 0.0
      %v1715 = vadd.f32 %v1713, %v1714
      %v1716 = vsel %vm793, %v1663, 0.0
      %v1717 = vadd.f32 %v1715, %v1716
      %v1718 = vsel %vm793, %v1664, 0.0
      %v1719 = vadd.f32 %v1717, %v1718
      %v1720 = vsel %vm793, %v1665, 0.0
      %v1721 = vadd.f32 %v1719, %v1720
      %v1722 = vsel %vm793, %v1666, 0.0
      %v1723 = vadd.f32 %v1721, %v1722
      %v1724 = vsel %vm793, %v1667, 0.0
      %v1725 = vadd.f32 %v1723, %v1724
      %v1726 = vsel %vm793, %v1668, 0.0
      %v1727 = vadd.f32 %v1725, %v1726
      %v1728 = vsel %vm793, %v1669, 0.0
      %v1729 = vadd.f32 %v1727, %v1728
      %v1730 = vsel %vm793, %v1670, 0.0
      %v1731 = vadd.f32 %v1729, %v1730
      %v1732 = vsel %vm793, %v1671, 0.0
      %v1733 = vadd.f32 %v1731, %v1732
      %v1734 = vsel %vm793, %v1672, 0.0
      %v1735 = vadd.f32 %v1733, %v1734
      %v1736 = vrot.slane %v1735, 4
      %v1737 = vadd.f32 %v1735, %v1736
      %v1738 = vrot.slane %v1737, 2
      %v1739 = vadd.f32 %v1737, %v1738
      %v1740 = vrot.slane %v1739, 1
      %v1741 = vadd.f32 %v1739, %v1740
      %v1742 = vmul.f32 %v1640, %v1640
      %v1743 = vmul.f32 %v1742, 0.00390625
      %v1744 = vsub.f32 %v1741, %v1743
      %v1745 = vmul.f32 %v1744, 0.003921569
      %v1746 = vadd.f32 %v1570, %v1745
      %v1747 = vadd.f32 %v1571, %v1745
      %v1748 = vld [vmem:[%s6] sm:$0xf]
      %v1749 = vld [vmem:[%s6 + $0x4] sm:$0xf]
      %v1750 = vld [vmem:[%s6 + $0x8] sm:$0xf]
      %v1751 = vld [vmem:[%s6 + $0xc] sm:$0xf]
      %v1754 = vcombine.low %v1746, %v1747
      %v1756 = vunpack.c.l.s4 1983009808
      %v1757 = vunpack.c.0.s8 %v1756
      %v1758 = vlaneseq
      %v1759 = vshrl.u32 %v1758, 7
      %v1760 = vsub.s32 %v1757, %v1759
      %v1761 = vrot.slane %v1754, %v1760
      %v1763 = vpack.c.bf16 %v1761, %v1761
      %v1764 = vld [vmem:[%s7] sm:$0x1]
      %v1766 = vlaneseq
      %v1767 = vshrl.u32 %v1766, 7
      %v1768 = vsub.s32 0, %v1767
      %v1769 = vrot.slane %v1764, %v1768
      %v1775 = vunpack.c.l.b16 %v1748
      %v1776 = vunpack.c.l.b16 %v1749
      %v1777 = vunpack.c.l.b16 %v1750
      %v1778 = vunpack.c.l.b16 %v1751
      %v1779 = vpack.c.b16 %v1776, %v1775
      %v1780 = vpack.c.b16 %v1778, %v1777
      %v1784 = vsel %vm793, %v1763, 0
      %1786 = vmatprep.subr.bf16.mxu0 0
      %1787 = vmatpush1.bf16.msra.mxu0 0
      %1788 = vmatprep.subr.bf16.mxu0 0
      %1789 = vmatpush1.bf16.msra.mxu0 0
      %1790 = vmatprep.subr.bf16.mxu0 0
      %1791 = vmatpush1.bf16.msra.mxu0 0
      %1792 = vmatprep.subr.bf16.mxu0 0
      %1793 = vmatpush1.bf16.msra.mxu0 0
      %1794 = vmatprep.subr.bf16.mxu0 0
      %1795 = vmatpush1.bf16.msra.mxu0 0
      %1796 = vmatprep.subr.bf16.mxu0 0
      %1797 = vmatpush1.bf16.msra.mxu0 0
      %1798 = vmatprep.subr.bf16.mxu0 0
      %1799 = vmatpush1.bf16.msra.mxu0 %v1780
      %1800 = vmatprep.subr.bf16.mxu0 0
      %1801 = vmatpush1.bf16.msra.mxu0 %v1779
      %1802 = vmatprep.subr.bf16.mxu0 0
      %1803 = vmatpush2.bf16.msra.mxu0 0
      %1804 = vmatprep.subr.bf16.mxu0 0
      %1805 = vmatpush2.bf16.msra.mxu0 0
      %1806 = vmatprep.subr.bf16.mxu0 0
      %1807 = vmatpush2.bf16.msra.mxu0 0
      %1808 = vmatprep.subr.bf16.mxu0 0
      %1809 = vmatpush2.bf16.msra.mxu0 0
      %1810 = vmatprep.subr.bf16.mxu0 0
      %1811 = vmatpush2.bf16.msra.mxu0 0
      %1812 = vmatprep.subr.bf16.mxu0 0
      %1813 = vmatpush2.bf16.msra.mxu0 0
      %1814 = vmatprep.subr.bf16.mxu0 0
      %1815 = vmatpush2.bf16.msra.mxu0 0
      %1816 = vmatprep.subr.bf16.mxu0 0
      %1817 = vmatpush2.bf16.msra.mxu0 0
      %1818 = vmatprep.mubr.bf16.mxu0 0
      %1819 = vmatmul.mubr.bf16.gmra.mxu0 %v1784
      %v1820 = vpop.f32.mrf.mxu0
      %v1821 = vadd.f32 %v1769, %v1820
      %v1822 = vpop.f32.mrf.mxu0
      %v1823 = vpop.f32.mrf.mxu0
      %v1824 = vpop.f32.mrf.mxu0
      %1825 = vdwg.mxu0
      %v1826 = vmul.f32 %v1821, 0.70710677
      %vm1827 = vcmp.ge.f32.partialorder %v1826, 0.0
      %v1828 = vsel %vm1827, 1.0, -1.0
      %v1829 = vand.u32 2147483647, %v1826
      %v1830 = vmul.f32 %v1829, 0.3275911
      %v1831 = vadd.f32 %v1830, 1.0
      %v1832 = vrcp.pop %v1831
      %v1833 = vmul.f32 1.0, %v1832
      %v1834 = vmul.f32 %v1833, 1.0614054
      %v1835 = vadd.f32 %v1834, -1.4531521
      %v1836 = vmul.f32 %v1835, %v1833
      %v1837 = vadd.f32 %v1836, 1.4214138
      %v1838 = vmul.f32 %v1837, %v1833
      %v1839 = vadd.f32 %v1838, -0.28449672
      %v1840 = vmul.f32 %v1839, %v1833
      %v1841 = vadd.f32 %v1840, 0.2548296
      %v1842 = vmul.f32 %v1841, %v1833
      %v1843 = vsub.f32 0.0, %v1829
      %v1844 = vmul.f32 %v1843, %v1829
      %v1845 = vmul.f32 %v1844, 1.442695
      %v1846 = vpow.pop %v1845
      %v1847 = vmul.f32 %v1842, %v1846
      %v1848 = vsub.f32 1.0, %v1847
      %v1849 = vmul.f32 %v1828, %v1848
      %v1850 = vmul.f32 %v1821, 0.5
      %v1851 = vadd.f32 %v1849, 1.0
      %v1852 = vmul.f32 %v1850, %v1851
      %v1853 = vld [vmem:[%s12] sm:$0xff]
      %v1854 = vld [vmem:[%s12 + $0x8] sm:$0x1]
      %v1855 = vld [vmem:[%s13] sm:$0xff]
      %v1856 = vld [vmem:[%s13 + $0x8] sm:$0x1]
      %v1857 = vld [vmem:[%s14] sm:$0x1]
      %v1858 = vld [vmem:[%s15] sm:$0x1]
      %v1891 = vrot.slane %v877, 7
      %v1892 = vrot.slane %v880, 7
      %v1893 = vsel %vm1451, %v1891, %v1892
      %v1894 = vrot.slane %v885, 7
      %v1895 = vrot.slane %v888, 7
      %v1896 = vsel %vm1451, %v1894, %v1895
      %v1897 = vrot.slane %v893, 7
      %v1898 = vrot.slane %v896, 7
      %v1899 = vsel %vm1451, %v1897, %v1898
      %v1900 = vrot.slane %v901, 7
      %v1901 = vrot.slane %v904, 7
      %v1902 = vsel %vm1451, %v1900, %v1901
      %v1903 = vrot.slane %v909, 7
      %v1904 = vrot.slane %v912, 7
      %v1905 = vsel %vm1451, %v1903, %v1904
      %v1906 = vrot.slane %v917, 7
      %v1907 = vrot.slane %v920, 7
      %v1908 = vsel %vm1451, %v1906, %v1907
      %v1909 = vrot.slane %v925, 7
      %v1910 = vrot.slane %v928, 7
      %v1911 = vsel %vm1451, %v1909, %v1910
      %v1912 = vrot.slane %v933, 7
      %v1913 = vrot.slane %v936, 7
      %v1914 = vsel %vm1451, %v1912, %v1913
      %v1915 = vrot.slane %v941, 7
      %v1916 = vrot.slane %v944, 7
      %v1917 = vsel %vm1451, %v1915, %v1916
      %v1918 = vrot.slane %v949, 7
      %v1919 = vrot.slane %v952, 7
      %v1920 = vsel %vm1451, %v1918, %v1919
      %v1921 = vrot.slane %v957, 7
      %v1922 = vrot.slane %v960, 7
      %v1923 = vsel %vm1451, %v1921, %v1922
      %v1924 = vrot.slane %v965, 7
      %v1925 = vrot.slane %v968, 7
      %v1926 = vsel %vm1451, %v1924, %v1925
      %v1927 = vrot.slane %v973, 7
      %v1928 = vrot.slane %v976, 7
      %v1929 = vsel %vm1451, %v1927, %v1928
      %v1930 = vrot.slane %v981, 7
      %v1931 = vrot.slane %v984, 7
      %v1932 = vsel %vm1451, %v1930, %v1931
      %v1933 = vrot.slane %v989, 7
      %v1934 = vrot.slane %v992, 7
      %v1935 = vsel %vm1451, %v1933, %v1934
      %v1936 = vrot.slane %v997, 7
      %v1937 = vrot.slane %v1000, 7
      %v1938 = vsel %vm1451, %v1936, %v1937
      %v1987 = vsel %vm1451, 0.0, %v1891
      %v1988 = vsel %vm1451, 0.0, %v1894
      %v1989 = vsel %vm1451, 0.0, %v1897
      %v1990 = vsel %vm1451, 0.0, %v1900
      %v1991 = vsel %vm1451, 0.0, %v1903
      %v1992 = vsel %vm1451, 0.0, %v1906
      %v1993 = vsel %vm1451, 0.0, %v1909
      %v1994 = vsel %vm1451, 0.0, %v1912
      %v1995 = vsel %vm1451, 0.0, %v1915
      %v1996 = vsel %vm1451, 0.0, %v1918
      %v1997 = vsel %vm1451, 0.0, %v1921
      %v1998 = vsel %vm1451, 0.0, %v1924
      %v1999 = vsel %vm1451, 0.0, %v1927
      %v2000 = vsel %vm1451, 0.0, %v1930
      %v2001 = vsel %vm1451, 0.0, %v1933
      %v2002 = vsel %vm1451, 0.0, %v1936
      %v2003 = vsel %vm1451, %v1892, 0.0
      %v2004 = vsel %vm1451, %v1895, 0.0
      %v2005 = vsel %vm1451, %v1898, 0.0
      %v2006 = vsel %vm1451, %v1901, 0.0
      %v2007 = vsel %vm1451, %v1904, 0.0
      %v2008 = vsel %vm1451, %v1907, 0.0
      %v2009 = vsel %vm1451, %v1910, 0.0
      %v2010 = vsel %vm1451, %v1913, 0.0
      %v2011 = vsel %vm1451, %v1916, 0.0
      %v2012 = vsel %vm1451, %v1919, 0.0
      %v2013 = vsel %vm1451, %v1922, 0.0
      %v2014 = vsel %vm1451, %v1925, 0.0
      %v2015 = vsel %vm1451, %v1928, 0.0
      %v2016 = vsel %vm1451, %v1931, 0.0
      %v2017 = vsel %vm1451, %v1934, 0.0
      %v2018 = vsel %vm1451, %v1937, 0.0
      %v2020 = vlaneseq
      %v2021 = vshrl.u32 %v2020, 7
      %v2022 = vsub.s32 0, %v2021
      %v2023 = vrot.slane %v1857, %v2022
      %v2025 = vadd.f32 %v2023, 0.0
      %v2027 = vlaneseq
      %v2028 = vshrl.u32 %v2027, 7
      %v2029 = vsub.s32 0, %v2028
      %v2030 = vrot.slane %v1858, %v2029
      %v2032 = vadd.f32 %v2030, 0.0
      %v2033 = vlaneseq
      %v2034 = vshrl.u32 %v2033, 7
      %v2035 = vsub.s32 0, %v2034
      %v2036 = vrot.slane %v1853, %v2035
      %v2037 = vmul.f32 %v2036, 0.0
      %v2038 = vmul.f32 %v1987, %v2036
      %v2039 = vmul.f32 %v1893, %v2036
      %v2040 = vmul.f32 %v1988, %v2036
      %v2041 = vmul.f32 %v1896, %v2036
      %v2042 = vmul.f32 %v1989, %v2036
      %v2043 = vmul.f32 %v1899, %v2036
      %v2044 = vmul.f32 %v1990, %v2036
      %v2045 = vmul.f32 %v1902, %v2036
      %v2046 = vmul.f32 %v1991, %v2036
      %v2047 = vmul.f32 %v1905, %v2036
      %v2048 = vmul.f32 %v1992, %v2036
      %v2049 = vmul.f32 %v1908, %v2036
      %v2050 = vmul.f32 %v1993, %v2036
      %v2051 = vmul.f32 %v1911, %v2036
      %v2052 = vmul.f32 %v1994, %v2036
      %v2053 = vmul.f32 %v1914, %v2036
      %v2054 = vmul.f32 %v1995, %v2036
      %v2055 = vmul.f32 %v1917, %v2036
      %v2056 = vmul.f32 %v1996, %v2036
      %v2057 = vmul.f32 %v1920, %v2036
      %v2058 = vmul.f32 %v1997, %v2036
      %v2059 = vmul.f32 %v1923, %v2036
      %v2060 = vmul.f32 %v1998, %v2036
      %v2061 = vmul.f32 %v1926, %v2036
      %v2062 = vmul.f32 %v1999, %v2036
      %v2063 = vmul.f32 %v1929, %v2036
      %v2064 = vmul.f32 %v2000, %v2036
      %v2065 = vmul.f32 %v1932, %v2036
      %v2066 = vmul.f32 %v2001, %v2036
      %v2067 = vmul.f32 %v1935, %v2036
      %v2068 = vadd.f32 %v2025, %v2037
      %v2069 = vadd.f32 %v2025, %v2038
      %v2070 = vadd.f32 %v2025, %v2039
      %v2071 = vadd.f32 %v2025, %v2040
      %v2072 = vadd.f32 %v2025, %v2041
      %v2073 = vadd.f32 %v2025, %v2042
      %v2074 = vadd.f32 %v2025, %v2043
      %v2075 = vadd.f32 %v2025, %v2044
      %v2076 = vadd.f32 %v2025, %v2045
      %v2077 = vadd.f32 %v2025, %v2046
      %v2078 = vadd.f32 %v2025, %v2047
      %v2079 = vadd.f32 %v2025, %v2048
      %v2080 = vadd.f32 %v2025, %v2049
      %v2081 = vadd.f32 %v2025, %v2050
      %v2082 = vadd.f32 %v2025, %v2051
      %v2083 = vadd.f32 %v2025, %v2052
      %v2084 = vadd.f32 %v2025, %v2053
      %v2085 = vadd.f32 %v2025, %v2054
      %v2086 = vadd.f32 %v2025, %v2055
      %v2087 = vadd.f32 %v2025, %v2056
      %v2088 = vadd.f32 %v2025, %v2057
      %v2089 = vadd.f32 %v2025, %v2058
      %v2090 = vadd.f32 %v2025, %v2059
      %v2091 = vadd.f32 %v2025, %v2060
      %v2092 = vadd.f32 %v2025, %v2061
      %v2093 = vadd.f32 %v2025, %v2062
      %v2094 = vadd.f32 %v2025, %v2063
      %v2095 = vadd.f32 %v2025, %v2064
      %v2096 = vadd.f32 %v2025, %v2065
      %v2097 = vadd.f32 %v2025, %v2066
      %v2098 = vadd.f32 %v2025, %v2067
      %v2099 = vlaneseq
      %v2100 = vshrl.u32 %v2099, 7
      %v2101 = vsub.s32 0, %v2100
      %v2102 = vrot.slane %v1855, %v2101
      %v2103 = vmul.f32 %v2102, 0.0
      %v2104 = vmul.f32 %v1987, %v2102
      %v2105 = vmul.f32 %v1893, %v2102
      %v2106 = vmul.f32 %v1988, %v2102
      %v2107 = vmul.f32 %v1896, %v2102
      %v2108 = vmul.f32 %v1989, %v2102
      %v2109 = vmul.f32 %v1899, %v2102
      %v2110 = vmul.f32 %v1990, %v2102
      %v2111 = vmul.f32 %v1902, %v2102
      %v2112 = vmul.f32 %v1991, %v2102
      %v2113 = vmul.f32 %v1905, %v2102
      %v2114 = vmul.f32 %v1992, %v2102
      %v2115 = vmul.f32 %v1908, %v2102
      %v2116 = vmul.f32 %v1993, %v2102
      %v2117 = vmul.f32 %v1911, %v2102
      %v2118 = vmul.f32 %v1994, %v2102
      %v2119 = vmul.f32 %v1914, %v2102
      %v2120 = vmul.f32 %v1995, %v2102
      %v2121 = vmul.f32 %v1917, %v2102
      %v2122 = vmul.f32 %v1996, %v2102
      %v2123 = vmul.f32 %v1920, %v2102
      %v2124 = vmul.f32 %v1997, %v2102
      %v2125 = vmul.f32 %v1923, %v2102
      %v2126 = vmul.f32 %v1998, %v2102
      %v2127 = vmul.f32 %v1926, %v2102
      %v2128 = vmul.f32 %v1999, %v2102
      %v2129 = vmul.f32 %v1929, %v2102
      %v2130 = vmul.f32 %v2000, %v2102
      %v2131 = vmul.f32 %v1932, %v2102
      %v2132 = vmul.f32 %v2001, %v2102
      %v2133 = vmul.f32 %v1935, %v2102
      %v2134 = vadd.f32 %v2032, %v2103
      %v2135 = vadd.f32 %v2032, %v2104
      %v2136 = vadd.f32 %v2032, %v2105
      %v2137 = vadd.f32 %v2032, %v2106
      %v2138 = vadd.f32 %v2032, %v2107
      %v2139 = vadd.f32 %v2032, %v2108
      %v2140 = vadd.f32 %v2032, %v2109
      %v2141 = vadd.f32 %v2032, %v2110
      %v2142 = vadd.f32 %v2032, %v2111
      %v2143 = vadd.f32 %v2032, %v2112
      %v2144 = vadd.f32 %v2032, %v2113
      %v2145 = vadd.f32 %v2032, %v2114
      %v2146 = vadd.f32 %v2032, %v2115
      %v2147 = vadd.f32 %v2032, %v2116
      %v2148 = vadd.f32 %v2032, %v2117
      %v2149 = vadd.f32 %v2032, %v2118
      %v2150 = vadd.f32 %v2032, %v2119
      %v2151 = vadd.f32 %v2032, %v2120
      %v2152 = vadd.f32 %v2032, %v2121
      %v2153 = vadd.f32 %v2032, %v2122
      %v2154 = vadd.f32 %v2032, %v2123
      %v2155 = vadd.f32 %v2032, %v2124
      %v2156 = vadd.f32 %v2032, %v2125
      %v2157 = vadd.f32 %v2032, %v2126
      %v2158 = vadd.f32 %v2032, %v2127
      %v2159 = vadd.f32 %v2032, %v2128
      %v2160 = vadd.f32 %v2032, %v2129
      %v2161 = vadd.f32 %v2032, %v2130
      %v2162 = vadd.f32 %v2032, %v2131
      %v2163 = vadd.f32 %v2032, %v2132
      %v2164 = vadd.f32 %v2032, %v2133
      %v2165 = vlaneseq
      %v2166 = vshrl.u32 %v2165, 7
      %v2167 = vsub.s32 1, %v2166
      %v2168 = vrot.slane %v1853, %v2167
      %v2169 = vmul.f32 %v2168, 0.0
      %v2170 = vmul.f32 %v1987, %v2168
      %v2171 = vmul.f32 %v1893, %v2168
      %v2172 = vmul.f32 %v2003, %v2168
      %v2173 = vmul.f32 %v1988, %v2168
      %v2174 = vmul.f32 %v1896, %v2168
      %v2175 = vmul.f32 %v2004, %v2168
      %v2176 = vmul.f32 %v1989, %v2168
      %v2177 = vmul.f32 %v1899, %v2168
      %v2178 = vmul.f32 %v2005, %v2168
      %v2179 = vmul.f32 %v1990, %v2168
      %v2180 = vmul.f32 %v1902, %v2168
      %v2181 = vmul.f32 %v2006, %v2168
      %v2182 = vmul.f32 %v1991, %v2168
      %v2183 = vmul.f32 %v1905, %v2168
      %v2184 = vmul.f32 %v2007, %v2168
      %v2185 = vmul.f32 %v1992, %v2168
      %v2186 = vmul.f32 %v1908, %v2168
      %v2187 = vmul.f32 %v2008, %v2168
      %v2188 = vmul.f32 %v1993, %v2168
      %v2189 = vmul.f32 %v1911, %v2168
      %v2190 = vmul.f32 %v2009, %v2168
      %v2191 = vmul.f32 %v1994, %v2168
      %v2192 = vmul.f32 %v1914, %v2168
      %v2193 = vmul.f32 %v2010, %v2168
      %v2194 = vmul.f32 %v1995, %v2168
      %v2195 = vmul.f32 %v1917, %v2168
      %v2196 = vmul.f32 %v2011, %v2168
      %v2197 = vmul.f32 %v1996, %v2168
      %v2198 = vmul.f32 %v1920, %v2168
      %v2199 = vmul.f32 %v2012, %v2168
      %v2200 = vmul.f32 %v1997, %v2168
      %v2201 = vmul.f32 %v1923, %v2168
      %v2202 = vmul.f32 %v2013, %v2168
      %v2203 = vmul.f32 %v1998, %v2168
      %v2204 = vmul.f32 %v1926, %v2168
      %v2205 = vmul.f32 %v2014, %v2168
      %v2206 = vmul.f32 %v1999, %v2168
      %v2207 = vmul.f32 %v1929, %v2168
      %v2208 = vmul.f32 %v2015, %v2168
      %v2209 = vmul.f32 %v2000, %v2168
      %v2210 = vmul.f32 %v1932, %v2168
      %v2211 = vmul.f32 %v2016, %v2168
      %v2212 = vmul.f32 %v2001, %v2168
      %v2213 = vmul.f32 %v1935, %v2168
      %v2214 = vmul.f32 %v2017, %v2168
      %vm2261 = vcmask 1046528
      %v2262 = vrot.slane %v2169, 1
      %v2263 = vsel %vm2261, %v2262, %v2262
      %v2264 = vrot.slane %v2170, 1
      %v2265 = vrot.slane %v2171, 1
      %v2266 = vsel %vm2261, %v2264, %v2265
      %v2267 = vrot.slane %v2172, 1
      %v2268 = vsel %vm2261, %v2265, %v2267
      %v2269 = vrot.slane %v2173, 1
      %v2270 = vrot.slane %v2174, 1
      %v2271 = vsel %vm2261, %v2269, %v2270
      %v2272 = vrot.slane %v2175, 1
      %v2273 = vsel %vm2261, %v2270, %v2272
      %v2274 = vrot.slane %v2176, 1
      %v2275 = vrot.slane %v2177, 1
      %v2276 = vsel %vm2261, %v2274, %v2275
      %v2277 = vrot.slane %v2178, 1
      %v2278 = vsel %vm2261, %v2275, %v2277
      %v2279 = vrot.slane %v2179, 1
      %v2280 = vrot.slane %v2180, 1
      %v2281 = vsel %vm2261, %v2279, %v2280
      %v2282 = vrot.slane %v2181, 1
      %v2283 = vsel %vm2261, %v2280, %v2282
      %v2284 = vrot.slane %v2182, 1
      %v2285 = vrot.slane %v2183, 1
      %v2286 = vsel %vm2261, %v2284, %v2285
      %v2287 = vrot.slane %v2184, 1
      %v2288 = vsel %vm2261, %v2285, %v2287
      %v2289 = vrot.slane %v2185, 1
      %v2290 = vrot.slane %v2186, 1
      %v2291 = vsel %vm2261, %v2289, %v2290
      %v2292 = vrot.slane %v2187, 1
      %v2293 = vsel %vm2261, %v2290, %v2292
      %v2294 = vrot.slane %v2188, 1
      %v2295 = vrot.slane %v2189, 1
      %v2296 = vsel %vm2261, %v2294, %v2295
      %v2297 = vrot.slane %v2190, 1
      %v2298 = vsel %vm2261, %v2295, %v2297
      %v2299 = vrot.slane %v2191, 1
      %v2300 = vrot.slane %v2192, 1
      %v2301 = vsel %vm2261, %v2299, %v2300
      %v2302 = vrot.slane %v2193, 1
      %v2303 = vsel %vm2261, %v2300, %v2302
      %v2304 = vrot.slane %v2194, 1
      %v2305 = vrot.slane %v2195, 1
      %v2306 = vsel %vm2261, %v2304, %v2305
      %v2307 = vrot.slane %v2196, 1
      %v2308 = vsel %vm2261, %v2305, %v2307
      %v2309 = vrot.slane %v2197, 1
      %v2310 = vrot.slane %v2198, 1
      %v2311 = vsel %vm2261, %v2309, %v2310
      %v2312 = vrot.slane %v2199, 1
      %v2313 = vsel %vm2261, %v2310, %v2312
      %v2314 = vrot.slane %v2200, 1
      %v2315 = vrot.slane %v2201, 1
      %v2316 = vsel %vm2261, %v2314, %v2315
      %v2317 = vrot.slane %v2202, 1
      %v2318 = vsel %vm2261, %v2315, %v2317
      %v2319 = vrot.slane %v2203, 1
      %v2320 = vrot.slane %v2204, 1
      %v2321 = vsel %vm2261, %v2319, %v2320
      %v2322 = vrot.slane %v2205, 1
      %v2323 = vsel %vm2261, %v2320, %v2322
      %v2324 = vrot.slane %v2206, 1
      %v2325 = vrot.slane %v2207, 1
      %v2326 = vsel %vm2261, %v2324, %v2325
      %v2327 = vrot.slane %v2208, 1
      %v2328 = vsel %vm2261, %v2325, %v2327
      %v2329 = vrot.slane %v2209, 1
      %v2330 = vrot.slane %v2210, 1
      %v2331 = vsel %vm2261, %v2329, %v2330
      %v2332 = vrot.slane %v2211, 1
      %v2333 = vsel %vm2261, %v2330, %v2332
      %v2334 = vrot.slane %v2212, 1
      %v2335 = vrot.slane %v2213, 1
      %v2336 = vsel %vm2261, %v2334, %v2335
      %v2337 = vrot.slane %v2214, 1
      %v2338 = vsel %vm2261, %v2335, %v2337
      %v2370 = vadd.f32 %v2068, %v2263
      %v2371 = vadd.f32 %v2069, %v2266
      %v2372 = vadd.f32 %v2070, %v2268
      %v2373 = vadd.f32 %v2071, %v2271
      %v2374 = vadd.f32 %v2072, %v2273
      %v2375 = vadd.f32 %v2073, %v2276
      %v2376 = vadd.f32 %v2074, %v2278
      %v2377 = vadd.f32 %v2075, %v2281
      %v2378 = vadd.f32 %v2076, %v2283
      %v2379 = vadd.f32 %v2077, %v2286
      %v2380 = vadd.f32 %v2078, %v2288
      %v2381 = vadd.f32 %v2079, %v2291
      %v2382 = vadd.f32 %v2080, %v2293
      %v2383 = vadd.f32 %v2081, %v2296
      %v2384 = vadd.f32 %v2082, %v2298
      %v2385 = vadd.f32 %v2083, %v2301
      %v2386 = vadd.f32 %v2084, %v2303
      %v2387 = vadd.f32 %v2085, %v2306
      %v2388 = vadd.f32 %v2086, %v2308
      %v2389 = vadd.f32 %v2087, %v2311
      %v2390 = vadd.f32 %v2088, %v2313
      %v2391 = vadd.f32 %v2089, %v2316
      %v2392 = vadd.f32 %v2090, %v2318
      %v2393 = vadd.f32 %v2091, %v2321
      %v2394 = vadd.f32 %v2092, %v2323
      %v2395 = vadd.f32 %v2093, %v2326
      %v2396 = vadd.f32 %v2094, %v2328
      %v2397 = vadd.f32 %v2095, %v2331
      %v2398 = vadd.f32 %v2096, %v2333
      %v2399 = vadd.f32 %v2097, %v2336
      %v2400 = vadd.f32 %v2098, %v2338
      %v2401 = vlaneseq
      %v2402 = vshrl.u32 %v2401, 7
      %v2403 = vsub.s32 1, %v2402
      %v2404 = vrot.slane %v1855, %v2403
      %v2405 = vmul.f32 %v2404, 0.0
      %v2406 = vmul.f32 %v1987, %v2404
      %v2407 = vmul.f32 %v1893, %v2404
      %v2408 = vmul.f32 %v2003, %v2404
      %v2409 = vmul.f32 %v1988, %v2404
      %v2410 = vmul.f32 %v1896, %v2404
      %v2411 = vmul.f32 %v2004, %v2404
      %v2412 = vmul.f32 %v1989, %v2404
      %v2413 = vmul.f32 %v1899, %v2404
      %v2414 = vmul.f32 %v2005, %v2404
      %v2415 = vmul.f32 %v1990, %v2404
      %v2416 = vmul.f32 %v1902, %v2404
      %v2417 = vmul.f32 %v2006, %v2404
      %v2418 = vmul.f32 %v1991, %v2404
      %v2419 = vmul.f32 %v1905, %v2404
      %v2420 = vmul.f32 %v2007, %v2404
      %v2421 = vmul.f32 %v1992, %v2404
      %v2422 = vmul.f32 %v1908, %v2404
      %v2423 = vmul.f32 %v2008, %v2404
      %v2424 = vmul.f32 %v1993, %v2404
      %v2425 = vmul.f32 %v1911, %v2404
      %v2426 = vmul.f32 %v2009, %v2404
      %v2427 = vmul.f32 %v1994, %v2404
      %v2428 = vmul.f32 %v1914, %v2404
      %v2429 = vmul.f32 %v2010, %v2404
      %v2430 = vmul.f32 %v1995, %v2404
      %v2431 = vmul.f32 %v1917, %v2404
      %v2432 = vmul.f32 %v2011, %v2404
      %v2433 = vmul.f32 %v1996, %v2404
      %v2434 = vmul.f32 %v1920, %v2404
      %v2435 = vmul.f32 %v2012, %v2404
      %v2436 = vmul.f32 %v1997, %v2404
      %v2437 = vmul.f32 %v1923, %v2404
      %v2438 = vmul.f32 %v2013, %v2404
      %v2439 = vmul.f32 %v1998, %v2404
      %v2440 = vmul.f32 %v1926, %v2404
      %v2441 = vmul.f32 %v2014, %v2404
      %v2442 = vmul.f32 %v1999, %v2404
      %v2443 = vmul.f32 %v1929, %v2404
      %v2444 = vmul.f32 %v2015, %v2404
      %v2445 = vmul.f32 %v2000, %v2404
      %v2446 = vmul.f32 %v1932, %v2404
      %v2447 = vmul.f32 %v2016, %v2404
      %v2448 = vmul.f32 %v2001, %v2404
      %v2449 = vmul.f32 %v1935, %v2404
      %v2450 = vmul.f32 %v2017, %v2404
      %v2497 = vrot.slane %v2405, 1
      %v2498 = vsel %vm2261, %v2497, %v2497
      %v2499 = vrot.slane %v2406, 1
      %v2500 = vrot.slane %v2407, 1
      %v2501 = vsel %vm2261, %v2499, %v2500
      %v2502 = vrot.slane %v2408, 1
      %v2503 = vsel %vm2261, %v2500, %v2502
      %v2504 = vrot.slane %v2409, 1
      %v2505 = vrot.slane %v2410, 1
      %v2506 = vsel %vm2261, %v2504, %v2505
      %v2507 = vrot.slane %v2411, 1
      %v2508 = vsel %vm2261, %v2505, %v2507
      %v2509 = vrot.slane %v2412, 1
      %v2510 = vrot.slane %v2413, 1
      %v2511 = vsel %vm2261, %v2509, %v2510
      %v2512 = vrot.slane %v2414, 1
      %v2513 = vsel %vm2261, %v2510, %v2512
      %v2514 = vrot.slane %v2415, 1
      %v2515 = vrot.slane %v2416, 1
      %v2516 = vsel %vm2261, %v2514, %v2515
      %v2517 = vrot.slane %v2417, 1
      %v2518 = vsel %vm2261, %v2515, %v2517
      %v2519 = vrot.slane %v2418, 1
      %v2520 = vrot.slane %v2419, 1
      %v2521 = vsel %vm2261, %v2519, %v2520
      %v2522 = vrot.slane %v2420, 1
      %v2523 = vsel %vm2261, %v2520, %v2522
      %v2524 = vrot.slane %v2421, 1
      %v2525 = vrot.slane %v2422, 1
      %v2526 = vsel %vm2261, %v2524, %v2525
      %v2527 = vrot.slane %v2423, 1
      %v2528 = vsel %vm2261, %v2525, %v2527
      %v2529 = vrot.slane %v2424, 1
      %v2530 = vrot.slane %v2425, 1
      %v2531 = vsel %vm2261, %v2529, %v2530
      %v2532 = vrot.slane %v2426, 1
      %v2533 = vsel %vm2261, %v2530, %v2532
      %v2534 = vrot.slane %v2427, 1
      %v2535 = vrot.slane %v2428, 1
      %v2536 = vsel %vm2261, %v2534, %v2535
      %v2537 = vrot.slane %v2429, 1
      %v2538 = vsel %vm2261, %v2535, %v2537
      %v2539 = vrot.slane %v2430, 1
      %v2540 = vrot.slane %v2431, 1
      %v2541 = vsel %vm2261, %v2539, %v2540
      %v2542 = vrot.slane %v2432, 1
      %v2543 = vsel %vm2261, %v2540, %v2542
      %v2544 = vrot.slane %v2433, 1
      %v2545 = vrot.slane %v2434, 1
      %v2546 = vsel %vm2261, %v2544, %v2545
      %v2547 = vrot.slane %v2435, 1
      %v2548 = vsel %vm2261, %v2545, %v2547
      %v2549 = vrot.slane %v2436, 1
      %v2550 = vrot.slane %v2437, 1
      %v2551 = vsel %vm2261, %v2549, %v2550
      %v2552 = vrot.slane %v2438, 1
      %v2553 = vsel %vm2261, %v2550, %v2552
      %v2554 = vrot.slane %v2439, 1
      %v2555 = vrot.slane %v2440, 1
      %v2556 = vsel %vm2261, %v2554, %v2555
      %v2557 = vrot.slane %v2441, 1
      %v2558 = vsel %vm2261, %v2555, %v2557
      %v2559 = vrot.slane %v2442, 1
      %v2560 = vrot.slane %v2443, 1
      %v2561 = vsel %vm2261, %v2559, %v2560
      %v2562 = vrot.slane %v2444, 1
      %v2563 = vsel %vm2261, %v2560, %v2562
      %v2564 = vrot.slane %v2445, 1
      %v2565 = vrot.slane %v2446, 1
      %v2566 = vsel %vm2261, %v2564, %v2565
      %v2567 = vrot.slane %v2447, 1
      %v2568 = vsel %vm2261, %v2565, %v2567
      %v2569 = vrot.slane %v2448, 1
      %v2570 = vrot.slane %v2449, 1
      %v2571 = vsel %vm2261, %v2569, %v2570
      %v2572 = vrot.slane %v2450, 1
      %v2573 = vsel %vm2261, %v2570, %v2572
      %v2605 = vadd.f32 %v2134, %v2498
      %v2606 = vadd.f32 %v2135, %v2501
      %v2607 = vadd.f32 %v2136, %v2503
      %v2608 = vadd.f32 %v2137, %v2506
      %v2609 = vadd.f32 %v2138, %v2508
      %v2610 = vadd.f32 %v2139, %v2511
      %v2611 = vadd.f32 %v2140, %v2513
      %v2612 = vadd.f32 %v2141, %v2516
      %v2613 = vadd.f32 %v2142, %v2518
      %v2614 = vadd.f32 %v2143, %v2521
      %v2615 = vadd.f32 %v2144, %v2523
      %v2616 = vadd.f32 %v2145, %v2526
      %v2617 = vadd.f32 %v2146, %v2528
      %v2618 = vadd.f32 %v2147, %v2531
      %v2619 = vadd.f32 %v2148, %v2533
      %v2620 = vadd.f32 %v2149, %v2536
      %v2621 = vadd.f32 %v2150, %v2538
      %v2622 = vadd.f32 %v2151, %v2541
      %v2623 = vadd.f32 %v2152, %v2543
      %v2624 = vadd.f32 %v2153, %v2546
      %v2625 = vadd.f32 %v2154, %v2548
      %v2626 = vadd.f32 %v2155, %v2551
      %v2627 = vadd.f32 %v2156, %v2553
      %v2628 = vadd.f32 %v2157, %v2556
      %v2629 = vadd.f32 %v2158, %v2558
      %v2630 = vadd.f32 %v2159, %v2561
      %v2631 = vadd.f32 %v2160, %v2563
      %v2632 = vadd.f32 %v2161, %v2566
      %v2633 = vadd.f32 %v2162, %v2568
      %v2634 = vadd.f32 %v2163, %v2571
      %v2635 = vadd.f32 %v2164, %v2573
      %v2636 = vlaneseq
      %v2637 = vshrl.u32 %v2636, 7
      %v2638 = vsub.s32 2, %v2637
      %v2639 = vrot.slane %v1853, %v2638
      %v2640 = vmul.f32 %v2639, 0.0
      %v2641 = vmul.f32 %v1987, %v2639
      %v2642 = vmul.f32 %v1893, %v2639
      %v2643 = vmul.f32 %v2003, %v2639
      %v2644 = vmul.f32 %v1988, %v2639
      %v2645 = vmul.f32 %v1896, %v2639
      %v2646 = vmul.f32 %v2004, %v2639
      %v2647 = vmul.f32 %v1989, %v2639
      %v2648 = vmul.f32 %v1899, %v2639
      %v2649 = vmul.f32 %v2005, %v2639
      %v2650 = vmul.f32 %v1990, %v2639
      %v2651 = vmul.f32 %v1902, %v2639
      %v2652 = vmul.f32 %v2006, %v2639
      %v2653 = vmul.f32 %v1991, %v2639
      %v2654 = vmul.f32 %v1905, %v2639
      %v2655 = vmul.f32 %v2007, %v2639
      %v2656 = vmul.f32 %v1992, %v2639
      %v2657 = vmul.f32 %v1908, %v2639
      %v2658 = vmul.f32 %v2008, %v2639
      %v2659 = vmul.f32 %v1993, %v2639
      %v2660 = vmul.f32 %v1911, %v2639
      %v2661 = vmul.f32 %v2009, %v2639
      %v2662 = vmul.f32 %v1994, %v2639
      %v2663 = vmul.f32 %v1914, %v2639
      %v2664 = vmul.f32 %v2010, %v2639
      %v2665 = vmul.f32 %v1995, %v2639
      %v2666 = vmul.f32 %v1917, %v2639
      %v2667 = vmul.f32 %v2011, %v2639
      %v2668 = vmul.f32 %v1996, %v2639
      %v2669 = vmul.f32 %v1920, %v2639
      %v2670 = vmul.f32 %v2012, %v2639
      %v2671 = vmul.f32 %v1997, %v2639
      %v2672 = vmul.f32 %v1923, %v2639
      %v2673 = vmul.f32 %v2013, %v2639
      %v2674 = vmul.f32 %v1998, %v2639
      %v2675 = vmul.f32 %v1926, %v2639
      %v2676 = vmul.f32 %v2014, %v2639
      %v2677 = vmul.f32 %v1999, %v2639
      %v2678 = vmul.f32 %v1929, %v2639
      %v2679 = vmul.f32 %v2015, %v2639
      %v2680 = vmul.f32 %v2000, %v2639
      %v2681 = vmul.f32 %v1932, %v2639
      %v2682 = vmul.f32 %v2016, %v2639
      %v2683 = vmul.f32 %v2001, %v2639
      %v2684 = vmul.f32 %v1935, %v2639
      %v2685 = vmul.f32 %v2017, %v2639
      %vm2732 = vcmask 1045504
      %v2733 = vrot.slane %v2640, 2
      %v2734 = vsel %vm2732, %v2733, %v2733
      %v2735 = vrot.slane %v2641, 2
      %v2736 = vrot.slane %v2642, 2
      %v2737 = vsel %vm2732, %v2735, %v2736
      %v2738 = vrot.slane %v2643, 2
      %v2739 = vsel %vm2732, %v2736, %v2738
      %v2740 = vrot.slane %v2644, 2
      %v2741 = vrot.slane %v2645, 2
      %v2742 = vsel %vm2732, %v2740, %v2741
      %v2743 = vrot.slane %v2646, 2
      %v2744 = vsel %vm2732, %v2741, %v2743
      %v2745 = vrot.slane %v2647, 2
      %v2746 = vrot.slane %v2648, 2
      %v2747 = vsel %vm2732, %v2745, %v2746
      %v2748 = vrot.slane %v2649, 2
      %v2749 = vsel %vm2732, %v2746, %v2748
      %v2750 = vrot.slane %v2650, 2
      %v2751 = vrot.slane %v2651, 2
      %v2752 = vsel %vm2732, %v2750, %v2751
      %v2753 = vrot.slane %v2652, 2
      %v2754 = vsel %vm2732, %v2751, %v2753
      %v2755 = vrot.slane %v2653, 2
      %v2756 = vrot.slane %v2654, 2
      %v2757 = vsel %vm2732, %v2755, %v2756
      %v2758 = vrot.slane %v2655, 2
      %v2759 = vsel %vm2732, %v2756, %v2758
      %v2760 = vrot.slane %v2656, 2
      %v2761 = vrot.slane %v2657, 2
      %v2762 = vsel %vm2732, %v2760, %v2761
      %v2763 = vrot.slane %v2658, 2
      %v2764 = vsel %vm2732, %v2761, %v2763
      %v2765 = vrot.slane %v2659, 2
      %v2766 = vrot.slane %v2660, 2
      %v2767 = vsel %vm2732, %v2765, %v2766
      %v2768 = vrot.slane %v2661, 2
      %v2769 = vsel %vm2732, %v2766, %v2768
      %v2770 = vrot.slane %v2662, 2
      %v2771 = vrot.slane %v2663, 2
      %v2772 = vsel %vm2732, %v2770, %v2771
      %v2773 = vrot.slane %v2664, 2
      %v2774 = vsel %vm2732, %v2771, %v2773
      %v2775 = vrot.slane %v2665, 2
      %v2776 = vrot.slane %v2666, 2
      %v2777 = vsel %vm2732, %v2775, %v2776
      %v2778 = vrot.slane %v2667, 2
      %v2779 = vsel %vm2732, %v2776, %v2778
      %v2780 = vrot.slane %v2668, 2
      %v2781 = vrot.slane %v2669, 2
      %v2782 = vsel %vm2732, %v2780, %v2781
      %v2783 = vrot.slane %v2670, 2
      %v2784 = vsel %vm2732, %v2781, %v2783
      %v2785 = vrot.slane %v2671, 2
      %v2786 = vrot.slane %v2672, 2
      %v2787 = vsel %vm2732, %v2785, %v2786
      %v2788 = vrot.slane %v2673, 2
      %v2789 = vsel %vm2732, %v2786, %v2788
      %v2790 = vrot.slane %v2674, 2
      %v2791 = vrot.slane %v2675, 2
      %v2792 = vsel %vm2732, %v2790, %v2791
      %v2793 = vrot.slane %v2676, 2
      %v2794 = vsel %vm2732, %v2791, %v2793
      %v2795 = vrot.slane %v2677, 2
      %v2796 = vrot.slane %v2678, 2
      %v2797 = vsel %vm2732, %v2795, %v2796
      %v2798 = vrot.slane %v2679, 2
      %v2799 = vsel %vm2732, %v2796, %v2798
      %v2800 = vrot.slane %v2680, 2
      %v2801 = vrot.slane %v2681, 2
      %v2802 = vsel %vm2732, %v2800, %v2801
      %v2803 = vrot.slane %v2682, 2
      %v2804 = vsel %vm2732, %v2801, %v2803
      %v2805 = vrot.slane %v2683, 2
      %v2806 = vrot.slane %v2684, 2
      %v2807 = vsel %vm2732, %v2805, %v2806
      %v2808 = vrot.slane %v2685, 2
      %v2809 = vsel %vm2732, %v2806, %v2808
      %v2841 = vadd.f32 %v2370, %v2734
      %v2842 = vadd.f32 %v2371, %v2737
      %v2843 = vadd.f32 %v2372, %v2739
      %v2844 = vadd.f32 %v2373, %v2742
      %v2845 = vadd.f32 %v2374, %v2744
      %v2846 = vadd.f32 %v2375, %v2747
      %v2847 = vadd.f32 %v2376, %v2749
      %v2848 = vadd.f32 %v2377, %v2752
      %v2849 = vadd.f32 %v2378, %v2754
      %v2850 = vadd.f32 %v2379, %v2757
      %v2851 = vadd.f32 %v2380, %v2759
      %v2852 = vadd.f32 %v2381, %v2762
      %v2853 = vadd.f32 %v2382, %v2764
      %v2854 = vadd.f32 %v2383, %v2767
      %v2855 = vadd.f32 %v2384, %v2769
      %v2856 = vadd.f32 %v2385, %v2772
      %v2857 = vadd.f32 %v2386, %v2774
      %v2858 = vadd.f32 %v2387, %v2777
      %v2859 = vadd.f32 %v2388, %v2779
      %v2860 = vadd.f32 %v2389, %v2782
      %v2861 = vadd.f32 %v2390, %v2784
      %v2862 = vadd.f32 %v2391, %v2787
      %v2863 = vadd.f32 %v2392, %v2789
      %v2864 = vadd.f32 %v2393, %v2792
      %v2865 = vadd.f32 %v2394, %v2794
      %v2866 = vadd.f32 %v2395, %v2797
      %v2867 = vadd.f32 %v2396, %v2799
      %v2868 = vadd.f32 %v2397, %v2802
      %v2869 = vadd.f32 %v2398, %v2804
      %v2870 = vadd.f32 %v2399, %v2807
      %v2871 = vadd.f32 %v2400, %v2809
      %v2872 = vlaneseq
      %v2873 = vshrl.u32 %v2872, 7
      %v2874 = vsub.s32 2, %v2873
      %v2875 = vrot.slane %v1855, %v2874
      %v2876 = vmul.f32 %v2875, 0.0
      %v2877 = vmul.f32 %v1987, %v2875
      %v2878 = vmul.f32 %v1893, %v2875
      %v2879 = vmul.f32 %v2003, %v2875
      %v2880 = vmul.f32 %v1988, %v2875
      %v2881 = vmul.f32 %v1896, %v2875
      %v2882 = vmul.f32 %v2004, %v2875
      %v2883 = vmul.f32 %v1989, %v2875
      %v2884 = vmul.f32 %v1899, %v2875
      %v2885 = vmul.f32 %v2005, %v2875
      %v2886 = vmul.f32 %v1990, %v2875
      %v2887 = vmul.f32 %v1902, %v2875
      %v2888 = vmul.f32 %v2006, %v2875
      %v2889 = vmul.f32 %v1991, %v2875
      %v2890 = vmul.f32 %v1905, %v2875
      %v2891 = vmul.f32 %v2007, %v2875
      %v2892 = vmul.f32 %v1992, %v2875
      %v2893 = vmul.f32 %v1908, %v2875
      %v2894 = vmul.f32 %v2008, %v2875
      %v2895 = vmul.f32 %v1993, %v2875
      %v2896 = vmul.f32 %v1911, %v2875
      %v2897 = vmul.f32 %v2009, %v2875
      %v2898 = vmul.f32 %v1994, %v2875
      %v2899 = vmul.f32 %v1914, %v2875
      %v2900 = vmul.f32 %v2010, %v2875
      %v2901 = vmul.f32 %v1995, %v2875
      %v2902 = vmul.f32 %v1917, %v2875
      %v2903 = vmul.f32 %v2011, %v2875
      %v2904 = vmul.f32 %v1996, %v2875
      %v2905 = vmul.f32 %v1920, %v2875
      %v2906 = vmul.f32 %v2012, %v2875
      %v2907 = vmul.f32 %v1997, %v2875
      %v2908 = vmul.f32 %v1923, %v2875
      %v2909 = vmul.f32 %v2013, %v2875
      %v2910 = vmul.f32 %v1998, %v2875
      %v2911 = vmul.f32 %v1926, %v2875
      %v2912 = vmul.f32 %v2014, %v2875
      %v2913 = vmul.f32 %v1999, %v2875
      %v2914 = vmul.f32 %v1929, %v2875
      %v2915 = vmul.f32 %v2015, %v2875
      %v2916 = vmul.f32 %v2000, %v2875
      %v2917 = vmul.f32 %v1932, %v2875
      %v2918 = vmul.f32 %v2016, %v2875
      %v2919 = vmul.f32 %v2001, %v2875
      %v2920 = vmul.f32 %v1935, %v2875
      %v2921 = vmul.f32 %v2017, %v2875
      %v2968 = vrot.slane %v2876, 2
      %v2969 = vsel %vm2732, %v2968, %v2968
      %v2970 = vrot.slane %v2877, 2
      %v2971 = vrot.slane %v2878, 2
      %v2972 = vsel %vm2732, %v2970, %v2971
      %v2973 = vrot.slane %v2879, 2
      %v2974 = vsel %vm2732, %v2971, %v2973
      %v2975 = vrot.slane %v2880, 2
      %v2976 = vrot.slane %v2881, 2
      %v2977 = vsel %vm2732, %v2975, %v2976
      %v2978 = vrot.slane %v2882, 2
      %v2979 = vsel %vm2732, %v2976, %v2978
      %v2980 = vrot.slane %v2883, 2
      %v2981 = vrot.slane %v2884, 2
      %v2982 = vsel %vm2732, %v2980, %v2981
      %v2983 = vrot.slane %v2885, 2
      %v2984 = vsel %vm2732, %v2981, %v2983
      %v2985 = vrot.slane %v2886, 2
      %v2986 = vrot.slane %v2887, 2
      %v2987 = vsel %vm2732, %v2985, %v2986
      %v2988 = vrot.slane %v2888, 2
      %v2989 = vsel %vm2732, %v2986, %v2988
      %v2990 = vrot.slane %v2889, 2
      %v2991 = vrot.slane %v2890, 2
      %v2992 = vsel %vm2732, %v2990, %v2991
      %v2993 = vrot.slane %v2891, 2
      %v2994 = vsel %vm2732, %v2991, %v2993
      %v2995 = vrot.slane %v2892, 2
      %v2996 = vrot.slane %v2893, 2
      %v2997 = vsel %vm2732, %v2995, %v2996
      %v2998 = vrot.slane %v2894, 2
      %v2999 = vsel %vm2732, %v2996, %v2998
      %v3000 = vrot.slane %v2895, 2
      %v3001 = vrot.slane %v2896, 2
      %v3002 = vsel %vm2732, %v3000, %v3001
      %v3003 = vrot.slane %v2897, 2
      %v3004 = vsel %vm2732, %v3001, %v3003
      %v3005 = vrot.slane %v2898, 2
      %v3006 = vrot.slane %v2899, 2
      %v3007 = vsel %vm2732, %v3005, %v3006
      %v3008 = vrot.slane %v2900, 2
      %v3009 = vsel %vm2732, %v3006, %v3008
      %v3010 = vrot.slane %v2901, 2
      %v3011 = vrot.slane %v2902, 2
      %v3012 = vsel %vm2732, %v3010, %v3011
      %v3013 = vrot.slane %v2903, 2
      %v3014 = vsel %vm2732, %v3011, %v3013
      %v3015 = vrot.slane %v2904, 2
      %v3016 = vrot.slane %v2905, 2
      %v3017 = vsel %vm2732, %v3015, %v3016
      %v3018 = vrot.slane %v2906, 2
      %v3019 = vsel %vm2732, %v3016, %v3018
      %v3020 = vrot.slane %v2907, 2
      %v3021 = vrot.slane %v2908, 2
      %v3022 = vsel %vm2732, %v3020, %v3021
      %v3023 = vrot.slane %v2909, 2
      %v3024 = vsel %vm2732, %v3021, %v3023
      %v3025 = vrot.slane %v2910, 2
      %v3026 = vrot.slane %v2911, 2
      %v3027 = vsel %vm2732, %v3025, %v3026
      %v3028 = vrot.slane %v2912, 2
      %v3029 = vsel %vm2732, %v3026, %v3028
      %v3030 = vrot.slane %v2913, 2
      %v3031 = vrot.slane %v2914, 2
      %v3032 = vsel %vm2732, %v3030, %v3031
      %v3033 = vrot.slane %v2915, 2
      %v3034 = vsel %vm2732, %v3031, %v3033
      %v3035 = vrot.slane %v2916, 2
      %v3036 = vrot.slane %v2917, 2
      %v3037 = vsel %vm2732, %v3035, %v3036
      %v3038 = vrot.slane %v2918, 2
      %v3039 = vsel %vm2732, %v3036, %v3038
      %v3040 = vrot.slane %v2919, 2
      %v3041 = vrot.slane %v2920, 2
      %v3042 = vsel %vm2732, %v3040, %v3041
      %v3043 = vrot.slane %v2921, 2
      %v3044 = vsel %vm2732, %v3041, %v3043
      %v3076 = vadd.f32 %v2605, %v2969
      %v3077 = vadd.f32 %v2606, %v2972
      %v3078 = vadd.f32 %v2607, %v2974
      %v3079 = vadd.f32 %v2608, %v2977
      %v3080 = vadd.f32 %v2609, %v2979
      %v3081 = vadd.f32 %v2610, %v2982
      %v3082 = vadd.f32 %v2611, %v2984
      %v3083 = vadd.f32 %v2612, %v2987
      %v3084 = vadd.f32 %v2613, %v2989
      %v3085 = vadd.f32 %v2614, %v2992
      %v3086 = vadd.f32 %v2615, %v2994
      %v3087 = vadd.f32 %v2616, %v2997
      %v3088 = vadd.f32 %v2617, %v2999
      %v3089 = vadd.f32 %v2618, %v3002
      %v3090 = vadd.f32 %v2619, %v3004
      %v3091 = vadd.f32 %v2620, %v3007
      %v3092 = vadd.f32 %v2621, %v3009
      %v3093 = vadd.f32 %v2622, %v3012
      %v3094 = vadd.f32 %v2623, %v3014
      %v3095 = vadd.f32 %v2624, %v3017
      %v3096 = vadd.f32 %v2625, %v3019
      %v3097 = vadd.f32 %v2626, %v3022
      %v3098 = vadd.f32 %v2627, %v3024
      %v3099 = vadd.f32 %v2628, %v3027
      %v3100 = vadd.f32 %v2629, %v3029
      %v3101 = vadd.f32 %v2630, %v3032
      %v3102 = vadd.f32 %v2631, %v3034
      %v3103 = vadd.f32 %v2632, %v3037
      %v3104 = vadd.f32 %v2633, %v3039
      %v3105 = vadd.f32 %v2634, %v3042
      %v3106 = vadd.f32 %v2635, %v3044
      %v3107 = vlaneseq
      %v3108 = vshrl.u32 %v3107, 7
      %v3109 = vsub.s32 3, %v3108
      %v3110 = vrot.slane %v1853, %v3109
      %v3111 = vmul.f32 %v1987, %v3110
      %v3112 = vmul.f32 %v1893, %v3110
      %v3113 = vmul.f32 %v1988, %v3110
      %v3114 = vmul.f32 %v1896, %v3110
      %v3115 = vmul.f32 %v1989, %v3110
      %v3116 = vmul.f32 %v1899, %v3110
      %v3117 = vmul.f32 %v1990, %v3110
      %v3118 = vmul.f32 %v1902, %v3110
      %v3119 = vmul.f32 %v1991, %v3110
      %v3120 = vmul.f32 %v1905, %v3110
      %v3121 = vmul.f32 %v1992, %v3110
      %v3122 = vmul.f32 %v1908, %v3110
      %v3123 = vmul.f32 %v1993, %v3110
      %v3124 = vmul.f32 %v1911, %v3110
      %v3125 = vmul.f32 %v1994, %v3110
      %v3126 = vmul.f32 %v1914, %v3110
      %v3127 = vmul.f32 %v1995, %v3110
      %v3128 = vmul.f32 %v1917, %v3110
      %v3129 = vmul.f32 %v1996, %v3110
      %v3130 = vmul.f32 %v1920, %v3110
      %v3131 = vmul.f32 %v1997, %v3110
      %v3132 = vmul.f32 %v1923, %v3110
      %v3133 = vmul.f32 %v1998, %v3110
      %v3134 = vmul.f32 %v1926, %v3110
      %v3135 = vmul.f32 %v1999, %v3110
      %v3136 = vmul.f32 %v1929, %v3110
      %v3137 = vmul.f32 %v2000, %v3110
      %v3138 = vmul.f32 %v1932, %v3110
      %v3139 = vmul.f32 %v2001, %v3110
      %v3140 = vmul.f32 %v1935, %v3110
      %v3141 = vmul.f32 %v2002, %v3110
      %v3142 = vmul.f32 %v1938, %v3110
      %v3143 = vadd.f32 %v2841, %v3111
      %v3144 = vadd.f32 %v2841, %v3112
      %v3145 = vadd.f32 %v2842, %v3113
      %v3146 = vadd.f32 %v2843, %v3114
      %v3147 = vadd.f32 %v2844, %v3115
      %v3148 = vadd.f32 %v2845, %v3116
      %v3149 = vadd.f32 %v2846, %v3117
      %v3150 = vadd.f32 %v2847, %v3118
      %v3151 = vadd.f32 %v2848, %v3119
      %v3152 = vadd.f32 %v2849, %v3120
      %v3153 = vadd.f32 %v2850, %v3121
      %v3154 = vadd.f32 %v2851, %v3122
      %v3155 = vadd.f32 %v2852, %v3123
      %v3156 = vadd.f32 %v2853, %v3124
      %v3157 = vadd.f32 %v2854, %v3125
      %v3158 = vadd.f32 %v2855, %v3126
      %v3159 = vadd.f32 %v2856, %v3127
      %v3160 = vadd.f32 %v2857, %v3128
      %v3161 = vadd.f32 %v2858, %v3129
      %v3162 = vadd.f32 %v2859, %v3130
      %v3163 = vadd.f32 %v2860, %v3131
      %v3164 = vadd.f32 %v2861, %v3132
      %v3165 = vadd.f32 %v2862, %v3133
      %v3166 = vadd.f32 %v2863, %v3134
      %v3167 = vadd.f32 %v2864, %v3135
      %v3168 = vadd.f32 %v2865, %v3136
      %v3169 = vadd.f32 %v2866, %v3137
      %v3170 = vadd.f32 %v2867, %v3138
      %v3171 = vadd.f32 %v2868, %v3139
      %v3172 = vadd.f32 %v2869, %v3140
      %v3173 = vadd.f32 %v2870, %v3141
      %v3174 = vadd.f32 %v2871, %v3142
      %v3175 = vlaneseq
      %v3176 = vshrl.u32 %v3175, 7
      %v3177 = vsub.s32 3, %v3176
      %v3178 = vrot.slane %v1855, %v3177
      %v3179 = vmul.f32 %v1987, %v3178
      %v3180 = vmul.f32 %v1893, %v3178
      %v3181 = vmul.f32 %v1988, %v3178
      %v3182 = vmul.f32 %v1896, %v3178
      %v3183 = vmul.f32 %v1989, %v3178
      %v3184 = vmul.f32 %v1899, %v3178
      %v3185 = vmul.f32 %v1990, %v3178
      %v3186 = vmul.f32 %v1902, %v3178
      %v3187 = vmul.f32 %v1991, %v3178
      %v3188 = vmul.f32 %v1905, %v3178
      %v3189 = vmul.f32 %v1992, %v3178
      %v3190 = vmul.f32 %v1908, %v3178
      %v3191 = vmul.f32 %v1993, %v3178
      %v3192 = vmul.f32 %v1911, %v3178
      %v3193 = vmul.f32 %v1994, %v3178
      %v3194 = vmul.f32 %v1914, %v3178
      %v3195 = vmul.f32 %v1995, %v3178
      %v3196 = vmul.f32 %v1917, %v3178
      %v3197 = vmul.f32 %v1996, %v3178
      %v3198 = vmul.f32 %v1920, %v3178
      %v3199 = vmul.f32 %v1997, %v3178
      %v3200 = vmul.f32 %v1923, %v3178
      %v3201 = vmul.f32 %v1998, %v3178
      %v3202 = vmul.f32 %v1926, %v3178
      %v3203 = vmul.f32 %v1999, %v3178
      %v3204 = vmul.f32 %v1929, %v3178
      %v3205 = vmul.f32 %v2000, %v3178
      %v3206 = vmul.f32 %v1932, %v3178
      %v3207 = vmul.f32 %v2001, %v3178
      %v3208 = vmul.f32 %v1935, %v3178
      %v3209 = vmul.f32 %v2002, %v3178
      %v3210 = vmul.f32 %v1938, %v3178
      %v3211 = vadd.f32 %v3076, %v3179
      %v3212 = vadd.f32 %v3076, %v3180
      %v3213 = vadd.f32 %v3077, %v3181
      %v3214 = vadd.f32 %v3078, %v3182
      %v3215 = vadd.f32 %v3079, %v3183
      %v3216 = vadd.f32 %v3080, %v3184
      %v3217 = vadd.f32 %v3081, %v3185
      %v3218 = vadd.f32 %v3082, %v3186
      %v3219 = vadd.f32 %v3083, %v3187
      %v3220 = vadd.f32 %v3084, %v3188
      %v3221 = vadd.f32 %v3085, %v3189
      %v3222 = vadd.f32 %v3086, %v3190
      %v3223 = vadd.f32 %v3087, %v3191
      %v3224 = vadd.f32 %v3088, %v3192
      %v3225 = vadd.f32 %v3089, %v3193
      %v3226 = vadd.f32 %v3090, %v3194
      %v3227 = vadd.f32 %v3091, %v3195
      %v3228 = vadd.f32 %v3092, %v3196
      %v3229 = vadd.f32 %v3093, %v3197
      %v3230 = vadd.f32 %v3094, %v3198
      %v3231 = vadd.f32 %v3095, %v3199
      %v3232 = vadd.f32 %v3096, %v3200
      %v3233 = vadd.f32 %v3097, %v3201
      %v3234 = vadd.f32 %v3098, %v3202
      %v3235 = vadd.f32 %v3099, %v3203
      %v3236 = vadd.f32 %v3100, %v3204
      %v3237 = vadd.f32 %v3101, %v3205
      %v3238 = vadd.f32 %v3102, %v3206
      %v3239 = vadd.f32 %v3103, %v3207
      %v3240 = vadd.f32 %v3104, %v3208
      %v3241 = vadd.f32 %v3105, %v3209
      %v3242 = vadd.f32 %v3106, %v3210
      %v3243 = vlaneseq
      %v3244 = vshrl.u32 %v3243, 7
      %v3245 = vsub.s32 4, %v3244
      %v3246 = vrot.slane %v1853, %v3245
      %v3247 = vmul.f32 %v1987, %v3246
      %v3248 = vmul.f32 %v1893, %v3246
      %v3249 = vmul.f32 %v2003, %v3246
      %v3250 = vmul.f32 %v1988, %v3246
      %v3251 = vmul.f32 %v1896, %v3246
      %v3252 = vmul.f32 %v2004, %v3246
      %v3253 = vmul.f32 %v1989, %v3246
      %v3254 = vmul.f32 %v1899, %v3246
      %v3255 = vmul.f32 %v2005, %v3246
      %v3256 = vmul.f32 %v1990, %v3246
      %v3257 = vmul.f32 %v1902, %v3246
      %v3258 = vmul.f32 %v2006, %v3246
      %v3259 = vmul.f32 %v1991, %v3246
      %v3260 = vmul.f32 %v1905, %v3246
      %v3261 = vmul.f32 %v2007, %v3246
      %v3262 = vmul.f32 %v1992, %v3246
      %v3263 = vmul.f32 %v1908, %v3246
      %v3264 = vmul.f32 %v2008, %v3246
      %v3265 = vmul.f32 %v1993, %v3246
      %v3266 = vmul.f32 %v1911, %v3246
      %v3267 = vmul.f32 %v2009, %v3246
      %v3268 = vmul.f32 %v1994, %v3246
      %v3269 = vmul.f32 %v1914, %v3246
      %v3270 = vmul.f32 %v2010, %v3246
      %v3271 = vmul.f32 %v1995, %v3246
      %v3272 = vmul.f32 %v1917, %v3246
      %v3273 = vmul.f32 %v2011, %v3246
      %v3274 = vmul.f32 %v1996, %v3246
      %v3275 = vmul.f32 %v1920, %v3246
      %v3276 = vmul.f32 %v2012, %v3246
      %v3277 = vmul.f32 %v1997, %v3246
      %v3278 = vmul.f32 %v1923, %v3246
      %v3279 = vmul.f32 %v2013, %v3246
      %v3280 = vmul.f32 %v1998, %v3246
      %v3281 = vmul.f32 %v1926, %v3246
      %v3282 = vmul.f32 %v2014, %v3246
      %v3283 = vmul.f32 %v1999, %v3246
      %v3284 = vmul.f32 %v1929, %v3246
      %v3285 = vmul.f32 %v2015, %v3246
      %v3286 = vmul.f32 %v2000, %v3246
      %v3287 = vmul.f32 %v1932, %v3246
      %v3288 = vmul.f32 %v2016, %v3246
      %v3289 = vmul.f32 %v2001, %v3246
      %v3290 = vmul.f32 %v1935, %v3246
      %v3291 = vmul.f32 %v2017, %v3246
      %v3292 = vmul.f32 %v2002, %v3246
      %v3293 = vmul.f32 %v1938, %v3246
      %v3294 = vmul.f32 %v2018, %v3246
      %v3343 = vrot.slane %v3247, 1
      %v3344 = vrot.slane %v3248, 1
      %v3345 = vsel %vm2261, %v3343, %v3344
      %v3346 = vrot.slane %v3249, 1
      %v3347 = vsel %vm2261, %v3344, %v3346
      %v3348 = vrot.slane %v3250, 1
      %v3349 = vrot.slane %v3251, 1
      %v3350 = vsel %vm2261, %v3348, %v3349
      %v3351 = vrot.slane %v3252, 1
      %v3352 = vsel %vm2261, %v3349, %v3351
      %v3353 = vrot.slane %v3253, 1
      %v3354 = vrot.slane %v3254, 1
      %v3355 = vsel %vm2261, %v3353, %v3354
      %v3356 = vrot.slane %v3255, 1
      %v3357 = vsel %vm2261, %v3354, %v3356
      %v3358 = vrot.slane %v3256, 1
      %v3359 = vrot.slane %v3257, 1
      %v3360 = vsel %vm2261, %v3358, %v3359
      %v3361 = vrot.slane %v3258, 1
      %v3362 = vsel %vm2261, %v3359, %v3361
      %v3363 = vrot.slane %v3259, 1
      %v3364 = vrot.slane %v3260, 1
      %v3365 = vsel %vm2261, %v3363, %v3364
      %v3366 = vrot.slane %v3261, 1
      %v3367 = vsel %vm2261, %v3364, %v3366
      %v3368 = vrot.slane %v3262, 1
      %v3369 = vrot.slane %v3263, 1
      %v3370 = vsel %vm2261, %v3368, %v3369
      %v3371 = vrot.slane %v3264, 1
      %v3372 = vsel %vm2261, %v3369, %v3371
      %v3373 = vrot.slane %v3265, 1
      %v3374 = vrot.slane %v3266, 1
      %v3375 = vsel %vm2261, %v3373, %v3374
      %v3376 = vrot.slane %v3267, 1
      %v3377 = vsel %vm2261, %v3374, %v3376
      %v3378 = vrot.slane %v3268, 1
      %v3379 = vrot.slane %v3269, 1
      %v3380 = vsel %vm2261, %v3378, %v3379
      %v3381 = vrot.slane %v3270, 1
      %v3382 = vsel %vm2261, %v3379, %v3381
      %v3383 = vrot.slane %v3271, 1
      %v3384 = vrot.slane %v3272, 1
      %v3385 = vsel %vm2261, %v3383, %v3384
      %v3386 = vrot.slane %v3273, 1
      %v3387 = vsel %vm2261, %v3384, %v3386
      %v3388 = vrot.slane %v3274, 1
      %v3389 = vrot.slane %v3275, 1
      %v3390 = vsel %vm2261, %v3388, %v3389
      %v3391 = vrot.slane %v3276, 1
      %v3392 = vsel %vm2261, %v3389, %v3391
      %v3393 = vrot.slane %v3277, 1
      %v3394 = vrot.slane %v3278, 1
      %v3395 = vsel %vm2261, %v3393, %v3394
      %v3396 = vrot.slane %v3279, 1
      %v3397 = vsel %vm2261, %v3394, %v3396
      %v3398 = vrot.slane %v3280, 1
      %v3399 = vrot.slane %v3281, 1
      %v3400 = vsel %vm2261, %v3398, %v3399
      %v3401 = vrot.slane %v3282, 1
      %v3402 = vsel %vm2261, %v3399, %v3401
      %v3403 = vrot.slane %v3283, 1
      %v3404 = vrot.slane %v3284, 1
      %v3405 = vsel %vm2261, %v3403, %v3404
      %v3406 = vrot.slane %v3285, 1
      %v3407 = vsel %vm2261, %v3404, %v3406
      %v3408 = vrot.slane %v3286, 1
      %v3409 = vrot.slane %v3287, 1
      %v3410 = vsel %vm2261, %v3408, %v3409
      %v3411 = vrot.slane %v3288, 1
      %v3412 = vsel %vm2261, %v3409, %v3411
      %v3413 = vrot.slane %v3289, 1
      %v3414 = vrot.slane %v3290, 1
      %v3415 = vsel %vm2261, %v3413, %v3414
      %v3416 = vrot.slane %v3291, 1
      %v3417 = vsel %vm2261, %v3414, %v3416
      %v3418 = vrot.slane %v3292, 1
      %v3419 = vrot.slane %v3293, 1
      %v3420 = vsel %vm2261, %v3418, %v3419
      %v3421 = vrot.slane %v3294, 1
      %v3422 = vsel %vm2261, %v3419, %v3421
      %v3455 = vadd.f32 %v3143, %v3345
      %v3456 = vadd.f32 %v3144, %v3347
      %v3457 = vadd.f32 %v3145, %v3350
      %v3458 = vadd.f32 %v3146, %v3352
      %v3459 = vadd.f32 %v3147, %v3355
      %v3460 = vadd.f32 %v3148, %v3357
      %v3461 = vadd.f32 %v3149, %v3360
      %v3462 = vadd.f32 %v3150, %v3362
      %v3463 = vadd.f32 %v3151, %v3365
      %v3464 = vadd.f32 %v3152, %v3367
      %v3465 = vadd.f32 %v3153, %v3370
      %v3466 = vadd.f32 %v3154, %v3372
      %v3467 = vadd.f32 %v3155, %v3375
      %v3468 = vadd.f32 %v3156, %v3377
      %v3469 = vadd.f32 %v3157, %v3380
      %v3470 = vadd.f32 %v3158, %v3382
      %v3471 = vadd.f32 %v3159, %v3385
      %v3472 = vadd.f32 %v3160, %v3387
      %v3473 = vadd.f32 %v3161, %v3390
      %v3474 = vadd.f32 %v3162, %v3392
      %v3475 = vadd.f32 %v3163, %v3395
      %v3476 = vadd.f32 %v3164, %v3397
      %v3477 = vadd.f32 %v3165, %v3400
      %v3478 = vadd.f32 %v3166, %v3402
      %v3479 = vadd.f32 %v3167, %v3405
      %v3480 = vadd.f32 %v3168, %v3407
      %v3481 = vadd.f32 %v3169, %v3410
      %v3482 = vadd.f32 %v3170, %v3412
      %v3483 = vadd.f32 %v3171, %v3415
      %v3484 = vadd.f32 %v3172, %v3417
      %v3485 = vadd.f32 %v3173, %v3420
      %v3486 = vadd.f32 %v3174, %v3422
      %v3487 = vlaneseq
      %v3488 = vshrl.u32 %v3487, 7
      %v3489 = vsub.s32 4, %v3488
      %v3490 = vrot.slane %v1855, %v3489
      %v3491 = vmul.f32 %v1987, %v3490
      %v3492 = vmul.f32 %v1893, %v3490
      %v3493 = vmul.f32 %v2003, %v3490
      %v3494 = vmul.f32 %v1988, %v3490
      %v3495 = vmul.f32 %v1896, %v3490
      %v3496 = vmul.f32 %v2004, %v3490
      %v3497 = vmul.f32 %v1989, %v3490
      %v3498 = vmul.f32 %v1899, %v3490
      %v3499 = vmul.f32 %v2005, %v3490
      %v3500 = vmul.f32 %v1990, %v3490
      %v3501 = vmul.f32 %v1902, %v3490
      %v3502 = vmul.f32 %v2006, %v3490
      %v3503 = vmul.f32 %v1991, %v3490
      %v3504 = vmul.f32 %v1905, %v3490
      %v3505 = vmul.f32 %v2007, %v3490
      %v3506 = vmul.f32 %v1992, %v3490
      %v3507 = vmul.f32 %v1908, %v3490
      %v3508 = vmul.f32 %v2008, %v3490
      %v3509 = vmul.f32 %v1993, %v3490
      %v3510 = vmul.f32 %v1911, %v3490
      %v3511 = vmul.f32 %v2009, %v3490
      %v3512 = vmul.f32 %v1994, %v3490
      %v3513 = vmul.f32 %v1914, %v3490
      %v3514 = vmul.f32 %v2010, %v3490
      %v3515 = vmul.f32 %v1995, %v3490
      %v3516 = vmul.f32 %v1917, %v3490
      %v3517 = vmul.f32 %v2011, %v3490
      %v3518 = vmul.f32 %v1996, %v3490
      %v3519 = vmul.f32 %v1920, %v3490
      %v3520 = vmul.f32 %v2012, %v3490
      %v3521 = vmul.f32 %v1997, %v3490
      %v3522 = vmul.f32 %v1923, %v3490
      %v3523 = vmul.f32 %v2013, %v3490
      %v3524 = vmul.f32 %v1998, %v3490
      %v3525 = vmul.f32 %v1926, %v3490
      %v3526 = vmul.f32 %v2014, %v3490
      %v3527 = vmul.f32 %v1999, %v3490
      %v3528 = vmul.f32 %v1929, %v3490
      %v3529 = vmul.f32 %v2015, %v3490
      %v3530 = vmul.f32 %v2000, %v3490
      %v3531 = vmul.f32 %v1932, %v3490
      %v3532 = vmul.f32 %v2016, %v3490
      %v3533 = vmul.f32 %v2001, %v3490
      %v3534 = vmul.f32 %v1935, %v3490
      %v3535 = vmul.f32 %v2017, %v3490
      %v3536 = vmul.f32 %v2002, %v3490
      %v3537 = vmul.f32 %v1938, %v3490
      %v3538 = vmul.f32 %v2018, %v3490
      %v3587 = vrot.slane %v3491, 1
      %v3588 = vrot.slane %v3492, 1
      %v3589 = vsel %vm2261, %v3587, %v3588
      %v3590 = vrot.slane %v3493, 1
      %v3591 = vsel %vm2261, %v3588, %v3590
      %v3592 = vrot.slane %v3494, 1
      %v3593 = vrot.slane %v3495, 1
      %v3594 = vsel %vm2261, %v3592, %v3593
      %v3595 = vrot.slane %v3496, 1
      %v3596 = vsel %vm2261, %v3593, %v3595
      %v3597 = vrot.slane %v3497, 1
      %v3598 = vrot.slane %v3498, 1
      %v3599 = vsel %vm2261, %v3597, %v3598
      %v3600 = vrot.slane %v3499, 1
      %v3601 = vsel %vm2261, %v3598, %v3600
      %v3602 = vrot.slane %v3500, 1
      %v3603 = vrot.slane %v3501, 1
      %v3604 = vsel %vm2261, %v3602, %v3603
      %v3605 = vrot.slane %v3502, 1
      %v3606 = vsel %vm2261, %v3603, %v3605
      %v3607 = vrot.slane %v3503, 1
      %v3608 = vrot.slane %v3504, 1
      %v3609 = vsel %vm2261, %v3607, %v3608
      %v3610 = vrot.slane %v3505, 1
      %v3611 = vsel %vm2261, %v3608, %v3610
      %v3612 = vrot.slane %v3506, 1
      %v3613 = vrot.slane %v3507, 1
      %v3614 = vsel %vm2261, %v3612, %v3613
      %v3615 = vrot.slane %v3508, 1
      %v3616 = vsel %vm2261, %v3613, %v3615
      %v3617 = vrot.slane %v3509, 1
      %v3618 = vrot.slane %v3510, 1
      %v3619 = vsel %vm2261, %v3617, %v3618
      %v3620 = vrot.slane %v3511, 1
      %v3621 = vsel %vm2261, %v3618, %v3620
      %v3622 = vrot.slane %v3512, 1
      %v3623 = vrot.slane %v3513, 1
      %v3624 = vsel %vm2261, %v3622, %v3623
      %v3625 = vrot.slane %v3514, 1
      %v3626 = vsel %vm2261, %v3623, %v3625
      %v3627 = vrot.slane %v3515, 1
      %v3628 = vrot.slane %v3516, 1
      %v3629 = vsel %vm2261, %v3627, %v3628
      %v3630 = vrot.slane %v3517, 1
      %v3631 = vsel %vm2261, %v3628, %v3630
      %v3632 = vrot.slane %v3518, 1
      %v3633 = vrot.slane %v3519, 1
      %v3634 = vsel %vm2261, %v3632, %v3633
      %v3635 = vrot.slane %v3520, 1
      %v3636 = vsel %vm2261, %v3633, %v3635
      %v3637 = vrot.slane %v3521, 1
      %v3638 = vrot.slane %v3522, 1
      %v3639 = vsel %vm2261, %v3637, %v3638
      %v3640 = vrot.slane %v3523, 1
      %v3641 = vsel %vm2261, %v3638, %v3640
      %v3642 = vrot.slane %v3524, 1
      %v3643 = vrot.slane %v3525, 1
      %v3644 = vsel %vm2261, %v3642, %v3643
      %v3645 = vrot.slane %v3526, 1
      %v3646 = vsel %vm2261, %v3643, %v3645
      %v3647 = vrot.slane %v3527, 1
      %v3648 = vrot.slane %v3528, 1
      %v3649 = vsel %vm2261, %v3647, %v3648
      %v3650 = vrot.slane %v3529, 1
      %v3651 = vsel %vm2261, %v3648, %v3650
      %v3652 = vrot.slane %v3530, 1
      %v3653 = vrot.slane %v3531, 1
      %v3654 = vsel %vm2261, %v3652, %v3653
      %v3655 = vrot.slane %v3532, 1
      %v3656 = vsel %vm2261, %v3653, %v3655
      %v3657 = vrot.slane %v3533, 1
      %v3658 = vrot.slane %v3534, 1
      %v3659 = vsel %vm2261, %v3657, %v3658
      %v3660 = vrot.slane %v3535, 1
      %v3661 = vsel %vm2261, %v3658, %v3660
      %v3662 = vrot.slane %v3536, 1
      %v3663 = vrot.slane %v3537, 1
      %v3664 = vsel %vm2261, %v3662, %v3663
      %v3665 = vrot.slane %v3538, 1
      %v3666 = vsel %vm2261, %v3663, %v3665
      %v3699 = vadd.f32 %v3211, %v3589
      %v3700 = vadd.f32 %v3212, %v3591
      %v3701 = vadd.f32 %v3213, %v3594
      %v3702 = vadd.f32 %v3214, %v3596
      %v3703 = vadd.f32 %v3215, %v3599
      %v3704 = vadd.f32 %v3216, %v3601
      %v3705 = vadd.f32 %v3217, %v3604
      %v3706 = vadd.f32 %v3218, %v3606
      %v3707 = vadd.f32 %v3219, %v3609
      %v3708 = vadd.f32 %v3220, %v3611
      %v3709 = vadd.f32 %v3221, %v3614
      %v3710 = vadd.f32 %v3222, %v3616
      %v3711 = vadd.f32 %v3223, %v3619
      %v3712 = vadd.f32 %v3224, %v3621
      %v3713 = vadd.f32 %v3225, %v3624
      %v3714 = vadd.f32 %v3226, %v3626
      %v3715 = vadd.f32 %v3227, %v3629
      %v3716 = vadd.f32 %v3228, %v3631
      %v3717 = vadd.f32 %v3229, %v3634
      %v3718 = vadd.f32 %v3230, %v3636
      %v3719 = vadd.f32 %v3231, %v3639
      %v3720 = vadd.f32 %v3232, %v3641
      %v3721 = vadd.f32 %v3233, %v3644
      %v3722 = vadd.f32 %v3234, %v3646
      %v3723 = vadd.f32 %v3235, %v3649
      %v3724 = vadd.f32 %v3236, %v3651
      %v3725 = vadd.f32 %v3237, %v3654
      %v3726 = vadd.f32 %v3238, %v3656
      %v3727 = vadd.f32 %v3239, %v3659
      %v3728 = vadd.f32 %v3240, %v3661
      %v3729 = vadd.f32 %v3241, %v3664
      %v3730 = vadd.f32 %v3242, %v3666
      %v3731 = vlaneseq
      %v3732 = vshrl.u32 %v3731, 7
      %v3733 = vsub.s32 5, %v3732
      %v3734 = vrot.slane %v1853, %v3733
      %v3735 = vmul.f32 %v1987, %v3734
      %v3736 = vmul.f32 %v1893, %v3734
      %v3737 = vmul.f32 %v2003, %v3734
      %v3738 = vmul.f32 %v1988, %v3734
      %v3739 = vmul.f32 %v1896, %v3734
      %v3740 = vmul.f32 %v2004, %v3734
      %v3741 = vmul.f32 %v1989, %v3734
      %v3742 = vmul.f32 %v1899, %v3734
      %v3743 = vmul.f32 %v2005, %v3734
      %v3744 = vmul.f32 %v1990, %v3734
      %v3745 = vmul.f32 %v1902, %v3734
      %v3746 = vmul.f32 %v2006, %v3734
      %v3747 = vmul.f32 %v1991, %v3734
      %v3748 = vmul.f32 %v1905, %v3734
      %v3749 = vmul.f32 %v2007, %v3734
      %v3750 = vmul.f32 %v1992, %v3734
      %v3751 = vmul.f32 %v1908, %v3734
      %v3752 = vmul.f32 %v2008, %v3734
      %v3753 = vmul.f32 %v1993, %v3734
      %v3754 = vmul.f32 %v1911, %v3734
      %v3755 = vmul.f32 %v2009, %v3734
      %v3756 = vmul.f32 %v1994, %v3734
      %v3757 = vmul.f32 %v1914, %v3734
      %v3758 = vmul.f32 %v2010, %v3734
      %v3759 = vmul.f32 %v1995, %v3734
      %v3760 = vmul.f32 %v1917, %v3734
      %v3761 = vmul.f32 %v2011, %v3734
      %v3762 = vmul.f32 %v1996, %v3734
      %v3763 = vmul.f32 %v1920, %v3734
      %v3764 = vmul.f32 %v2012, %v3734
      %v3765 = vmul.f32 %v1997, %v3734
      %v3766 = vmul.f32 %v1923, %v3734
      %v3767 = vmul.f32 %v2013, %v3734
      %v3768 = vmul.f32 %v1998, %v3734
      %v3769 = vmul.f32 %v1926, %v3734
      %v3770 = vmul.f32 %v2014, %v3734
      %v3771 = vmul.f32 %v1999, %v3734
      %v3772 = vmul.f32 %v1929, %v3734
      %v3773 = vmul.f32 %v2015, %v3734
      %v3774 = vmul.f32 %v2000, %v3734
      %v3775 = vmul.f32 %v1932, %v3734
      %v3776 = vmul.f32 %v2016, %v3734
      %v3777 = vmul.f32 %v2001, %v3734
      %v3778 = vmul.f32 %v1935, %v3734
      %v3779 = vmul.f32 %v2017, %v3734
      %v3780 = vmul.f32 %v2002, %v3734
      %v3781 = vmul.f32 %v1938, %v3734
      %v3782 = vmul.f32 %v2018, %v3734
      %v3831 = vrot.slane %v3735, 2
      %v3832 = vrot.slane %v3736, 2
      %v3833 = vsel %vm2732, %v3831, %v3832
      %v3834 = vrot.slane %v3737, 2
      %v3835 = vsel %vm2732, %v3832, %v3834
      %v3836 = vrot.slane %v3738, 2
      %v3837 = vrot.slane %v3739, 2
      %v3838 = vsel %vm2732, %v3836, %v3837
      %v3839 = vrot.slane %v3740, 2
      %v3840 = vsel %vm2732, %v3837, %v3839
      %v3841 = vrot.slane %v3741, 2
      %v3842 = vrot.slane %v3742, 2
      %v3843 = vsel %vm2732, %v3841, %v3842
      %v3844 = vrot.slane %v3743, 2
      %v3845 = vsel %vm2732, %v3842, %v3844
      %v3846 = vrot.slane %v3744, 2
      %v3847 = vrot.slane %v3745, 2
      %v3848 = vsel %vm2732, %v3846, %v3847
      %v3849 = vrot.slane %v3746, 2
      %v3850 = vsel %vm2732, %v3847, %v3849
      %v3851 = vrot.slane %v3747, 2
      %v3852 = vrot.slane %v3748, 2
      %v3853 = vsel %vm2732, %v3851, %v3852
      %v3854 = vrot.slane %v3749, 2
      %v3855 = vsel %vm2732, %v3852, %v3854
      %v3856 = vrot.slane %v3750, 2
      %v3857 = vrot.slane %v3751, 2
      %v3858 = vsel %vm2732, %v3856, %v3857
      %v3859 = vrot.slane %v3752, 2
      %v3860 = vsel %vm2732, %v3857, %v3859
      %v3861 = vrot.slane %v3753, 2
      %v3862 = vrot.slane %v3754, 2
      %v3863 = vsel %vm2732, %v3861, %v3862
      %v3864 = vrot.slane %v3755, 2
      %v3865 = vsel %vm2732, %v3862, %v3864
      %v3866 = vrot.slane %v3756, 2
      %v3867 = vrot.slane %v3757, 2
      %v3868 = vsel %vm2732, %v3866, %v3867
      %v3869 = vrot.slane %v3758, 2
      %v3870 = vsel %vm2732, %v3867, %v3869
      %v3871 = vrot.slane %v3759, 2
      %v3872 = vrot.slane %v3760, 2
      %v3873 = vsel %vm2732, %v3871, %v3872
      %v3874 = vrot.slane %v3761, 2
      %v3875 = vsel %vm2732, %v3872, %v3874
      %v3876 = vrot.slane %v3762, 2
      %v3877 = vrot.slane %v3763, 2
      %v3878 = vsel %vm2732, %v3876, %v3877
      %v3879 = vrot.slane %v3764, 2
      %v3880 = vsel %vm2732, %v3877, %v3879
      %v3881 = vrot.slane %v3765, 2
      %v3882 = vrot.slane %v3766, 2
      %v3883 = vsel %vm2732, %v3881, %v3882
      %v3884 = vrot.slane %v3767, 2
      %v3885 = vsel %vm2732, %v3882, %v3884
      %v3886 = vrot.slane %v3768, 2
      %v3887 = vrot.slane %v3769, 2
      %v3888 = vsel %vm2732, %v3886, %v3887
      %v3889 = vrot.slane %v3770, 2
      %v3890 = vsel %vm2732, %v3887, %v3889
      %v3891 = vrot.slane %v3771, 2
      %v3892 = vrot.slane %v3772, 2
      %v3893 = vsel %vm2732, %v3891, %v3892
      %v3894 = vrot.slane %v3773, 2
      %v3895 = vsel %vm2732, %v3892, %v3894
      %v3896 = vrot.slane %v3774, 2
      %v3897 = vrot.slane %v3775, 2
      %v3898 = vsel %vm2732, %v3896, %v3897
      %v3899 = vrot.slane %v3776, 2
      %v3900 = vsel %vm2732, %v3897, %v3899
      %v3901 = vrot.slane %v3777, 2
      %v3902 = vrot.slane %v3778, 2
      %v3903 = vsel %vm2732, %v3901, %v3902
      %v3904 = vrot.slane %v3779, 2
      %v3905 = vsel %vm2732, %v3902, %v3904
      %v3906 = vrot.slane %v3780, 2
      %v3907 = vrot.slane %v3781, 2
      %v3908 = vsel %vm2732, %v3906, %v3907
      %v3909 = vrot.slane %v3782, 2
      %v3910 = vsel %vm2732, %v3907, %v3909
      %v3943 = vadd.f32 %v3455, %v3833
      %v3944 = vadd.f32 %v3456, %v3835
      %v3945 = vadd.f32 %v3457, %v3838
      %v3946 = vadd.f32 %v3458, %v3840
      %v3947 = vadd.f32 %v3459, %v3843
      %v3948 = vadd.f32 %v3460, %v3845
      %v3949 = vadd.f32 %v3461, %v3848
      %v3950 = vadd.f32 %v3462, %v3850
      %v3951 = vadd.f32 %v3463, %v3853
      %v3952 = vadd.f32 %v3464, %v3855
      %v3953 = vadd.f32 %v3465, %v3858
      %v3954 = vadd.f32 %v3466, %v3860
      %v3955 = vadd.f32 %v3467, %v3863
      %v3956 = vadd.f32 %v3468, %v3865
      %v3957 = vadd.f32 %v3469, %v3868
      %v3958 = vadd.f32 %v3470, %v3870
      %v3959 = vadd.f32 %v3471, %v3873
      %v3960 = vadd.f32 %v3472, %v3875
      %v3961 = vadd.f32 %v3473, %v3878
      %v3962 = vadd.f32 %v3474, %v3880
      %v3963 = vadd.f32 %v3475, %v3883
      %v3964 = vadd.f32 %v3476, %v3885
      %v3965 = vadd.f32 %v3477, %v3888
      %v3966 = vadd.f32 %v3478, %v3890
      %v3967 = vadd.f32 %v3479, %v3893
      %v3968 = vadd.f32 %v3480, %v3895
      %v3969 = vadd.f32 %v3481, %v3898
      %v3970 = vadd.f32 %v3482, %v3900
      %v3971 = vadd.f32 %v3483, %v3903
      %v3972 = vadd.f32 %v3484, %v3905
      %v3973 = vadd.f32 %v3485, %v3908
      %v3974 = vadd.f32 %v3486, %v3910
      %v3975 = vlaneseq
      %v3976 = vshrl.u32 %v3975, 7
      %v3977 = vsub.s32 5, %v3976
      %v3978 = vrot.slane %v1855, %v3977
      %v3979 = vmul.f32 %v1987, %v3978
      %v3980 = vmul.f32 %v1893, %v3978
      %v3981 = vmul.f32 %v2003, %v3978
      %v3982 = vmul.f32 %v1988, %v3978
      %v3983 = vmul.f32 %v1896, %v3978
      %v3984 = vmul.f32 %v2004, %v3978
      %v3985 = vmul.f32 %v1989, %v3978
      %v3986 = vmul.f32 %v1899, %v3978
      %v3987 = vmul.f32 %v2005, %v3978
      %v3988 = vmul.f32 %v1990, %v3978
      %v3989 = vmul.f32 %v1902, %v3978
      %v3990 = vmul.f32 %v2006, %v3978
      %v3991 = vmul.f32 %v1991, %v3978
      %v3992 = vmul.f32 %v1905, %v3978
      %v3993 = vmul.f32 %v2007, %v3978
      %v3994 = vmul.f32 %v1992, %v3978
      %v3995 = vmul.f32 %v1908, %v3978
      %v3996 = vmul.f32 %v2008, %v3978
      %v3997 = vmul.f32 %v1993, %v3978
      %v3998 = vmul.f32 %v1911, %v3978
      %v3999 = vmul.f32 %v2009, %v3978
      %v4000 = vmul.f32 %v1994, %v3978
      %v4001 = vmul.f32 %v1914, %v3978
      %v4002 = vmul.f32 %v2010, %v3978
      %v4003 = vmul.f32 %v1995, %v3978
      %v4004 = vmul.f32 %v1917, %v3978
      %v4005 = vmul.f32 %v2011, %v3978
      %v4006 = vmul.f32 %v1996, %v3978
      %v4007 = vmul.f32 %v1920, %v3978
      %v4008 = vmul.f32 %v2012, %v3978
      %v4009 = vmul.f32 %v1997, %v3978
      %v4010 = vmul.f32 %v1923, %v3978
      %v4011 = vmul.f32 %v2013, %v3978
      %v4012 = vmul.f32 %v1998, %v3978
      %v4013 = vmul.f32 %v1926, %v3978
      %v4014 = vmul.f32 %v2014, %v3978
      %v4015 = vmul.f32 %v1999, %v3978
      %v4016 = vmul.f32 %v1929, %v3978
      %v4017 = vmul.f32 %v2015, %v3978
      %v4018 = vmul.f32 %v2000, %v3978
      %v4019 = vmul.f32 %v1932, %v3978
      %v4020 = vmul.f32 %v2016, %v3978
      %v4021 = vmul.f32 %v2001, %v3978
      %v4022 = vmul.f32 %v1935, %v3978
      %v4023 = vmul.f32 %v2017, %v3978
      %v4024 = vmul.f32 %v2002, %v3978
      %v4025 = vmul.f32 %v1938, %v3978
      %v4026 = vmul.f32 %v2018, %v3978
      %v4075 = vrot.slane %v3979, 2
      %v4076 = vrot.slane %v3980, 2
      %v4077 = vsel %vm2732, %v4075, %v4076
      %v4078 = vrot.slane %v3981, 2
      %v4079 = vsel %vm2732, %v4076, %v4078
      %v4080 = vrot.slane %v3982, 2
      %v4081 = vrot.slane %v3983, 2
      %v4082 = vsel %vm2732, %v4080, %v4081
      %v4083 = vrot.slane %v3984, 2
      %v4084 = vsel %vm2732, %v4081, %v4083
      %v4085 = vrot.slane %v3985, 2
      %v4086 = vrot.slane %v3986, 2
      %v4087 = vsel %vm2732, %v4085, %v4086
      %v4088 = vrot.slane %v3987, 2
      %v4089 = vsel %vm2732, %v4086, %v4088
      %v4090 = vrot.slane %v3988, 2
      %v4091 = vrot.slane %v3989, 2
      %v4092 = vsel %vm2732, %v4090, %v4091
      %v4093 = vrot.slane %v3990, 2
      %v4094 = vsel %vm2732, %v4091, %v4093
      %v4095 = vrot.slane %v3991, 2
      %v4096 = vrot.slane %v3992, 2
      %v4097 = vsel %vm2732, %v4095, %v4096
      %v4098 = vrot.slane %v3993, 2
      %v4099 = vsel %vm2732, %v4096, %v4098
      %v4100 = vrot.slane %v3994, 2
      %v4101 = vrot.slane %v3995, 2
      %v4102 = vsel %vm2732, %v4100, %v4101
      %v4103 = vrot.slane %v3996, 2
      %v4104 = vsel %vm2732, %v4101, %v4103
      %v4105 = vrot.slane %v3997, 2
      %v4106 = vrot.slane %v3998, 2
      %v4107 = vsel %vm2732, %v4105, %v4106
      %v4108 = vrot.slane %v3999, 2
      %v4109 = vsel %vm2732, %v4106, %v4108
      %v4110 = vrot.slane %v4000, 2
      %v4111 = vrot.slane %v4001, 2
      %v4112 = vsel %vm2732, %v4110, %v4111
      %v4113 = vrot.slane %v4002, 2
      %v4114 = vsel %vm2732, %v4111, %v4113
      %v4115 = vrot.slane %v4003, 2
      %v4116 = vrot.slane %v4004, 2
      %v4117 = vsel %vm2732, %v4115, %v4116
      %v4118 = vrot.slane %v4005, 2
      %v4119 = vsel %vm2732, %v4116, %v4118
      %v4120 = vrot.slane %v4006, 2
      %v4121 = vrot.slane %v4007, 2
      %v4122 = vsel %vm2732, %v4120, %v4121
      %v4123 = vrot.slane %v4008, 2
      %v4124 = vsel %vm2732, %v4121, %v4123
      %v4125 = vrot.slane %v4009, 2
      %v4126 = vrot.slane %v4010, 2
      %v4127 = vsel %vm2732, %v4125, %v4126
      %v4128 = vrot.slane %v4011, 2
      %v4129 = vsel %vm2732, %v4126, %v4128
      %v4130 = vrot.slane %v4012, 2
      %v4131 = vrot.slane %v4013, 2
      %v4132 = vsel %vm2732, %v4130, %v4131
      %v4133 = vrot.slane %v4014, 2
      %v4134 = vsel %vm2732, %v4131, %v4133
      %v4135 = vrot.slane %v4015, 2
      %v4136 = vrot.slane %v4016, 2
      %v4137 = vsel %vm2732, %v4135, %v4136
      %v4138 = vrot.slane %v4017, 2
      %v4139 = vsel %vm2732, %v4136, %v4138
      %v4140 = vrot.slane %v4018, 2
      %v4141 = vrot.slane %v4019, 2
      %v4142 = vsel %vm2732, %v4140, %v4141
      %v4143 = vrot.slane %v4020, 2
      %v4144 = vsel %vm2732, %v4141, %v4143
      %v4145 = vrot.slane %v4021, 2
      %v4146 = vrot.slane %v4022, 2
      %v4147 = vsel %vm2732, %v4145, %v4146
      %v4148 = vrot.slane %v4023, 2
      %v4149 = vsel %vm2732, %v4146, %v4148
      %v4150 = vrot.slane %v4024, 2
      %v4151 = vrot.slane %v4025, 2
      %v4152 = vsel %vm2732, %v4150, %v4151
      %v4153 = vrot.slane %v4026, 2
      %v4154 = vsel %vm2732, %v4151, %v4153
      %v4187 = vadd.f32 %v3699, %v4077
      %v4188 = vadd.f32 %v3700, %v4079
      %v4189 = vadd.f32 %v3701, %v4082
      %v4190 = vadd.f32 %v3702, %v4084
      %v4191 = vadd.f32 %v3703, %v4087
      %v4192 = vadd.f32 %v3704, %v4089
      %v4193 = vadd.f32 %v3705, %v4092
      %v4194 = vadd.f32 %v3706, %v4094
      %v4195 = vadd.f32 %v3707, %v4097
      %v4196 = vadd.f32 %v3708, %v4099
      %v4197 = vadd.f32 %v3709, %v4102
      %v4198 = vadd.f32 %v3710, %v4104
      %v4199 = vadd.f32 %v3711, %v4107
      %v4200 = vadd.f32 %v3712, %v4109
      %v4201 = vadd.f32 %v3713, %v4112
      %v4202 = vadd.f32 %v3714, %v4114
      %v4203 = vadd.f32 %v3715, %v4117
      %v4204 = vadd.f32 %v3716, %v4119
      %v4205 = vadd.f32 %v3717, %v4122
      %v4206 = vadd.f32 %v3718, %v4124
      %v4207 = vadd.f32 %v3719, %v4127
      %v4208 = vadd.f32 %v3720, %v4129
      %v4209 = vadd.f32 %v3721, %v4132
      %v4210 = vadd.f32 %v3722, %v4134
      %v4211 = vadd.f32 %v3723, %v4137
      %v4212 = vadd.f32 %v3724, %v4139
      %v4213 = vadd.f32 %v3725, %v4142
      %v4214 = vadd.f32 %v3726, %v4144
      %v4215 = vadd.f32 %v3727, %v4147
      %v4216 = vadd.f32 %v3728, %v4149
      %v4217 = vadd.f32 %v3729, %v4152
      %v4218 = vadd.f32 %v3730, %v4154
      %v4219 = vlaneseq
      %v4220 = vshrl.u32 %v4219, 7
      %v4221 = vsub.s32 6, %v4220
      %v4222 = vrot.slane %v1853, %v4221
      %v4223 = vmul.f32 %v1988, %v4222
      %v4224 = vmul.f32 %v1896, %v4222
      %v4225 = vmul.f32 %v1989, %v4222
      %v4226 = vmul.f32 %v1899, %v4222
      %v4227 = vmul.f32 %v1990, %v4222
      %v4228 = vmul.f32 %v1902, %v4222
      %v4229 = vmul.f32 %v1991, %v4222
      %v4230 = vmul.f32 %v1905, %v4222
      %v4231 = vmul.f32 %v1992, %v4222
      %v4232 = vmul.f32 %v1908, %v4222
      %v4233 = vmul.f32 %v1993, %v4222
      %v4234 = vmul.f32 %v1911, %v4222
      %v4235 = vmul.f32 %v1994, %v4222
      %v4236 = vmul.f32 %v1914, %v4222
      %v4237 = vmul.f32 %v1995, %v4222
      %v4238 = vmul.f32 %v1917, %v4222
      %v4239 = vmul.f32 %v1996, %v4222
      %v4240 = vmul.f32 %v1920, %v4222
      %v4241 = vmul.f32 %v1997, %v4222
      %v4242 = vmul.f32 %v1923, %v4222
      %v4243 = vmul.f32 %v1998, %v4222
      %v4244 = vmul.f32 %v1926, %v4222
      %v4245 = vmul.f32 %v1999, %v4222
      %v4246 = vmul.f32 %v1929, %v4222
      %v4247 = vmul.f32 %v2000, %v4222
      %v4248 = vmul.f32 %v1932, %v4222
      %v4249 = vmul.f32 %v2001, %v4222
      %v4250 = vmul.f32 %v1935, %v4222
      %v4251 = vmul.f32 %v2002, %v4222
      %v4252 = vmul.f32 %v1938, %v4222
      %v4253 = vmul.f32 %v4222, 0.0
      %v4254 = vadd.f32 %v3943, %v4223
      %v4255 = vadd.f32 %v3944, %v4224
      %v4256 = vadd.f32 %v3945, %v4225
      %v4257 = vadd.f32 %v3946, %v4226
      %v4258 = vadd.f32 %v3947, %v4227
      %v4259 = vadd.f32 %v3948, %v4228
      %v4260 = vadd.f32 %v3949, %v4229
      %v4261 = vadd.f32 %v3950, %v4230
      %v4262 = vadd.f32 %v3951, %v4231
      %v4263 = vadd.f32 %v3952, %v4232
      %v4264 = vadd.f32 %v3953, %v4233
      %v4265 = vadd.f32 %v3954, %v4234
      %v4266 = vadd.f32 %v3955, %v4235
      %v4267 = vadd.f32 %v3956, %v4236
      %v4268 = vadd.f32 %v3957, %v4237
      %v4269 = vadd.f32 %v3958, %v4238
      %v4270 = vadd.f32 %v3959, %v4239
      %v4271 = vadd.f32 %v3960, %v4240
      %v4272 = vadd.f32 %v3961, %v4241
      %v4273 = vadd.f32 %v3962, %v4242
      %v4274 = vadd.f32 %v3963, %v4243
      %v4275 = vadd.f32 %v3964, %v4244
      %v4276 = vadd.f32 %v3965, %v4245
      %v4277 = vadd.f32 %v3966, %v4246
      %v4278 = vadd.f32 %v3967, %v4247
      %v4279 = vadd.f32 %v3968, %v4248
      %v4280 = vadd.f32 %v3969, %v4249
      %v4281 = vadd.f32 %v3970, %v4250
      %v4282 = vadd.f32 %v3971, %v4251
      %v4283 = vadd.f32 %v3972, %v4252
      %v4284 = vadd.f32 %v3973, %v4253
      %v4285 = vadd.f32 %v3974, %v4253
      %v4286 = vlaneseq
      %v4287 = vshrl.u32 %v4286, 7
      %v4288 = vsub.s32 6, %v4287
      %v4289 = vrot.slane %v1855, %v4288
      %v4290 = vmul.f32 %v1988, %v4289
      %v4291 = vmul.f32 %v1896, %v4289
      %v4292 = vmul.f32 %v1989, %v4289
      %v4293 = vmul.f32 %v1899, %v4289
      %v4294 = vmul.f32 %v1990, %v4289
      %v4295 = vmul.f32 %v1902, %v4289
      %v4296 = vmul.f32 %v1991, %v4289
      %v4297 = vmul.f32 %v1905, %v4289
      %v4298 = vmul.f32 %v1992, %v4289
      %v4299 = vmul.f32 %v1908, %v4289
      %v4300 = vmul.f32 %v1993, %v4289
      %v4301 = vmul.f32 %v1911, %v4289
      %v4302 = vmul.f32 %v1994, %v4289
      %v4303 = vmul.f32 %v1914, %v4289
      %v4304 = vmul.f32 %v1995, %v4289
      %v4305 = vmul.f32 %v1917, %v4289
      %v4306 = vmul.f32 %v1996, %v4289
      %v4307 = vmul.f32 %v1920, %v4289
      %v4308 = vmul.f32 %v1997, %v4289
      %v4309 = vmul.f32 %v1923, %v4289
      %v4310 = vmul.f32 %v1998, %v4289
      %v4311 = vmul.f32 %v1926, %v4289
      %v4312 = vmul.f32 %v1999, %v4289
      %v4313 = vmul.f32 %v1929, %v4289
      %v4314 = vmul.f32 %v2000, %v4289
      %v4315 = vmul.f32 %v1932, %v4289
      %v4316 = vmul.f32 %v2001, %v4289
      %v4317 = vmul.f32 %v1935, %v4289
      %v4318 = vmul.f32 %v2002, %v4289
      %v4319 = vmul.f32 %v1938, %v4289
      %v4320 = vmul.f32 %v4289, 0.0
      %v4321 = vadd.f32 %v4187, %v4290
      %v4322 = vadd.f32 %v4188, %v4291
      %v4323 = vadd.f32 %v4189, %v4292
      %v4324 = vadd.f32 %v4190, %v4293
      %v4325 = vadd.f32 %v4191, %v4294
      %v4326 = vadd.f32 %v4192, %v4295
      %v4327 = vadd.f32 %v4193, %v4296
      %v4328 = vadd.f32 %v4194, %v4297
      %v4329 = vadd.f32 %v4195, %v4298
      %v4330 = vadd.f32 %v4196, %v4299
      %v4331 = vadd.f32 %v4197, %v4300
      %v4332 = vadd.f32 %v4198, %v4301
      %v4333 = vadd.f32 %v4199, %v4302
      %v4334 = vadd.f32 %v4200, %v4303
      %v4335 = vadd.f32 %v4201, %v4304
      %v4336 = vadd.f32 %v4202, %v4305
      %v4337 = vadd.f32 %v4203, %v4306
      %v4338 = vadd.f32 %v4204, %v4307
      %v4339 = vadd.f32 %v4205, %v4308
      %v4340 = vadd.f32 %v4206, %v4309
      %v4341 = vadd.f32 %v4207, %v4310
      %v4342 = vadd.f32 %v4208, %v4311
      %v4343 = vadd.f32 %v4209, %v4312
      %v4344 = vadd.f32 %v4210, %v4313
      %v4345 = vadd.f32 %v4211, %v4314
      %v4346 = vadd.f32 %v4212, %v4315
      %v4347 = vadd.f32 %v4213, %v4316
      %v4348 = vadd.f32 %v4214, %v4317
      %v4349 = vadd.f32 %v4215, %v4318
      %v4350 = vadd.f32 %v4216, %v4319
      %v4351 = vadd.f32 %v4217, %v4320
      %v4352 = vadd.f32 %v4218, %v4320
      %v4353 = vlaneseq
      %v4354 = vshrl.u32 %v4353, 7
      %v4355 = vsub.s32 7, %v4354
      %v4356 = vrot.slane %v1853, %v4355
      %v4357 = vmul.f32 %v1988, %v4356
      %v4358 = vmul.f32 %v1896, %v4356
      %v4359 = vmul.f32 %v2004, %v4356
      %v4360 = vmul.f32 %v1989, %v4356
      %v4361 = vmul.f32 %v1899, %v4356
      %v4362 = vmul.f32 %v2005, %v4356
      %v4363 = vmul.f32 %v1990, %v4356
      %v4364 = vmul.f32 %v1902, %v4356
      %v4365 = vmul.f32 %v2006, %v4356
      %v4366 = vmul.f32 %v1991, %v4356
      %v4367 = vmul.f32 %v1905, %v4356
      %v4368 = vmul.f32 %v2007, %v4356
      %v4369 = vmul.f32 %v1992, %v4356
      %v4370 = vmul.f32 %v1908, %v4356
      %v4371 = vmul.f32 %v2008, %v4356
      %v4372 = vmul.f32 %v1993, %v4356
      %v4373 = vmul.f32 %v1911, %v4356
      %v4374 = vmul.f32 %v2009, %v4356
      %v4375 = vmul.f32 %v1994, %v4356
      %v4376 = vmul.f32 %v1914, %v4356
      %v4377 = vmul.f32 %v2010, %v4356
      %v4378 = vmul.f32 %v1995, %v4356
      %v4379 = vmul.f32 %v1917, %v4356
      %v4380 = vmul.f32 %v2011, %v4356
      %v4381 = vmul.f32 %v1996, %v4356
      %v4382 = vmul.f32 %v1920, %v4356
      %v4383 = vmul.f32 %v2012, %v4356
      %v4384 = vmul.f32 %v1997, %v4356
      %v4385 = vmul.f32 %v1923, %v4356
      %v4386 = vmul.f32 %v2013, %v4356
      %v4387 = vmul.f32 %v1998, %v4356
      %v4388 = vmul.f32 %v1926, %v4356
      %v4389 = vmul.f32 %v2014, %v4356
      %v4390 = vmul.f32 %v1999, %v4356
      %v4391 = vmul.f32 %v1929, %v4356
      %v4392 = vmul.f32 %v2015, %v4356
      %v4393 = vmul.f32 %v2000, %v4356
      %v4394 = vmul.f32 %v1932, %v4356
      %v4395 = vmul.f32 %v2016, %v4356
      %v4396 = vmul.f32 %v2001, %v4356
      %v4397 = vmul.f32 %v1935, %v4356
      %v4398 = vmul.f32 %v2017, %v4356
      %v4399 = vmul.f32 %v2002, %v4356
      %v4400 = vmul.f32 %v1938, %v4356
      %v4401 = vmul.f32 %v2018, %v4356
      %v4402 = vmul.f32 %v4356, 0.0
      %v4449 = vrot.slane %v4357, 1
      %v4450 = vrot.slane %v4358, 1
      %v4451 = vsel %vm2261, %v4449, %v4450
      %v4452 = vrot.slane %v4359, 1
      %v4453 = vsel %vm2261, %v4450, %v4452
      %v4454 = vrot.slane %v4360, 1
      %v4455 = vrot.slane %v4361, 1
      %v4456 = vsel %vm2261, %v4454, %v4455
      %v4457 = vrot.slane %v4362, 1
      %v4458 = vsel %vm2261, %v4455, %v4457
      %v4459 = vrot.slane %v4363, 1
      %v4460 = vrot.slane %v4364, 1
      %v4461 = vsel %vm2261, %v4459, %v4460
      %v4462 = vrot.slane %v4365, 1
      %v4463 = vsel %vm2261, %v4460, %v4462
      %v4464 = vrot.slane %v4366, 1
      %v4465 = vrot.slane %v4367, 1
      %v4466 = vsel %vm2261, %v4464, %v4465
      %v4467 = vrot.slane %v4368, 1
      %v4468 = vsel %vm2261, %v4465, %v4467
      %v4469 = vrot.slane %v4369, 1
      %v4470 = vrot.slane %v4370, 1
      %v4471 = vsel %vm2261, %v4469, %v4470
      %v4472 = vrot.slane %v4371, 1
      %v4473 = vsel %vm2261, %v4470, %v4472
      %v4474 = vrot.slane %v4372, 1
      %v4475 = vrot.slane %v4373, 1
      %v4476 = vsel %vm2261, %v4474, %v4475
      %v4477 = vrot.slane %v4374, 1
      %v4478 = vsel %vm2261, %v4475, %v4477
      %v4479 = vrot.slane %v4375, 1
      %v4480 = vrot.slane %v4376, 1
      %v4481 = vsel %vm2261, %v4479, %v4480
      %v4482 = vrot.slane %v4377, 1
      %v4483 = vsel %vm2261, %v4480, %v4482
      %v4484 = vrot.slane %v4378, 1
      %v4485 = vrot.slane %v4379, 1
      %v4486 = vsel %vm2261, %v4484, %v4485
      %v4487 = vrot.slane %v4380, 1
      %v4488 = vsel %vm2261, %v4485, %v4487
      %v4489 = vrot.slane %v4381, 1
      %v4490 = vrot.slane %v4382, 1
      %v4491 = vsel %vm2261, %v4489, %v4490
      %v4492 = vrot.slane %v4383, 1
      %v4493 = vsel %vm2261, %v4490, %v4492
      %v4494 = vrot.slane %v4384, 1
      %v4495 = vrot.slane %v4385, 1
      %v4496 = vsel %vm2261, %v4494, %v4495
      %v4497 = vrot.slane %v4386, 1
      %v4498 = vsel %vm2261, %v4495, %v4497
      %v4499 = vrot.slane %v4387, 1
      %v4500 = vrot.slane %v4388, 1
      %v4501 = vsel %vm2261, %v4499, %v4500
      %v4502 = vrot.slane %v4389, 1
      %v4503 = vsel %vm2261, %v4500, %v4502
      %v4504 = vrot.slane %v4390, 1
      %v4505 = vrot.slane %v4391, 1
      %v4506 = vsel %vm2261, %v4504, %v4505
      %v4507 = vrot.slane %v4392, 1
      %v4508 = vsel %vm2261, %v4505, %v4507
      %v4509 = vrot.slane %v4393, 1
      %v4510 = vrot.slane %v4394, 1
      %v4511 = vsel %vm2261, %v4509, %v4510
      %v4512 = vrot.slane %v4395, 1
      %v4513 = vsel %vm2261, %v4510, %v4512
      %v4514 = vrot.slane %v4396, 1
      %v4515 = vrot.slane %v4397, 1
      %v4516 = vsel %vm2261, %v4514, %v4515
      %v4517 = vrot.slane %v4398, 1
      %v4518 = vsel %vm2261, %v4515, %v4517
      %v4519 = vrot.slane %v4399, 1
      %v4520 = vrot.slane %v4400, 1
      %v4521 = vsel %vm2261, %v4519, %v4520
      %v4522 = vrot.slane %v4401, 1
      %v4523 = vsel %vm2261, %v4520, %v4522
      %v4524 = vrot.slane %v4402, 1
      %v4525 = vsel %vm2261, %v4524, %v4524
      %v4557 = vadd.f32 %v4254, %v4451
      %v4558 = vadd.f32 %v4255, %v4453
      %v4559 = vadd.f32 %v4256, %v4456
      %v4560 = vadd.f32 %v4257, %v4458
      %v4561 = vadd.f32 %v4258, %v4461
      %v4562 = vadd.f32 %v4259, %v4463
      %v4563 = vadd.f32 %v4260, %v4466
      %v4564 = vadd.f32 %v4261, %v4468
      %v4565 = vadd.f32 %v4262, %v4471
      %v4566 = vadd.f32 %v4263, %v4473
      %v4567 = vadd.f32 %v4264, %v4476
      %v4568 = vadd.f32 %v4265, %v4478
      %v4569 = vadd.f32 %v4266, %v4481
      %v4570 = vadd.f32 %v4267, %v4483
      %v4571 = vadd.f32 %v4268, %v4486
      %v4572 = vadd.f32 %v4269, %v4488
      %v4573 = vadd.f32 %v4270, %v4491
      %v4574 = vadd.f32 %v4271, %v4493
      %v4575 = vadd.f32 %v4272, %v4496
      %v4576 = vadd.f32 %v4273, %v4498
      %v4577 = vadd.f32 %v4274, %v4501
      %v4578 = vadd.f32 %v4275, %v4503
      %v4579 = vadd.f32 %v4276, %v4506
      %v4580 = vadd.f32 %v4277, %v4508
      %v4581 = vadd.f32 %v4278, %v4511
      %v4582 = vadd.f32 %v4279, %v4513
      %v4583 = vadd.f32 %v4280, %v4516
      %v4584 = vadd.f32 %v4281, %v4518
      %v4585 = vadd.f32 %v4282, %v4521
      %v4586 = vadd.f32 %v4283, %v4523
      %v4587 = vadd.f32 %v4284, %v4525
      %v4588 = vadd.f32 %v4285, %v4525
      %v4589 = vlaneseq
      %v4590 = vshrl.u32 %v4589, 7
      %v4591 = vsub.s32 7, %v4590
      %v4592 = vrot.slane %v1855, %v4591
      %v4593 = vmul.f32 %v1988, %v4592
      %v4594 = vmul.f32 %v1896, %v4592
      %v4595 = vmul.f32 %v2004, %v4592
      %v4596 = vmul.f32 %v1989, %v4592
      %v4597 = vmul.f32 %v1899, %v4592
      %v4598 = vmul.f32 %v2005, %v4592
      %v4599 = vmul.f32 %v1990, %v4592
      %v4600 = vmul.f32 %v1902, %v4592
      %v4601 = vmul.f32 %v2006, %v4592
      %v4602 = vmul.f32 %v1991, %v4592
      %v4603 = vmul.f32 %v1905, %v4592
      %v4604 = vmul.f32 %v2007, %v4592
      %v4605 = vmul.f32 %v1992, %v4592
      %v4606 = vmul.f32 %v1908, %v4592
      %v4607 = vmul.f32 %v2008, %v4592
      %v4608 = vmul.f32 %v1993, %v4592
      %v4609 = vmul.f32 %v1911, %v4592
      %v4610 = vmul.f32 %v2009, %v4592
      %v4611 = vmul.f32 %v1994, %v4592
      %v4612 = vmul.f32 %v1914, %v4592
      %v4613 = vmul.f32 %v2010, %v4592
      %v4614 = vmul.f32 %v1995, %v4592
      %v4615 = vmul.f32 %v1917, %v4592
      %v4616 = vmul.f32 %v2011, %v4592
      %v4617 = vmul.f32 %v1996, %v4592
      %v4618 = vmul.f32 %v1920, %v4592
      %v4619 = vmul.f32 %v2012, %v4592
      %v4620 = vmul.f32 %v1997, %v4592
      %v4621 = vmul.f32 %v1923, %v4592
      %v4622 = vmul.f32 %v2013, %v4592
      %v4623 = vmul.f32 %v1998, %v4592
      %v4624 = vmul.f32 %v1926, %v4592
      %v4625 = vmul.f32 %v2014, %v4592
      %v4626 = vmul.f32 %v1999, %v4592
      %v4627 = vmul.f32 %v1929, %v4592
      %v4628 = vmul.f32 %v2015, %v4592
      %v4629 = vmul.f32 %v2000, %v4592
      %v4630 = vmul.f32 %v1932, %v4592
      %v4631 = vmul.f32 %v2016, %v4592
      %v4632 = vmul.f32 %v2001, %v4592
      %v4633 = vmul.f32 %v1935, %v4592
      %v4634 = vmul.f32 %v2017, %v4592
      %v4635 = vmul.f32 %v2002, %v4592
      %v4636 = vmul.f32 %v1938, %v4592
      %v4637 = vmul.f32 %v2018, %v4592
      %v4638 = vmul.f32 %v4592, 0.0
      %v4685 = vrot.slane %v4593, 1
      %v4686 = vrot.slane %v4594, 1
      %v4687 = vsel %vm2261, %v4685, %v4686
      %v4688 = vrot.slane %v4595, 1
      %v4689 = vsel %vm2261, %v4686, %v4688
      %v4690 = vrot.slane %v4596, 1
      %v4691 = vrot.slane %v4597, 1
      %v4692 = vsel %vm2261, %v4690, %v4691
      %v4693 = vrot.slane %v4598, 1
      %v4694 = vsel %vm2261, %v4691, %v4693
      %v4695 = vrot.slane %v4599, 1
      %v4696 = vrot.slane %v4600, 1
      %v4697 = vsel %vm2261, %v4695, %v4696
      %v4698 = vrot.slane %v4601, 1
      %v4699 = vsel %vm2261, %v4696, %v4698
      %v4700 = vrot.slane %v4602, 1
      %v4701 = vrot.slane %v4603, 1
      %v4702 = vsel %vm2261, %v4700, %v4701
      %v4703 = vrot.slane %v4604, 1
      %v4704 = vsel %vm2261, %v4701, %v4703
      %v4705 = vrot.slane %v4605, 1
      %v4706 = vrot.slane %v4606, 1
      %v4707 = vsel %vm2261, %v4705, %v4706
      %v4708 = vrot.slane %v4607, 1
      %v4709 = vsel %vm2261, %v4706, %v4708
      %v4710 = vrot.slane %v4608, 1
      %v4711 = vrot.slane %v4609, 1
      %v4712 = vsel %vm2261, %v4710, %v4711
      %v4713 = vrot.slane %v4610, 1
      %v4714 = vsel %vm2261, %v4711, %v4713
      %v4715 = vrot.slane %v4611, 1
      %v4716 = vrot.slane %v4612, 1
      %v4717 = vsel %vm2261, %v4715, %v4716
      %v4718 = vrot.slane %v4613, 1
      %v4719 = vsel %vm2261, %v4716, %v4718
      %v4720 = vrot.slane %v4614, 1
      %v4721 = vrot.slane %v4615, 1
      %v4722 = vsel %vm2261, %v4720, %v4721
      %v4723 = vrot.slane %v4616, 1
      %v4724 = vsel %vm2261, %v4721, %v4723
      %v4725 = vrot.slane %v4617, 1
      %v4726 = vrot.slane %v4618, 1
      %v4727 = vsel %vm2261, %v4725, %v4726
      %v4728 = vrot.slane %v4619, 1
      %v4729 = vsel %vm2261, %v4726, %v4728
      %v4730 = vrot.slane %v4620, 1
      %v4731 = vrot.slane %v4621, 1
      %v4732 = vsel %vm2261, %v4730, %v4731
      %v4733 = vrot.slane %v4622, 1
      %v4734 = vsel %vm2261, %v4731, %v4733
      %v4735 = vrot.slane %v4623, 1
      %v4736 = vrot.slane %v4624, 1
      %v4737 = vsel %vm2261, %v4735, %v4736
      %v4738 = vrot.slane %v4625, 1
      %v4739 = vsel %vm2261, %v4736, %v4738
      %v4740 = vrot.slane %v4626, 1
      %v4741 = vrot.slane %v4627, 1
      %v4742 = vsel %vm2261, %v4740, %v4741
      %v4743 = vrot.slane %v4628, 1
      %v4744 = vsel %vm2261, %v4741, %v4743
      %v4745 = vrot.slane %v4629, 1
      %v4746 = vrot.slane %v4630, 1
      %v4747 = vsel %vm2261, %v4745, %v4746
      %v4748 = vrot.slane %v4631, 1
      %v4749 = vsel %vm2261, %v4746, %v4748
      %v4750 = vrot.slane %v4632, 1
      %v4751 = vrot.slane %v4633, 1
      %v4752 = vsel %vm2261, %v4750, %v4751
      %v4753 = vrot.slane %v4634, 1
      %v4754 = vsel %vm2261, %v4751, %v4753
      %v4755 = vrot.slane %v4635, 1
      %v4756 = vrot.slane %v4636, 1
      %v4757 = vsel %vm2261, %v4755, %v4756
      %v4758 = vrot.slane %v4637, 1
      %v4759 = vsel %vm2261, %v4756, %v4758
      %v4760 = vrot.slane %v4638, 1
      %v4761 = vsel %vm2261, %v4760, %v4760
      %v4793 = vadd.f32 %v4321, %v4687
      %v4794 = vadd.f32 %v4322, %v4689
      %v4795 = vadd.f32 %v4323, %v4692
      %v4796 = vadd.f32 %v4324, %v4694
      %v4797 = vadd.f32 %v4325, %v4697
      %v4798 = vadd.f32 %v4326, %v4699
      %v4799 = vadd.f32 %v4327, %v4702
      %v4800 = vadd.f32 %v4328, %v4704
      %v4801 = vadd.f32 %v4329, %v4707
      %v4802 = vadd.f32 %v4330, %v4709
      %v4803 = vadd.f32 %v4331, %v4712
      %v4804 = vadd.f32 %v4332, %v4714
      %v4805 = vadd.f32 %v4333, %v4717
      %v4806 = vadd.f32 %v4334, %v4719
      %v4807 = vadd.f32 %v4335, %v4722
      %v4808 = vadd.f32 %v4336, %v4724
      %v4809 = vadd.f32 %v4337, %v4727
      %v4810 = vadd.f32 %v4338, %v4729
      %v4811 = vadd.f32 %v4339, %v4732
      %v4812 = vadd.f32 %v4340, %v4734
      %v4813 = vadd.f32 %v4341, %v4737
      %v4814 = vadd.f32 %v4342, %v4739
      %v4815 = vadd.f32 %v4343, %v4742
      %v4816 = vadd.f32 %v4344, %v4744
      %v4817 = vadd.f32 %v4345, %v4747
      %v4818 = vadd.f32 %v4346, %v4749
      %v4819 = vadd.f32 %v4347, %v4752
      %v4820 = vadd.f32 %v4348, %v4754
      %v4821 = vadd.f32 %v4349, %v4757
      %v4822 = vadd.f32 %v4350, %v4759
      %v4823 = vadd.f32 %v4351, %v4761
      %v4824 = vadd.f32 %v4352, %v4761
      %v4825 = vlaneseq
      %v4826 = vshrl.u32 %v4825, 7
      %v4827 = vsub.s32 0, %v4826
      %v4828 = vrot.slane %v1854, %v4827
      %v4829 = vmul.f32 %v1988, %v4828
      %v4830 = vmul.f32 %v1896, %v4828
      %v4831 = vmul.f32 %v2004, %v4828
      %v4832 = vmul.f32 %v1989, %v4828
      %v4833 = vmul.f32 %v1899, %v4828
      %v4834 = vmul.f32 %v2005, %v4828
      %v4835 = vmul.f32 %v1990, %v4828
      %v4836 = vmul.f32 %v1902, %v4828
      %v4837 = vmul.f32 %v2006, %v4828
      %v4838 = vmul.f32 %v1991, %v4828
      %v4839 = vmul.f32 %v1905, %v4828
      %v4840 = vmul.f32 %v2007, %v4828
      %v4841 = vmul.f32 %v1992, %v4828
      %v4842 = vmul.f32 %v1908, %v4828
      %v4843 = vmul.f32 %v2008, %v4828
      %v4844 = vmul.f32 %v1993, %v4828
      %v4845 = vmul.f32 %v1911, %v4828
      %v4846 = vmul.f32 %v2009, %v4828
      %v4847 = vmul.f32 %v1994, %v4828
      %v4848 = vmul.f32 %v1914, %v4828
      %v4849 = vmul.f32 %v2010, %v4828
      %v4850 = vmul.f32 %v1995, %v4828
      %v4851 = vmul.f32 %v1917, %v4828
      %v4852 = vmul.f32 %v2011, %v4828
      %v4853 = vmul.f32 %v1996, %v4828
      %v4854 = vmul.f32 %v1920, %v4828
      %v4855 = vmul.f32 %v2012, %v4828
      %v4856 = vmul.f32 %v1997, %v4828
      %v4857 = vmul.f32 %v1923, %v4828
      %v4858 = vmul.f32 %v2013, %v4828
      %v4859 = vmul.f32 %v1998, %v4828
      %v4860 = vmul.f32 %v1926, %v4828
      %v4861 = vmul.f32 %v2014, %v4828
      %v4862 = vmul.f32 %v1999, %v4828
      %v4863 = vmul.f32 %v1929, %v4828
      %v4864 = vmul.f32 %v2015, %v4828
      %v4865 = vmul.f32 %v2000, %v4828
      %v4866 = vmul.f32 %v1932, %v4828
      %v4867 = vmul.f32 %v2016, %v4828
      %v4868 = vmul.f32 %v2001, %v4828
      %v4869 = vmul.f32 %v1935, %v4828
      %v4870 = vmul.f32 %v2017, %v4828
      %v4871 = vmul.f32 %v2002, %v4828
      %v4872 = vmul.f32 %v1938, %v4828
      %v4873 = vmul.f32 %v2018, %v4828
      %v4874 = vmul.f32 %v4828, 0.0
      %v4921 = vrot.slane %v4829, 2
      %v4922 = vrot.slane %v4830, 2
      %v4923 = vsel %vm2732, %v4921, %v4922
      %v4924 = vrot.slane %v4831, 2
      %v4925 = vsel %vm2732, %v4922, %v4924
      %v4926 = vrot.slane %v4832, 2
      %v4927 = vrot.slane %v4833, 2
      %v4928 = vsel %vm2732, %v4926, %v4927
      %v4929 = vrot.slane %v4834, 2
      %v4930 = vsel %vm2732, %v4927, %v4929
      %v4931 = vrot.slane %v4835, 2
      %v4932 = vrot.slane %v4836, 2
      %v4933 = vsel %vm2732, %v4931, %v4932
      %v4934 = vrot.slane %v4837, 2
      %v4935 = vsel %vm2732, %v4932, %v4934
      %v4936 = vrot.slane %v4838, 2
      %v4937 = vrot.slane %v4839, 2
      %v4938 = vsel %vm2732, %v4936, %v4937
      %v4939 = vrot.slane %v4840, 2
      %v4940 = vsel %vm2732, %v4937, %v4939
      %v4941 = vrot.slane %v4841, 2
      %v4942 = vrot.slane %v4842, 2
      %v4943 = vsel %vm2732, %v4941, %v4942
      %v4944 = vrot.slane %v4843, 2
      %v4945 = vsel %vm2732, %v4942, %v4944
      %v4946 = vrot.slane %v4844, 2
      %v4947 = vrot.slane %v4845, 2
      %v4948 = vsel %vm2732, %v4946, %v4947
      %v4949 = vrot.slane %v4846, 2
      %v4950 = vsel %vm2732, %v4947, %v4949
      %v4951 = vrot.slane %v4847, 2
      %v4952 = vrot.slane %v4848, 2
      %v4953 = vsel %vm2732, %v4951, %v4952
      %v4954 = vrot.slane %v4849, 2
      %v4955 = vsel %vm2732, %v4952, %v4954
      %v4956 = vrot.slane %v4850, 2
      %v4957 = vrot.slane %v4851, 2
      %v4958 = vsel %vm2732, %v4956, %v4957
      %v4959 = vrot.slane %v4852, 2
      %v4960 = vsel %vm2732, %v4957, %v4959
      %v4961 = vrot.slane %v4853, 2
      %v4962 = vrot.slane %v4854, 2
      %v4963 = vsel %vm2732, %v4961, %v4962
      %v4964 = vrot.slane %v4855, 2
      %v4965 = vsel %vm2732, %v4962, %v4964
      %v4966 = vrot.slane %v4856, 2
      %v4967 = vrot.slane %v4857, 2
      %v4968 = vsel %vm2732, %v4966, %v4967
      %v4969 = vrot.slane %v4858, 2
      %v4970 = vsel %vm2732, %v4967, %v4969
      %v4971 = vrot.slane %v4859, 2
      %v4972 = vrot.slane %v4860, 2
      %v4973 = vsel %vm2732, %v4971, %v4972
      %v4974 = vrot.slane %v4861, 2
      %v4975 = vsel %vm2732, %v4972, %v4974
      %v4976 = vrot.slane %v4862, 2
      %v4977 = vrot.slane %v4863, 2
      %v4978 = vsel %vm2732, %v4976, %v4977
      %v4979 = vrot.slane %v4864, 2
      %v4980 = vsel %vm2732, %v4977, %v4979
      %v4981 = vrot.slane %v4865, 2
      %v4982 = vrot.slane %v4866, 2
      %v4983 = vsel %vm2732, %v4981, %v4982
      %v4984 = vrot.slane %v4867, 2
      %v4985 = vsel %vm2732, %v4982, %v4984
      %v4986 = vrot.slane %v4868, 2
      %v4987 = vrot.slane %v4869, 2
      %v4988 = vsel %vm2732, %v4986, %v4987
      %v4989 = vrot.slane %v4870, 2
      %v4990 = vsel %vm2732, %v4987, %v4989
      %v4991 = vrot.slane %v4871, 2
      %v4992 = vrot.slane %v4872, 2
      %v4993 = vsel %vm2732, %v4991, %v4992
      %v4994 = vrot.slane %v4873, 2
      %v4995 = vsel %vm2732, %v4992, %v4994
      %v4996 = vrot.slane %v4874, 2
      %v4997 = vsel %vm2732, %v4996, %v4996
      %v5029 = vadd.f32 %v4557, %v4923
      %v5030 = vadd.f32 %v4558, %v4925
      %v5031 = vadd.f32 %v4559, %v4928
      %v5032 = vadd.f32 %v4560, %v4930
      %v5033 = vadd.f32 %v4561, %v4933
      %v5034 = vadd.f32 %v4562, %v4935
      %v5035 = vadd.f32 %v4563, %v4938
      %v5036 = vadd.f32 %v4564, %v4940
      %v5037 = vadd.f32 %v4565, %v4943
      %v5038 = vadd.f32 %v4566, %v4945
      %v5039 = vadd.f32 %v4567, %v4948
      %v5040 = vadd.f32 %v4568, %v4950
      %v5041 = vadd.f32 %v4569, %v4953
      %v5042 = vadd.f32 %v4570, %v4955
      %v5043 = vadd.f32 %v4571, %v4958
      %v5044 = vadd.f32 %v4572, %v4960
      %v5045 = vadd.f32 %v4573, %v4963
      %v5046 = vadd.f32 %v4574, %v4965
      %v5047 = vadd.f32 %v4575, %v4968
      %v5048 = vadd.f32 %v4576, %v4970
      %v5049 = vadd.f32 %v4577, %v4973
      %v5050 = vadd.f32 %v4578, %v4975
      %v5051 = vadd.f32 %v4579, %v4978
      %v5052 = vadd.f32 %v4580, %v4980
      %v5053 = vadd.f32 %v4581, %v4983
      %v5054 = vadd.f32 %v4582, %v4985
      %v5055 = vadd.f32 %v4583, %v4988
      %v5056 = vadd.f32 %v4584, %v4990
      %v5057 = vadd.f32 %v4585, %v4993
      %v5058 = vadd.f32 %v4586, %v4995
      %v5059 = vadd.f32 %v4587, %v4997
      %v5060 = vadd.f32 %v4588, %v4997
      %v5061 = vlaneseq
      %v5062 = vshrl.u32 %v5061, 7
      %v5063 = vsub.s32 0, %v5062
      %v5064 = vrot.slane %v1856, %v5063
      %v5065 = vmul.f32 %v1988, %v5064
      %v5066 = vmul.f32 %v1896, %v5064
      %v5067 = vmul.f32 %v2004, %v5064
      %v5068 = vmul.f32 %v1989, %v5064
      %v5069 = vmul.f32 %v1899, %v5064
      %v5070 = vmul.f32 %v2005, %v5064
      %v5071 = vmul.f32 %v1990, %v5064
      %v5072 = vmul.f32 %v1902, %v5064
      %v5073 = vmul.f32 %v2006, %v5064
      %v5074 = vmul.f32 %v1991, %v5064
      %v5075 = vmul.f32 %v1905, %v5064
      %v5076 = vmul.f32 %v2007, %v5064
      %v5077 = vmul.f32 %v1992, %v5064
      %v5078 = vmul.f32 %v1908, %v5064
      %v5079 = vmul.f32 %v2008, %v5064
      %v5080 = vmul.f32 %v1993, %v5064
      %v5081 = vmul.f32 %v1911, %v5064
      %v5082 = vmul.f32 %v2009, %v5064
      %v5083 = vmul.f32 %v1994, %v5064
      %v5084 = vmul.f32 %v1914, %v5064
      %v5085 = vmul.f32 %v2010, %v5064
      %v5086 = vmul.f32 %v1995, %v5064
      %v5087 = vmul.f32 %v1917, %v5064
      %v5088 = vmul.f32 %v2011, %v5064
      %v5089 = vmul.f32 %v1996, %v5064
      %v5090 = vmul.f32 %v1920, %v5064
      %v5091 = vmul.f32 %v2012, %v5064
      %v5092 = vmul.f32 %v1997, %v5064
      %v5093 = vmul.f32 %v1923, %v5064
      %v5094 = vmul.f32 %v2013, %v5064
      %v5095 = vmul.f32 %v1998, %v5064
      %v5096 = vmul.f32 %v1926, %v5064
      %v5097 = vmul.f32 %v2014, %v5064
      %v5098 = vmul.f32 %v1999, %v5064
      %v5099 = vmul.f32 %v1929, %v5064
      %v5100 = vmul.f32 %v2015, %v5064
      %v5101 = vmul.f32 %v2000, %v5064
      %v5102 = vmul.f32 %v1932, %v5064
      %v5103 = vmul.f32 %v2016, %v5064
      %v5104 = vmul.f32 %v2001, %v5064
      %v5105 = vmul.f32 %v1935, %v5064
      %v5106 = vmul.f32 %v2017, %v5064
      %v5107 = vmul.f32 %v2002, %v5064
      %v5108 = vmul.f32 %v1938, %v5064
      %v5109 = vmul.f32 %v2018, %v5064
      %v5110 = vmul.f32 %v5064, 0.0
      %v5157 = vrot.slane %v5065, 2
      %v5158 = vrot.slane %v5066, 2
      %v5159 = vsel %vm2732, %v5157, %v5158
      %v5160 = vrot.slane %v5067, 2
      %v5161 = vsel %vm2732, %v5158, %v5160
      %v5162 = vrot.slane %v5068, 2
      %v5163 = vrot.slane %v5069, 2
      %v5164 = vsel %vm2732, %v5162, %v5163
      %v5165 = vrot.slane %v5070, 2
      %v5166 = vsel %vm2732, %v5163, %v5165
      %v5167 = vrot.slane %v5071, 2
      %v5168 = vrot.slane %v5072, 2
      %v5169 = vsel %vm2732, %v5167, %v5168
      %v5170 = vrot.slane %v5073, 2
      %v5171 = vsel %vm2732, %v5168, %v5170
      %v5172 = vrot.slane %v5074, 2
      %v5173 = vrot.slane %v5075, 2
      %v5174 = vsel %vm2732, %v5172, %v5173
      %v5175 = vrot.slane %v5076, 2
      %v5176 = vsel %vm2732, %v5173, %v5175
      %v5177 = vrot.slane %v5077, 2
      %v5178 = vrot.slane %v5078, 2
      %v5179 = vsel %vm2732, %v5177, %v5178
      %v5180 = vrot.slane %v5079, 2
      %v5181 = vsel %vm2732, %v5178, %v5180
      %v5182 = vrot.slane %v5080, 2
      %v5183 = vrot.slane %v5081, 2
      %v5184 = vsel %vm2732, %v5182, %v5183
      %v5185 = vrot.slane %v5082, 2
      %v5186 = vsel %vm2732, %v5183, %v5185
      %v5187 = vrot.slane %v5083, 2
      %v5188 = vrot.slane %v5084, 2
      %v5189 = vsel %vm2732, %v5187, %v5188
      %v5190 = vrot.slane %v5085, 2
      %v5191 = vsel %vm2732, %v5188, %v5190
      %v5192 = vrot.slane %v5086, 2
      %v5193 = vrot.slane %v5087, 2
      %v5194 = vsel %vm2732, %v5192, %v5193
      %v5195 = vrot.slane %v5088, 2
      %v5196 = vsel %vm2732, %v5193, %v5195
      %v5197 = vrot.slane %v5089, 2
      %v5198 = vrot.slane %v5090, 2
      %v5199 = vsel %vm2732, %v5197, %v5198
      %v5200 = vrot.slane %v5091, 2
      %v5201 = vsel %vm2732, %v5198, %v5200
      %v5202 = vrot.slane %v5092, 2
      %v5203 = vrot.slane %v5093, 2
      %v5204 = vsel %vm2732, %v5202, %v5203
      %v5205 = vrot.slane %v5094, 2
      %v5206 = vsel %vm2732, %v5203, %v5205
      %v5207 = vrot.slane %v5095, 2
      %v5208 = vrot.slane %v5096, 2
      %v5209 = vsel %vm2732, %v5207, %v5208
      %v5210 = vrot.slane %v5097, 2
      %v5211 = vsel %vm2732, %v5208, %v5210
      %v5212 = vrot.slane %v5098, 2
      %v5213 = vrot.slane %v5099, 2
      %v5214 = vsel %vm2732, %v5212, %v5213
      %v5215 = vrot.slane %v5100, 2
      %v5216 = vsel %vm2732, %v5213, %v5215
      %v5217 = vrot.slane %v5101, 2
      %v5218 = vrot.slane %v5102, 2
      %v5219 = vsel %vm2732, %v5217, %v5218
      %v5220 = vrot.slane %v5103, 2
      %v5221 = vsel %vm2732, %v5218, %v5220
      %v5222 = vrot.slane %v5104, 2
      %v5223 = vrot.slane %v5105, 2
      %v5224 = vsel %vm2732, %v5222, %v5223
      %v5225 = vrot.slane %v5106, 2
      %v5226 = vsel %vm2732, %v5223, %v5225
      %v5227 = vrot.slane %v5107, 2
      %v5228 = vrot.slane %v5108, 2
      %v5229 = vsel %vm2732, %v5227, %v5228
      %v5230 = vrot.slane %v5109, 2
      %v5231 = vsel %vm2732, %v5228, %v5230
      %v5232 = vrot.slane %v5110, 2
      %v5233 = vsel %vm2732, %v5232, %v5232
      %v5265 = vadd.f32 %v4793, %v5159
      %v5266 = vadd.f32 %v4794, %v5161
      %v5267 = vadd.f32 %v4795, %v5164
      %v5268 = vadd.f32 %v4796, %v5166
      %v5269 = vadd.f32 %v4797, %v5169
      %v5270 = vadd.f32 %v4798, %v5171
      %v5271 = vadd.f32 %v4799, %v5174
      %v5272 = vadd.f32 %v4800, %v5176
      %v5273 = vadd.f32 %v4801, %v5179
      %v5274 = vadd.f32 %v4802, %v5181
      %v5275 = vadd.f32 %v4803, %v5184
      %v5276 = vadd.f32 %v4804, %v5186
      %v5277 = vadd.f32 %v4805, %v5189
      %v5278 = vadd.f32 %v4806, %v5191
      %v5279 = vadd.f32 %v4807, %v5194
      %v5280 = vadd.f32 %v4808, %v5196
      %v5281 = vadd.f32 %v4809, %v5199
      %v5282 = vadd.f32 %v4810, %v5201
      %v5283 = vadd.f32 %v4811, %v5204
      %v5284 = vadd.f32 %v4812, %v5206
      %v5285 = vadd.f32 %v4813, %v5209
      %v5286 = vadd.f32 %v4814, %v5211
      %v5287 = vadd.f32 %v4815, %v5214
      %v5288 = vadd.f32 %v4816, %v5216
      %v5289 = vadd.f32 %v4817, %v5219
      %v5290 = vadd.f32 %v4818, %v5221
      %v5291 = vadd.f32 %v4819, %v5224
      %v5292 = vadd.f32 %v4820, %v5226
      %v5293 = vadd.f32 %v4821, %v5229
      %v5294 = vadd.f32 %v4822, %v5231
      %v5295 = vadd.f32 %v4823, %v5233
      %v5296 = vadd.f32 %v4824, %v5233
      %v5297 = vld [vmem:[%s16] sm:$0xf]
      %v5298 = vld [vmem:[%s16 + $0x4] sm:$0xf]
      %v5299 = vld [vmem:[%s16 + $0x8] sm:$0xf]
      %v5300 = vld [vmem:[%s16 + $0xc] sm:$0xf]
      %v5301 = vpack.c.bf16 %v5030, %v5029
      %v5302 = vpack.c.bf16 %v5032, %v5031
      %v5303 = vpack.c.bf16 %v5034, %v5033
      %v5304 = vpack.c.bf16 %v5036, %v5035
      %v5305 = vpack.c.bf16 %v5038, %v5037
      %v5306 = vpack.c.bf16 %v5040, %v5039
      %v5307 = vpack.c.bf16 %v5042, %v5041
      %v5308 = vpack.c.bf16 %v5044, %v5043
      %v5309 = vpack.c.bf16 %v5046, %v5045
      %v5310 = vpack.c.bf16 %v5048, %v5047
      %v5311 = vpack.c.bf16 %v5050, %v5049
      %v5312 = vpack.c.bf16 %v5052, %v5051
      %v5313 = vpack.c.bf16 %v5054, %v5053
      %v5314 = vpack.c.bf16 %v5056, %v5055
      %v5315 = vpack.c.bf16 %v5058, %v5057
      %v5316 = vpack.c.bf16 %v5060, %v5059
      %v5317 = vld [vmem:[%s17] sm:$0xf]
      %v5318 = vld [vmem:[%s17 + $0x4] sm:$0xf]
      %v5319 = vld [vmem:[%s17 + $0x8] sm:$0xf]
      %v5320 = vld [vmem:[%s17 + $0xc] sm:$0xf]
      %v5321 = vpack.c.bf16 %v5266, %v5265
      %v5322 = vpack.c.bf16 %v5268, %v5267
      %v5323 = vpack.c.bf16 %v5270, %v5269
      %v5324 = vpack.c.bf16 %v5272, %v5271
      %v5325 = vpack.c.bf16 %v5274, %v5273
      %v5326 = vpack.c.bf16 %v5276, %v5275
      %v5327 = vpack.c.bf16 %v5278, %v5277
      %v5328 = vpack.c.bf16 %v5280, %v5279
      %v5329 = vpack.c.bf16 %v5282, %v5281
      %v5330 = vpack.c.bf16 %v5284, %v5283
      %v5331 = vpack.c.bf16 %v5286, %v5285
      %v5332 = vpack.c.bf16 %v5288, %v5287
      %v5333 = vpack.c.bf16 %v5290, %v5289
      %v5334 = vpack.c.bf16 %v5292, %v5291
      %v5335 = vpack.c.bf16 %v5294, %v5293
      %v5336 = vpack.c.bf16 %v5296, %v5295
      %v5341 = vunpack.c.l.b16 %v5317
      %v5342 = vunpack.c.l.b16 %v5318
      %v5343 = vunpack.c.l.b16 %v5319
      %v5344 = vunpack.c.l.b16 %v5320
      %v5345 = vpack.c.b16 %v5342, %v5341
      %v5346 = vpack.c.b16 %v5344, %v5343
      %v5350 = vsel %vm793, %v5321, 0
      %v5353 = vsel %vm793, %v5322, 0
      %v5356 = vsel %vm793, %v5323, 0
      %v5359 = vsel %vm793, %v5324, 0
      %v5362 = vsel %vm793, %v5325, 0
      %v5365 = vsel %vm793, %v5326, 0
      %v5368 = vsel %vm793, %v5327, 0
      %v5371 = vsel %vm793, %v5328, 0
      %v5374 = vsel %vm793, %v5329, 0
      %v5377 = vsel %vm793, %v5330, 0
      %v5380 = vsel %vm793, %v5331, 0
      %v5383 = vsel %vm793, %v5332, 0
      %v5386 = vsel %vm793, %v5333, 0
      %v5389 = vsel %vm793, %v5334, 0
      %v5392 = vsel %vm793, %v5335, 0
      %v5395 = vsel %vm793, %v5336, 0
      %5397 = vmatprep.subr.bf16.mxu0 0
      %5398 = vmatpush1.bf16.msra.mxu0 0
      %5399 = vmatprep.subr.bf16.mxu0 0
      %5400 = vmatpush1.bf16.msra.mxu0 0
      %5401 = vmatprep.subr.bf16.mxu0 0
      %5402 = vmatpush1.bf16.msra.mxu0 0
      %5403 = vmatprep.subr.bf16.mxu0 0
      %5404 = vmatpush1.bf16.msra.mxu0 0
      %5405 = vmatprep.subr.bf16.mxu0 0
      %5406 = vmatpush1.bf16.msra.mxu0 0
      %5407 = vmatprep.subr.bf16.mxu0 0
      %5408 = vmatpush1.bf16.msra.mxu0 0
      %5409 = vmatprep.subr.bf16.mxu0 0
      %5410 = vmatpush1.bf16.msra.mxu0 %v5346
      %5411 = vmatprep.subr.bf16.mxu0 0
      %5412 = vmatpush1.bf16.msra.mxu0 %v5345
      %5413 = vmatprep.subr.bf16.mxu0 0
      %5414 = vmatpush2.bf16.msra.mxu0 0
      %5415 = vmatprep.subr.bf16.mxu0 0
      %5416 = vmatpush2.bf16.msra.mxu0 0
      %5417 = vmatprep.subr.bf16.mxu0 0
      %5418 = vmatpush2.bf16.msra.mxu0 0
      %5419 = vmatprep.subr.bf16.mxu0 0
      %5420 = vmatpush2.bf16.msra.mxu0 0
      %5421 = vmatprep.subr.bf16.mxu0 0
      %5422 = vmatpush2.bf16.msra.mxu0 0
      %5423 = vmatprep.subr.bf16.mxu0 0
      %5424 = vmatpush2.bf16.msra.mxu0 0
      %5425 = vmatprep.subr.bf16.mxu0 0
      %5426 = vmatpush2.bf16.msra.mxu0 0
      %5427 = vmatprep.subr.bf16.mxu0 0
      %5428 = vmatpush2.bf16.msra.mxu0 0
      %5429 = vmatprep.mubr.bf16.mxu0 0
      %5430 = vmatmul.mubr.bf16.gmra.mxu0 %v5350
      %v5431 = vpop.f32.mrf.mxu0
      %v5432 = vadd.f32 0.0, %v5431
      %v5433 = vpop.f32.mrf.mxu0
      %v5434 = vpop.f32.mrf.mxu0
      %v5435 = vadd.f32 0.0, %v5434
      %v5436 = vpop.f32.mrf.mxu0
      %5437 = vmatprep.mubr.bf16.mxu0 0
      %5438 = vmatmul.mubr.bf16.gmra.mxu0 %v5353
      %v5439 = vpop.f32.mrf.mxu0
      %v5440 = vadd.f32 0.0, %v5439
      %v5441 = vpop.f32.mrf.mxu0
      %v5442 = vpop.f32.mrf.mxu0
      %v5443 = vadd.f32 0.0, %v5442
      %v5444 = vpop.f32.mrf.mxu0
      %5445 = vmatprep.mubr.bf16.mxu0 0
      %5446 = vmatmul.mubr.bf16.gmra.mxu0 %v5356
      %v5447 = vpop.f32.mrf.mxu0
      %v5448 = vadd.f32 0.0, %v5447
      %v5449 = vpop.f32.mrf.mxu0
      %v5450 = vpop.f32.mrf.mxu0
      %v5451 = vadd.f32 0.0, %v5450
      %v5452 = vpop.f32.mrf.mxu0
      %5453 = vmatprep.mubr.bf16.mxu0 0
      %5454 = vmatmul.mubr.bf16.gmra.mxu0 %v5359
      %v5455 = vpop.f32.mrf.mxu0
      %v5456 = vadd.f32 0.0, %v5455
      %v5457 = vpop.f32.mrf.mxu0
      %v5458 = vpop.f32.mrf.mxu0
      %v5459 = vadd.f32 0.0, %v5458
      %v5460 = vpop.f32.mrf.mxu0
      %5461 = vmatprep.mubr.bf16.mxu0 0
      %5462 = vmatmul.mubr.bf16.gmra.mxu0 %v5362
      %v5463 = vpop.f32.mrf.mxu0
      %v5464 = vadd.f32 0.0, %v5463
      %v5465 = vpop.f32.mrf.mxu0
      %v5466 = vpop.f32.mrf.mxu0
      %v5467 = vadd.f32 0.0, %v5466
      %v5468 = vpop.f32.mrf.mxu0
      %5469 = vmatprep.mubr.bf16.mxu0 0
      %5470 = vmatmul.mubr.bf16.gmra.mxu0 %v5365
      %v5471 = vpop.f32.mrf.mxu0
      %v5472 = vadd.f32 0.0, %v5471
      %v5473 = vpop.f32.mrf.mxu0
      %v5474 = vpop.f32.mrf.mxu0
      %v5475 = vadd.f32 0.0, %v5474
      %v5476 = vpop.f32.mrf.mxu0
      %5477 = vmatprep.mubr.bf16.mxu0 0
      %5478 = vmatmul.mubr.bf16.gmra.mxu0 %v5368
      %v5479 = vpop.f32.mrf.mxu0
      %v5480 = vadd.f32 0.0, %v5479
      %v5481 = vpop.f32.mrf.mxu0
      %v5482 = vpop.f32.mrf.mxu0
      %v5483 = vadd.f32 0.0, %v5482
      %v5484 = vpop.f32.mrf.mxu0
      %5485 = vmatprep.mubr.bf16.mxu0 0
      %5486 = vmatmul.mubr.bf16.gmra.mxu0 %v5371
      %v5487 = vpop.f32.mrf.mxu0
      %v5488 = vadd.f32 0.0, %v5487
      %v5489 = vpop.f32.mrf.mxu0
      %v5490 = vpop.f32.mrf.mxu0
      %v5491 = vadd.f32 0.0, %v5490
      %v5492 = vpop.f32.mrf.mxu0
      %5493 = vmatprep.mubr.bf16.mxu0 0
      %5494 = vmatmul.mubr.bf16.gmra.mxu0 %v5374
      %v5495 = vpop.f32.mrf.mxu0
      %v5496 = vadd.f32 0.0, %v5495
      %v5497 = vpop.f32.mrf.mxu0
      %v5498 = vpop.f32.mrf.mxu0
      %v5499 = vadd.f32 0.0, %v5498
      %v5500 = vpop.f32.mrf.mxu0
      %5501 = vmatprep.mubr.bf16.mxu0 0
      %5502 = vmatmul.mubr.bf16.gmra.mxu0 %v5377
      %v5503 = vpop.f32.mrf.mxu0
      %v5504 = vadd.f32 0.0, %v5503
      %v5505 = vpop.f32.mrf.mxu0
      %v5506 = vpop.f32.mrf.mxu0
      %v5507 = vadd.f32 0.0, %v5506
      %v5508 = vpop.f32.mrf.mxu0
      %5509 = vmatprep.mubr.bf16.mxu0 0
      %5510 = vmatmul.mubr.bf16.gmra.mxu0 %v5380
      %v5511 = vpop.f32.mrf.mxu0
      %v5512 = vadd.f32 0.0, %v5511
      %v5513 = vpop.f32.mrf.mxu0
      %v5514 = vpop.f32.mrf.mxu0
      %v5515 = vadd.f32 0.0, %v5514
      %v5516 = vpop.f32.mrf.mxu0
      %5517 = vmatprep.mubr.bf16.mxu0 0
      %5518 = vmatmul.mubr.bf16.gmra.mxu0 %v5383
      %v5519 = vpop.f32.mrf.mxu0
      %v5520 = vadd.f32 0.0, %v5519
      %v5521 = vpop.f32.mrf.mxu0
      %v5522 = vpop.f32.mrf.mxu0
      %v5523 = vadd.f32 0.0, %v5522
      %v5524 = vpop.f32.mrf.mxu0
      %5525 = vmatprep.mubr.bf16.mxu0 0
      %5526 = vmatmul.mubr.bf16.gmra.mxu0 %v5386
      %v5527 = vpop.f32.mrf.mxu0
      %v5528 = vadd.f32 0.0, %v5527
      %v5529 = vpop.f32.mrf.mxu0
      %v5530 = vpop.f32.mrf.mxu0
      %v5531 = vadd.f32 0.0, %v5530
      %v5532 = vpop.f32.mrf.mxu0
      %5533 = vmatprep.mubr.bf16.mxu0 0
      %5534 = vmatmul.mubr.bf16.gmra.mxu0 %v5389
      %v5535 = vpop.f32.mrf.mxu0
      %v5536 = vadd.f32 0.0, %v5535
      %v5537 = vpop.f32.mrf.mxu0
      %v5538 = vpop.f32.mrf.mxu0
      %v5539 = vadd.f32 0.0, %v5538
      %v5540 = vpop.f32.mrf.mxu0
      %5541 = vmatprep.mubr.bf16.mxu0 0
      %5542 = vmatmul.mubr.bf16.gmra.mxu0 %v5392
      %v5543 = vpop.f32.mrf.mxu0
      %v5544 = vadd.f32 0.0, %v5543
      %v5545 = vpop.f32.mrf.mxu0
      %v5546 = vpop.f32.mrf.mxu0
      %v5547 = vadd.f32 0.0, %v5546
      %v5548 = vpop.f32.mrf.mxu0
      %5549 = vmatprep.mubr.bf16.mxu0 0
      %5550 = vmatmul.mubr.bf16.gmra.mxu0 %v5395
      %v5551 = vpop.f32.mrf.mxu0
      %v5552 = vadd.f32 0.0, %v5551
      %v5553 = vpop.f32.mrf.mxu0
      %v5554 = vpop.f32.mrf.mxu0
      %v5555 = vadd.f32 0.0, %v5554
      %v5556 = vpop.f32.mrf.mxu0
      %5557 = vdwg.mxu0
      %v5562 = vunpack.c.l.b16 %v5297
      %v5563 = vunpack.c.l.b16 %v5298
      %v5564 = vunpack.c.l.b16 %v5299
      %v5565 = vunpack.c.l.b16 %v5300
      %v5566 = vpack.c.b16 %v5563, %v5562
      %v5567 = vpack.c.b16 %v5565, %v5564
      %v5571 = vsel %vm793, %v5301, 0
      %v5574 = vsel %vm793, %v5302, 0
      %v5577 = vsel %vm793, %v5303, 0
      %v5580 = vsel %vm793, %v5304, 0
      %v5583 = vsel %vm793, %v5305, 0
      %v5586 = vsel %vm793, %v5306, 0
      %v5589 = vsel %vm793, %v5307, 0
      %v5592 = vsel %vm793, %v5308, 0
      %v5595 = vsel %vm793, %v5309, 0
      %v5598 = vsel %vm793, %v5310, 0
      %v5601 = vsel %vm793, %v5311, 0
      %v5604 = vsel %vm793, %v5312, 0
      %v5607 = vsel %vm793, %v5313, 0
      %v5610 = vsel %vm793, %v5314, 0
      %v5613 = vsel %vm793, %v5315, 0
      %v5616 = vsel %vm793, %v5316, 0
      %5618 = vmatprep.subr.bf16.mxu0 0
      %5619 = vmatpush1.bf16.msra.mxu0 0
      %5620 = vmatprep.subr.bf16.mxu0 0
      %5621 = vmatpush1.bf16.msra.mxu0 0
      %5622 = vmatprep.subr.bf16.mxu0 0
      %5623 = vmatpush1.bf16.msra.mxu0 0
      %5624 = vmatprep.subr.bf16.mxu0 0
      %5625 = vmatpush1.bf16.msra.mxu0 0
      %5626 = vmatprep.subr.bf16.mxu0 0
      %5627 = vmatpush1.bf16.msra.mxu0 0
      %5628 = vmatprep.subr.bf16.mxu0 0
      %5629 = vmatpush1.bf16.msra.mxu0 0
      %5630 = vmatprep.subr.bf16.mxu0 0
      %5631 = vmatpush1.bf16.msra.mxu0 %v5567
      %5632 = vmatprep.subr.bf16.mxu0 0
      %5633 = vmatpush1.bf16.msra.mxu0 %v5566
      %5634 = vmatprep.subr.bf16.mxu0 0
      %5635 = vmatpush2.bf16.msra.mxu0 0
      %5636 = vmatprep.subr.bf16.mxu0 0
      %5637 = vmatpush2.bf16.msra.mxu0 0
      %5638 = vmatprep.subr.bf16.mxu0 0
      %5639 = vmatpush2.bf16.msra.mxu0 0
      %5640 = vmatprep.subr.bf16.mxu0 0
      %5641 = vmatpush2.bf16.msra.mxu0 0
      %5642 = vmatprep.subr.bf16.mxu0 0
      %5643 = vmatpush2.bf16.msra.mxu0 0
      %5644 = vmatprep.subr.bf16.mxu0 0
      %5645 = vmatpush2.bf16.msra.mxu0 0
      %5646 = vmatprep.subr.bf16.mxu0 0
      %5647 = vmatpush2.bf16.msra.mxu0 0
      %5648 = vmatprep.subr.bf16.mxu0 0
      %5649 = vmatpush2.bf16.msra.mxu0 0
      %5650 = vmatprep.mubr.bf16.mxu0 0
      %5651 = vmatmul.mubr.bf16.gmra.mxu0 %v5571
      %v5652 = vpop.f32.mrf.mxu0
      %v5653 = vadd.f32 %v5432, %v5652
      %v5654 = vpop.f32.mrf.mxu0
      %v5655 = vpop.f32.mrf.mxu0
      %v5656 = vadd.f32 %v5435, %v5655
      %v5657 = vpop.f32.mrf.mxu0
      %5658 = vmatprep.mubr.bf16.mxu0 0
      %5659 = vmatmul.mubr.bf16.gmra.mxu0 %v5574
      %v5660 = vpop.f32.mrf.mxu0
      %v5661 = vadd.f32 %v5440, %v5660
      %v5662 = vpop.f32.mrf.mxu0
      %v5663 = vpop.f32.mrf.mxu0
      %v5664 = vadd.f32 %v5443, %v5663
      %v5665 = vpop.f32.mrf.mxu0
      %5666 = vmatprep.mubr.bf16.mxu0 0
      %5667 = vmatmul.mubr.bf16.gmra.mxu0 %v5577
      %v5668 = vpop.f32.mrf.mxu0
      %v5669 = vadd.f32 %v5448, %v5668
      %v5670 = vpop.f32.mrf.mxu0
      %v5671 = vpop.f32.mrf.mxu0
      %v5672 = vadd.f32 %v5451, %v5671
      %v5673 = vpop.f32.mrf.mxu0
      %5674 = vmatprep.mubr.bf16.mxu0 0
      %5675 = vmatmul.mubr.bf16.gmra.mxu0 %v5580
      %v5676 = vpop.f32.mrf.mxu0
      %v5677 = vadd.f32 %v5456, %v5676
      %v5678 = vpop.f32.mrf.mxu0
      %v5679 = vpop.f32.mrf.mxu0
      %v5680 = vadd.f32 %v5459, %v5679
      %v5681 = vpop.f32.mrf.mxu0
      %5682 = vmatprep.mubr.bf16.mxu0 0
      %5683 = vmatmul.mubr.bf16.gmra.mxu0 %v5583
      %v5684 = vpop.f32.mrf.mxu0
      %v5685 = vadd.f32 %v5464, %v5684
      %v5686 = vpop.f32.mrf.mxu0
      %v5687 = vpop.f32.mrf.mxu0
      %v5688 = vadd.f32 %v5467, %v5687
      %v5689 = vpop.f32.mrf.mxu0
      %5690 = vmatprep.mubr.bf16.mxu0 0
      %5691 = vmatmul.mubr.bf16.gmra.mxu0 %v5586
      %v5692 = vpop.f32.mrf.mxu0
      %v5693 = vadd.f32 %v5472, %v5692
      %v5694 = vpop.f32.mrf.mxu0
      %v5695 = vpop.f32.mrf.mxu0
      %v5696 = vadd.f32 %v5475, %v5695
      %v5697 = vpop.f32.mrf.mxu0
      %5698 = vmatprep.mubr.bf16.mxu0 0
      %5699 = vmatmul.mubr.bf16.gmra.mxu0 %v5589
      %v5700 = vpop.f32.mrf.mxu0
      %v5701 = vadd.f32 %v5480, %v5700
      %v5702 = vpop.f32.mrf.mxu0
      %v5703 = vpop.f32.mrf.mxu0
      %v5704 = vadd.f32 %v5483, %v5703
      %v5705 = vpop.f32.mrf.mxu0
      %5706 = vmatprep.mubr.bf16.mxu0 0
      %5707 = vmatmul.mubr.bf16.gmra.mxu0 %v5592
      %v5708 = vpop.f32.mrf.mxu0
      %v5709 = vadd.f32 %v5488, %v5708
      %v5710 = vpop.f32.mrf.mxu0
      %v5711 = vpop.f32.mrf.mxu0
      %v5712 = vadd.f32 %v5491, %v5711
      %v5713 = vpop.f32.mrf.mxu0
      %5714 = vmatprep.mubr.bf16.mxu0 0
      %5715 = vmatmul.mubr.bf16.gmra.mxu0 %v5595
      %v5716 = vpop.f32.mrf.mxu0
      %v5717 = vadd.f32 %v5496, %v5716
      %v5718 = vpop.f32.mrf.mxu0
      %v5719 = vpop.f32.mrf.mxu0
      %v5720 = vadd.f32 %v5499, %v5719
      %v5721 = vpop.f32.mrf.mxu0
      %5722 = vmatprep.mubr.bf16.mxu0 0
      %5723 = vmatmul.mubr.bf16.gmra.mxu0 %v5598
      %v5724 = vpop.f32.mrf.mxu0
      %v5725 = vadd.f32 %v5504, %v5724
      %v5726 = vpop.f32.mrf.mxu0
      %v5727 = vpop.f32.mrf.mxu0
      %v5728 = vadd.f32 %v5507, %v5727
      %v5729 = vpop.f32.mrf.mxu0
      %5730 = vmatprep.mubr.bf16.mxu0 0
      %5731 = vmatmul.mubr.bf16.gmra.mxu0 %v5601
      %v5732 = vpop.f32.mrf.mxu0
      %v5733 = vadd.f32 %v5512, %v5732
      %v5734 = vpop.f32.mrf.mxu0
      %v5735 = vpop.f32.mrf.mxu0
      %v5736 = vadd.f32 %v5515, %v5735
      %v5737 = vpop.f32.mrf.mxu0
      %5738 = vmatprep.mubr.bf16.mxu0 0
      %5739 = vmatmul.mubr.bf16.gmra.mxu0 %v5604
      %v5740 = vpop.f32.mrf.mxu0
      %v5741 = vadd.f32 %v5520, %v5740
      %v5742 = vpop.f32.mrf.mxu0
      %v5743 = vpop.f32.mrf.mxu0
      %v5744 = vadd.f32 %v5523, %v5743
      %v5745 = vpop.f32.mrf.mxu0
      %5746 = vmatprep.mubr.bf16.mxu0 0
      %5747 = vmatmul.mubr.bf16.gmra.mxu0 %v5607
      %v5748 = vpop.f32.mrf.mxu0
      %v5749 = vadd.f32 %v5528, %v5748
      %v5750 = vpop.f32.mrf.mxu0
      %v5751 = vpop.f32.mrf.mxu0
      %v5752 = vadd.f32 %v5531, %v5751
      %v5753 = vpop.f32.mrf.mxu0
      %5754 = vmatprep.mubr.bf16.mxu0 0
      %5755 = vmatmul.mubr.bf16.gmra.mxu0 %v5610
      %v5756 = vpop.f32.mrf.mxu0
      %v5757 = vadd.f32 %v5536, %v5756
      %v5758 = vpop.f32.mrf.mxu0
      %v5759 = vpop.f32.mrf.mxu0
      %v5760 = vadd.f32 %v5539, %v5759
      %v5761 = vpop.f32.mrf.mxu0
      %5762 = vmatprep.mubr.bf16.mxu0 0
      %5763 = vmatmul.mubr.bf16.gmra.mxu0 %v5613
      %v5764 = vpop.f32.mrf.mxu0
      %v5765 = vadd.f32 %v5544, %v5764
      %v5766 = vpop.f32.mrf.mxu0
      %v5767 = vpop.f32.mrf.mxu0
      %v5768 = vadd.f32 %v5547, %v5767
      %v5769 = vpop.f32.mrf.mxu0
      %5770 = vmatprep.mubr.bf16.mxu0 0
      %5771 = vmatmul.mubr.bf16.gmra.mxu0 %v5616
      %v5772 = vpop.f32.mrf.mxu0
      %v5773 = vadd.f32 %v5552, %v5772
      %v5774 = vpop.f32.mrf.mxu0
      %v5775 = vpop.f32.mrf.mxu0
      %v5776 = vadd.f32 %v5555, %v5775
      %v5777 = vpop.f32.mrf.mxu0
      %5778 = vdwg.mxu0
      %v5779 = vld [vmem:[%s18] sm:$0x1]
      %v5781 = vlaneseq
      %v5782 = vshrl.u32 %v5781, 7
      %v5783 = vsub.s32 0, %v5782
      %v5784 = vrot.slane %v5779, %v5783
      %v5786 = vadd.f32 %v5653, %v5784
      %v5787 = vadd.f32 %v5656, %v5784
      %v5788 = vadd.f32 %v5661, %v5784
      %v5789 = vadd.f32 %v5664, %v5784
      %v5790 = vadd.f32 %v5669, %v5784
      %v5791 = vadd.f32 %v5672, %v5784
      %v5792 = vadd.f32 %v5677, %v5784
      %v5793 = vadd.f32 %v5680, %v5784
      %v5794 = vadd.f32 %v5685, %v5784
      %v5795 = vadd.f32 %v5688, %v5784
      %v5796 = vadd.f32 %v5693, %v5784
      %v5797 = vadd.f32 %v5696, %v5784
      %v5798 = vadd.f32 %v5701, %v5784
      %v5799 = vadd.f32 %v5704, %v5784
      %v5800 = vadd.f32 %v5709, %v5784
      %v5801 = vadd.f32 %v5712, %v5784
      %v5802 = vadd.f32 %v5717, %v5784
      %v5803 = vadd.f32 %v5720, %v5784
      %v5804 = vadd.f32 %v5725, %v5784
      %v5805 = vadd.f32 %v5728, %v5784
      %v5806 = vadd.f32 %v5733, %v5784
      %v5807 = vadd.f32 %v5736, %v5784
      %v5808 = vadd.f32 %v5741, %v5784
      %v5809 = vadd.f32 %v5744, %v5784
      %v5810 = vadd.f32 %v5749, %v5784
      %v5811 = vadd.f32 %v5752, %v5784
      %v5812 = vadd.f32 %v5757, %v5784
      %v5813 = vadd.f32 %v5760, %v5784
      %v5814 = vadd.f32 %v5765, %v5784
      %v5815 = vadd.f32 %v5768, %v5784
      %v5816 = vadd.f32 %v5773, %v5784
      %v5817 = vadd.f32 %v5776, %v5784
      %v5818 = vmul.f32 %v5786, 0.70710677
      %v5819 = vmul.f32 %v5787, 0.70710677
      %v5820 = vmul.f32 %v5788, 0.70710677
      %v5821 = vmul.f32 %v5789, 0.70710677
      %v5822 = vmul.f32 %v5790, 0.70710677
      %v5823 = vmul.f32 %v5791, 0.70710677
      %v5824 = vmul.f32 %v5792, 0.70710677
      %v5825 = vmul.f32 %v5793, 0.70710677
      %v5826 = vmul.f32 %v5794, 0.70710677
      %v5827 = vmul.f32 %v5795, 0.70710677
      %v5828 = vmul.f32 %v5796, 0.70710677
      %v5829 = vmul.f32 %v5797, 0.70710677
      %v5830 = vmul.f32 %v5798, 0.70710677
      %v5831 = vmul.f32 %v5799, 0.70710677
      %v5832 = vmul.f32 %v5800, 0.70710677
      %v5833 = vmul.f32 %v5801, 0.70710677
      %v5834 = vmul.f32 %v5802, 0.70710677
      %v5835 = vmul.f32 %v5803, 0.70710677
      %v5836 = vmul.f32 %v5804, 0.70710677
      %v5837 = vmul.f32 %v5805, 0.70710677
      %v5838 = vmul.f32 %v5806, 0.70710677
      %v5839 = vmul.f32 %v5807, 0.70710677
      %v5840 = vmul.f32 %v5808, 0.70710677
      %v5841 = vmul.f32 %v5809, 0.70710677
      %v5842 = vmul.f32 %v5810, 0.70710677
      %v5843 = vmul.f32 %v5811, 0.70710677
      %v5844 = vmul.f32 %v5812, 0.70710677
      %v5845 = vmul.f32 %v5813, 0.70710677
      %v5846 = vmul.f32 %v5814, 0.70710677
      %v5847 = vmul.f32 %v5815, 0.70710677
      %v5848 = vmul.f32 %v5816, 0.70710677
      %v5849 = vmul.f32 %v5817, 0.70710677
      %vm5850 = vcmp.ge.f32.partialorder %v5818, 0.0
      %vm5851 = vcmp.ge.f32.partialorder %v5819, 0.0
      %vm5852 = vcmp.ge.f32.partialorder %v5820, 0.0
      %vm5853 = vcmp.ge.f32.partialorder %v5821, 0.0
      %vm5854 = vcmp.ge.f32.partialorder %v5822, 0.0
      %vm5855 = vcmp.ge.f32.partialorder %v5823, 0.0
      %vm5856 = vcmp.ge.f32.partialorder %v5824, 0.0
      %vm5857 = vcmp.ge.f32.partialorder %v5825, 0.0
      %vm5858 = vcmp.ge.f32.partialorder %v5826, 0.0
      %vm5859 = vcmp.ge.f32.partialorder %v5827, 0.0
      %vm5860 = vcmp.ge.f32.partialorder %v5828, 0.0
      %vm5861 = vcmp.ge.f32.partialorder %v5829, 0.0
      %vm5862 = vcmp.ge.f32.partialorder %v5830, 0.0
      %vm5863 = vcmp.ge.f32.partialorder %v5831, 0.0
      %vm5864 = vcmp.ge.f32.partialorder %v5832, 0.0
      %vm5865 = vcmp.ge.f32.partialorder %v5833, 0.0
      %vm5866 = vcmp.ge.f32.partialorder %v5834, 0.0
      %vm5867 = vcmp.ge.f32.partialorder %v5835, 0.0
      %vm5868 = vcmp.ge.f32.partialorder %v5836, 0.0
      %vm5869 = vcmp.ge.f32.partialorder %v5837, 0.0
      %vm5870 = vcmp.ge.f32.partialorder %v5838, 0.0
      %vm5871 = vcmp.ge.f32.partialorder %v5839, 0.0
      %vm5872 = vcmp.ge.f32.partialorder %v5840, 0.0
      %vm5873 = vcmp.ge.f32.partialorder %v5841, 0.0
      %vm5874 = vcmp.ge.f32.partialorder %v5842, 0.0
      %vm5875 = vcmp.ge.f32.partialorder %v5843, 0.0
      %vm5876 = vcmp.ge.f32.partialorder %v5844, 0.0
      %vm5877 = vcmp.ge.f32.partialorder %v5845, 0.0
      %vm5878 = vcmp.ge.f32.partialorder %v5846, 0.0
      %vm5879 = vcmp.ge.f32.partialorder %v5847, 0.0
      %vm5880 = vcmp.ge.f32.partialorder %v5848, 0.0
      %vm5881 = vcmp.ge.f32.partialorder %v5849, 0.0
      %v5882 = vsel %vm5850, 1.0, -1.0
      %v5883 = vsel %vm5851, 1.0, -1.0
      %v5884 = vsel %vm5852, 1.0, -1.0
      %v5885 = vsel %vm5853, 1.0, -1.0
      %v5886 = vsel %vm5854, 1.0, -1.0
      %v5887 = vsel %vm5855, 1.0, -1.0
      %v5888 = vsel %vm5856, 1.0, -1.0
      %v5889 = vsel %vm5857, 1.0, -1.0
      %v5890 = vsel %vm5858, 1.0, -1.0
      %v5891 = vsel %vm5859, 1.0, -1.0
      %v5892 = vsel %vm5860, 1.0, -1.0
      %v5893 = vsel %vm5861, 1.0, -1.0
      %v5894 = vsel %vm5862, 1.0, -1.0
      %v5895 = vsel %vm5863, 1.0, -1.0
      %v5896 = vsel %vm5864, 1.0, -1.0
      %v5897 = vsel %vm5865, 1.0, -1.0
      %v5898 = vsel %vm5866, 1.0, -1.0
      %v5899 = vsel %vm5867, 1.0, -1.0
      %v5900 = vsel %vm5868, 1.0, -1.0
      %v5901 = vsel %vm5869, 1.0, -1.0
      %v5902 = vsel %vm5870, 1.0, -1.0
      %v5903 = vsel %vm5871, 1.0, -1.0
      %v5904 = vsel %vm5872, 1.0, -1.0
      %v5905 = vsel %vm5873, 1.0, -1.0
      %v5906 = vsel %vm5874, 1.0, -1.0
      %v5907 = vsel %vm5875, 1.0, -1.0
      %v5908 = vsel %vm5876, 1.0, -1.0
      %v5909 = vsel %vm5877, 1.0, -1.0
      %v5910 = vsel %vm5878, 1.0, -1.0
      %v5911 = vsel %vm5879, 1.0, -1.0
      %v5912 = vsel %vm5880, 1.0, -1.0
      %v5913 = vsel %vm5881, 1.0, -1.0
      %v5914 = vand.u32 2147483647, %v5818
      %v5915 = vand.u32 2147483647, %v5819
      %v5916 = vand.u32 2147483647, %v5820
      %v5917 = vand.u32 2147483647, %v5821
      %v5918 = vand.u32 2147483647, %v5822
      %v5919 = vand.u32 2147483647, %v5823
      %v5920 = vand.u32 2147483647, %v5824
      %v5921 = vand.u32 2147483647, %v5825
      %v5922 = vand.u32 2147483647, %v5826
      %v5923 = vand.u32 2147483647, %v5827
      %v5924 = vand.u32 2147483647, %v5828
      %v5925 = vand.u32 2147483647, %v5829
      %v5926 = vand.u32 2147483647, %v5830
      %v5927 = vand.u32 2147483647, %v5831
      %v5928 = vand.u32 2147483647, %v5832
      %v5929 = vand.u32 2147483647, %v5833
      %v5930 = vand.u32 2147483647, %v5834
      %v5931 = vand.u32 2147483647, %v5835
      %v5932 = vand.u32 2147483647, %v5836
      %v5933 = vand.u32 2147483647, %v5837
      %v5934 = vand.u32 2147483647, %v5838
      %v5935 = vand.u32 2147483647, %v5839
      %v5936 = vand.u32 2147483647, %v5840
      %v5937 = vand.u32 2147483647, %v5841
      %v5938 = vand.u32 2147483647, %v5842
      %v5939 = vand.u32 2147483647, %v5843
      %v5940 = vand.u32 2147483647, %v5844
      %v5941 = vand.u32 2147483647, %v5845
      %v5942 = vand.u32 2147483647, %v5846
      %v5943 = vand.u32 2147483647, %v5847
      %v5944 = vand.u32 2147483647, %v5848
      %v5945 = vand.u32 2147483647, %v5849
      %v5946 = vmul.f32 %v5914, 0.3275911
      %v5947 = vmul.f32 %v5915, 0.3275911
      %v5948 = vmul.f32 %v5916, 0.3275911
      %v5949 = vmul.f32 %v5917, 0.3275911
      %v5950 = vmul.f32 %v5918, 0.3275911
      %v5951 = vmul.f32 %v5919, 0.3275911
      %v5952 = vmul.f32 %v5920, 0.3275911
      %v5953 = vmul.f32 %v5921, 0.3275911
      %v5954 = vmul.f32 %v5922, 0.3275911
      %v5955 = vmul.f32 %v5923, 0.3275911
      %v5956 = vmul.f32 %v5924, 0.3275911
      %v5957 = vmul.f32 %v5925, 0.3275911
      %v5958 = vmul.f32 %v5926, 0.3275911
      %v5959 = vmul.f32 %v5927, 0.3275911
      %v5960 = vmul.f32 %v5928, 0.3275911
      %v5961 = vmul.f32 %v5929, 0.3275911
      %v5962 = vmul.f32 %v5930, 0.3275911
      %v5963 = vmul.f32 %v5931, 0.3275911
      %v5964 = vmul.f32 %v5932, 0.3275911
      %v5965 = vmul.f32 %v5933, 0.3275911
      %v5966 = vmul.f32 %v5934, 0.3275911
      %v5967 = vmul.f32 %v5935, 0.3275911
      %v5968 = vmul.f32 %v5936, 0.3275911
      %v5969 = vmul.f32 %v5937, 0.3275911
      %v5970 = vmul.f32 %v5938, 0.3275911
      %v5971 = vmul.f32 %v5939, 0.3275911
      %v5972 = vmul.f32 %v5940, 0.3275911
      %v5973 = vmul.f32 %v5941, 0.3275911
      %v5974 = vmul.f32 %v5942, 0.3275911
      %v5975 = vmul.f32 %v5943, 0.3275911
      %v5976 = vmul.f32 %v5944, 0.3275911
      %v5977 = vmul.f32 %v5945, 0.3275911
      %v5978 = vadd.f32 %v5946, 1.0
      %v5979 = vadd.f32 %v5947, 1.0
      %v5980 = vadd.f32 %v5948, 1.0
      %v5981 = vadd.f32 %v5949, 1.0
      %v5982 = vadd.f32 %v5950, 1.0
      %v5983 = vadd.f32 %v5951, 1.0
      %v5984 = vadd.f32 %v5952, 1.0
      %v5985 = vadd.f32 %v5953, 1.0
      %v5986 = vadd.f32 %v5954, 1.0
      %v5987 = vadd.f32 %v5955, 1.0
      %v5988 = vadd.f32 %v5956, 1.0
      %v5989 = vadd.f32 %v5957, 1.0
      %v5990 = vadd.f32 %v5958, 1.0
      %v5991 = vadd.f32 %v5959, 1.0
      %v5992 = vadd.f32 %v5960, 1.0
      %v5993 = vadd.f32 %v5961, 1.0
      %v5994 = vadd.f32 %v5962, 1.0
      %v5995 = vadd.f32 %v5963, 1.0
      %v5996 = vadd.f32 %v5964, 1.0
      %v5997 = vadd.f32 %v5965, 1.0
      %v5998 = vadd.f32 %v5966, 1.0
      %v5999 = vadd.f32 %v5967, 1.0
      %v6000 = vadd.f32 %v5968, 1.0
      %v6001 = vadd.f32 %v5969, 1.0
      %v6002 = vadd.f32 %v5970, 1.0
      %v6003 = vadd.f32 %v5971, 1.0
      %v6004 = vadd.f32 %v5972, 1.0
      %v6005 = vadd.f32 %v5973, 1.0
      %v6006 = vadd.f32 %v5974, 1.0
      %v6007 = vadd.f32 %v5975, 1.0
      %v6008 = vadd.f32 %v5976, 1.0
      %v6009 = vadd.f32 %v5977, 1.0
      %v6010 = vrcp.pop %v5978
      %v6011 = vmul.f32 1.0, %v6010
      %v6012 = vrcp.pop %v5979
      %v6013 = vmul.f32 1.0, %v6012
      %v6014 = vrcp.pop %v5980
      %v6015 = vmul.f32 1.0, %v6014
      %v6016 = vrcp.pop %v5981
      %v6017 = vmul.f32 1.0, %v6016
      %v6018 = vrcp.pop %v5982
      %v6019 = vmul.f32 1.0, %v6018
      %v6020 = vrcp.pop %v5983
      %v6021 = vmul.f32 1.0, %v6020
      %v6022 = vrcp.pop %v5984
      %v6023 = vmul.f32 1.0, %v6022
      %v6024 = vrcp.pop %v5985
      %v6025 = vmul.f32 1.0, %v6024
      %v6026 = vrcp.pop %v5986
      %v6027 = vmul.f32 1.0, %v6026
      %v6028 = vrcp.pop %v5987
      %v6029 = vmul.f32 1.0, %v6028
      %v6030 = vrcp.pop %v5988
      %v6031 = vmul.f32 1.0, %v6030
      %v6032 = vrcp.pop %v5989
      %v6033 = vmul.f32 1.0, %v6032
      %v6034 = vrcp.pop %v5990
      %v6035 = vmul.f32 1.0, %v6034
      %v6036 = vrcp.pop %v5991
      %v6037 = vmul.f32 1.0, %v6036
      %v6038 = vrcp.pop %v5992
      %v6039 = vmul.f32 1.0, %v6038
      %v6040 = vrcp.pop %v5993
      %v6041 = vmul.f32 1.0, %v6040
      %v6042 = vrcp.pop %v5994
      %v6043 = vmul.f32 1.0, %v6042
      %v6044 = vrcp.pop %v5995
      %v6045 = vmul.f32 1.0, %v6044
      %v6046 = vrcp.pop %v5996
      %v6047 = vmul.f32 1.0, %v6046
      %v6048 = vrcp.pop %v5997
      %v6049 = vmul.f32 1.0, %v6048
      %v6050 = vrcp.pop %v5998
      %v6051 = vmul.f32 1.0, %v6050
      %v6052 = vrcp.pop %v5999
      %v6053 = vmul.f32 1.0, %v6052
      %v6054 = vrcp.pop %v6000
      %v6055 = vmul.f32 1.0, %v6054
      %v6056 = vrcp.pop %v6001
      %v6057 = vmul.f32 1.0, %v6056
      %v6058 = vrcp.pop %v6002
      %v6059 = vmul.f32 1.0, %v6058
      %v6060 = vrcp.pop %v6003
      %v6061 = vmul.f32 1.0, %v6060
      %v6062 = vrcp.pop %v6004
      %v6063 = vmul.f32 1.0, %v6062
      %v6064 = vrcp.pop %v6005
      %v6065 = vmul.f32 1.0, %v6064
      %v6066 = vrcp.pop %v6006
      %v6067 = vmul.f32 1.0, %v6066
      %v6068 = vrcp.pop %v6007
      %v6069 = vmul.f32 1.0, %v6068
      %v6070 = vrcp.pop %v6008
      %v6071 = vmul.f32 1.0, %v6070
      %v6072 = vrcp.pop %v6009
      %v6073 = vmul.f32 1.0, %v6072
      %v6074 = vmul.f32 %v6011, 1.0614054
      %v6075 = vmul.f32 %v6013, 1.0614054
      %v6076 = vmul.f32 %v6015, 1.0614054
      %v6077 = vmul.f32 %v6017, 1.0614054
      %v6078 = vmul.f32 %v6019, 1.0614054
      %v6079 = vmul.f32 %v6021, 1.0614054
      %v6080 = vmul.f32 %v6023, 1.0614054
      %v6081 = vmul.f32 %v6025, 1.0614054
      %v6082 = vmul.f32 %v6027, 1.0614054
      %v6083 = vmul.f32 %v6029, 1.0614054
      %v6084 = vmul.f32 %v6031, 1.0614054
      %v6085 = vmul.f32 %v6033, 1.0614054
      %v6086 = vmul.f32 %v6035, 1.0614054
      %v6087 = vmul.f32 %v6037, 1.0614054
      %v6088 = vmul.f32 %v6039, 1.0614054
      %v6089 = vmul.f32 %v6041, 1.0614054
      %v6090 = vmul.f32 %v6043, 1.0614054
      %v6091 = vmul.f32 %v6045, 1.0614054
      %v6092 = vmul.f32 %v6047, 1.0614054
      %v6093 = vmul.f32 %v6049, 1.0614054
      %v6094 = vmul.f32 %v6051, 1.0614054
      %v6095 = vmul.f32 %v6053, 1.0614054
      %v6096 = vmul.f32 %v6055, 1.0614054
      %v6097 = vmul.f32 %v6057, 1.0614054
      %v6098 = vmul.f32 %v6059, 1.0614054
      %v6099 = vmul.f32 %v6061, 1.0614054
      %v6100 = vmul.f32 %v6063, 1.0614054
      %v6101 = vmul.f32 %v6065, 1.0614054
      %v6102 = vmul.f32 %v6067, 1.0614054
      %v6103 = vmul.f32 %v6069, 1.0614054
      %v6104 = vmul.f32 %v6071, 1.0614054
      %v6105 = vmul.f32 %v6073, 1.0614054
      %v6106 = vadd.f32 %v6074, -1.4531521
      %v6107 = vadd.f32 %v6075, -1.4531521
      %v6108 = vadd.f32 %v6076, -1.4531521
      %v6109 = vadd.f32 %v6077, -1.4531521
      %v6110 = vadd.f32 %v6078, -1.4531521
      %v6111 = vadd.f32 %v6079, -1.4531521
      %v6112 = vadd.f32 %v6080, -1.4531521
      %v6113 = vadd.f32 %v6081, -1.4531521
      %v6114 = vadd.f32 %v6082, -1.4531521
      %v6115 = vadd.f32 %v6083, -1.4531521
      %v6116 = vadd.f32 %v6084, -1.4531521
      %v6117 = vadd.f32 %v6085, -1.4531521
      %v6118 = vadd.f32 %v6086, -1.4531521
      %v6119 = vadd.f32 %v6087, -1.4531521
      %v6120 = vadd.f32 %v6088, -1.4531521
      %v6121 = vadd.f32 %v6089, -1.4531521
      %v6122 = vadd.f32 %v6090, -1.4531521
      %v6123 = vadd.f32 %v6091, -1.4531521
      %v6124 = vadd.f32 %v6092, -1.4531521
      %v6125 = vadd.f32 %v6093, -1.4531521
      %v6126 = vadd.f32 %v6094, -1.4531521
      %v6127 = vadd.f32 %v6095, -1.4531521
      %v6128 = vadd.f32 %v6096, -1.4531521
      %v6129 = vadd.f32 %v6097, -1.4531521
      %v6130 = vadd.f32 %v6098, -1.4531521
      %v6131 = vadd.f32 %v6099, -1.4531521
      %v6132 = vadd.f32 %v6100, -1.4531521
      %v6133 = vadd.f32 %v6101, -1.4531521
      %v6134 = vadd.f32 %v6102, -1.4531521
      %v6135 = vadd.f32 %v6103, -1.4531521
      %v6136 = vadd.f32 %v6104, -1.4531521
      %v6137 = vadd.f32 %v6105, -1.4531521
      %v6138 = vmul.f32 %v6106, %v6011
      %v6139 = vmul.f32 %v6107, %v6013
      %v6140 = vmul.f32 %v6108, %v6015
      %v6141 = vmul.f32 %v6109, %v6017
      %v6142 = vmul.f32 %v6110, %v6019
      %v6143 = vmul.f32 %v6111, %v6021
      %v6144 = vmul.f32 %v6112, %v6023
      %v6145 = vmul.f32 %v6113, %v6025
      %v6146 = vmul.f32 %v6114, %v6027
      %v6147 = vmul.f32 %v6115, %v6029
      %v6148 = vmul.f32 %v6116, %v6031
      %v6149 = vmul.f32 %v6117, %v6033
      %v6150 = vmul.f32 %v6118, %v6035
      %v6151 = vmul.f32 %v6119, %v6037
      %v6152 = vmul.f32 %v6120, %v6039
      %v6153 = vmul.f32 %v6121, %v6041
      %v6154 = vmul.f32 %v6122, %v6043
      %v6155 = vmul.f32 %v6123, %v6045
      %v6156 = vmul.f32 %v6124, %v6047
      %v6157 = vmul.f32 %v6125, %v6049
      %v6158 = vmul.f32 %v6126, %v6051
      %v6159 = vmul.f32 %v6127, %v6053
      %v6160 = vmul.f32 %v6128, %v6055
      %v6161 = vmul.f32 %v6129, %v6057
      %v6162 = vmul.f32 %v6130, %v6059
      %v6163 = vmul.f32 %v6131, %v6061
      %v6164 = vmul.f32 %v6132, %v6063
      %v6165 = vmul.f32 %v6133, %v6065
      %v6166 = vmul.f32 %v6134, %v6067
      %v6167 = vmul.f32 %v6135, %v6069
      %v6168 = vmul.f32 %v6136, %v6071
      %v6169 = vmul.f32 %v6137, %v6073
      %v6170 = vadd.f32 %v6138, 1.4214138
      %v6171 = vadd.f32 %v6139, 1.4214138
      %v6172 = vadd.f32 %v6140, 1.4214138
      %v6173 = vadd.f32 %v6141, 1.4214138
      %v6174 = vadd.f32 %v6142, 1.4214138
      %v6175 = vadd.f32 %v6143, 1.4214138
      %v6176 = vadd.f32 %v6144, 1.4214138
      %v6177 = vadd.f32 %v6145, 1.4214138
      %v6178 = vadd.f32 %v6146, 1.4214138
      %v6179 = vadd.f32 %v6147, 1.4214138
      %v6180 = vadd.f32 %v6148, 1.4214138
      %v6181 = vadd.f32 %v6149, 1.4214138
      %v6182 = vadd.f32 %v6150, 1.4214138
      %v6183 = vadd.f32 %v6151, 1.4214138
      %v6184 = vadd.f32 %v6152, 1.4214138
      %v6185 = vadd.f32 %v6153, 1.4214138
      %v6186 = vadd.f32 %v6154, 1.4214138
      %v6187 = vadd.f32 %v6155, 1.4214138
      %v6188 = vadd.f32 %v6156, 1.4214138
      %v6189 = vadd.f32 %v6157, 1.4214138
      %v6190 = vadd.f32 %v6158, 1.4214138
      %v6191 = vadd.f32 %v6159, 1.4214138
      %v6192 = vadd.f32 %v6160, 1.4214138
      %v6193 = vadd.f32 %v6161, 1.4214138
      %v6194 = vadd.f32 %v6162, 1.4214138
      %v6195 = vadd.f32 %v6163, 1.4214138
      %v6196 = vadd.f32 %v6164, 1.4214138
      %v6197 = vadd.f32 %v6165, 1.4214138
      %v6198 = vadd.f32 %v6166, 1.4214138
      %v6199 = vadd.f32 %v6167, 1.4214138
      %v6200 = vadd.f32 %v6168, 1.4214138
      %v6201 = vadd.f32 %v6169, 1.4214138
      %v6202 = vmul.f32 %v6170, %v6011
      %v6203 = vmul.f32 %v6171, %v6013
      %v6204 = vmul.f32 %v6172, %v6015
      %v6205 = vmul.f32 %v6173, %v6017
      %v6206 = vmul.f32 %v6174, %v6019
      %v6207 = vmul.f32 %v6175, %v6021
      %v6208 = vmul.f32 %v6176, %v6023
      %v6209 = vmul.f32 %v6177, %v6025
      %v6210 = vmul.f32 %v6178, %v6027
      %v6211 = vmul.f32 %v6179, %v6029
      %v6212 = vmul.f32 %v6180, %v6031
      %v6213 = vmul.f32 %v6181, %v6033
      %v6214 = vmul.f32 %v6182, %v6035
      %v6215 = vmul.f32 %v6183, %v6037
      %v6216 = vmul.f32 %v6184, %v6039
      %v6217 = vmul.f32 %v6185, %v6041
      %v6218 = vmul.f32 %v6186, %v6043
      %v6219 = vmul.f32 %v6187, %v6045
      %v6220 = vmul.f32 %v6188, %v6047
      %v6221 = vmul.f32 %v6189, %v6049
      %v6222 = vmul.f32 %v6190, %v6051
      %v6223 = vmul.f32 %v6191, %v6053
      %v6224 = vmul.f32 %v6192, %v6055
      %v6225 = vmul.f32 %v6193, %v6057
      %v6226 = vmul.f32 %v6194, %v6059
      %v6227 = vmul.f32 %v6195, %v6061
      %v6228 = vmul.f32 %v6196, %v6063
      %v6229 = vmul.f32 %v6197, %v6065
      %v6230 = vmul.f32 %v6198, %v6067
      %v6231 = vmul.f32 %v6199, %v6069
      %v6232 = vmul.f32 %v6200, %v6071
      %v6233 = vmul.f32 %v6201, %v6073
      %v6234 = vadd.f32 %v6202, -0.28449672
      %v6235 = vadd.f32 %v6203, -0.28449672
      %v6236 = vadd.f32 %v6204, -0.28449672
      %v6237 = vadd.f32 %v6205, -0.28449672
      %v6238 = vadd.f32 %v6206, -0.28449672
      %v6239 = vadd.f32 %v6207, -0.28449672
      %v6240 = vadd.f32 %v6208, -0.28449672
      %v6241 = vadd.f32 %v6209, -0.28449672
      %v6242 = vadd.f32 %v6210, -0.28449672
      %v6243 = vadd.f32 %v6211, -0.28449672
      %v6244 = vadd.f32 %v6212, -0.28449672
      %v6245 = vadd.f32 %v6213, -0.28449672
      %v6246 = vadd.f32 %v6214, -0.28449672
      %v6247 = vadd.f32 %v6215, -0.28449672
      %v6248 = vadd.f32 %v6216, -0.28449672
      %v6249 = vadd.f32 %v6217, -0.28449672
      %v6250 = vadd.f32 %v6218, -0.28449672
      %v6251 = vadd.f32 %v6219, -0.28449672
      %v6252 = vadd.f32 %v6220, -0.28449672
      %v6253 = vadd.f32 %v6221, -0.28449672
      %v6254 = vadd.f32 %v6222, -0.28449672
      %v6255 = vadd.f32 %v6223, -0.28449672
      %v6256 = vadd.f32 %v6224, -0.28449672
      %v6257 = vadd.f32 %v6225, -0.28449672
      %v6258 = vadd.f32 %v6226, -0.28449672
      %v6259 = vadd.f32 %v6227, -0.28449672
      %v6260 = vadd.f32 %v6228, -0.28449672
      %v6261 = vadd.f32 %v6229, -0.28449672
      %v6262 = vadd.f32 %v6230, -0.28449672
      %v6263 = vadd.f32 %v6231, -0.28449672
      %v6264 = vadd.f32 %v6232, -0.28449672
      %v6265 = vadd.f32 %v6233, -0.28449672
      %v6266 = vmul.f32 %v6234, %v6011
      %v6267 = vmul.f32 %v6235, %v6013
      %v6268 = vmul.f32 %v6236, %v6015
      %v6269 = vmul.f32 %v6237, %v6017
      %v6270 = vmul.f32 %v6238, %v6019
      %v6271 = vmul.f32 %v6239, %v6021
      %v6272 = vmul.f32 %v6240, %v6023
      %v6273 = vmul.f32 %v6241, %v6025
      %v6274 = vmul.f32 %v6242, %v6027
      %v6275 = vmul.f32 %v6243, %v6029
      %v6276 = vmul.f32 %v6244, %v6031
      %v6277 = vmul.f32 %v6245, %v6033
      %v6278 = vmul.f32 %v6246, %v6035
      %v6279 = vmul.f32 %v6247, %v6037
      %v6280 = vmul.f32 %v6248, %v6039
      %v6281 = vmul.f32 %v6249, %v6041
      %v6282 = vmul.f32 %v6250, %v6043
      %v6283 = vmul.f32 %v6251, %v6045
      %v6284 = vmul.f32 %v6252, %v6047
      %v6285 = vmul.f32 %v6253, %v6049
      %v6286 = vmul.f32 %v6254, %v6051
      %v6287 = vmul.f32 %v6255, %v6053
      %v6288 = vmul.f32 %v6256, %v6055
      %v6289 = vmul.f32 %v6257, %v6057
      %v6290 = vmul.f32 %v6258, %v6059
      %v6291 = vmul.f32 %v6259, %v6061
      %v6292 = vmul.f32 %v6260, %v6063
      %v6293 = vmul.f32 %v6261, %v6065
      %v6294 = vmul.f32 %v6262, %v6067
      %v6295 = vmul.f32 %v6263, %v6069
      %v6296 = vmul.f32 %v6264, %v6071
      %v6297 = vmul.f32 %v6265, %v6073
      %v6298 = vadd.f32 %v6266, 0.2548296
      %v6299 = vadd.f32 %v6267, 0.2548296
      %v6300 = vadd.f32 %v6268, 0.2548296
      %v6301 = vadd.f32 %v6269, 0.2548296
      %v6302 = vadd.f32 %v6270, 0.2548296
      %v6303 = vadd.f32 %v6271, 0.2548296
      %v6304 = vadd.f32 %v6272, 0.2548296
      %v6305 = vadd.f32 %v6273, 0.2548296
      %v6306 = vadd.f32 %v6274, 0.2548296
      %v6307 = vadd.f32 %v6275, 0.2548296
      %v6308 = vadd.f32 %v6276, 0.2548296
      %v6309 = vadd.f32 %v6277, 0.2548296
      %v6310 = vadd.f32 %v6278, 0.2548296
      %v6311 = vadd.f32 %v6279, 0.2548296
      %v6312 = vadd.f32 %v6280, 0.2548296
      %v6313 = vadd.f32 %v6281, 0.2548296
      %v6314 = vadd.f32 %v6282, 0.2548296
      %v6315 = vadd.f32 %v6283, 0.2548296
      %v6316 = vadd.f32 %v6284, 0.2548296
      %v6317 = vadd.f32 %v6285, 0.2548296
      %v6318 = vadd.f32 %v6286, 0.2548296
      %v6319 = vadd.f32 %v6287, 0.2548296
      %v6320 = vadd.f32 %v6288, 0.2548296
      %v6321 = vadd.f32 %v6289, 0.2548296
      %v6322 = vadd.f32 %v6290, 0.2548296
      %v6323 = vadd.f32 %v6291, 0.2548296
      %v6324 = vadd.f32 %v6292, 0.2548296
      %v6325 = vadd.f32 %v6293, 0.2548296
      %v6326 = vadd.f32 %v6294, 0.2548296
      %v6327 = vadd.f32 %v6295, 0.2548296
      %v6328 = vadd.f32 %v6296, 0.2548296
      %v6329 = vadd.f32 %v6297, 0.2548296
      %v6330 = vmul.f32 %v6298, %v6011
      %v6331 = vmul.f32 %v6299, %v6013
      %v6332 = vmul.f32 %v6300, %v6015
      %v6333 = vmul.f32 %v6301, %v6017
      %v6334 = vmul.f32 %v6302, %v6019
      %v6335 = vmul.f32 %v6303, %v6021
      %v6336 = vmul.f32 %v6304, %v6023
      %v6337 = vmul.f32 %v6305, %v6025
      %v6338 = vmul.f32 %v6306, %v6027
      %v6339 = vmul.f32 %v6307, %v6029
      %v6340 = vmul.f32 %v6308, %v6031
      %v6341 = vmul.f32 %v6309, %v6033
      %v6342 = vmul.f32 %v6310, %v6035
      %v6343 = vmul.f32 %v6311, %v6037
      %v6344 = vmul.f32 %v6312, %v6039
      %v6345 = vmul.f32 %v6313, %v6041
      %v6346 = vmul.f32 %v6314, %v6043
      %v6347 = vmul.f32 %v6315, %v6045
      %v6348 = vmul.f32 %v6316, %v6047
      %v6349 = vmul.f32 %v6317, %v6049
      %v6350 = vmul.f32 %v6318, %v6051
      %v6351 = vmul.f32 %v6319, %v6053
      %v6352 = vmul.f32 %v6320, %v6055
      %v6353 = vmul.f32 %v6321, %v6057
      %v6354 = vmul.f32 %v6322, %v6059
      %v6355 = vmul.f32 %v6323, %v6061
      %v6356 = vmul.f32 %v6324, %v6063
      %v6357 = vmul.f32 %v6325, %v6065
      %v6358 = vmul.f32 %v6326, %v6067
      %v6359 = vmul.f32 %v6327, %v6069
      %v6360 = vmul.f32 %v6328, %v6071
      %v6361 = vmul.f32 %v6329, %v6073
      %v6362 = vsub.f32 0.0, %v5914
      %v6363 = vsub.f32 0.0, %v5915
      %v6364 = vsub.f32 0.0, %v5916
      %v6365 = vsub.f32 0.0, %v5917
      %v6366 = vsub.f32 0.0, %v5918
      %v6367 = vsub.f32 0.0, %v5919
      %v6368 = vsub.f32 0.0, %v5920
      %v6369 = vsub.f32 0.0, %v5921
      %v6370 = vsub.f32 0.0, %v5922
      %v6371 = vsub.f32 0.0, %v5923
      %v6372 = vsub.f32 0.0, %v5924
      %v6373 = vsub.f32 0.0, %v5925
      %v6374 = vsub.f32 0.0, %v5926
      %v6375 = vsub.f32 0.0, %v5927
      %v6376 = vsub.f32 0.0, %v5928
      %v6377 = vsub.f32 0.0, %v5929
      %v6378 = vsub.f32 0.0, %v5930
      %v6379 = vsub.f32 0.0, %v5931
      %v6380 = vsub.f32 0.0, %v5932
      %v6381 = vsub.f32 0.0, %v5933
      %v6382 = vsub.f32 0.0, %v5934
      %v6383 = vsub.f32 0.0, %v5935
      %v6384 = vsub.f32 0.0, %v5936
      %v6385 = vsub.f32 0.0, %v5937
      %v6386 = vsub.f32 0.0, %v5938
      %v6387 = vsub.f32 0.0, %v5939
      %v6388 = vsub.f32 0.0, %v5940
      %v6389 = vsub.f32 0.0, %v5941
      %v6390 = vsub.f32 0.0, %v5942
      %v6391 = vsub.f32 0.0, %v5943
      %v6392 = vsub.f32 0.0, %v5944
      %v6393 = vsub.f32 0.0, %v5945
      %v6394 = vmul.f32 %v6362, %v5914
      %v6395 = vmul.f32 %v6363, %v5915
      %v6396 = vmul.f32 %v6364, %v5916
      %v6397 = vmul.f32 %v6365, %v5917
      %v6398 = vmul.f32 %v6366, %v5918
      %v6399 = vmul.f32 %v6367, %v5919
      %v6400 = vmul.f32 %v6368, %v5920
      %v6401 = vmul.f32 %v6369, %v5921
      %v6402 = vmul.f32 %v6370, %v5922
      %v6403 = vmul.f32 %v6371, %v5923
      %v6404 = vmul.f32 %v6372, %v5924
      %v6405 = vmul.f32 %v6373, %v5925
      %v6406 = vmul.f32 %v6374, %v5926
      %v6407 = vmul.f32 %v6375, %v5927
      %v6408 = vmul.f32 %v6376, %v5928
      %v6409 = vmul.f32 %v6377, %v5929
      %v6410 = vmul.f32 %v6378, %v5930
      %v6411 = vmul.f32 %v6379, %v5931
      %v6412 = vmul.f32 %v6380, %v5932
      %v6413 = vmul.f32 %v6381, %v5933
      %v6414 = vmul.f32 %v6382, %v5934
      %v6415 = vmul.f32 %v6383, %v5935
      %v6416 = vmul.f32 %v6384, %v5936
      %v6417 = vmul.f32 %v6385, %v5937
      %v6418 = vmul.f32 %v6386, %v5938
      %v6419 = vmul.f32 %v6387, %v5939
      %v6420 = vmul.f32 %v6388, %v5940
      %v6421 = vmul.f32 %v6389, %v5941
      %v6422 = vmul.f32 %v6390, %v5942
      %v6423 = vmul.f32 %v6391, %v5943
      %v6424 = vmul.f32 %v6392, %v5944
      %v6425 = vmul.f32 %v6393, %v5945
      %v6426 = vmul.f32 %v6394, 1.442695
      %v6427 = vpow.pop %v6426
      %v6428 = vmul.f32 %v6395, 1.442695
      %v6429 = vpow.pop %v6428
      %v6430 = vmul.f32 %v6396, 1.442695
      %v6431 = vpow.pop %v6430
      %v6432 = vmul.f32 %v6397, 1.442695
      %v6433 = vpow.pop %v6432
      %v6434 = vmul.f32 %v6398, 1.442695
      %v6435 = vpow.pop %v6434
      %v6436 = vmul.f32 %v6399, 1.442695
      %v6437 = vpow.pop %v6436
      %v6438 = vmul.f32 %v6400, 1.442695
      %v6439 = vpow.pop %v6438
      %v6440 = vmul.f32 %v6401, 1.442695
      %v6441 = vpow.pop %v6440
      %v6442 = vmul.f32 %v6402, 1.442695
      %v6443 = vpow.pop %v6442
      %v6444 = vmul.f32 %v6403, 1.442695
      %v6445 = vpow.pop %v6444
      %v6446 = vmul.f32 %v6404, 1.442695
      %v6447 = vpow.pop %v6446
      %v6448 = vmul.f32 %v6405, 1.442695
      %v6449 = vpow.pop %v6448
      %v6450 = vmul.f32 %v6406, 1.442695
      %v6451 = vpow.pop %v6450
      %v6452 = vmul.f32 %v6407, 1.442695
      %v6453 = vpow.pop %v6452
      %v6454 = vmul.f32 %v6408, 1.442695
      %v6455 = vpow.pop %v6454
      %v6456 = vmul.f32 %v6409, 1.442695
      %v6457 = vpow.pop %v6456
      %v6458 = vmul.f32 %v6410, 1.442695
      %v6459 = vpow.pop %v6458
      %v6460 = vmul.f32 %v6411, 1.442695
      %v6461 = vpow.pop %v6460
      %v6462 = vmul.f32 %v6412, 1.442695
      %v6463 = vpow.pop %v6462
      %v6464 = vmul.f32 %v6413, 1.442695
      %v6465 = vpow.pop %v6464
      %v6466 = vmul.f32 %v6414, 1.442695
      %v6467 = vpow.pop %v6466
      %v6468 = vmul.f32 %v6415, 1.442695
      %v6469 = vpow.pop %v6468
      %v6470 = vmul.f32 %v6416, 1.442695
      %v6471 = vpow.pop %v6470
      %v6472 = vmul.f32 %v6417, 1.442695
      %v6473 = vpow.pop %v6472
      %v6474 = vmul.f32 %v6418, 1.442695
      %v6475 = vpow.pop %v6474
      %v6476 = vmul.f32 %v6419, 1.442695
      %v6477 = vpow.pop %v6476
      %v6478 = vmul.f32 %v6420, 1.442695
      %v6479 = vpow.pop %v6478
      %v6480 = vmul.f32 %v6421, 1.442695
      %v6481 = vpow.pop %v6480
      %v6482 = vmul.f32 %v6422, 1.442695
      %v6483 = vpow.pop %v6482
      %v6484 = vmul.f32 %v6423, 1.442695
      %v6485 = vpow.pop %v6484
      %v6486 = vmul.f32 %v6424, 1.442695
      %v6487 = vpow.pop %v6486
      %v6488 = vmul.f32 %v6425, 1.442695
      %v6489 = vpow.pop %v6488
      %v6490 = vmul.f32 %v6330, %v6427
      %v6491 = vmul.f32 %v6331, %v6429
      %v6492 = vmul.f32 %v6332, %v6431
      %v6493 = vmul.f32 %v6333, %v6433
      %v6494 = vmul.f32 %v6334, %v6435
      %v6495 = vmul.f32 %v6335, %v6437
      %v6496 = vmul.f32 %v6336, %v6439
      %v6497 = vmul.f32 %v6337, %v6441
      %v6498 = vmul.f32 %v6338, %v6443
      %v6499 = vmul.f32 %v6339, %v6445
      %v6500 = vmul.f32 %v6340, %v6447
      %v6501 = vmul.f32 %v6341, %v6449
      %v6502 = vmul.f32 %v6342, %v6451
      %v6503 = vmul.f32 %v6343, %v6453
      %v6504 = vmul.f32 %v6344, %v6455
      %v6505 = vmul.f32 %v6345, %v6457
      %v6506 = vmul.f32 %v6346, %v6459
      %v6507 = vmul.f32 %v6347, %v6461
      %v6508 = vmul.f32 %v6348, %v6463
      %v6509 = vmul.f32 %v6349, %v6465
      %v6510 = vmul.f32 %v6350, %v6467
      %v6511 = vmul.f32 %v6351, %v6469
      %v6512 = vmul.f32 %v6352, %v6471
      %v6513 = vmul.f32 %v6353, %v6473
      %v6514 = vmul.f32 %v6354, %v6475
      %v6515 = vmul.f32 %v6355, %v6477
      %v6516 = vmul.f32 %v6356, %v6479
      %v6517 = vmul.f32 %v6357, %v6481
      %v6518 = vmul.f32 %v6358, %v6483
      %v6519 = vmul.f32 %v6359, %v6485
      %v6520 = vmul.f32 %v6360, %v6487
      %v6521 = vmul.f32 %v6361, %v6489
      %v6522 = vsub.f32 1.0, %v6490
      %v6523 = vsub.f32 1.0, %v6491
      %v6524 = vsub.f32 1.0, %v6492
      %v6525 = vsub.f32 1.0, %v6493
      %v6526 = vsub.f32 1.0, %v6494
      %v6527 = vsub.f32 1.0, %v6495
      %v6528 = vsub.f32 1.0, %v6496
      %v6529 = vsub.f32 1.0, %v6497
      %v6530 = vsub.f32 1.0, %v6498
      %v6531 = vsub.f32 1.0, %v6499
      %v6532 = vsub.f32 1.0, %v6500
      %v6533 = vsub.f32 1.0, %v6501
      %v6534 = vsub.f32 1.0, %v6502
      %v6535 = vsub.f32 1.0, %v6503
      %v6536 = vsub.f32 1.0, %v6504
      %v6537 = vsub.f32 1.0, %v6505
      %v6538 = vsub.f32 1.0, %v6506
      %v6539 = vsub.f32 1.0, %v6507
      %v6540 = vsub.f32 1.0, %v6508
      %v6541 = vsub.f32 1.0, %v6509
      %v6542 = vsub.f32 1.0, %v6510
      %v6543 = vsub.f32 1.0, %v6511
      %v6544 = vsub.f32 1.0, %v6512
      %v6545 = vsub.f32 1.0, %v6513
      %v6546 = vsub.f32 1.0, %v6514
      %v6547 = vsub.f32 1.0, %v6515
      %v6548 = vsub.f32 1.0, %v6516
      %v6549 = vsub.f32 1.0, %v6517
      %v6550 = vsub.f32 1.0, %v6518
      %v6551 = vsub.f32 1.0, %v6519
      %v6552 = vsub.f32 1.0, %v6520
      %v6553 = vsub.f32 1.0, %v6521
      %v6554 = vmul.f32 %v5882, %v6522
      %v6555 = vmul.f32 %v5883, %v6523
      %v6556 = vmul.f32 %v5884, %v6524
      %v6557 = vmul.f32 %v5885, %v6525
      %v6558 = vmul.f32 %v5886, %v6526
      %v6559 = vmul.f32 %v5887, %v6527
      %v6560 = vmul.f32 %v5888, %v6528
      %v6561 = vmul.f32 %v5889, %v6529
      %v6562 = vmul.f32 %v5890, %v6530
      %v6563 = vmul.f32 %v5891, %v6531
      %v6564 = vmul.f32 %v5892, %v6532
      %v6565 = vmul.f32 %v5893, %v6533
      %v6566 = vmul.f32 %v5894, %v6534
      %v6567 = vmul.f32 %v5895, %v6535
      %v6568 = vmul.f32 %v5896, %v6536
      %v6569 = vmul.f32 %v5897, %v6537
      %v6570 = vmul.f32 %v5898, %v6538
      %v6571 = vmul.f32 %v5899, %v6539
      %v6572 = vmul.f32 %v5900, %v6540
      %v6573 = vmul.f32 %v5901, %v6541
      %v6574 = vmul.f32 %v5902, %v6542
      %v6575 = vmul.f32 %v5903, %v6543
      %v6576 = vmul.f32 %v5904, %v6544
      %v6577 = vmul.f32 %v5905, %v6545
      %v6578 = vmul.f32 %v5906, %v6546
      %v6579 = vmul.f32 %v5907, %v6547
      %v6580 = vmul.f32 %v5908, %v6548
      %v6581 = vmul.f32 %v5909, %v6549
      %v6582 = vmul.f32 %v5910, %v6550
      %v6583 = vmul.f32 %v5911, %v6551
      %v6584 = vmul.f32 %v5912, %v6552
      %v6585 = vmul.f32 %v5913, %v6553
      %v6586 = vmul.f32 %v5786, 0.5
      %v6587 = vmul.f32 %v5787, 0.5
      %v6588 = vmul.f32 %v5788, 0.5
      %v6589 = vmul.f32 %v5789, 0.5
      %v6590 = vmul.f32 %v5790, 0.5
      %v6591 = vmul.f32 %v5791, 0.5
      %v6592 = vmul.f32 %v5792, 0.5
      %v6593 = vmul.f32 %v5793, 0.5
      %v6594 = vmul.f32 %v5794, 0.5
      %v6595 = vmul.f32 %v5795, 0.5
      %v6596 = vmul.f32 %v5796, 0.5
      %v6597 = vmul.f32 %v5797, 0.5
      %v6598 = vmul.f32 %v5798, 0.5
      %v6599 = vmul.f32 %v5799, 0.5
      %v6600 = vmul.f32 %v5800, 0.5
      %v6601 = vmul.f32 %v5801, 0.5
      %v6602 = vmul.f32 %v5802, 0.5
      %v6603 = vmul.f32 %v5803, 0.5
      %v6604 = vmul.f32 %v5804, 0.5
      %v6605 = vmul.f32 %v5805, 0.5
      %v6606 = vmul.f32 %v5806, 0.5
      %v6607 = vmul.f32 %v5807, 0.5
      %v6608 = vmul.f32 %v5808, 0.5
      %v6609 = vmul.f32 %v5809, 0.5
      %v6610 = vmul.f32 %v5810, 0.5
      %v6611 = vmul.f32 %v5811, 0.5
      %v6612 = vmul.f32 %v5812, 0.5
      %v6613 = vmul.f32 %v5813, 0.5
      %v6614 = vmul.f32 %v5814, 0.5
      %v6615 = vmul.f32 %v5815, 0.5
      %v6616 = vmul.f32 %v5816, 0.5
      %v6617 = vmul.f32 %v5817, 0.5
      %v6618 = vadd.f32 %v6554, 1.0
      %v6619 = vadd.f32 %v6555, 1.0
      %v6620 = vadd.f32 %v6556, 1.0
      %v6621 = vadd.f32 %v6557, 1.0
      %v6622 = vadd.f32 %v6558, 1.0
      %v6623 = vadd.f32 %v6559, 1.0
      %v6624 = vadd.f32 %v6560, 1.0
      %v6625 = vadd.f32 %v6561, 1.0
      %v6626 = vadd.f32 %v6562, 1.0
      %v6627 = vadd.f32 %v6563, 1.0
      %v6628 = vadd.f32 %v6564, 1.0
      %v6629 = vadd.f32 %v6565, 1.0
      %v6630 = vadd.f32 %v6566, 1.0
      %v6631 = vadd.f32 %v6567, 1.0
      %v6632 = vadd.f32 %v6568, 1.0
      %v6633 = vadd.f32 %v6569, 1.0
      %v6634 = vadd.f32 %v6570, 1.0
      %v6635 = vadd.f32 %v6571, 1.0
      %v6636 = vadd.f32 %v6572, 1.0
      %v6637 = vadd.f32 %v6573, 1.0
      %v6638 = vadd.f32 %v6574, 1.0
      %v6639 = vadd.f32 %v6575, 1.0
      %v6640 = vadd.f32 %v6576, 1.0
      %v6641 = vadd.f32 %v6577, 1.0
      %v6642 = vadd.f32 %v6578, 1.0
      %v6643 = vadd.f32 %v6579, 1.0
      %v6644 = vadd.f32 %v6580, 1.0
      %v6645 = vadd.f32 %v6581, 1.0
      %v6646 = vadd.f32 %v6582, 1.0
      %v6647 = vadd.f32 %v6583, 1.0
      %v6648 = vadd.f32 %v6584, 1.0
      %v6649 = vadd.f32 %v6585, 1.0
      %v6650 = vmul.f32 %v6586, %v6618
      %v6651 = vmul.f32 %v6587, %v6619
      %v6652 = vmul.f32 %v6588, %v6620
      %v6653 = vmul.f32 %v6589, %v6621
      %v6654 = vmul.f32 %v6590, %v6622
      %v6655 = vmul.f32 %v6591, %v6623
      %v6656 = vmul.f32 %v6592, %v6624
      %v6657 = vmul.f32 %v6593, %v6625
      %v6658 = vmul.f32 %v6594, %v6626
      %v6659 = vmul.f32 %v6595, %v6627
      %v6660 = vmul.f32 %v6596, %v6628
      %v6661 = vmul.f32 %v6597, %v6629
      %v6662 = vmul.f32 %v6598, %v6630
      %v6663 = vmul.f32 %v6599, %v6631
      %v6664 = vmul.f32 %v6600, %v6632
      %v6665 = vmul.f32 %v6601, %v6633
      %v6666 = vmul.f32 %v6602, %v6634
      %v6667 = vmul.f32 %v6603, %v6635
      %v6668 = vmul.f32 %v6604, %v6636
      %v6669 = vmul.f32 %v6605, %v6637
      %v6670 = vmul.f32 %v6606, %v6638
      %v6671 = vmul.f32 %v6607, %v6639
      %v6672 = vmul.f32 %v6608, %v6640
      %v6673 = vmul.f32 %v6609, %v6641
      %v6674 = vmul.f32 %v6610, %v6642
      %v6675 = vmul.f32 %v6611, %v6643
      %v6676 = vmul.f32 %v6612, %v6644
      %v6677 = vmul.f32 %v6613, %v6645
      %v6678 = vmul.f32 %v6614, %v6646
      %v6679 = vmul.f32 %v6615, %v6647
      %v6680 = vmul.f32 %v6616, %v6648
      %v6681 = vmul.f32 %v6617, %v6649
      %v6682 = vld [vmem:[%s19] sm:$0xf]
      %v6683 = vld [vmem:[%s19 + $0x4] sm:$0xf]
      %v6684 = vld [vmem:[%s19 + $0x8] sm:$0xf]
      %v6685 = vld [vmem:[%s19 + $0xc] sm:$0xf]
      %v6686 = vld [vmem:[%s19 + $0x10] sm:$0xf]
      %v6687 = vld [vmem:[%s19 + $0x14] sm:$0xf]
      %v6688 = vld [vmem:[%s19 + $0x18] sm:$0xf]
      %v6689 = vld [vmem:[%s19 + $0x1c] sm:$0xf]
      %v6690 = vpack.c.bf16 %v6651, %v6650
      %v6691 = vpack.c.bf16 %v6653, %v6652
      %v6692 = vpack.c.bf16 %v6655, %v6654
      %v6693 = vpack.c.bf16 %v6657, %v6656
      %v6694 = vpack.c.bf16 %v6659, %v6658
      %v6695 = vpack.c.bf16 %v6661, %v6660
      %v6696 = vpack.c.bf16 %v6663, %v6662
      %v6697 = vpack.c.bf16 %v6665, %v6664
      %v6698 = vpack.c.bf16 %v6667, %v6666
      %v6699 = vpack.c.bf16 %v6669, %v6668
      %v6700 = vpack.c.bf16 %v6671, %v6670
      %v6701 = vpack.c.bf16 %v6673, %v6672
      %v6702 = vpack.c.bf16 %v6675, %v6674
      %v6703 = vpack.c.bf16 %v6677, %v6676
      %v6704 = vpack.c.bf16 %v6679, %v6678
      %v6705 = vpack.c.bf16 %v6681, %v6680
      %v6706 = vld [vmem:[%s20] sm:$0x1]
      %v6708 = vlaneseq
      %v6709 = vshrl.u32 %v6708, 7
      %v6710 = vsub.s32 0, %v6709
      %v6711 = vrot.slane %v6706, %v6710
      %v6721 = vunpack.c.l.b16 %v6682
      %v6722 = vunpack.c.l.b16 %v6683
      %v6723 = vunpack.c.l.b16 %v6684
      %v6724 = vunpack.c.l.b16 %v6685
      %v6725 = vunpack.c.l.b16 %v6686
      %v6726 = vunpack.c.l.b16 %v6687
      %v6727 = vunpack.c.l.b16 %v6688
      %v6728 = vunpack.c.l.b16 %v6689
      %v6729 = vpack.c.b16 %v6722, %v6721
      %v6730 = vpack.c.b16 %v6724, %v6723
      %v6731 = vpack.c.b16 %v6726, %v6725
      %v6732 = vpack.c.b16 %v6728, %v6727
      %vm6737 = vcmask 523264
      %v6739 = vsel %vm6737, %v6690, 0
      %v6742 = vsel %vm6737, %v6691, 0
      %v6745 = vsel %vm6737, %v6692, 0
      %v6748 = vsel %vm6737, %v6693, 0
      %v6751 = vsel %vm6737, %v6694, 0
      %v6754 = vsel %vm6737, %v6695, 0
      %v6757 = vsel %vm6737, %v6696, 0
      %v6760 = vsel %vm6737, %v6697, 0
      %v6763 = vsel %vm6737, %v6698, 0
      %v6766 = vsel %vm6737, %v6699, 0
      %v6769 = vsel %vm6737, %v6700, 0
      %v6772 = vsel %vm6737, %v6701, 0
      %v6775 = vsel %vm6737, %v6702, 0
      %v6778 = vsel %vm6737, %v6703, 0
      %v6781 = vsel %vm6737, %v6704, 0
      %v6784 = vsel %vm6737, %v6705, 0
      %6786 = vmatprep.subr.bf16.mxu0 0
      %6787 = vmatpush1.bf16.msra.mxu0 0
      %6788 = vmatprep.subr.bf16.mxu0 0
      %6789 = vmatpush1.bf16.msra.mxu0 0
      %6790 = vmatprep.subr.bf16.mxu0 0
      %6791 = vmatpush1.bf16.msra.mxu0 0
      %6792 = vmatprep.subr.bf16.mxu0 0
      %6793 = vmatpush1.bf16.msra.mxu0 0
      %6794 = vmatprep.subr.bf16.mxu0 0
      %6795 = vmatpush1.bf16.msra.mxu0 %v6732
      %6796 = vmatprep.subr.bf16.mxu0 0
      %6797 = vmatpush1.bf16.msra.mxu0 %v6731
      %6798 = vmatprep.subr.bf16.mxu0 0
      %6799 = vmatpush1.bf16.msra.mxu0 %v6730
      %6800 = vmatprep.subr.bf16.mxu0 0
      %6801 = vmatpush1.bf16.msra.mxu0 %v6729
      %6802 = vmatprep.subr.bf16.mxu0 0
      %6803 = vmatpush2.bf16.msra.mxu0 0
      %6804 = vmatprep.subr.bf16.mxu0 0
      %6805 = vmatpush2.bf16.msra.mxu0 0
      %6806 = vmatprep.subr.bf16.mxu0 0
      %6807 = vmatpush2.bf16.msra.mxu0 0
      %6808 = vmatprep.subr.bf16.mxu0 0
      %6809 = vmatpush2.bf16.msra.mxu0 0
      %6810 = vmatprep.subr.bf16.mxu0 0
      %6811 = vmatpush2.bf16.msra.mxu0 0
      %6812 = vmatprep.subr.bf16.mxu0 0
      %6813 = vmatpush2.bf16.msra.mxu0 0
      %6814 = vmatprep.subr.bf16.mxu0 0
      %6815 = vmatpush2.bf16.msra.mxu0 0
      %6816 = vmatprep.subr.bf16.mxu0 0
      %6817 = vmatpush2.bf16.msra.mxu0 0
      %6818 = vmatprep.mubr.bf16.mxu0 0
      %6819 = vmatmul.mubr.bf16.gmra.mxu0 %v6739
      %v6820 = vpop.f32.mrf.mxu0
      %v6821 = vadd.f32 %v6711, %v6820
      %v6822 = vpop.f32.mrf.mxu0
      %v6823 = vpop.f32.mrf.mxu0
      %v6824 = vadd.f32 %v6711, %v6823
      %v6825 = vpop.f32.mrf.mxu0
      %6826 = vmatprep.mubr.bf16.mxu0 0
      %6827 = vmatmul.mubr.bf16.gmra.mxu0 %v6742
      %v6828 = vpop.f32.mrf.mxu0
      %v6829 = vadd.f32 %v6711, %v6828
      %v6830 = vpop.f32.mrf.mxu0
      %v6831 = vpop.f32.mrf.mxu0
      %v6832 = vadd.f32 %v6711, %v6831
      %v6833 = vpop.f32.mrf.mxu0
      %6834 = vmatprep.mubr.bf16.mxu0 0
      %6835 = vmatmul.mubr.bf16.gmra.mxu0 %v6745
      %v6836 = vpop.f32.mrf.mxu0
      %v6837 = vadd.f32 %v6711, %v6836
      %v6838 = vpop.f32.mrf.mxu0
      %v6839 = vpop.f32.mrf.mxu0
      %v6840 = vadd.f32 %v6711, %v6839
      %v6841 = vpop.f32.mrf.mxu0
      %6842 = vmatprep.mubr.bf16.mxu0 0
      %6843 = vmatmul.mubr.bf16.gmra.mxu0 %v6748
      %v6844 = vpop.f32.mrf.mxu0
      %v6845 = vadd.f32 %v6711, %v6844
      %v6846 = vpop.f32.mrf.mxu0
      %v6847 = vpop.f32.mrf.mxu0
      %v6848 = vadd.f32 %v6711, %v6847
      %v6849 = vpop.f32.mrf.mxu0
      %6850 = vmatprep.mubr.bf16.mxu0 0
      %6851 = vmatmul.mubr.bf16.gmra.mxu0 %v6751
      %v6852 = vpop.f32.mrf.mxu0
      %v6853 = vadd.f32 %v6711, %v6852
      %v6854 = vpop.f32.mrf.mxu0
      %v6855 = vpop.f32.mrf.mxu0
      %v6856 = vadd.f32 %v6711, %v6855
      %v6857 = vpop.f32.mrf.mxu0
      %6858 = vmatprep.mubr.bf16.mxu0 0
      %6859 = vmatmul.mubr.bf16.gmra.mxu0 %v6754
      %v6860 = vpop.f32.mrf.mxu0
      %v6861 = vadd.f32 %v6711, %v6860
      %v6862 = vpop.f32.mrf.mxu0
      %v6863 = vpop.f32.mrf.mxu0
      %v6864 = vadd.f32 %v6711, %v6863
      %v6865 = vpop.f32.mrf.mxu0
      %6866 = vmatprep.mubr.bf16.mxu0 0
      %6867 = vmatmul.mubr.bf16.gmra.mxu0 %v6757
      %v6868 = vpop.f32.mrf.mxu0
      %v6869 = vadd.f32 %v6711, %v6868
      %v6870 = vpop.f32.mrf.mxu0
      %v6871 = vpop.f32.mrf.mxu0
      %v6872 = vadd.f32 %v6711, %v6871
      %v6873 = vpop.f32.mrf.mxu0
      %6874 = vmatprep.mubr.bf16.mxu0 0
      %6875 = vmatmul.mubr.bf16.gmra.mxu0 %v6760
      %v6876 = vpop.f32.mrf.mxu0
      %v6877 = vadd.f32 %v6711, %v6876
      %v6878 = vpop.f32.mrf.mxu0
      %v6879 = vpop.f32.mrf.mxu0
      %v6880 = vadd.f32 %v6711, %v6879
      %v6881 = vpop.f32.mrf.mxu0
      %6882 = vmatprep.mubr.bf16.mxu0 0
      %6883 = vmatmul.mubr.bf16.gmra.mxu0 %v6763
      %v6884 = vpop.f32.mrf.mxu0
      %v6885 = vadd.f32 %v6711, %v6884
      %v6886 = vpop.f32.mrf.mxu0
      %v6887 = vpop.f32.mrf.mxu0
      %v6888 = vadd.f32 %v6711, %v6887
      %v6889 = vpop.f32.mrf.mxu0
      %6890 = vmatprep.mubr.bf16.mxu0 0
      %6891 = vmatmul.mubr.bf16.gmra.mxu0 %v6766
      %v6892 = vpop.f32.mrf.mxu0
      %v6893 = vadd.f32 %v6711, %v6892
      %v6894 = vpop.f32.mrf.mxu0
      %v6895 = vpop.f32.mrf.mxu0
      %v6896 = vadd.f32 %v6711, %v6895
      %v6897 = vpop.f32.mrf.mxu0
      %6898 = vmatprep.mubr.bf16.mxu0 0
      %6899 = vmatmul.mubr.bf16.gmra.mxu0 %v6769
      %v6900 = vpop.f32.mrf.mxu0
      %v6901 = vadd.f32 %v6711, %v6900
      %v6902 = vpop.f32.mrf.mxu0
      %v6903 = vpop.f32.mrf.mxu0
      %v6904 = vadd.f32 %v6711, %v6903
      %v6905 = vpop.f32.mrf.mxu0
      %6906 = vmatprep.mubr.bf16.mxu0 0
      %6907 = vmatmul.mubr.bf16.gmra.mxu0 %v6772
      %v6908 = vpop.f32.mrf.mxu0
      %v6909 = vadd.f32 %v6711, %v6908
      %v6910 = vpop.f32.mrf.mxu0
      %v6911 = vpop.f32.mrf.mxu0
      %v6912 = vadd.f32 %v6711, %v6911
      %v6913 = vpop.f32.mrf.mxu0
      %6914 = vmatprep.mubr.bf16.mxu0 0
      %6915 = vmatmul.mubr.bf16.gmra.mxu0 %v6775
      %v6916 = vpop.f32.mrf.mxu0
      %v6917 = vadd.f32 %v6711, %v6916
      %v6918 = vpop.f32.mrf.mxu0
      %v6919 = vpop.f32.mrf.mxu0
      %v6920 = vadd.f32 %v6711, %v6919
      %v6921 = vpop.f32.mrf.mxu0
      %6922 = vmatprep.mubr.bf16.mxu0 0
      %6923 = vmatmul.mubr.bf16.gmra.mxu0 %v6778
      %v6924 = vpop.f32.mrf.mxu0
      %v6925 = vadd.f32 %v6711, %v6924
      %v6926 = vpop.f32.mrf.mxu0
      %v6927 = vpop.f32.mrf.mxu0
      %v6928 = vadd.f32 %v6711, %v6927
      %v6929 = vpop.f32.mrf.mxu0
      %6930 = vmatprep.mubr.bf16.mxu0 0
      %6931 = vmatmul.mubr.bf16.gmra.mxu0 %v6781
      %v6932 = vpop.f32.mrf.mxu0
      %v6933 = vadd.f32 %v6711, %v6932
      %v6934 = vpop.f32.mrf.mxu0
      %v6935 = vpop.f32.mrf.mxu0
      %v6936 = vadd.f32 %v6711, %v6935
      %v6937 = vpop.f32.mrf.mxu0
      %6938 = vmatprep.mubr.bf16.mxu0 0
      %6939 = vmatmul.mubr.bf16.gmra.mxu0 %v6784
      %v6940 = vpop.f32.mrf.mxu0
      %v6941 = vadd.f32 %v6711, %v6940
      %v6942 = vpop.f32.mrf.mxu0
      %v6943 = vpop.f32.mrf.mxu0
      %v6944 = vadd.f32 %v6711, %v6943
      %v6945 = vpop.f32.mrf.mxu0
      %6946 = vdwg.mxu0
      %v6947 = vld [vmem:[%s1] sm:$0xf]
      %v6948 = vld [vmem:[%s1 + $0x4] sm:$0xf]
      %v6949 = vld [vmem:[%s1 + $0x8] sm:$0xf]
      %v6950 = vld [vmem:[%s1 + $0xc] sm:$0xf]
      %v6951 = vld [vmem:[%s1 + $0x10] sm:$0xf]
      %v6952 = vld [vmem:[%s1 + $0x14] sm:$0xf]
      %v6953 = vld [vmem:[%s1 + $0x18] sm:$0xf]
      %v6954 = vld [vmem:[%s1 + $0x1c] sm:$0xf]
      %v6955 = vld [vmem:[%s1 + $0x20] sm:$0xf]
      %v6956 = vld [vmem:[%s1 + $0x24] sm:$0xf]
      %v6957 = vld [vmem:[%s1 + $0x28] sm:$0xf]
      %v6958 = vld [vmem:[%s1 + $0x2c] sm:$0xf]
      %v6959 = vld [vmem:[%s1 + $0x30] sm:$0xf]
      %v6960 = vld [vmem:[%s1 + $0x34] sm:$0xf]
      %v6961 = vld [vmem:[%s1 + $0x38] sm:$0xf]
      %v6962 = vld [vmem:[%s1 + $0x3c] sm:$0xf]
      %v6963 = vld [vmem:[%s1 + $0x40] sm:$0xf]
      %v6964 = vld [vmem:[%s1 + $0x44] sm:$0xf]
      %v6965 = vld [vmem:[%s1 + $0x48] sm:$0xf]
      %v6966 = vld [vmem:[%s1 + $0x4c] sm:$0xf]
      %v6967 = vld [vmem:[%s1 + $0x50] sm:$0xf]
      %v6968 = vld [vmem:[%s1 + $0x54] sm:$0xf]
      %v6969 = vld [vmem:[%s1 + $0x58] sm:$0xf]
      %v6970 = vld [vmem:[%s1 + $0x5c] sm:$0xf]
      %v6971 = vld [vmem:[%s1 + $0x60] sm:$0xf]
      %v6972 = vld [vmem:[%s1 + $0x64] sm:$0xf]
      %v6973 = vld [vmem:[%s1 + $0x68] sm:$0xf]
      %v6974 = vld [vmem:[%s1 + $0x6c] sm:$0xf]
      %v6975 = vld [vmem:[%s1 + $0x70] sm:$0xf]
      %v6976 = vld [vmem:[%s1 + $0x74] sm:$0xf]
      %v6977 = vld [vmem:[%s1 + $0x78] sm:$0xf]
      %v6978 = vld [vmem:[%s1 + $0x7c] sm:$0xf]
      %v6979 = vpack.c.bf16 %v1852, %v1852
      %v7012 = vunpack.c.l.b16 %v6947
      %v7013 = vunpack.c.l.b16 %v6948
      %v7014 = vunpack.c.l.b16 %v6949
      %v7015 = vunpack.c.l.b16 %v6950
      %v7016 = vunpack.c.l.b16 %v6951
      %v7017 = vunpack.c.l.b16 %v6952
      %v7018 = vunpack.c.l.b16 %v6953
      %v7019 = vunpack.c.l.b16 %v6954
      %v7020 = vunpack.c.l.b16 %v6955
      %v7021 = vunpack.c.l.b16 %v6956
      %v7022 = vunpack.c.l.b16 %v6957
      %v7023 = vunpack.c.l.b16 %v6958
      %v7024 = vunpack.c.l.b16 %v6959
      %v7025 = vunpack.c.l.b16 %v6960
      %v7026 = vunpack.c.l.b16 %v6961
      %v7027 = vunpack.c.l.b16 %v6962
      %v7028 = vunpack.c.l.b16 %v6963
      %v7029 = vunpack.c.l.b16 %v6964
      %v7030 = vunpack.c.l.b16 %v6965
      %v7031 = vunpack.c.l.b16 %v6966
      %v7032 = vunpack.c.l.b16 %v6967
      %v7033 = vunpack.c.l.b16 %v6968
      %v7034 = vunpack.c.l.b16 %v6969
      %v7035 = vunpack.c.l.b16 %v6970
      %v7036 = vunpack.c.l.b16 %v6971
      %v7037 = vunpack.c.l.b16 %v6972
      %v7038 = vunpack.c.l.b16 %v6973
      %v7039 = vunpack.c.l.b16 %v6974
      %v7040 = vunpack.c.l.b16 %v6975
      %v7041 = vunpack.c.l.b16 %v6976
      %v7042 = vunpack.c.l.b16 %v6977
      %v7043 = vunpack.c.l.b16 %v6978
      %v7044 = vpack.c.b16 %v7013, %v7012
      %v7045 = vpack.c.b16 %v7015, %v7014
      %v7046 = vpack.c.b16 %v7017, %v7016
      %v7047 = vpack.c.b16 %v7019, %v7018
      %v7048 = vpack.c.b16 %v7021, %v7020
      %v7049 = vpack.c.b16 %v7023, %v7022
      %v7050 = vpack.c.b16 %v7025, %v7024
      %v7051 = vpack.c.b16 %v7027, %v7026
      %v7052 = vpack.c.b16 %v7029, %v7028
      %v7053 = vpack.c.b16 %v7031, %v7030
      %v7054 = vpack.c.b16 %v7033, %v7032
      %v7055 = vpack.c.b16 %v7035, %v7034
      %v7056 = vpack.c.b16 %v7037, %v7036
      %v7057 = vpack.c.b16 %v7039, %v7038
      %v7058 = vpack.c.b16 %v7041, %v7040
      %v7059 = vpack.c.b16 %v7043, %v7042
      %vm7060 = vcmask 31744
      %v7062 = vsel %vm7060, %v7044, 0
      %v7065 = vsel %vm7060, %v7045, 0
      %v7068 = vsel %vm7060, %v7046, 0
      %v7071 = vsel %vm7060, %v7047, 0
      %v7074 = vsel %vm7060, %v7048, 0
      %v7077 = vsel %vm7060, %v7049, 0
      %v7080 = vsel %vm7060, %v7050, 0
      %v7083 = vsel %vm7060, %v7051, 0
      %v7086 = vsel %vm7060, %v7052, 0
      %v7089 = vsel %vm7060, %v7053, 0
      %v7092 = vsel %vm7060, %v7054, 0
      %v7095 = vsel %vm7060, %v7055, 0
      %v7098 = vsel %vm7060, %v7056, 0
      %v7101 = vsel %vm7060, %v7057, 0
      %v7104 = vsel %vm7060, %v7058, 0
      %v7107 = vsel %vm7060, %v7059, 0
      %vm7109 = vcmask 1041408
      %v7111 = vsel %vm7109, %v6979, 0
      %7113 = vmatprep.subr.bf16.mxu0 0
      %7114 = vmatpush1.bf16.msra.mxu0 0
      %7115 = vmatprep.subr.bf16.mxu0 0
      %7116 = vmatpush1.bf16.msra.mxu0 0
      %7117 = vmatprep.subr.bf16.mxu0 0
      %7118 = vmatpush1.bf16.msra.mxu0 0
      %7119 = vmatprep.subr.bf16.mxu0 0
      %7120 = vmatpush1.bf16.msra.mxu0 0
      %7121 = vmatprep.subr.bf16.mxu0 0
      %7122 = vmatpush1.bf16.msra.mxu0 0
      %7123 = vmatprep.subr.bf16.mxu0 0
      %7124 = vmatpush1.bf16.msra.mxu0 0
      %7125 = vmatprep.subr.bf16.mxu0 0
      %7126 = vmatpush1.bf16.msra.mxu0 0
      %7127 = vmatprep.subr.bf16.mxu0 0
      %7128 = vmatpush1.bf16.msra.mxu0 %v7111
      %7129 = vmatprep.subr.bf16.mxu0 0
      %7130 = vmatpush2.bf16.msra.mxu0 0
      %7131 = vmatprep.subr.bf16.mxu0 0
      %7132 = vmatpush2.bf16.msra.mxu0 0
      %7133 = vmatprep.subr.bf16.mxu0 0
      %7134 = vmatpush2.bf16.msra.mxu0 0
      %7135 = vmatprep.subr.bf16.mxu0 0
      %7136 = vmatpush2.bf16.msra.mxu0 0
      %7137 = vmatprep.subr.bf16.mxu0 0
      %7138 = vmatpush2.bf16.msra.mxu0 0
      %7139 = vmatprep.subr.bf16.mxu0 0
      %7140 = vmatpush2.bf16.msra.mxu0 0
      %7141 = vmatprep.subr.bf16.mxu0 0
      %7142 = vmatpush2.bf16.msra.mxu0 0
      %7143 = vmatprep.subr.bf16.mxu0 0
      %7144 = vmatpush2.bf16.msra.mxu0 0
      %7145 = vmatprep.mubr.bf16.mxu0 0
      %7146 = vmatmul.mubr.bf16.gmra.mxu0 %v7062
      %v7147 = vpop.f32.mrf.mxu0
      %v7148 = vadd.f32 0.0, %v7147
      %v7149 = vpop.f32.mrf.mxu0
      %v7150 = vpop.f32.mrf.mxu0
      %v7151 = vadd.f32 0.0, %v7150
      %v7152 = vpop.f32.mrf.mxu0
      %7153 = vmatprep.mubr.bf16.mxu0 0
      %7154 = vmatmul.mubr.bf16.gmra.mxu0 %v7065
      %v7155 = vpop.f32.mrf.mxu0
      %v7156 = vadd.f32 0.0, %v7155
      %v7157 = vpop.f32.mrf.mxu0
      %v7158 = vpop.f32.mrf.mxu0
      %v7159 = vadd.f32 0.0, %v7158
      %v7160 = vpop.f32.mrf.mxu0
      %7161 = vmatprep.mubr.bf16.mxu0 0
      %7162 = vmatmul.mubr.bf16.gmra.mxu0 %v7068
      %v7163 = vpop.f32.mrf.mxu0
      %v7164 = vadd.f32 0.0, %v7163
      %v7165 = vpop.f32.mrf.mxu0
      %v7166 = vpop.f32.mrf.mxu0
      %v7167 = vadd.f32 0.0, %v7166
      %v7168 = vpop.f32.mrf.mxu0
      %7169 = vmatprep.mubr.bf16.mxu0 0
      %7170 = vmatmul.mubr.bf16.gmra.mxu0 %v7071
      %v7171 = vpop.f32.mrf.mxu0
      %v7172 = vadd.f32 0.0, %v7171
      %v7173 = vpop.f32.mrf.mxu0
      %v7174 = vpop.f32.mrf.mxu0
      %v7175 = vadd.f32 0.0, %v7174
      %v7176 = vpop.f32.mrf.mxu0
      %7177 = vmatprep.mubr.bf16.mxu0 0
      %7178 = vmatmul.mubr.bf16.gmra.mxu0 %v7074
      %v7179 = vpop.f32.mrf.mxu0
      %v7180 = vadd.f32 0.0, %v7179
      %v7181 = vpop.f32.mrf.mxu0
      %v7182 = vpop.f32.mrf.mxu0
      %v7183 = vadd.f32 0.0, %v7182
      %v7184 = vpop.f32.mrf.mxu0
      %7185 = vmatprep.mubr.bf16.mxu0 0
      %7186 = vmatmul.mubr.bf16.gmra.mxu0 %v7077
      %v7187 = vpop.f32.mrf.mxu0
      %v7188 = vadd.f32 0.0, %v7187
      %v7189 = vpop.f32.mrf.mxu0
      %v7190 = vpop.f32.mrf.mxu0
      %v7191 = vadd.f32 0.0, %v7190
      %v7192 = vpop.f32.mrf.mxu0
      %7193 = vmatprep.mubr.bf16.mxu0 0
      %7194 = vmatmul.mubr.bf16.gmra.mxu0 %v7080
      %v7195 = vpop.f32.mrf.mxu0
      %v7196 = vadd.f32 0.0, %v7195
      %v7197 = vpop.f32.mrf.mxu0
      %v7198 = vpop.f32.mrf.mxu0
      %v7199 = vadd.f32 0.0, %v7198
      %v7200 = vpop.f32.mrf.mxu0
      %7201 = vmatprep.mubr.bf16.mxu0 0
      %7202 = vmatmul.mubr.bf16.gmra.mxu0 %v7083
      %v7203 = vpop.f32.mrf.mxu0
      %v7204 = vadd.f32 0.0, %v7203
      %v7205 = vpop.f32.mrf.mxu0
      %v7206 = vpop.f32.mrf.mxu0
      %v7207 = vadd.f32 0.0, %v7206
      %v7208 = vpop.f32.mrf.mxu0
      %7209 = vmatprep.mubr.bf16.mxu0 0
      %7210 = vmatmul.mubr.bf16.gmra.mxu0 %v7086
      %v7211 = vpop.f32.mrf.mxu0
      %v7212 = vadd.f32 0.0, %v7211
      %v7213 = vpop.f32.mrf.mxu0
      %v7214 = vpop.f32.mrf.mxu0
      %v7215 = vadd.f32 0.0, %v7214
      %v7216 = vpop.f32.mrf.mxu0
      %7217 = vmatprep.mubr.bf16.mxu0 0
      %7218 = vmatmul.mubr.bf16.gmra.mxu0 %v7089
      %v7219 = vpop.f32.mrf.mxu0
      %v7220 = vadd.f32 0.0, %v7219
      %v7221 = vpop.f32.mrf.mxu0
      %v7222 = vpop.f32.mrf.mxu0
      %v7223 = vadd.f32 0.0, %v7222
      %v7224 = vpop.f32.mrf.mxu0
      %7225 = vmatprep.mubr.bf16.mxu0 0
      %7226 = vmatmul.mubr.bf16.gmra.mxu0 %v7092
      %v7227 = vpop.f32.mrf.mxu0
      %v7228 = vadd.f32 0.0, %v7227
      %v7229 = vpop.f32.mrf.mxu0
      %v7230 = vpop.f32.mrf.mxu0
      %v7231 = vadd.f32 0.0, %v7230
      %v7232 = vpop.f32.mrf.mxu0
      %7233 = vmatprep.mubr.bf16.mxu0 0
      %7234 = vmatmul.mubr.bf16.gmra.mxu0 %v7095
      %v7235 = vpop.f32.mrf.mxu0
      %v7236 = vadd.f32 0.0, %v7235
      %v7237 = vpop.f32.mrf.mxu0
      %v7238 = vpop.f32.mrf.mxu0
      %v7239 = vadd.f32 0.0, %v7238
      %v7240 = vpop.f32.mrf.mxu0
      %7241 = vmatprep.mubr.bf16.mxu0 0
      %7242 = vmatmul.mubr.bf16.gmra.mxu0 %v7098
      %v7243 = vpop.f32.mrf.mxu0
      %v7244 = vadd.f32 0.0, %v7243
      %v7245 = vpop.f32.mrf.mxu0
      %v7246 = vpop.f32.mrf.mxu0
      %v7247 = vadd.f32 0.0, %v7246
      %v7248 = vpop.f32.mrf.mxu0
      %7249 = vmatprep.mubr.bf16.mxu0 0
      %7250 = vmatmul.mubr.bf16.gmra.mxu0 %v7101
      %v7251 = vpop.f32.mrf.mxu0
      %v7252 = vadd.f32 0.0, %v7251
      %v7253 = vpop.f32.mrf.mxu0
      %v7254 = vpop.f32.mrf.mxu0
      %v7255 = vadd.f32 0.0, %v7254
      %v7256 = vpop.f32.mrf.mxu0
      %7257 = vmatprep.mubr.bf16.mxu0 0
      %7258 = vmatmul.mubr.bf16.gmra.mxu0 %v7104
      %v7259 = vpop.f32.mrf.mxu0
      %v7260 = vadd.f32 0.0, %v7259
      %v7261 = vpop.f32.mrf.mxu0
      %v7262 = vpop.f32.mrf.mxu0
      %v7263 = vadd.f32 0.0, %v7262
      %v7264 = vpop.f32.mrf.mxu0
      %7265 = vmatprep.mubr.bf16.mxu0 0
      %7266 = vmatmul.mubr.bf16.gmra.mxu0 %v7107
      %v7267 = vpop.f32.mrf.mxu0
      %v7268 = vadd.f32 0.0, %v7267
      %v7269 = vpop.f32.mrf.mxu0
      %v7270 = vpop.f32.mrf.mxu0
      %v7271 = vadd.f32 0.0, %v7270
      %v7272 = vpop.f32.mrf.mxu0
      %7273 = vdwg.mxu0
      %v7274 = vmul.f32 %v1061, %v7148
      %v7275 = vmul.f32 %v1064, %v7151
      %v7276 = vmul.f32 %v1069, %v7156
      %v7277 = vmul.f32 %v1072, %v7159
      %v7278 = vmul.f32 %v1077, %v7164
      %v7279 = vmul.f32 %v1080, %v7167
      %v7280 = vmul.f32 %v1085, %v7172
      %v7281 = vmul.f32 %v1088, %v7175
      %v7282 = vmul.f32 %v1093, %v7180
      %v7283 = vmul.f32 %v1096, %v7183
      %v7284 = vmul.f32 %v1101, %v7188
      %v7285 = vmul.f32 %v1104, %v7191
      %v7286 = vmul.f32 %v1109, %v7196
      %v7287 = vmul.f32 %v1112, %v7199
      %v7288 = vmul.f32 %v1117, %v7204
      %v7289 = vmul.f32 %v1120, %v7207
      %v7290 = vmul.f32 %v1125, %v7212
      %v7291 = vmul.f32 %v1128, %v7215
      %v7292 = vmul.f32 %v1133, %v7220
      %v7293 = vmul.f32 %v1136, %v7223
      %v7294 = vmul.f32 %v1141, %v7228
      %v7295 = vmul.f32 %v1144, %v7231
      %v7296 = vmul.f32 %v1149, %v7236
      %v7297 = vmul.f32 %v1152, %v7239
      %v7298 = vmul.f32 %v1157, %v7244
      %v7299 = vmul.f32 %v1160, %v7247
      %v7300 = vmul.f32 %v1165, %v7252
      %v7301 = vmul.f32 %v1168, %v7255
      %v7302 = vmul.f32 %v1173, %v7260
      %v7303 = vmul.f32 %v1176, %v7263
      %v7304 = vmul.f32 %v1181, %v7268
      %v7305 = vmul.f32 %v1184, %v7271
      %v7306 = vadd.f32 %v7274, %v6821
      %v7307 = vadd.f32 %v7275, %v6824
      %v7308 = vadd.f32 %v7276, %v6829
      %v7309 = vadd.f32 %v7277, %v6832
      %v7310 = vadd.f32 %v7278, %v6837
      %v7311 = vadd.f32 %v7279, %v6840
      %v7312 = vadd.f32 %v7280, %v6845
      %v7313 = vadd.f32 %v7281, %v6848
      %v7314 = vadd.f32 %v7282, %v6853
      %v7315 = vadd.f32 %v7283, %v6856
      %v7316 = vadd.f32 %v7284, %v6861
      %v7317 = vadd.f32 %v7285, %v6864
      %v7318 = vadd.f32 %v7286, %v6869
      %v7319 = vadd.f32 %v7287, %v6872
      %v7320 = vadd.f32 %v7288, %v6877
      %v7321 = vadd.f32 %v7289, %v6880
      %v7322 = vadd.f32 %v7290, %v6885
      %v7323 = vadd.f32 %v7291, %v6888
      %v7324 = vadd.f32 %v7292, %v6893
      %v7325 = vadd.f32 %v7293, %v6896
      %v7326 = vadd.f32 %v7294, %v6901
      %v7327 = vadd.f32 %v7295, %v6904
      %v7328 = vadd.f32 %v7296, %v6909
      %v7329 = vadd.f32 %v7297, %v6912
      %v7330 = vadd.f32 %v7298, %v6917
      %v7331 = vadd.f32 %v7299, %v6920
      %v7332 = vadd.f32 %v7300, %v6925
      %v7333 = vadd.f32 %v7301, %v6928
      %v7334 = vadd.f32 %v7302, %v6933
      %v7335 = vadd.f32 %v7303, %v6936
      %v7336 = vadd.f32 %v7304, %v6941
      %v7337 = vadd.f32 %v7305, %v6944
      %v7338 = vld [vmem:[%s8] sm:$0xf]
      %v7339 = vld [vmem:[%s8 + $0x4] sm:$0xf]
      %v7340 = vld [vmem:[%s8 + $0x8] sm:$0xf]
      %v7341 = vld [vmem:[%s8 + $0xc] sm:$0xf]
      %v7342 = vpack.c.bf16 %v7307, %v7306
      %v7343 = vpack.c.bf16 %v7309, %v7308
      %v7344 = vpack.c.bf16 %v7311, %v7310
      %v7345 = vpack.c.bf16 %v7313, %v7312
      %v7346 = vpack.c.bf16 %v7315, %v7314
      %v7347 = vpack.c.bf16 %v7317, %v7316
      %v7348 = vpack.c.bf16 %v7319, %v7318
      %v7349 = vpack.c.bf16 %v7321, %v7320
      %v7350 = vpack.c.bf16 %v7323, %v7322
      %v7351 = vpack.c.bf16 %v7325, %v7324
      %v7352 = vpack.c.bf16 %v7327, %v7326
      %v7353 = vpack.c.bf16 %v7329, %v7328
      %v7354 = vpack.c.bf16 %v7331, %v7330
      %v7355 = vpack.c.bf16 %v7333, %v7332
      %v7356 = vpack.c.bf16 %v7335, %v7334
      %v7357 = vpack.c.bf16 %v7337, %v7336
      %v7358 = vld [vmem:[%s9] sm:$0x1]
      %v7360 = vlaneseq
      %v7361 = vshrl.u32 %v7360, 7
      %v7362 = vsub.s32 0, %v7361
      %v7363 = vrot.slane %v7358, %v7362
      %v7369 = vunpack.c.l.b16 %v7338
      %v7370 = vunpack.c.l.b16 %v7339
      %v7371 = vunpack.c.l.b16 %v7340
      %v7372 = vunpack.c.l.b16 %v7341
      %v7373 = vpack.c.b16 %v7370, %v7369
      %v7374 = vpack.c.b16 %v7372, %v7371
      %v7378 = vsel %vm793, %v7342, 0
      %v7381 = vsel %vm793, %v7343, 0
      %v7384 = vsel %vm793, %v7344, 0
      %v7387 = vsel %vm793, %v7345, 0
      %v7390 = vsel %vm793, %v7346, 0
      %v7393 = vsel %vm793, %v7347, 0
      %v7396 = vsel %vm793, %v7348, 0
      %v7399 = vsel %vm793, %v7349, 0
      %v7402 = vsel %vm793, %v7350, 0
      %v7405 = vsel %vm793, %v7351, 0
      %v7408 = vsel %vm793, %v7352, 0
      %v7411 = vsel %vm793, %v7353, 0
      %v7414 = vsel %vm793, %v7354, 0
      %v7417 = vsel %vm793, %v7355, 0
      %v7420 = vsel %vm793, %v7356, 0
      %v7423 = vsel %vm793, %v7357, 0
      %7425 = vmatprep.subr.bf16.mxu0 0
      %7426 = vmatpush1.bf16.msra.mxu0 0
      %7427 = vmatprep.subr.bf16.mxu0 0
      %7428 = vmatpush1.bf16.msra.mxu0 0
      %7429 = vmatprep.subr.bf16.mxu0 0
      %7430 = vmatpush1.bf16.msra.mxu0 0
      %7431 = vmatprep.subr.bf16.mxu0 0
      %7432 = vmatpush1.bf16.msra.mxu0 0
      %7433 = vmatprep.subr.bf16.mxu0 0
      %7434 = vmatpush1.bf16.msra.mxu0 0
      %7435 = vmatprep.subr.bf16.mxu0 0
      %7436 = vmatpush1.bf16.msra.mxu0 0
      %7437 = vmatprep.subr.bf16.mxu0 0
      %7438 = vmatpush1.bf16.msra.mxu0 %v7374
      %7439 = vmatprep.subr.bf16.mxu0 0
      %7440 = vmatpush1.bf16.msra.mxu0 %v7373
      %7441 = vmatprep.subr.bf16.mxu0 0
      %7442 = vmatpush2.bf16.msra.mxu0 0
      %7443 = vmatprep.subr.bf16.mxu0 0
      %7444 = vmatpush2.bf16.msra.mxu0 0
      %7445 = vmatprep.subr.bf16.mxu0 0
      %7446 = vmatpush2.bf16.msra.mxu0 0
      %7447 = vmatprep.subr.bf16.mxu0 0
      %7448 = vmatpush2.bf16.msra.mxu0 0
      %7449 = vmatprep.subr.bf16.mxu0 0
      %7450 = vmatpush2.bf16.msra.mxu0 0
      %7451 = vmatprep.subr.bf16.mxu0 0
      %7452 = vmatpush2.bf16.msra.mxu0 0
      %7453 = vmatprep.subr.bf16.mxu0 0
      %7454 = vmatpush2.bf16.msra.mxu0 0
      %7455 = vmatprep.subr.bf16.mxu0 0
      %7456 = vmatpush2.bf16.msra.mxu0 0
      %7457 = vmatprep.mubr.bf16.mxu0 0
      %7458 = vmatmul.mubr.bf16.gmra.mxu0 %v7378
      %v7459 = vpop.f32.mrf.mxu0
      %v7460 = vadd.f32 %v7363, %v7459
      %v7461 = vpop.f32.mrf.mxu0
      %v7462 = vpop.f32.mrf.mxu0
      %v7463 = vadd.f32 %v7363, %v7462
      %v7464 = vpop.f32.mrf.mxu0
      %7465 = vmatprep.mubr.bf16.mxu0 0
      %7466 = vmatmul.mubr.bf16.gmra.mxu0 %v7381
      %v7467 = vpop.f32.mrf.mxu0
      %v7468 = vadd.f32 %v7363, %v7467
      %v7469 = vpop.f32.mrf.mxu0
      %v7470 = vpop.f32.mrf.mxu0
      %v7471 = vadd.f32 %v7363, %v7470
      %v7472 = vpop.f32.mrf.mxu0
      %7473 = vmatprep.mubr.bf16.mxu0 0
      %7474 = vmatmul.mubr.bf16.gmra.mxu0 %v7384
      %v7475 = vpop.f32.mrf.mxu0
      %v7476 = vadd.f32 %v7363, %v7475
      %v7477 = vpop.f32.mrf.mxu0
      %v7478 = vpop.f32.mrf.mxu0
      %v7479 = vadd.f32 %v7363, %v7478
      %v7480 = vpop.f32.mrf.mxu0
      %7481 = vmatprep.mubr.bf16.mxu0 0
      %7482 = vmatmul.mubr.bf16.gmra.mxu0 %v7387
      %v7483 = vpop.f32.mrf.mxu0
      %v7484 = vadd.f32 %v7363, %v7483
      %v7485 = vpop.f32.mrf.mxu0
      %v7486 = vpop.f32.mrf.mxu0
      %v7487 = vadd.f32 %v7363, %v7486
      %v7488 = vpop.f32.mrf.mxu0
      %7489 = vmatprep.mubr.bf16.mxu0 0
      %7490 = vmatmul.mubr.bf16.gmra.mxu0 %v7390
      %v7491 = vpop.f32.mrf.mxu0
      %v7492 = vadd.f32 %v7363, %v7491
      %v7493 = vpop.f32.mrf.mxu0
      %v7494 = vpop.f32.mrf.mxu0
      %v7495 = vadd.f32 %v7363, %v7494
      %v7496 = vpop.f32.mrf.mxu0
      %7497 = vmatprep.mubr.bf16.mxu0 0
      %7498 = vmatmul.mubr.bf16.gmra.mxu0 %v7393
      %v7499 = vpop.f32.mrf.mxu0
      %v7500 = vadd.f32 %v7363, %v7499
      %v7501 = vpop.f32.mrf.mxu0
      %v7502 = vpop.f32.mrf.mxu0
      %v7503 = vadd.f32 %v7363, %v7502
      %v7504 = vpop.f32.mrf.mxu0
      %7505 = vmatprep.mubr.bf16.mxu0 0
      %7506 = vmatmul.mubr.bf16.gmra.mxu0 %v7396
      %v7507 = vpop.f32.mrf.mxu0
      %v7508 = vadd.f32 %v7363, %v7507
      %v7509 = vpop.f32.mrf.mxu0
      %v7510 = vpop.f32.mrf.mxu0
      %v7511 = vadd.f32 %v7363, %v7510
      %v7512 = vpop.f32.mrf.mxu0
      %7513 = vmatprep.mubr.bf16.mxu0 0
      %7514 = vmatmul.mubr.bf16.gmra.mxu0 %v7399
      %v7515 = vpop.f32.mrf.mxu0
      %v7516 = vadd.f32 %v7363, %v7515
      %v7517 = vpop.f32.mrf.mxu0
      %v7518 = vpop.f32.mrf.mxu0
      %v7519 = vadd.f32 %v7363, %v7518
      %v7520 = vpop.f32.mrf.mxu0
      %7521 = vmatprep.mubr.bf16.mxu0 0
      %7522 = vmatmul.mubr.bf16.gmra.mxu0 %v7402
      %v7523 = vpop.f32.mrf.mxu0
      %v7524 = vadd.f32 %v7363, %v7523
      %v7525 = vpop.f32.mrf.mxu0
      %v7526 = vpop.f32.mrf.mxu0
      %v7527 = vadd.f32 %v7363, %v7526
      %v7528 = vpop.f32.mrf.mxu0
      %7529 = vmatprep.mubr.bf16.mxu0 0
      %7530 = vmatmul.mubr.bf16.gmra.mxu0 %v7405
      %v7531 = vpop.f32.mrf.mxu0
      %v7532 = vadd.f32 %v7363, %v7531
      %v7533 = vpop.f32.mrf.mxu0
      %v7534 = vpop.f32.mrf.mxu0
      %v7535 = vadd.f32 %v7363, %v7534
      %v7536 = vpop.f32.mrf.mxu0
      %7537 = vmatprep.mubr.bf16.mxu0 0
      %7538 = vmatmul.mubr.bf16.gmra.mxu0 %v7408
      %v7539 = vpop.f32.mrf.mxu0
      %v7540 = vadd.f32 %v7363, %v7539
      %v7541 = vpop.f32.mrf.mxu0
      %v7542 = vpop.f32.mrf.mxu0
      %v7543 = vadd.f32 %v7363, %v7542
      %v7544 = vpop.f32.mrf.mxu0
      %7545 = vmatprep.mubr.bf16.mxu0 0
      %7546 = vmatmul.mubr.bf16.gmra.mxu0 %v7411
      %v7547 = vpop.f32.mrf.mxu0
      %v7548 = vadd.f32 %v7363, %v7547
      %v7549 = vpop.f32.mrf.mxu0
      %v7550 = vpop.f32.mrf.mxu0
      %v7551 = vadd.f32 %v7363, %v7550
      %v7552 = vpop.f32.mrf.mxu0
      %7553 = vmatprep.mubr.bf16.mxu0 0
      %7554 = vmatmul.mubr.bf16.gmra.mxu0 %v7414
      %v7555 = vpop.f32.mrf.mxu0
      %v7556 = vadd.f32 %v7363, %v7555
      %v7557 = vpop.f32.mrf.mxu0
      %v7558 = vpop.f32.mrf.mxu0
      %v7559 = vadd.f32 %v7363, %v7558
      %v7560 = vpop.f32.mrf.mxu0
      %7561 = vmatprep.mubr.bf16.mxu0 0
      %7562 = vmatmul.mubr.bf16.gmra.mxu0 %v7417
      %v7563 = vpop.f32.mrf.mxu0
      %v7564 = vadd.f32 %v7363, %v7563
      %v7565 = vpop.f32.mrf.mxu0
      %v7566 = vpop.f32.mrf.mxu0
      %v7567 = vadd.f32 %v7363, %v7566
      %v7568 = vpop.f32.mrf.mxu0
      %7569 = vmatprep.mubr.bf16.mxu0 0
      %7570 = vmatmul.mubr.bf16.gmra.mxu0 %v7420
      %v7571 = vpop.f32.mrf.mxu0
      %v7572 = vadd.f32 %v7363, %v7571
      %v7573 = vpop.f32.mrf.mxu0
      %v7574 = vpop.f32.mrf.mxu0
      %v7575 = vadd.f32 %v7363, %v7574
      %v7576 = vpop.f32.mrf.mxu0
      %7577 = vmatprep.mubr.bf16.mxu0 0
      %7578 = vmatmul.mubr.bf16.gmra.mxu0 %v7423
      %v7579 = vpop.f32.mrf.mxu0
      %v7580 = vadd.f32 %v7363, %v7579
      %v7581 = vpop.f32.mrf.mxu0
      %v7582 = vpop.f32.mrf.mxu0
      %v7583 = vadd.f32 %v7363, %v7582
      %v7584 = vpop.f32.mrf.mxu0
      %7585 = vdwg.mxu0
      %7586 = vst.msk [vmem:[%s656] sm:$0xff] %vm793, %v7460
      %7587 = vst.msk [vmem:[%s656 + $0x8] sm:$0xff] %vm793, %v7463
      %7588 = vst.msk [vmem:[%s656 + $0x10] sm:$0xff] %vm793, %v7468
      %7589 = vst.msk [vmem:[%s656 + $0x18] sm:$0xff] %vm793, %v7471
      %7590 = vst.msk [vmem:[%s656 + $0x20] sm:$0xff] %vm793, %v7476
      %7591 = vst.msk [vmem:[%s656 + $0x28] sm:$0xff] %vm793, %v7479
      %7592 = vst.msk [vmem:[%s656 + $0x30] sm:$0xff] %vm793, %v7484
      %7593 = vst.msk [vmem:[%s656 + $0x38] sm:$0xff] %vm793, %v7487
      %7594 = vst.msk [vmem:[%s656 + $0x40] sm:$0xff] %vm793, %v7492
      %7595 = vst.msk [vmem:[%s656 + $0x48] sm:$0xff] %vm793, %v7495
      %7596 = vst.msk [vmem:[%s656 + $0x50] sm:$0xff] %vm793, %v7500
      %7597 = vst.msk [vmem:[%s656 + $0x58] sm:$0xff] %vm793, %v7503
      %7598 = vst.msk [vmem:[%s656 + $0x60] sm:$0xff] %vm793, %v7508
      %7599 = vst.msk [vmem:[%s656 + $0x68] sm:$0xff] %vm793, %v7511
      %7600 = vst.msk [vmem:[%s656 + $0x70] sm:$0xff] %vm793, %v7516
      %7601 = vst.msk [vmem:[%s656 + $0x78] sm:$0xff] %vm793, %v7519
      %7602 = vst.msk [vmem:[%s656 + $0x80] sm:$0xff] %vm793, %v7524
      %7603 = vst.msk [vmem:[%s656 + $0x88] sm:$0xff] %vm793, %v7527
      %7604 = vst.msk [vmem:[%s656 + $0x90] sm:$0xff] %vm793, %v7532
      %7605 = vst.msk [vmem:[%s656 + $0x98] sm:$0xff] %vm793, %v7535
      %7606 = vst.msk [vmem:[%s656 + $0xa0] sm:$0xff] %vm793, %v7540
      %7607 = vst.msk [vmem:[%s656 + $0xa8] sm:$0xff] %vm793, %v7543
      %7608 = vst.msk [vmem:[%s656 + $0xb0] sm:$0xff] %vm793, %v7548
      %7609 = vst.msk [vmem:[%s656 + $0xb8] sm:$0xff] %vm793, %v7551
      %7610 = vst.msk [vmem:[%s656 + $0xc0] sm:$0xff] %vm793, %v7556
      %7611 = vst.msk [vmem:[%s656 + $0xc8] sm:$0xff] %vm793, %v7559
      %7612 = vst.msk [vmem:[%s656 + $0xd0] sm:$0xff] %vm793, %v7564
      %7613 = vst.msk [vmem:[%s656 + $0xd8] sm:$0xff] %vm793, %v7567
      %7614 = vst.msk [vmem:[%s656 + $0xe0] sm:$0xff] %vm793, %v7572
      %7615 = vst.msk [vmem:[%s656 + $0xe8] sm:$0xff] %vm793, %v7575
      %7616 = vst.msk [vmem:[%s656 + $0xf0] sm:$0xff] %vm793, %v7580
      %7617 = vst.msk [vmem:[%s656 + $0xf8] sm:$0xff] %vm793, %v7583
      %p7618 = scmp.lt.s32.totalorder %s32, 1
      %s7619 = scalar_select %p7618, %s32, 1
      %s7620 = smul.addr %s7619, 32
      %s7621 = smul.addr %s7620, 8
      %s7622 = scalar_lea.vmem %s21, %s7621
      // Predicated region
      $region105: #{tpu_custom_call.1} parent=103 // pred_check
        %p7623 = pneg %p496
      $region106: #{tpu_custom_call.1} parent=103 // pred_check_branch
        %7625 = sbr.rel (%p7623) target = $region108
      $region107: #{tpu_custom_call.1} parent=103 // pred_region
        _
      $region108: #{tpu_custom_call.1} parent=103 // pred_fallthru
        _
    $region104: #{tpu_custom_call.1} parent=5 // pred_fallthru
      _
    %p7626 = scmp.le.s32.totalorder 2, %s27
    // Predicated region
    $region109: #{tpu_custom_call.1} parent=5 // pred_check
      %p7627 = pneg %p7626
    $region110: #{tpu_custom_call.1} parent=5 // pred_check_branch
      %7629 = sbr.rel (%p7627) target = $region112
    $region111: #{tpu_custom_call.1} parent=5 // pred_region
      %s7630 = ssub.s32 %s27, 2
      // Predicated region
      $region113: #{tpu_custom_call.1} parent=111 // pred_check
        %p7631 = pneg %p502
      $region114: #{tpu_custom_call.1} parent=111 // pred_check_branch
        %7633 = sbr.rel (%p7631) target = $region116
      $region115: #{tpu_custom_call.1} parent=111 // pred_region
        %p7634 = scmp.lt.s32.totalorder %s33, 1
        %s7635 = scalar_select %p7634, %s33, 1
        %s7636 = smul.addr %s7635, 32
        %s7637 = smul.addr %s7636, 8
        %s7638 = scalar_lea.vmem %s21, %s7637
      $region116: #{tpu_custom_call.1} parent=111 // pred_fallthru
        _
    $region112: #{tpu_custom_call.1} parent=5 // pred_fallthru
      _
  $region6: #{tpu_custom_call.1} parent=0 // loop_footer
    %s31 = sadd.s32 1, %s27
  $region7: #{tpu_custom_call.1} parent=0 // loop_footer_branch
    %26 = sbr.rel target = $region3
  $region8: #{tpu_custom_call.1} parent=0 // loop_exit
    _

</llo_original>
